<compile_context>
chip_gen: v7x
topology: tpu7x:2x2x1
jax: 0.10.0
libtpu: 0.0.40
codegen_flags: <defaults>
</compile_context>

<pallas_src>
import jax
import jax.numpy as jnp
from jax import lax
from jax.experimental import pallas as pl
from jax.experimental.pallas import tpu as pltpu


def _round_up(x, m):
    return -(-x // m) * m


# ---------------------------------------------------------------------------
# Kernel
# ---------------------------------------------------------------------------
def _make_lstm_kernel(n_chains, unroll):
    """Build the LSTM recurrence kernel with `n_chains` interleaved batch sub-chains."""

    def kernel(xp_ref,     # (Tt, Bt, 4Hp) bf16 : precomputed x@W_ih^T + (b_ih+b_hh) tile
               whh_ref,    # (Hp, 4Hp)     bf16 : gate-padded W_hh^T (gate order i, f, g, o)
               wlin_ref,   # (Hp, 128)     f32  : final linear weight^T (cols >=5 are zero)
               blin_ref,   # (1, 128)      f32  : final linear bias (cols >=5 are zero)
               out_ref,    # (Bt, 128)     f32  : logits (lane-dense)
               h_scr,      # (Bt, Hp)      f32  : hidden state (persists across grid steps)
               c_scr):     # (Bt, Hp)      f32  : cell state   (persists across grid steps)
        Tt = xp_ref.shape[0]
        Bt = h_scr.shape[0]
        Hp = h_scr.shape[1]
        Bh = Bt // n_chains

        t_blk = pl.program_id(1)

        @pl.when(t_blk == 0)
        def _init():
            h_scr[...] = jnp.zeros_like(h_scr)
            c_scr[...] = jnp.zeros_like(c_scr)

        def step(t, carry):
            x_t = xp_ref[t]                                   # (Bt, 4Hp) bf16
            # n_chains independent batch sub-chains -> the LLO scheduler can overlap one
            # chain's EUP/VPU gate tail with the other chain's MXU push.
            for ci in range(n_chains):
                lo = ci * Bh
                hi = lo + Bh
                gates = (x_t[lo:hi, :].astype(jnp.float32)
                         + jnp.dot(h_scr[lo:hi, :].astype(jnp.bfloat16), whh_ref[...],
                                   preferred_element_type=jnp.float32))   # (Bh, 4Hp) f32
                i_g = jax.nn.sigmoid(gates[:, 0 * Hp:1 * Hp])   # lane-aligned slices
                f_g = jax.nn.sigmoid(gates[:, 1 * Hp:2 * Hp])
                g_g = jnp.tanh(gates[:, 2 * Hp:3 * Hp])
                o_g = jax.nn.sigmoid(gates[:, 3 * Hp:4 * Hp])
                c_new = f_g * c_scr[lo:hi, :] + i_g * g_g
                h_new = o_g * jnp.tanh(c_new)
                c_scr[lo:hi, :] = c_new
                h_scr[lo:hi, :] = h_new
            return carry

        lax.fori_loop(0, Tt, step, 0, unroll=unroll)

        # Final linear on ht[-1] once the whole sequence (all t-blocks) has been consumed.
        @pl.when(t_blk == pl.num_programs(1) - 1)
        def _finalize():
            out_ref[...] = (jnp.dot(h_scr[...], wlin_ref[...],
                                    preferred_element_type=jnp.float32)
                            + blin_ref[...])

    return kernel


# ---------------------------------------------------------------------------
# Per-chip configuration & tiling
# ---------------------------------------------------------------------------
def _tpu_generation():
    try:
        kind = jax.devices()[0].device_kind.lower()
    except Exception:
        return "unknown"
    if "v7" in kind:
        return "v7x"
    if "v6" in kind:
        return "v6e"
    if "v5" in kind:
        return "v5e"
    return "unknown"


def _chip_config():
    gen = _tpu_generation()
    if gen == "v7x":
        # 64 MiB physical VMEM, 2 TensorCores: keep footprint under ~48 MiB and make sure
        # the parallel batch axis has >= 2 blocks so megacore actually splits work.
        return dict(gen=gen, vmem_limit=48 << 20, tile_budget=5 << 20,
                    bt_cap=256, split_cores=True)
    if gen == "v6e":
        return dict(gen=gen, vmem_limit=96 << 20, tile_budget=8 << 20,
                    bt_cap=256, split_cores=False)
    if gen == "v5e":
        return dict(gen=gen, vmem_limit=96 << 20, tile_budget=8 << 20,
                    bt_cap=128, split_cores=False)
    # Unknown generation: conservative limits that fit every chip.
    return dict(gen=gen, vmem_limit=48 << 20, tile_budget=4 << 20,
                bt_cap=128, split_cores=False)


def _vmem_footprint(tt, bt, hp, four_hp):
    """Combined VMEM footprint (bytes), assuming default double-buffering on all inputs."""
    xp = 2 * tt * bt * four_hp * 2          # streamed x_proj tiles, bf16
    whh = 2 * hp * four_hp * 2              # W_hh^T, bf16
    wlin = 2 * hp * 128 * 4                 # W_lin^T, f32
    blin = 2 * 8 * 128 * 4                  # bias (padded tile), f32
    out = 2 * bt * 128 * 4                  # output tile, f32
    state = 2 * bt * hp * 4                 # h + c scratch, f32
    return xp + whh + wlin + blin + out + state


def _pick_tiles(b_pad, t, hp, four_hp, cfg):
    """Pick (Bt, Tt): Bt a multiple-of-32 divisor of B_pad, Tt a divisor of T, under VMEM."""
    margin = 4 << 20
    cap = cfg["bt_cap"]
    if cfg["split_cores"] and b_pad >= 64:
        cap = min(cap, b_pad // 2)          # guarantee >= 2 batch blocks on v7x

    candidates = [d for d in range(32, b_pad + 1, 32) if b_pad % d == 0 and d <= cap]
    if not candidates:
        candidates = [32]                   # b_pad is always a multiple of 32
    bt = candidates[-1]

    while True:
        tt = 0
        for d in range(1, t + 1):
            if t % d:
                continue
            if d * bt * four_hp * 2 > cfg["tile_budget"]:
                break                       # slabs only grow with d
            if _vmem_footprint(d, bt, hp, four_hp) <= cfg["vmem_limit"] - margin:
                tt = d
        if tt >= 1 or bt == 32:
            break
        candidates = [d for d in candidates if d < bt]
        bt = candidates[-1] if candidates else 32

    return bt, max(tt, 1)


# ---------------------------------------------------------------------------
# Forward wrapper
# ---------------------------------------------------------------------------
@jax.jit
def lstm_fixed_len_forward(x_tokens, params):
    """x_tokens: (B, T) int32 token ids. Returns (B, 5) float32 logits (eval mode)."""
    emb = params["embedding"]          # (V, E), row 0 zeros (padding_idx=0)
    wih_t = params["w_ih_t"]           # (E, 4H)
    whh_t = params["w_hh_t"]           # (H, 4H)
    b = params["b"]                    # (1, 4H) = b_ih + b_hh
    wlin_t = params["w_lin_t"]         # (H, 5)
    blin = params["b_lin"]             # (1, 5)

    B, T = x_tokens.shape
    H = whh_t.shape[0]
    Hp = _round_up(H, 128)             # lane-aligned per-gate width
    four_hp = 4 * Hp

    # --- Gate-block padding: gate k's H real columns start at the 128-aligned offset k*Hp. ---
    def pad_gates(m):                  # (rows, 4H) -> (rows, 4Hp), zeros in padded lanes
        out = jnp.zeros((m.shape[0], four_hp), m.dtype)
        for k in range(4):
            out = out.at[:, k * Hp:k * Hp + H].set(m[:, k * H:(k + 1) * H])
        return out

    wih_p = pad_gates(wih_t)                                              # (E, 4Hp)
    b_p = pad_gates(b)                                                    # (1, 4Hp)
    whh_p = jnp.zeros((Hp, four_hp), jnp.float32).at[:H, :].set(pad_gates(whh_t))
    whh_bf16 = whh_p.astype(jnp.bfloat16)                                 # (Hp, 4Hp)

    # Lane-dense final Linear (zeros beyond column 5 / row H).
    wlin_p = jnp.zeros((Hp, 128), jnp.float32).at[:H, :5].set(wlin_t)     # (Hp, 128)
    blin_p = jnp.zeros((1, 128), jnp.float32).at[:, :5].set(blin)         # (1, 128)

    # Hoist the input projection out of the recurrence (one (V,E)@(E,4Hp) matmul, bias folded).
    # Padding token 0 has a zero embedding row, so emb_proj[0] == b, identical to 0@W_ih + b.
    emb_proj = (jnp.dot(emb, wih_p, preferred_element_type=jnp.float32) + b_p
                ).astype(jnp.bfloat16)                                    # (V, 4Hp) bf16

    # Pad batch to a multiple of 32 (bf16 sublane packing + two 16-row sub-chains per tile).
    B_pad = max(32, _round_up(B, 32))
    tokens_p = jnp.pad(x_tokens, ((0, B_pad - B), (0, 0)))                # (B_pad, T)

    # Time-major gather directly (no post-gather transpose of the big tensor).
    x_proj = jnp.take(emb_proj, tokens_p.T, axis=0)                       # (T, B_pad, 4Hp) bf16

    cfg = _chip_config()
    Bt, Tt = _pick_tiles(B_pad, T, Hp, four_hp, cfg)
    n_chains = 2 if Bt % 32 == 0 else 1
    unroll = Tt if Tt <= 8 else 8
    grid = (B_pad // Bt, T // Tt)                                         # (batch blocks, T blocks)

    out = pl.pallas_call(
        _make_lstm_kernel(n_chains, unroll),
        out_shape=jax.ShapeDtypeStruct((B_pad, 128), jnp.float32),
        grid_spec=pltpu.PrefetchScalarGridSpec(
            num_scalar_prefetch=0,
            grid=grid,
            in_specs=[
                pl.BlockSpec((Tt, Bt, four_hp), lambda bi, ti: (ti, bi, 0)),  # streamed x_proj
                pl.BlockSpec((Hp, four_hp), lambda bi, ti: (0, 0)),           # W_hh^T (resident)
                pl.BlockSpec((Hp, 128), lambda bi, ti: (0, 0)),               # W_lin^T
                pl.BlockSpec((1, 128), lambda bi, ti: (0, 0)),                # b_lin
            ],
            out_specs=pl.BlockSpec((Bt, 128), lambda bi, ti: (bi, 0)),
            scratch_shapes=[
                pltpu.VMEM((Bt, Hp), jnp.float32),   # h
                pltpu.VMEM((Bt, Hp), jnp.float32),   # c
            ],
        ),
        compiler_params=pltpu.CompilerParams(
            dimension_semantics=("parallel", "arbitrary"),
            vmem_limit_bytes=cfg["vmem_limit"],
        ),
    )(x_proj, whh_bf16, wlin_p, blin_p)

    return out[:B, :5]


# ---------------------------------------------------------------------------
# Parameters & pure-JAX reference
# ---------------------------------------------------------------------------
def make_params(key, vocab_size, embedding_dim, hidden_dim):
    k = jax.random.split(key, 7)
    H, E, V = hidden_dim, embedding_dim, vocab_size
    scale = 1.0 / jnp.sqrt(H)

    embedding = jax.random.normal(k[0], (V, E), jnp.float32)
    embedding = embedding.at[0].set(0.0)                 # padding_idx=0 row is zero

    w_ih = jax.random.uniform(k[1], (4 * H, E), jnp.float32, -scale, scale)
    w_hh = jax.random.uniform(k[2], (4 * H, H), jnp.float32, -scale, scale)
    b_ih = jax.random.uniform(k[3], (4 * H,), jnp.float32, -scale, scale)
    b_hh = jax.random.uniform(k[4], (4 * H,), jnp.float32, -scale, scale)

    lin_scale = 1.0 / jnp.sqrt(H)
    w_lin = jax.random.uniform(k[5], (5, H), jnp.float32, -lin_scale, lin_scale)
    b_lin = jax.random.uniform(k[6], (5,), jnp.float32, -lin_scale, lin_scale)

    return {
        "embedding": embedding,
        "w_ih_t": w_ih.T,                                # (E, 4H)
        "w_hh_t": w_hh.T,                                # (H, 4H)
        "b": (b_ih + b_hh)[None, :],                     # (1, 4H)
        "w_lin_t": w_lin.T,                              # (H, 5)
        "b_lin": b_lin[None, :],                         # (1, 5)
    }


def _reference_forward(x_tokens, params):
    """Pure-JAX f32 reference of the PyTorch forward (eval mode)."""
    emb = jnp.take(params["embedding"], x_tokens, axis=0)   # (B, T, E)
    B, T, E = emb.shape
    H = params["w_hh_t"].shape[0]
    h = jnp.zeros((B, H), jnp.float32)
    c = jnp.zeros((B, H), jnp.float32)
    for t in range(T):
        gates = emb[:, t, :] @ params["w_ih_t"] + h @ params["w_hh_t"] + params["b"]
        i = jax.nn.sigmoid(gates[:, 0 * H:1 * H])
        f = jax.nn.sigmoid(gates[:, 1 * H:2 * H])
        g = jnp.tanh(gates[:, 2 * H:3 * H])
        o = jax.nn.sigmoid(gates[:, 3 * H:4 * H])
        c = f * c + i * g
        h = o * jnp.tanh(c)
    return h @ params["w_lin_t"] + params["b_lin"]


if __name__ == "__main__":
    vocab_size, embedding_dim, hidden_dim = 20, 16, 32
    B, T = 2, 8

    key = jax.random.PRNGKey(0)
    pkey, xkey = jax.random.split(key)
    params = make_params(pkey, vocab_size, embedding_dim, hidden_dim)

    x_tokens = jax.random.randint(xkey, (B, T), 0, vocab_size, dtype=jnp.int32)

    out = lstm_fixed_len_forward(x_tokens, params)
    out = jax.block_until_ready(out)

    ref = _reference_forward(x_tokens, params)
    assert out.shape == (B, 5)
    # Streamed activations / W_hh are bf16 in the kernel -> bf16-appropriate tolerance vs f32 ref.
    assert jnp.allclose(out, ref, atol=2.5e-2, rtol=2.5e-2), "mismatch vs JAX reference"

    print("KERNEL_OK")
</pallas_src>

<mosaic_0001>
module attributes {stable_mosaic.version = 11 : i64} {
  func.func @kernel(%arg0: i32, %arg1: i32, %arg2: memref<8x32x512xbf16, #tpu.memory_space<vmem>>, %arg3: memref<128x512xbf16, #tpu.memory_space<vmem>>, %arg4: memref<128x128xf32, #tpu.memory_space<vmem>>, %arg5: memref<1x128xf32, #tpu.memory_space<vmem>>, %arg6: memref<32x128xf32, #tpu.memory_space<vmem>>, %arg7: memref<32x128xf32, #tpu.memory_space<vmem>>, %arg8: memref<32x128xf32, #tpu.memory_space<vmem>>) attributes {dimension_semantics = [#tpu.dimension_semantics<parallel>, #tpu.dimension_semantics<arbitrary>], iteration_bounds = array<i64: 1, 1>, scalar_prefetch = 0 : i64, scratch_operands = 2 : i64, tpu.core_type = #tpu.core_type<tc>, window_params = [{transform_indices = @transform_0, window_bounds = array<i64: 8, 32, 512>}, {pipeline_mode = #tpu.pipeline_mode<synchronous>, transform_indices = @transform_1, window_bounds = array<i64: 128, 512>}, {pipeline_mode = #tpu.pipeline_mode<synchronous>, transform_indices = @transform_2, window_bounds = array<i64: 128, 128>}, {pipeline_mode = #tpu.pipeline_mode<synchronous>, transform_indices = @transform_3, window_bounds = array<i64: 1, 128>}, {transform_indices = @transform_4, window_bounds = array<i64: 32, 128>}]} {
    %c0_i32 = arith.constant 0 : i32
    %0 = arith.cmpi eq, %arg1, %c0_i32 : i32
    %1 = arith.extui %0 : i1 to i32
    %c0_i32_0 = arith.constant 0 : i32
    %2 = arith.cmpi ne, %1, %c0_i32_0 : i32
    scf.if %2 {
      %cst_241 = arith.constant 0.000000e+00 : f32
      %590 = vector.broadcast %cst_241 : f32 to vector<32x128xf32>
      %c0_242 = arith.constant 0 : index
      %c0_243 = arith.constant 0 : index
      %591 = vector.load %arg7[%c0_242, %c0_243] : memref<32x128xf32, #tpu.memory_space<vmem>>, vector<32x128xf32>
      tpu.vector_store %arg7[%c0_242, %c0_243], %590 {strides = array<i32>} : memref<32x128xf32, #tpu.memory_space<vmem>>, vector<32x128xf32>,
      %cst_244 = arith.constant 0.000000e+00 : f32
      %592 = vector.broadcast %cst_244 : f32 to vector<32x128xf32>
      %c0_245 = arith.constant 0 : index
      %c0_246 = arith.constant 0 : index
      %593 = vector.load %arg8[%c0_245, %c0_246] : memref<32x128xf32, #tpu.memory_space<vmem>>, vector<32x128xf32>
      tpu.vector_store %arg8[%c0_245, %c0_246], %592 {strides = array<i32>} : memref<32x128xf32, #tpu.memory_space<vmem>>, vector<32x128xf32>,
    } else {
    }
    %c0_i32_1 = arith.constant 0 : i32
    %3 = arith.index_cast %c0_i32_1 : i32 to index
    %c0 = arith.constant 0 : index
    %c0_2 = arith.constant 0 : index
    %4 = vector.load %arg2[%3, %c0, %c0_2] : memref<8x32x512xbf16, #tpu.memory_space<vmem>>, vector<1x32x512xbf16>
    %5 = vector.shape_cast %4 : vector<1x32x512xbf16> to vector<32x512xbf16>
    %6 = vector.extract_strided_slice %5 {offsets = [0, 0], sizes = [16, 512], strides = [1, 1]} : vector<32x512xbf16> to vector<16x512xbf16>
    %7 = arith.extf %6 : vector<16x512xbf16> to vector<16x512xf32>
    %c0_3 = arith.constant 0 : index
    %c0_4 = arith.constant 0 : index
    %8 = vector.load %arg7[%c0_3, %c0_4] : memref<32x128xf32, #tpu.memory_space<vmem>>, vector<16x128xf32>
    %9 = arith.truncf %8 : vector<16x128xf32> to vector<16x128xbf16>
    %c0_5 = arith.constant 0 : index
    %c0_6 = arith.constant 0 : index
    %10 = vector.load %arg3[%c0_5, %c0_6] : memref<128x512xbf16, #tpu.memory_space<vmem>>, vector<128x512xbf16>
    %cst = arith.constant dense<0.000000e+00> : vector<16x512xf32>
    %11 = tpu.matmul %9, %10, %cst {dimension_numbers = #tpu.dot_dimension_numbers<[1], [0], [0], [1], [0, 0, 1, 1], [], []>} : vector<16x128xbf16>, vector<128x512xbf16>, vector<16x512xf32> -> vector<16x512xf32>
    %12 = arith.addf %7, %11 : vector<16x512xf32>
    %13 = vector.extract_strided_slice %12 {offsets = [0, 0], sizes = [16, 128], strides = [1, 1]} : vector<16x512xf32> to vector<16x128xf32>
    %14 = arith.negf %13 : vector<16x128xf32>
    %15 = math.exp %14 : vector<16x128xf32>
    %cst_7 = arith.constant 1.000000e+00 : f32
    %16 = vector.broadcast %cst_7 : f32 to vector<16x128xf32>
    %17 = arith.addf %16, %15 : vector<16x128xf32>
    %18 = arith.divf %16, %17 : vector<16x128xf32>
    %19 = vector.extract_strided_slice %12 {offsets = [0, 128], sizes = [16, 128], strides = [1, 1]} : vector<16x512xf32> to vector<16x128xf32>
    %20 = arith.negf %19 : vector<16x128xf32>
    %21 = math.exp %20 : vector<16x128xf32>
    %cst_8 = arith.constant 1.000000e+00 : f32
    %22 = vector.broadcast %cst_8 : f32 to vector<16x128xf32>
    %23 = arith.addf %22, %21 : vector<16x128xf32>
    %24 = arith.divf %22, %23 : vector<16x128xf32>
    %25 = vector.extract_strided_slice %12 {offsets = [0, 256], sizes = [16, 128], strides = [1, 1]} : vector<16x512xf32> to vector<16x128xf32>
    %26 = math.tanh %25 : vector<16x128xf32>
    %27 = vector.extract_strided_slice %12 {offsets = [0, 384], sizes = [16, 128], strides = [1, 1]} : vector<16x512xf32> to vector<16x128xf32>
    %28 = arith.negf %27 : vector<16x128xf32>
    %29 = math.exp %28 : vector<16x128xf32>
    %cst_9 = arith.constant 1.000000e+00 : f32
    %30 = vector.broadcast %cst_9 : f32 to vector<16x128xf32>
    %31 = arith.addf %30, %29 : vector<16x128xf32>
    %32 = arith.divf %30, %31 : vector<16x128xf32>
    %c0_10 = arith.constant 0 : index
    %c0_11 = arith.constant 0 : index
    %33 = vector.load %arg8[%c0_10, %c0_11] : memref<32x128xf32, #tpu.memory_space<vmem>>, vector<16x128xf32>
    %34 = arith.mulf %24, %33 : vector<16x128xf32>
    %35 = arith.mulf %18, %26 : vector<16x128xf32>
    %36 = arith.addf %34, %35 : vector<16x128xf32>
    %37 = math.tanh %36 : vector<16x128xf32>
    %38 = arith.mulf %32, %37 : vector<16x128xf32>
    %c0_12 = arith.constant 0 : index
    %c0_13 = arith.constant 0 : index
    %39 = vector.load %arg8[%c0_12, %c0_13] : memref<32x128xf32, #tpu.memory_space<vmem>>, vector<16x128xf32>
    tpu.vector_store %arg8[%c0_12, %c0_13], %36 {strides = array<i32>} : memref<32x128xf32, #tpu.memory_space<vmem>>, vector<16x128xf32>,
    %c0_14 = arith.constant 0 : index
    %c0_15 = arith.constant 0 : index
    %40 = vector.load %arg7[%c0_14, %c0_15] : memref<32x128xf32, #tpu.memory_space<vmem>>, vector<16x128xf32>
    tpu.vector_store %arg7[%c0_14, %c0_15], %38 {strides = array<i32>} : memref<32x128xf32, #tpu.memory_space<vmem>>, vector<16x128xf32>,
    %41 = vector.extract_strided_slice %5 {offsets = [16, 0], sizes = [16, 512], strides = [1, 1]} : vector<32x512xbf16> to vector<16x512xbf16>
    %42 = arith.extf %41 : vector<16x512xbf16> to vector<16x512xf32>
    %c16 = arith.constant 16 : index
    %c0_16 = arith.constant 0 : index
    %43 = vector.load %arg7[%c16, %c0_16] : memref<32x128xf32, #tpu.memory_space<vmem>>, vector<16x128xf32>
    %44 = arith.truncf %43 : vector<16x128xf32> to vector<16x128xbf16>
    %c0_17 = arith.constant 0 : index
    %c0_18 = arith.constant 0 : index
    %45 = vector.load %arg3[%c0_17, %c0_18] : memref<128x512xbf16, #tpu.memory_space<vmem>>, vector<128x512xbf16>
    %cst_19 = arith.constant dense<0.000000e+00> : vector<16x512xf32>
    %46 = tpu.matmul %44, %45, %cst_19 {dimension_numbers = #tpu.dot_dimension_numbers<[1], [0], [0], [1], [0, 0, 1, 1], [], []>} : vector<16x128xbf16>, vector<128x512xbf16>, vector<16x512xf32> -> vector<16x512xf32>
    %47 = arith.addf %42, %46 : vector<16x512xf32>
    %48 = vector.extract_strided_slice %47 {offsets = [0, 0], sizes = [16, 128], strides = [1, 1]} : vector<16x512xf32> to vector<16x128xf32>
    %49 = arith.negf %48 : vector<16x128xf32>
    %50 = math.exp %49 : vector<16x128xf32>
    %cst_20 = arith.constant 1.000000e+00 : f32
    %51 = vector.broadcast %cst_20 : f32 to vector<16x128xf32>
    %52 = arith.addf %51, %50 : vector<16x128xf32>
    %53 = arith.divf %51, %52 : vector<16x128xf32>
    %54 = vector.extract_strided_slice %47 {offsets = [0, 128], sizes = [16, 128], strides = [1, 1]} : vector<16x512xf32> to vector<16x128xf32>
    %55 = arith.negf %54 : vector<16x128xf32>
    %56 = math.exp %55 : vector<16x128xf32>
    %cst_21 = arith.constant 1.000000e+00 : f32
    %57 = vector.broadcast %cst_21 : f32 to vector<16x128xf32>
    %58 = arith.addf %57, %56 : vector<16x128xf32>
    %59 = arith.divf %57, %58 : vector<16x128xf32>
    %60 = vector.extract_strided_slice %47 {offsets = [0, 256], sizes = [16, 128], strides = [1, 1]} : vector<16x512xf32> to vector<16x128xf32>
    %61 = math.tanh %60 : vector<16x128xf32>
    %62 = vector.extract_strided_slice %47 {offsets = [0, 384], sizes = [16, 128], strides = [1, 1]} : vector<16x512xf32> to vector<16x128xf32>
    %63 = arith.negf %62 : vector<16x128xf32>
    %64 = math.exp %63 : vector<16x128xf32>
    %cst_22 = arith.constant 1.000000e+00 : f32
    %65 = vector.broadcast %cst_22 : f32 to vector<16x128xf32>
    %66 = arith.addf %65, %64 : vector<16x128xf32>
    %67 = arith.divf %65, %66 : vector<16x128xf32>
    %c16_23 = arith.constant 16 : index
    %c0_24 = arith.constant 0 : index
    %68 = vector.load %arg8[%c16_23, %c0_24] : memref<32x128xf32, #tpu.memory_space<vmem>>, vector<16x128xf32>
    %69 = arith.mulf %59, %68 : vector<16x128xf32>
    %70 = arith.mulf %53, %61 : vector<16x128xf32>
    %71 = arith.addf %69, %70 : vector<16x128xf32>
    %72 = math.tanh %71 : vector<16x128xf32>
    %73 = arith.mulf %67, %72 : vector<16x128xf32>
    %c16_25 = arith.constant 16 : index
    %c0_26 = arith.constant 0 : index
    %74 = vector.load %arg8[%c16_25, %c0_26] : memref<32x128xf32, #tpu.memory_space<vmem>>, vector<16x128xf32>
    tpu.vector_store %arg8[%c16_25, %c0_26], %71 {strides = array<i32>} : memref<32x128xf32, #tpu.memory_space<vmem>>, vector<16x128xf32>,
    %c16_27 = arith.constant 16 : index
    %c0_28 = arith.constant 0 : index
    %75 = vector.load %arg7[%c16_27, %c0_28] : memref<32x128xf32, #tpu.memory_space<vmem>>, vector<16x128xf32>
    tpu.vector_store %arg7[%c16_27, %c0_28], %73 {strides = array<i32>} : memref<32x128xf32, #tpu.memory_space<vmem>>, vector<16x128xf32>,
    %c1_i32 = arith.constant 1 : i32
    %76 = arith.index_cast %c1_i32 : i32 to index
    %c0_29 = arith.constant 0 : index
    %c0_30 = arith.constant 0 : index
    %77 = vector.load %arg2[%76, %c0_29, %c0_30] : memref<8x32x512xbf16, #tpu.memory_space<vmem>>, vector<1x32x512xbf16>
    %78 = vector.shape_cast %77 : vector<1x32x512xbf16> to vector<32x512xbf16>
    %79 = vector.extract_strided_slice %78 {offsets = [0, 0], sizes = [16, 512], strides = [1, 1]} : vector<32x512xbf16> to vector<16x512xbf16>
    %80 = arith.extf %79 : vector<16x512xbf16> to vector<16x512xf32>
    %c0_31 = arith.constant 0 : index
    %c0_32 = arith.constant 0 : index
    %81 = vector.load %arg7[%c0_31, %c0_32] : memref<32x128xf32, #tpu.memory_space<vmem>>, vector<16x128xf32>
    %82 = arith.truncf %81 : vector<16x128xf32> to vector<16x128xbf16>
    %c0_33 = arith.constant 0 : index
    %c0_34 = arith.constant 0 : index
    %83 = vector.load %arg3[%c0_33, %c0_34] : memref<128x512xbf16, #tpu.memory_space<vmem>>, vector<128x512xbf16>
    %cst_35 = arith.constant dense<0.000000e+00> : vector<16x512xf32>
    %84 = tpu.matmul %82, %83, %cst_35 {dimension_numbers = #tpu.dot_dimension_numbers<[1], [0], [0], [1], [0, 0, 1, 1], [], []>} : vector<16x128xbf16>, vector<128x512xbf16>, vector<16x512xf32> -> vector<16x512xf32>
    %85 = arith.addf %80, %84 : vector<16x512xf32>
    %86 = vector.extract_strided_slice %85 {offsets = [0, 0], sizes = [16, 128], strides = [1, 1]} : vector<16x512xf32> to vector<16x128xf32>
    %87 = arith.negf %86 : vector<16x128xf32>
    %88 = math.exp %87 : vector<16x128xf32>
    %cst_36 = arith.constant 1.000000e+00 : f32
    %89 = vector.broadcast %cst_36 : f32 to vector<16x128xf32>
    %90 = arith.addf %89, %88 : vector<16x128xf32>
    %91 = arith.divf %89, %90 : vector<16x128xf32>
    %92 = vector.extract_strided_slice %85 {offsets = [0, 128], sizes = [16, 128], strides = [1, 1]} : vector<16x512xf32> to vector<16x128xf32>
    %93 = arith.negf %92 : vector<16x128xf32>
    %94 = math.exp %93 : vector<16x128xf32>
    %cst_37 = arith.constant 1.000000e+00 : f32
    %95 = vector.broadcast %cst_37 : f32 to vector<16x128xf32>
    %96 = arith.addf %95, %94 : vector<16x128xf32>
    %97 = arith.divf %95, %96 : vector<16x128xf32>
    %98 = vector.extract_strided_slice %85 {offsets = [0, 256], sizes = [16, 128], strides = [1, 1]} : vector<16x512xf32> to vector<16x128xf32>
    %99 = math.tanh %98 : vector<16x128xf32>
    %100 = vector.extract_strided_slice %85 {offsets = [0, 384], sizes = [16, 128], strides = [1, 1]} : vector<16x512xf32> to vector<16x128xf32>
    %101 = arith.negf %100 : vector<16x128xf32>
    %102 = math.exp %101 : vector<16x128xf32>
    %cst_38 = arith.constant 1.000000e+00 : f32
    %103 = vector.broadcast %cst_38 : f32 to vector<16x128xf32>
    %104 = arith.addf %103, %102 : vector<16x128xf32>
    %105 = arith.divf %103, %104 : vector<16x128xf32>
    %c0_39 = arith.constant 0 : index
    %c0_40 = arith.constant 0 : index
    %106 = vector.load %arg8[%c0_39, %c0_40] : memref<32x128xf32, #tpu.memory_space<vmem>>, vector<16x128xf32>
    %107 = arith.mulf %97, %106 : vector<16x128xf32>
    %108 = arith.mulf %91, %99 : vector<16x128xf32>
    %109 = arith.addf %107, %108 : vector<16x128xf32>
    %110 = math.tanh %109 : vector<16x128xf32>
    %111 = arith.mulf %105, %110 : vector<16x128xf32>
    %c0_41 = arith.constant 0 : index
    %c0_42 = arith.constant 0 : index
    %112 = vector.load %arg8[%c0_41, %c0_42] : memref<32x128xf32, #tpu.memory_space<vmem>>, vector<16x128xf32>
    tpu.vector_store %arg8[%c0_41, %c0_42], %109 {strides = array<i32>} : memref<32x128xf32, #tpu.memory_space<vmem>>, vector<16x128xf32>,
    %c0_43 = arith.constant 0 : index
    %c0_44 = arith.constant 0 : index
    %113 = vector.load %arg7[%c0_43, %c0_44] : memref<32x128xf32, #tpu.memory_space<vmem>>, vector<16x128xf32>
    tpu.vector_store %arg7[%c0_43, %c0_44], %111 {strides = array<i32>} : memref<32x128xf32, #tpu.memory_space<vmem>>, vector<16x128xf32>,
    %114 = vector.extract_strided_slice %78 {offsets = [16, 0], sizes = [16, 512], strides = [1, 1]} : vector<32x512xbf16> to vector<16x512xbf16>
    %115 = arith.extf %114 : vector<16x512xbf16> to vector<16x512xf32>
    %c16_45 = arith.constant 16 : index
    %c0_46 = arith.constant 0 : index
    %116 = vector.load %arg7[%c16_45, %c0_46] : memref<32x128xf32, #tpu.memory_space<vmem>>, vector<16x128xf32>
    %117 = arith.truncf %116 : vector<16x128xf32> to vector<16x128xbf16>
    %c0_47 = arith.constant 0 : index
    %c0_48 = arith.constant 0 : index
    %118 = vector.load %arg3[%c0_47, %c0_48] : memref<128x512xbf16, #tpu.memory_space<vmem>>, vector<128x512xbf16>
    %cst_49 = arith.constant dense<0.000000e+00> : vector<16x512xf32>
    %119 = tpu.matmul %117, %118, %cst_49 {dimension_numbers = #tpu.dot_dimension_numbers<[1], [0], [0], [1], [0, 0, 1, 1], [], []>} : vector<16x128xbf16>, vector<128x512xbf16>, vector<16x512xf32> -> vector<16x512xf32>
    %120 = arith.addf %115, %119 : vector<16x512xf32>
    %121 = vector.extract_strided_slice %120 {offsets = [0, 0], sizes = [16, 128], strides = [1, 1]} : vector<16x512xf32> to vector<16x128xf32>
    %122 = arith.negf %121 : vector<16x128xf32>
    %123 = math.exp %122 : vector<16x128xf32>
    %cst_50 = arith.constant 1.000000e+00 : f32
    %124 = vector.broadcast %cst_50 : f32 to vector<16x128xf32>
    %125 = arith.addf %124, %123 : vector<16x128xf32>
    %126 = arith.divf %124, %125 : vector<16x128xf32>
    %127 = vector.extract_strided_slice %120 {offsets = [0, 128], sizes = [16, 128], strides = [1, 1]} : vector<16x512xf32> to vector<16x128xf32>
    %128 = arith.negf %127 : vector<16x128xf32>
    %129 = math.exp %128 : vector<16x128xf32>
    %cst_51 = arith.constant 1.000000e+00 : f32
    %130 = vector.broadcast %cst_51 : f32 to vector<16x128xf32>
    %131 = arith.addf %130, %129 : vector<16x128xf32>
    %132 = arith.divf %130, %131 : vector<16x128xf32>
    %133 = vector.extract_strided_slice %120 {offsets = [0, 256], sizes = [16, 128], strides = [1, 1]} : vector<16x512xf32> to vector<16x128xf32>
    %134 = math.tanh %133 : vector<16x128xf32>
    %135 = vector.extract_strided_slice %120 {offsets = [0, 384], sizes = [16, 128], strides = [1, 1]} : vector<16x512xf32> to vector<16x128xf32>
    %136 = arith.negf %135 : vector<16x128xf32>
    %137 = math.exp %136 : vector<16x128xf32>
    %cst_52 = arith.constant 1.000000e+00 : f32
    %138 = vector.broadcast %cst_52 : f32 to vector<16x128xf32>
    %139 = arith.addf %138, %137 : vector<16x128xf32>
    %140 = arith.divf %138, %139 : vector<16x128xf32>
    %c16_53 = arith.constant 16 : index
    %c0_54 = arith.constant 0 : index
    %141 = vector.load %arg8[%c16_53, %c0_54] : memref<32x128xf32, #tpu.memory_space<vmem>>, vector<16x128xf32>
    %142 = arith.mulf %132, %141 : vector<16x128xf32>
    %143 = arith.mulf %126, %134 : vector<16x128xf32>
    %144 = arith.addf %142, %143 : vector<16x128xf32>
    %145 = math.tanh %144 : vector<16x128xf32>
    %146 = arith.mulf %140, %145 : vector<16x128xf32>
    %c16_55 = arith.constant 16 : index
    %c0_56 = arith.constant 0 : index
    %147 = vector.load %arg8[%c16_55, %c0_56] : memref<32x128xf32, #tpu.memory_space<vmem>>, vector<16x128xf32>
    tpu.vector_store %arg8[%c16_55, %c0_56], %144 {strides = array<i32>} : memref<32x128xf32, #tpu.memory_space<vmem>>, vector<16x128xf32>,
    %c16_57 = arith.constant 16 : index
    %c0_58 = arith.constant 0 : index
    %148 = vector.load %arg7[%c16_57, %c0_58] : memref<32x128xf32, #tpu.memory_space<vmem>>, vector<16x128xf32>
    tpu.vector_store %arg7[%c16_57, %c0_58], %146 {strides = array<i32>} : memref<32x128xf32, #tpu.memory_space<vmem>>, vector<16x128xf32>,
    %c2_i32 = arith.constant 2 : i32
    %149 = arith.index_cast %c2_i32 : i32 to index
    %c0_59 = arith.constant 0 : index
    %c0_60 = arith.constant 0 : index
    %150 = vector.load %arg2[%149, %c0_59, %c0_60] : memref<8x32x512xbf16, #tpu.memory_space<vmem>>, vector<1x32x512xbf16>
    %151 = vector.shape_cast %150 : vector<1x32x512xbf16> to vector<32x512xbf16>
    %152 = vector.extract_strided_slice %151 {offsets = [0, 0], sizes = [16, 512], strides = [1, 1]} : vector<32x512xbf16> to vector<16x512xbf16>
    %153 = arith.extf %152 : vector<16x512xbf16> to vector<16x512xf32>
    %c0_61 = arith.constant 0 : index
    %c0_62 = arith.constant 0 : index
    %154 = vector.load %arg7[%c0_61, %c0_62] : memref<32x128xf32, #tpu.memory_space<vmem>>, vector<16x128xf32>
    %155 = arith.truncf %154 : vector<16x128xf32> to vector<16x128xbf16>
    %c0_63 = arith.constant 0 : index
    %c0_64 = arith.constant 0 : index
    %156 = vector.load %arg3[%c0_63, %c0_64] : memref<128x512xbf16, #tpu.memory_space<vmem>>, vector<128x512xbf16>
    %cst_65 = arith.constant dense<0.000000e+00> : vector<16x512xf32>
    %157 = tpu.matmul %155, %156, %cst_65 {dimension_numbers = #tpu.dot_dimension_numbers<[1], [0], [0], [1], [0, 0, 1, 1], [], []>} : vector<16x128xbf16>, vector<128x512xbf16>, vector<16x512xf32> -> vector<16x512xf32>
    %158 = arith.addf %153, %157 : vector<16x512xf32>
    %159 = vector.extract_strided_slice %158 {offsets = [0, 0], sizes = [16, 128], strides = [1, 1]} : vector<16x512xf32> to vector<16x128xf32>
    %160 = arith.negf %159 : vector<16x128xf32>
    %161 = math.exp %160 : vector<16x128xf32>
    %cst_66 = arith.constant 1.000000e+00 : f32
    %162 = vector.broadcast %cst_66 : f32 to vector<16x128xf32>
    %163 = arith.addf %162, %161 : vector<16x128xf32>
    %164 = arith.divf %162, %163 : vector<16x128xf32>
    %165 = vector.extract_strided_slice %158 {offsets = [0, 128], sizes = [16, 128], strides = [1, 1]} : vector<16x512xf32> to vector<16x128xf32>
    %166 = arith.negf %165 : vector<16x128xf32>
    %167 = math.exp %166 : vector<16x128xf32>
    %cst_67 = arith.constant 1.000000e+00 : f32
    %168 = vector.broadcast %cst_67 : f32 to vector<16x128xf32>
    %169 = arith.addf %168, %167 : vector<16x128xf32>
    %170 = arith.divf %168, %169 : vector<16x128xf32>
    %171 = vector.extract_strided_slice %158 {offsets = [0, 256], sizes = [16, 128], strides = [1, 1]} : vector<16x512xf32> to vector<16x128xf32>
    %172 = math.tanh %171 : vector<16x128xf32>
    %173 = vector.extract_strided_slice %158 {offsets = [0, 384], sizes = [16, 128], strides = [1, 1]} : vector<16x512xf32> to vector<16x128xf32>
    %174 = arith.negf %173 : vector<16x128xf32>
    %175 = math.exp %174 : vector<16x128xf32>
    %cst_68 = arith.constant 1.000000e+00 : f32
    %176 = vector.broadcast %cst_68 : f32 to vector<16x128xf32>
    %177 = arith.addf %176, %175 : vector<16x128xf32>
    %178 = arith.divf %176, %177 : vector<16x128xf32>
    %c0_69 = arith.constant 0 : index
    %c0_70 = arith.constant 0 : index
    %179 = vector.load %arg8[%c0_69, %c0_70] : memref<32x128xf32, #tpu.memory_space<vmem>>, vector<16x128xf32>
    %180 = arith.mulf %170, %179 : vector<16x128xf32>
    %181 = arith.mulf %164, %172 : vector<16x128xf32>
    %182 = arith.addf %180, %181 : vector<16x128xf32>
    %183 = math.tanh %182 : vector<16x128xf32>
    %184 = arith.mulf %178, %183 : vector<16x128xf32>
    %c0_71 = arith.constant 0 : index
    %c0_72 = arith.constant 0 : index
    %185 = vector.load %arg8[%c0_71, %c0_72] : memref<32x128xf32, #tpu.memory_space<vmem>>, vector<16x128xf32>
    tpu.vector_store %arg8[%c0_71, %c0_72], %182 {strides = array<i32>} : memref<32x128xf32, #tpu.memory_space<vmem>>, vector<16x128xf32>,
    %c0_73 = arith.constant 0 : index
    %c0_74 = arith.constant 0 : index
    %186 = vector.load %arg7[%c0_73, %c0_74] : memref<32x128xf32, #tpu.memory_space<vmem>>, vector<16x128xf32>
    tpu.vector_store %arg7[%c0_73, %c0_74], %184 {strides = array<i32>} : memref<32x128xf32, #tpu.memory_space<vmem>>, vector<16x128xf32>,
    %187 = vector.extract_strided_slice %151 {offsets = [16, 0], sizes = [16, 512], strides = [1, 1]} : vector<32x512xbf16> to vector<16x512xbf16>
    %188 = arith.extf %187 : vector<16x512xbf16> to vector<16x512xf32>
    %c16_75 = arith.constant 16 : index
    %c0_76 = arith.constant 0 : index
    %189 = vector.load %arg7[%c16_75, %c0_76] : memref<32x128xf32, #tpu.memory_space<vmem>>, vector<16x128xf32>
    %190 = arith.truncf %189 : vector<16x128xf32> to vector<16x128xbf16>
    %c0_77 = arith.constant 0 : index
    %c0_78 = arith.constant 0 : index
    %191 = vector.load %arg3[%c0_77, %c0_78] : memref<128x512xbf16, #tpu.memory_space<vmem>>, vector<128x512xbf16>
    %cst_79 = arith.constant dense<0.000000e+00> : vector<16x512xf32>
    %192 = tpu.matmul %190, %191, %cst_79 {dimension_numbers = #tpu.dot_dimension_numbers<[1], [0], [0], [1], [0, 0, 1, 1], [], []>} : vector<16x128xbf16>, vector<128x512xbf16>, vector<16x512xf32> -> vector<16x512xf32>
    %193 = arith.addf %188, %192 : vector<16x512xf32>
    %194 = vector.extract_strided_slice %193 {offsets = [0, 0], sizes = [16, 128], strides = [1, 1]} : vector<16x512xf32> to vector<16x128xf32>
    %195 = arith.negf %194 : vector<16x128xf32>
    %196 = math.exp %195 : vector<16x128xf32>
    %cst_80 = arith.constant 1.000000e+00 : f32
    %197 = vector.broadcast %cst_80 : f32 to vector<16x128xf32>
    %198 = arith.addf %197, %196 : vector<16x128xf32>
    %199 = arith.divf %197, %198 : vector<16x128xf32>
    %200 = vector.extract_strided_slice %193 {offsets = [0, 128], sizes = [16, 128], strides = [1, 1]} : vector<16x512xf32> to vector<16x128xf32>
    %201 = arith.negf %200 : vector<16x128xf32>
    %202 = math.exp %201 : vector<16x128xf32>
    %cst_81 = arith.constant 1.000000e+00 : f32
    %203 = vector.broadcast %cst_81 : f32 to vector<16x128xf32>
    %204 = arith.addf %203, %202 : vector<16x128xf32>
    %205 = arith.divf %203, %204 : vector<16x128xf32>
    %206 = vector.extract_strided_slice %193 {offsets = [0, 256], sizes = [16, 128], strides = [1, 1]} : vector<16x512xf32> to vector<16x128xf32>
    %207 = math.tanh %206 : vector<16x128xf32>
    %208 = vector.extract_strided_slice %193 {offsets = [0, 384], sizes = [16, 128], strides = [1, 1]} : vector<16x512xf32> to vector<16x128xf32>
    %209 = arith.negf %208 : vector<16x128xf32>
    %210 = math.exp %209 : vector<16x128xf32>
    %cst_82 = arith.constant 1.000000e+00 : f32
    %211 = vector.broadcast %cst_82 : f32 to vector<16x128xf32>
    %212 = arith.addf %211, %210 : vector<16x128xf32>
    %213 = arith.divf %211, %212 : vector<16x128xf32>
    %c16_83 = arith.constant 16 : index
    %c0_84 = arith.constant 0 : index
    %214 = vector.load %arg8[%c16_83, %c0_84] : memref<32x128xf32, #tpu.memory_space<vmem>>, vector<16x128xf32>
    %215 = arith.mulf %205, %214 : vector<16x128xf32>
    %216 = arith.mulf %199, %207 : vector<16x128xf32>
    %217 = arith.addf %215, %216 : vector<16x128xf32>
    %218 = math.tanh %217 : vector<16x128xf32>
    %219 = arith.mulf %213, %218 : vector<16x128xf32>
    %c16_85 = arith.constant 16 : index
    %c0_86 = arith.constant 0 : index
    %220 = vector.load %arg8[%c16_85, %c0_86] : memref<32x128xf32, #tpu.memory_space<vmem>>, vector<16x128xf32>
    tpu.vector_store %arg8[%c16_85, %c0_86], %217 {strides = array<i32>} : memref<32x128xf32, #tpu.memory_space<vmem>>, vector<16x128xf32>,
    %c16_87 = arith.constant 16 : index
    %c0_88 = arith.constant 0 : index
    %221 = vector.load %arg7[%c16_87, %c0_88] : memref<32x128xf32, #tpu.memory_space<vmem>>, vector<16x128xf32>
    tpu.vector_store %arg7[%c16_87, %c0_88], %219 {strides = array<i32>} : memref<32x128xf32, #tpu.memory_space<vmem>>, vector<16x128xf32>,
    %c3_i32 = arith.constant 3 : i32
    %222 = arith.index_cast %c3_i32 : i32 to index
    %c0_89 = arith.constant 0 : index
    %c0_90 = arith.constant 0 : index
    %223 = vector.load %arg2[%222, %c0_89, %c0_90] : memref<8x32x512xbf16, #tpu.memory_space<vmem>>, vector<1x32x512xbf16>
    %224 = vector.shape_cast %223 : vector<1x32x512xbf16> to vector<32x512xbf16>
    %225 = vector.extract_strided_slice %224 {offsets = [0, 0], sizes = [16, 512], strides = [1, 1]} : vector<32x512xbf16> to vector<16x512xbf16>
    %226 = arith.extf %225 : vector<16x512xbf16> to vector<16x512xf32>
    %c0_91 = arith.constant 0 : index
    %c0_92 = arith.constant 0 : index
    %227 = vector.load %arg7[%c0_91, %c0_92] : memref<32x128xf32, #tpu.memory_space<vmem>>, vector<16x128xf32>
    %228 = arith.truncf %227 : vector<16x128xf32> to vector<16x128xbf16>
    %c0_93 = arith.constant 0 : index
    %c0_94 = arith.constant 0 : index
    %229 = vector.load %arg3[%c0_93, %c0_94] : memref<128x512xbf16, #tpu.memory_space<vmem>>, vector<128x512xbf16>
    %cst_95 = arith.constant dense<0.000000e+00> : vector<16x512xf32>
    %230 = tpu.matmul %228, %229, %cst_95 {dimension_numbers = #tpu.dot_dimension_numbers<[1], [0], [0], [1], [0, 0, 1, 1], [], []>} : vector<16x128xbf16>, vector<128x512xbf16>, vector<16x512xf32> -> vector<16x512xf32>
    %231 = arith.addf %226, %230 : vector<16x512xf32>
    %232 = vector.extract_strided_slice %231 {offsets = [0, 0], sizes = [16, 128], strides = [1, 1]} : vector<16x512xf32> to vector<16x128xf32>
    %233 = arith.negf %232 : vector<16x128xf32>
    %234 = math.exp %233 : vector<16x128xf32>
    %cst_96 = arith.constant 1.000000e+00 : f32
    %235 = vector.broadcast %cst_96 : f32 to vector<16x128xf32>
    %236 = arith.addf %235, %234 : vector<16x128xf32>
    %237 = arith.divf %235, %236 : vector<16x128xf32>
    %238 = vector.extract_strided_slice %231 {offsets = [0, 128], sizes = [16, 128], strides = [1, 1]} : vector<16x512xf32> to vector<16x128xf32>
    %239 = arith.negf %238 : vector<16x128xf32>
    %240 = math.exp %239 : vector<16x128xf32>
    %cst_97 = arith.constant 1.000000e+00 : f32
    %241 = vector.broadcast %cst_97 : f32 to vector<16x128xf32>
    %242 = arith.addf %241, %240 : vector<16x128xf32>
    %243 = arith.divf %241, %242 : vector<16x128xf32>
    %244 = vector.extract_strided_slice %231 {offsets = [0, 256], sizes = [16, 128], strides = [1, 1]} : vector<16x512xf32> to vector<16x128xf32>
    %245 = math.tanh %244 : vector<16x128xf32>
    %246 = vector.extract_strided_slice %231 {offsets = [0, 384], sizes = [16, 128], strides = [1, 1]} : vector<16x512xf32> to vector<16x128xf32>
    %247 = arith.negf %246 : vector<16x128xf32>
    %248 = math.exp %247 : vector<16x128xf32>
    %cst_98 = arith.constant 1.000000e+00 : f32
    %249 = vector.broadcast %cst_98 : f32 to vector<16x128xf32>
    %250 = arith.addf %249, %248 : vector<16x128xf32>
    %251 = arith.divf %249, %250 : vector<16x128xf32>
    %c0_99 = arith.constant 0 : index
    %c0_100 = arith.constant 0 : index
    %252 = vector.load %arg8[%c0_99, %c0_100] : memref<32x128xf32, #tpu.memory_space<vmem>>, vector<16x128xf32>
    %253 = arith.mulf %243, %252 : vector<16x128xf32>
    %254 = arith.mulf %237, %245 : vector<16x128xf32>
    %255 = arith.addf %253, %254 : vector<16x128xf32>
    %256 = math.tanh %255 : vector<16x128xf32>
    %257 = arith.mulf %251, %256 : vector<16x128xf32>
    %c0_101 = arith.constant 0 : index
    %c0_102 = arith.constant 0 : index
    %258 = vector.load %arg8[%c0_101, %c0_102] : memref<32x128xf32, #tpu.memory_space<vmem>>, vector<16x128xf32>
    tpu.vector_store %arg8[%c0_101, %c0_102], %255 {strides = array<i32>} : memref<32x128xf32, #tpu.memory_space<vmem>>, vector<16x128xf32>,
    %c0_103 = arith.constant 0 : index
    %c0_104 = arith.constant 0 : index
    %259 = vector.load %arg7[%c0_103, %c0_104] : memref<32x128xf32, #tpu.memory_space<vmem>>, vector<16x128xf32>
    tpu.vector_store %arg7[%c0_103, %c0_104], %257 {strides = array<i32>} : memref<32x128xf32, #tpu.memory_space<vmem>>, vector<16x128xf32>,
    %260 = vector.extract_strided_slice %224 {offsets = [16, 0], sizes = [16, 512], strides = [1, 1]} : vector<32x512xbf16> to vector<16x512xbf16>
    %261 = arith.extf %260 : vector<16x512xbf16> to vector<16x512xf32>
    %c16_105 = arith.constant 16 : index
    %c0_106 = arith.constant 0 : index
    %262 = vector.load %arg7[%c16_105, %c0_106] : memref<32x128xf32, #tpu.memory_space<vmem>>, vector<16x128xf32>
    %263 = arith.truncf %262 : vector<16x128xf32> to vector<16x128xbf16>
    %c0_107 = arith.constant 0 : index
    %c0_108 = arith.constant 0 : index
    %264 = vector.load %arg3[%c0_107, %c0_108] : memref<128x512xbf16, #tpu.memory_space<vmem>>, vector<128x512xbf16>
    %cst_109 = arith.constant dense<0.000000e+00> : vector<16x512xf32>
    %265 = tpu.matmul %263, %264, %cst_109 {dimension_numbers = #tpu.dot_dimension_numbers<[1], [0], [0], [1], [0, 0, 1, 1], [], []>} : vector<16x128xbf16>, vector<128x512xbf16>, vector<16x512xf32> -> vector<16x512xf32>
    %266 = arith.addf %261, %265 : vector<16x512xf32>
    %267 = vector.extract_strided_slice %266 {offsets = [0, 0], sizes = [16, 128], strides = [1, 1]} : vector<16x512xf32> to vector<16x128xf32>
    %268 = arith.negf %267 : vector<16x128xf32>
    %269 = math.exp %268 : vector<16x128xf32>
    %cst_110 = arith.constant 1.000000e+00 : f32
    %270 = vector.broadcast %cst_110 : f32 to vector<16x128xf32>
    %271 = arith.addf %270, %269 : vector<16x128xf32>
    %272 = arith.divf %270, %271 : vector<16x128xf32>
    %273 = vector.extract_strided_slice %266 {offsets = [0, 128], sizes = [16, 128], strides = [1, 1]} : vector<16x512xf32> to vector<16x128xf32>
    %274 = arith.negf %273 : vector<16x128xf32>
    %275 = math.exp %274 : vector<16x128xf32>
    %cst_111 = arith.constant 1.000000e+00 : f32
    %276 = vector.broadcast %cst_111 : f32 to vector<16x128xf32>
    %277 = arith.addf %276, %275 : vector<16x128xf32>
    %278 = arith.divf %276, %277 : vector<16x128xf32>
    %279 = vector.extract_strided_slice %266 {offsets = [0, 256], sizes = [16, 128], strides = [1, 1]} : vector<16x512xf32> to vector<16x128xf32>
    %280 = math.tanh %279 : vector<16x128xf32>
    %281 = vector.extract_strided_slice %266 {offsets = [0, 384], sizes = [16, 128], strides = [1, 1]} : vector<16x512xf32> to vector<16x128xf32>
    %282 = arith.negf %281 : vector<16x128xf32>
    %283 = math.exp %282 : vector<16x128xf32>
    %cst_112 = arith.constant 1.000000e+00 : f32
    %284 = vector.broadcast %cst_112 : f32 to vector<16x128xf32>
    %285 = arith.addf %284, %283 : vector<16x128xf32>
    %286 = arith.divf %284, %285 : vector<16x128xf32>
    %c16_113 = arith.constant 16 : index
    %c0_114 = arith.constant 0 : index
    %287 = vector.load %arg8[%c16_113, %c0_114] : memref<32x128xf32, #tpu.memory_space<vmem>>, vector<16x128xf32>
    %288 = arith.mulf %278, %287 : vector<16x128xf32>
    %289 = arith.mulf %272, %280 : vector<16x128xf32>
    %290 = arith.addf %288, %289 : vector<16x128xf32>
    %291 = math.tanh %290 : vector<16x128xf32>
    %292 = arith.mulf %286, %291 : vector<16x128xf32>
    %c16_115 = arith.constant 16 : index
    %c0_116 = arith.constant 0 : index
    %293 = vector.load %arg8[%c16_115, %c0_116] : memref<32x128xf32, #tpu.memory_space<vmem>>, vector<16x128xf32>
    tpu.vector_store %arg8[%c16_115, %c0_116], %290 {strides = array<i32>} : memref<32x128xf32, #tpu.memory_space<vmem>>, vector<16x128xf32>,
    %c16_117 = arith.constant 16 : index
    %c0_118 = arith.constant 0 : index
    %294 = vector.load %arg7[%c16_117, %c0_118] : memref<32x128xf32, #tpu.memory_space<vmem>>, vector<16x128xf32>
    tpu.vector_store %arg7[%c16_117, %c0_118], %292 {strides = array<i32>} : memref<32x128xf32, #tpu.memory_space<vmem>>, vector<16x128xf32>,
    %c4_i32 = arith.constant 4 : i32
    %295 = arith.index_cast %c4_i32 : i32 to index
    %c0_119 = arith.constant 0 : index
    %c0_120 = arith.constant 0 : index
    %296 = vector.load %arg2[%295, %c0_119, %c0_120] : memref<8x32x512xbf16, #tpu.memory_space<vmem>>, vector<1x32x512xbf16>
    %297 = vector.shape_cast %296 : vector<1x32x512xbf16> to vector<32x512xbf16>
    %298 = vector.extract_strided_slice %297 {offsets = [0, 0], sizes = [16, 512], strides = [1, 1]} : vector<32x512xbf16> to vector<16x512xbf16>
    %299 = arith.extf %298 : vector<16x512xbf16> to vector<16x512xf32>
    %c0_121 = arith.constant 0 : index
    %c0_122 = arith.constant 0 : index
    %300 = vector.load %arg7[%c0_121, %c0_122] : memref<32x128xf32, #tpu.memory_space<vmem>>, vector<16x128xf32>
    %301 = arith.truncf %300 : vector<16x128xf32> to vector<16x128xbf16>
    %c0_123 = arith.constant 0 : index
    %c0_124 = arith.constant 0 : index
    %302 = vector.load %arg3[%c0_123, %c0_124] : memref<128x512xbf16, #tpu.memory_space<vmem>>, vector<128x512xbf16>
    %cst_125 = arith.constant dense<0.000000e+00> : vector<16x512xf32>
    %303 = tpu.matmul %301, %302, %cst_125 {dimension_numbers = #tpu.dot_dimension_numbers<[1], [0], [0], [1], [0, 0, 1, 1], [], []>} : vector<16x128xbf16>, vector<128x512xbf16>, vector<16x512xf32> -> vector<16x512xf32>
    %304 = arith.addf %299, %303 : vector<16x512xf32>
    %305 = vector.extract_strided_slice %304 {offsets = [0, 0], sizes = [16, 128], strides = [1, 1]} : vector<16x512xf32> to vector<16x128xf32>
    %306 = arith.negf %305 : vector<16x128xf32>
    %307 = math.exp %306 : vector<16x128xf32>
    %cst_126 = arith.constant 1.000000e+00 : f32
    %308 = vector.broadcast %cst_126 : f32 to vector<16x128xf32>
    %309 = arith.addf %308, %307 : vector<16x128xf32>
    %310 = arith.divf %308, %309 : vector<16x128xf32>
    %311 = vector.extract_strided_slice %304 {offsets = [0, 128], sizes = [16, 128], strides = [1, 1]} : vector<16x512xf32> to vector<16x128xf32>
    %312 = arith.negf %311 : vector<16x128xf32>
    %313 = math.exp %312 : vector<16x128xf32>
    %cst_127 = arith.constant 1.000000e+00 : f32
    %314 = vector.broadcast %cst_127 : f32 to vector<16x128xf32>
    %315 = arith.addf %314, %313 : vector<16x128xf32>
    %316 = arith.divf %314, %315 : vector<16x128xf32>
    %317 = vector.extract_strided_slice %304 {offsets = [0, 256], sizes = [16, 128], strides = [1, 1]} : vector<16x512xf32> to vector<16x128xf32>
    %318 = math.tanh %317 : vector<16x128xf32>
    %319 = vector.extract_strided_slice %304 {offsets = [0, 384], sizes = [16, 128], strides = [1, 1]} : vector<16x512xf32> to vector<16x128xf32>
    %320 = arith.negf %319 : vector<16x128xf32>
    %321 = math.exp %320 : vector<16x128xf32>
    %cst_128 = arith.constant 1.000000e+00 : f32
    %322 = vector.broadcast %cst_128 : f32 to vector<16x128xf32>
    %323 = arith.addf %322, %321 : vector<16x128xf32>
    %324 = arith.divf %322, %323 : vector<16x128xf32>
    %c0_129 = arith.constant 0 : index
    %c0_130 = arith.constant 0 : index
    %325 = vector.load %arg8[%c0_129, %c0_130] : memref<32x128xf32, #tpu.memory_space<vmem>>, vector<16x128xf32>
    %326 = arith.mulf %316, %325 : vector<16x128xf32>
    %327 = arith.mulf %310, %318 : vector<16x128xf32>
    %328 = arith.addf %326, %327 : vector<16x128xf32>
    %329 = math.tanh %328 : vector<16x128xf32>
    %330 = arith.mulf %324, %329 : vector<16x128xf32>
    %c0_131 = arith.constant 0 : index
    %c0_132 = arith.constant 0 : index
    %331 = vector.load %arg8[%c0_131, %c0_132] : memref<32x128xf32, #tpu.memory_space<vmem>>, vector<16x128xf32>
    tpu.vector_store %arg8[%c0_131, %c0_132], %328 {strides = array<i32>} : memref<32x128xf32, #tpu.memory_space<vmem>>, vector<16x128xf32>,
    %c0_133 = arith.constant 0 : index
    %c0_134 = arith.constant 0 : index
    %332 = vector.load %arg7[%c0_133, %c0_134] : memref<32x128xf32, #tpu.memory_space<vmem>>, vector<16x128xf32>
    tpu.vector_store %arg7[%c0_133, %c0_134], %330 {strides = array<i32>} : memref<32x128xf32, #tpu.memory_space<vmem>>, vector<16x128xf32>,
    %333 = vector.extract_strided_slice %297 {offsets = [16, 0], sizes = [16, 512], strides = [1, 1]} : vector<32x512xbf16> to vector<16x512xbf16>
    %334 = arith.extf %333 : vector<16x512xbf16> to vector<16x512xf32>
    %c16_135 = arith.constant 16 : index
    %c0_136 = arith.constant 0 : index
    %335 = vector.load %arg7[%c16_135, %c0_136] : memref<32x128xf32, #tpu.memory_space<vmem>>, vector<16x128xf32>
    %336 = arith.truncf %335 : vector<16x128xf32> to vector<16x128xbf16>
    %c0_137 = arith.constant 0 : index
    %c0_138 = arith.constant 0 : index
    %337 = vector.load %arg3[%c0_137, %c0_138] : memref<128x512xbf16, #tpu.memory_space<vmem>>, vector<128x512xbf16>
    %cst_139 = arith.constant dense<0.000000e+00> : vector<16x512xf32>
    %338 = tpu.matmul %336, %337, %cst_139 {dimension_numbers = #tpu.dot_dimension_numbers<[1], [0], [0], [1], [0, 0, 1, 1], [], []>} : vector<16x128xbf16>, vector<128x512xbf16>, vector<16x512xf32> -> vector<16x512xf32>
    %339 = arith.addf %334, %338 : vector<16x512xf32>
    %340 = vector.extract_strided_slice %339 {offsets = [0, 0], sizes = [16, 128], strides = [1, 1]} : vector<16x512xf32> to vector<16x128xf32>
    %341 = arith.negf %340 : vector<16x128xf32>
    %342 = math.exp %341 : vector<16x128xf32>
    %cst_140 = arith.constant 1.000000e+00 : f32
    %343 = vector.broadcast %cst_140 : f32 to vector<16x128xf32>
    %344 = arith.addf %343, %342 : vector<16x128xf32>
    %345 = arith.divf %343, %344 : vector<16x128xf32>
    %346 = vector.extract_strided_slice %339 {offsets = [0, 128], sizes = [16, 128], strides = [1, 1]} : vector<16x512xf32> to vector<16x128xf32>
    %347 = arith.negf %346 : vector<16x128xf32>
    %348 = math.exp %347 : vector<16x128xf32>
    %cst_141 = arith.constant 1.000000e+00 : f32
    %349 = vector.broadcast %cst_141 : f32 to vector<16x128xf32>
    %350 = arith.addf %349, %348 : vector<16x128xf32>
    %351 = arith.divf %349, %350 : vector<16x128xf32>
    %352 = vector.extract_strided_slice %339 {offsets = [0, 256], sizes = [16, 128], strides = [1, 1]} : vector<16x512xf32> to vector<16x128xf32>
    %353 = math.tanh %352 : vector<16x128xf32>
    %354 = vector.extract_strided_slice %339 {offsets = [0, 384], sizes = [16, 128], strides = [1, 1]} : vector<16x512xf32> to vector<16x128xf32>
    %355 = arith.negf %354 : vector<16x128xf32>
    %356 = math.exp %355 : vector<16x128xf32>
    %cst_142 = arith.constant 1.000000e+00 : f32
    %357 = vector.broadcast %cst_142 : f32 to vector<16x128xf32>
    %358 = arith.addf %357, %356 : vector<16x128xf32>
    %359 = arith.divf %357, %358 : vector<16x128xf32>
    %c16_143 = arith.constant 16 : index
    %c0_144 = arith.constant 0 : index
    %360 = vector.load %arg8[%c16_143, %c0_144] : memref<32x128xf32, #tpu.memory_space<vmem>>, vector<16x128xf32>
    %361 = arith.mulf %351, %360 : vector<16x128xf32>
    %362 = arith.mulf %345, %353 : vector<16x128xf32>
    %363 = arith.addf %361, %362 : vector<16x128xf32>
    %364 = math.tanh %363 : vector<16x128xf32>
    %365 = arith.mulf %359, %364 : vector<16x128xf32>
    %c16_145 = arith.constant 16 : index
    %c0_146 = arith.constant 0 : index
    %366 = vector.load %arg8[%c16_145, %c0_146] : memref<32x128xf32, #tpu.memory_space<vmem>>, vector<16x128xf32>
    tpu.vector_store %arg8[%c16_145, %c0_146], %363 {strides = array<i32>} : memref<32x128xf32, #tpu.memory_space<vmem>>, vector<16x128xf32>,
    %c16_147 = arith.constant 16 : index
    %c0_148 = arith.constant 0 : index
    %367 = vector.load %arg7[%c16_147, %c0_148] : memref<32x128xf32, #tpu.memory_space<vmem>>, vector<16x128xf32>
    tpu.vector_store %arg7[%c16_147, %c0_148], %365 {strides = array<i32>} : memref<32x128xf32, #tpu.memory_space<vmem>>, vector<16x128xf32>,
    %c5_i32 = arith.constant 5 : i32
    %368 = arith.index_cast %c5_i32 : i32 to index
    %c0_149 = arith.constant 0 : index
    %c0_150 = arith.constant 0 : index
    %369 = vector.load %arg2[%368, %c0_149, %c0_150] : memref<8x32x512xbf16, #tpu.memory_space<vmem>>, vector<1x32x512xbf16>
    %370 = vector.shape_cast %369 : vector<1x32x512xbf16> to vector<32x512xbf16>
    %371 = vector.extract_strided_slice %370 {offsets = [0, 0], sizes = [16, 512], strides = [1, 1]} : vector<32x512xbf16> to vector<16x512xbf16>
    %372 = arith.extf %371 : vector<16x512xbf16> to vector<16x512xf32>
    %c0_151 = arith.constant 0 : index
    %c0_152 = arith.constant 0 : index
    %373 = vector.load %arg7[%c0_151, %c0_152] : memref<32x128xf32, #tpu.memory_space<vmem>>, vector<16x128xf32>
    %374 = arith.truncf %373 : vector<16x128xf32> to vector<16x128xbf16>
    %c0_153 = arith.constant 0 : index
    %c0_154 = arith.constant 0 : index
    %375 = vector.load %arg3[%c0_153, %c0_154] : memref<128x512xbf16, #tpu.memory_space<vmem>>, vector<128x512xbf16>
    %cst_155 = arith.constant dense<0.000000e+00> : vector<16x512xf32>
    %376 = tpu.matmul %374, %375, %cst_155 {dimension_numbers = #tpu.dot_dimension_numbers<[1], [0], [0], [1], [0, 0, 1, 1], [], []>} : vector<16x128xbf16>, vector<128x512xbf16>, vector<16x512xf32> -> vector<16x512xf32>
    %377 = arith.addf %372, %376 : vector<16x512xf32>
    %378 = vector.extract_strided_slice %377 {offsets = [0, 0], sizes = [16, 128], strides = [1, 1]} : vector<16x512xf32> to vector<16x128xf32>
    %379 = arith.negf %378 : vector<16x128xf32>
    %380 = math.exp %379 : vector<16x128xf32>
    %cst_156 = arith.constant 1.000000e+00 : f32
    %381 = vector.broadcast %cst_156 : f32 to vector<16x128xf32>
    %382 = arith.addf %381, %380 : vector<16x128xf32>
    %383 = arith.divf %381, %382 : vector<16x128xf32>
    %384 = vector.extract_strided_slice %377 {offsets = [0, 128], sizes = [16, 128], strides = [1, 1]} : vector<16x512xf32> to vector<16x128xf32>
    %385 = arith.negf %384 : vector<16x128xf32>
    %386 = math.exp %385 : vector<16x128xf32>
    %cst_157 = arith.constant 1.000000e+00 : f32
    %387 = vector.broadcast %cst_157 : f32 to vector<16x128xf32>
    %388 = arith.addf %387, %386 : vector<16x128xf32>
    %389 = arith.divf %387, %388 : vector<16x128xf32>
    %390 = vector.extract_strided_slice %377 {offsets = [0, 256], sizes = [16, 128], strides = [1, 1]} : vector<16x512xf32> to vector<16x128xf32>
    %391 = math.tanh %390 : vector<16x128xf32>
    %392 = vector.extract_strided_slice %377 {offsets = [0, 384], sizes = [16, 128], strides = [1, 1]} : vector<16x512xf32> to vector<16x128xf32>
    %393 = arith.negf %392 : vector<16x128xf32>
    %394 = math.exp %393 : vector<16x128xf32>
    %cst_158 = arith.constant 1.000000e+00 : f32
    %395 = vector.broadcast %cst_158 : f32 to vector<16x128xf32>
    %396 = arith.addf %395, %394 : vector<16x128xf32>
    %397 = arith.divf %395, %396 : vector<16x128xf32>
    %c0_159 = arith.constant 0 : index
    %c0_160 = arith.constant 0 : index
    %398 = vector.load %arg8[%c0_159, %c0_160] : memref<32x128xf32, #tpu.memory_space<vmem>>, vector<16x128xf32>
    %399 = arith.mulf %389, %398 : vector<16x128xf32>
    %400 = arith.mulf %383, %391 : vector<16x128xf32>
    %401 = arith.addf %399, %400 : vector<16x128xf32>
    %402 = math.tanh %401 : vector<16x128xf32>
    %403 = arith.mulf %397, %402 : vector<16x128xf32>
    %c0_161 = arith.constant 0 : index
    %c0_162 = arith.constant 0 : index
    %404 = vector.load %arg8[%c0_161, %c0_162] : memref<32x128xf32, #tpu.memory_space<vmem>>, vector<16x128xf32>
    tpu.vector_store %arg8[%c0_161, %c0_162], %401 {strides = array<i32>} : memref<32x128xf32, #tpu.memory_space<vmem>>, vector<16x128xf32>,
    %c0_163 = arith.constant 0 : index
    %c0_164 = arith.constant 0 : index
    %405 = vector.load %arg7[%c0_163, %c0_164] : memref<32x128xf32, #tpu.memory_space<vmem>>, vector<16x128xf32>
    tpu.vector_store %arg7[%c0_163, %c0_164], %403 {strides = array<i32>} : memref<32x128xf32, #tpu.memory_space<vmem>>, vector<16x128xf32>,
    %406 = vector.extract_strided_slice %370 {offsets = [16, 0], sizes = [16, 512], strides = [1, 1]} : vector<32x512xbf16> to vector<16x512xbf16>
    %407 = arith.extf %406 : vector<16x512xbf16> to vector<16x512xf32>
    %c16_165 = arith.constant 16 : index
    %c0_166 = arith.constant 0 : index
    %408 = vector.load %arg7[%c16_165, %c0_166] : memref<32x128xf32, #tpu.memory_space<vmem>>, vector<16x128xf32>
    %409 = arith.truncf %408 : vector<16x128xf32> to vector<16x128xbf16>
    %c0_167 = arith.constant 0 : index
    %c0_168 = arith.constant 0 : index
    %410 = vector.load %arg3[%c0_167, %c0_168] : memref<128x512xbf16, #tpu.memory_space<vmem>>, vector<128x512xbf16>
    %cst_169 = arith.constant dense<0.000000e+00> : vector<16x512xf32>
    %411 = tpu.matmul %409, %410, %cst_169 {dimension_numbers = #tpu.dot_dimension_numbers<[1], [0], [0], [1], [0, 0, 1, 1], [], []>} : vector<16x128xbf16>, vector<128x512xbf16>, vector<16x512xf32> -> vector<16x512xf32>
    %412 = arith.addf %407, %411 : vector<16x512xf32>
    %413 = vector.extract_strided_slice %412 {offsets = [0, 0], sizes = [16, 128], strides = [1, 1]} : vector<16x512xf32> to vector<16x128xf32>
    %414 = arith.negf %413 : vector<16x128xf32>
    %415 = math.exp %414 : vector<16x128xf32>
    %cst_170 = arith.constant 1.000000e+00 : f32
    %416 = vector.broadcast %cst_170 : f32 to vector<16x128xf32>
    %417 = arith.addf %416, %415 : vector<16x128xf32>
    %418 = arith.divf %416, %417 : vector<16x128xf32>
    %419 = vector.extract_strided_slice %412 {offsets = [0, 128], sizes = [16, 128], strides = [1, 1]} : vector<16x512xf32> to vector<16x128xf32>
    %420 = arith.negf %419 : vector<16x128xf32>
    %421 = math.exp %420 : vector<16x128xf32>
    %cst_171 = arith.constant 1.000000e+00 : f32
    %422 = vector.broadcast %cst_171 : f32 to vector<16x128xf32>
    %423 = arith.addf %422, %421 : vector<16x128xf32>
    %424 = arith.divf %422, %423 : vector<16x128xf32>
    %425 = vector.extract_strided_slice %412 {offsets = [0, 256], sizes = [16, 128], strides = [1, 1]} : vector<16x512xf32> to vector<16x128xf32>
    %426 = math.tanh %425 : vector<16x128xf32>
    %427 = vector.extract_strided_slice %412 {offsets = [0, 384], sizes = [16, 128], strides = [1, 1]} : vector<16x512xf32> to vector<16x128xf32>
    %428 = arith.negf %427 : vector<16x128xf32>
    %429 = math.exp %428 : vector<16x128xf32>
    %cst_172 = arith.constant 1.000000e+00 : f32
    %430 = vector.broadcast %cst_172 : f32 to vector<16x128xf32>
    %431 = arith.addf %430, %429 : vector<16x128xf32>
    %432 = arith.divf %430, %431 : vector<16x128xf32>
    %c16_173 = arith.constant 16 : index
    %c0_174 = arith.constant 0 : index
    %433 = vector.load %arg8[%c16_173, %c0_174] : memref<32x128xf32, #tpu.memory_space<vmem>>, vector<16x128xf32>
    %434 = arith.mulf %424, %433 : vector<16x128xf32>
    %435 = arith.mulf %418, %426 : vector<16x128xf32>
    %436 = arith.addf %434, %435 : vector<16x128xf32>
    %437 = math.tanh %436 : vector<16x128xf32>
    %438 = arith.mulf %432, %437 : vector<16x128xf32>
    %c16_175 = arith.constant 16 : index
    %c0_176 = arith.constant 0 : index
    %439 = vector.load %arg8[%c16_175, %c0_176] : memref<32x128xf32, #tpu.memory_space<vmem>>, vector<16x128xf32>
    tpu.vector_store %arg8[%c16_175, %c0_176], %436 {strides = array<i32>} : memref<32x128xf32, #tpu.memory_space<vmem>>, vector<16x128xf32>,
    %c16_177 = arith.constant 16 : index
    %c0_178 = arith.constant 0 : index
    %440 = vector.load %arg7[%c16_177, %c0_178] : memref<32x128xf32, #tpu.memory_space<vmem>>, vector<16x128xf32>
    tpu.vector_store %arg7[%c16_177, %c0_178], %438 {strides = array<i32>} : memref<32x128xf32, #tpu.memory_space<vmem>>, vector<16x128xf32>,
    %c6_i32 = arith.constant 6 : i32
    %441 = arith.index_cast %c6_i32 : i32 to index
    %c0_179 = arith.constant 0 : index
    %c0_180 = arith.constant 0 : index
    %442 = vector.load %arg2[%441, %c0_179, %c0_180] : memref<8x32x512xbf16, #tpu.memory_space<vmem>>, vector<1x32x512xbf16>
    %443 = vector.shape_cast %442 : vector<1x32x512xbf16> to vector<32x512xbf16>
    %444 = vector.extract_strided_slice %443 {offsets = [0, 0], sizes = [16, 512], strides = [1, 1]} : vector<32x512xbf16> to vector<16x512xbf16>
    %445 = arith.extf %444 : vector<16x512xbf16> to vector<16x512xf32>
    %c0_181 = arith.constant 0 : index
    %c0_182 = arith.constant 0 : index
    %446 = vector.load %arg7[%c0_181, %c0_182] : memref<32x128xf32, #tpu.memory_space<vmem>>, vector<16x128xf32>
    %447 = arith.truncf %446 : vector<16x128xf32> to vector<16x128xbf16>
    %c0_183 = arith.constant 0 : index
    %c0_184 = arith.constant 0 : index
    %448 = vector.load %arg3[%c0_183, %c0_184] : memref<128x512xbf16, #tpu.memory_space<vmem>>, vector<128x512xbf16>
    %cst_185 = arith.constant dense<0.000000e+00> : vector<16x512xf32>
    %449 = tpu.matmul %447, %448, %cst_185 {dimension_numbers = #tpu.dot_dimension_numbers<[1], [0], [0], [1], [0, 0, 1, 1], [], []>} : vector<16x128xbf16>, vector<128x512xbf16>, vector<16x512xf32> -> vector<16x512xf32>
    %450 = arith.addf %445, %449 : vector<16x512xf32>
    %451 = vector.extract_strided_slice %450 {offsets = [0, 0], sizes = [16, 128], strides = [1, 1]} : vector<16x512xf32> to vector<16x128xf32>
    %452 = arith.negf %451 : vector<16x128xf32>
    %453 = math.exp %452 : vector<16x128xf32>
    %cst_186 = arith.constant 1.000000e+00 : f32
    %454 = vector.broadcast %cst_186 : f32 to vector<16x128xf32>
    %455 = arith.addf %454, %453 : vector<16x128xf32>
    %456 = arith.divf %454, %455 : vector<16x128xf32>
    %457 = vector.extract_strided_slice %450 {offsets = [0, 128], sizes = [16, 128], strides = [1, 1]} : vector<16x512xf32> to vector<16x128xf32>
    %458 = arith.negf %457 : vector<16x128xf32>
    %459 = math.exp %458 : vector<16x128xf32>
    %cst_187 = arith.constant 1.000000e+00 : f32
    %460 = vector.broadcast %cst_187 : f32 to vector<16x128xf32>
    %461 = arith.addf %460, %459 : vector<16x128xf32>
    %462 = arith.divf %460, %461 : vector<16x128xf32>
    %463 = vector.extract_strided_slice %450 {offsets = [0, 256], sizes = [16, 128], strides = [1, 1]} : vector<16x512xf32> to vector<16x128xf32>
    %464 = math.tanh %463 : vector<16x128xf32>
    %465 = vector.extract_strided_slice %450 {offsets = [0, 384], sizes = [16, 128], strides = [1, 1]} : vector<16x512xf32> to vector<16x128xf32>
    %466 = arith.negf %465 : vector<16x128xf32>
    %467 = math.exp %466 : vector<16x128xf32>
    %cst_188 = arith.constant 1.000000e+00 : f32
    %468 = vector.broadcast %cst_188 : f32 to vector<16x128xf32>
    %469 = arith.addf %468, %467 : vector<16x128xf32>
    %470 = arith.divf %468, %469 : vector<16x128xf32>
    %c0_189 = arith.constant 0 : index
    %c0_190 = arith.constant 0 : index
    %471 = vector.load %arg8[%c0_189, %c0_190] : memref<32x128xf32, #tpu.memory_space<vmem>>, vector<16x128xf32>
    %472 = arith.mulf %462, %471 : vector<16x128xf32>
    %473 = arith.mulf %456, %464 : vector<16x128xf32>
    %474 = arith.addf %472, %473 : vector<16x128xf32>
    %475 = math.tanh %474 : vector<16x128xf32>
    %476 = arith.mulf %470, %475 : vector<16x128xf32>
    %c0_191 = arith.constant 0 : index
    %c0_192 = arith.constant 0 : index
    %477 = vector.load %arg8[%c0_191, %c0_192] : memref<32x128xf32, #tpu.memory_space<vmem>>, vector<16x128xf32>
    tpu.vector_store %arg8[%c0_191, %c0_192], %474 {strides = array<i32>} : memref<32x128xf32, #tpu.memory_space<vmem>>, vector<16x128xf32>,
    %c0_193 = arith.constant 0 : index
    %c0_194 = arith.constant 0 : index
    %478 = vector.load %arg7[%c0_193, %c0_194] : memref<32x128xf32, #tpu.memory_space<vmem>>, vector<16x128xf32>
    tpu.vector_store %arg7[%c0_193, %c0_194], %476 {strides = array<i32>} : memref<32x128xf32, #tpu.memory_space<vmem>>, vector<16x128xf32>,
    %479 = vector.extract_strided_slice %443 {offsets = [16, 0], sizes = [16, 512], strides = [1, 1]} : vector<32x512xbf16> to vector<16x512xbf16>
    %480 = arith.extf %479 : vector<16x512xbf16> to vector<16x512xf32>
    %c16_195 = arith.constant 16 : index
    %c0_196 = arith.constant 0 : index
    %481 = vector.load %arg7[%c16_195, %c0_196] : memref<32x128xf32, #tpu.memory_space<vmem>>, vector<16x128xf32>
    %482 = arith.truncf %481 : vector<16x128xf32> to vector<16x128xbf16>
    %c0_197 = arith.constant 0 : index
    %c0_198 = arith.constant 0 : index
    %483 = vector.load %arg3[%c0_197, %c0_198] : memref<128x512xbf16, #tpu.memory_space<vmem>>, vector<128x512xbf16>
    %cst_199 = arith.constant dense<0.000000e+00> : vector<16x512xf32>
    %484 = tpu.matmul %482, %483, %cst_199 {dimension_numbers = #tpu.dot_dimension_numbers<[1], [0], [0], [1], [0, 0, 1, 1], [], []>} : vector<16x128xbf16>, vector<128x512xbf16>, vector<16x512xf32> -> vector<16x512xf32>
    %485 = arith.addf %480, %484 : vector<16x512xf32>
    %486 = vector.extract_strided_slice %485 {offsets = [0, 0], sizes = [16, 128], strides = [1, 1]} : vector<16x512xf32> to vector<16x128xf32>
    %487 = arith.negf %486 : vector<16x128xf32>
    %488 = math.exp %487 : vector<16x128xf32>
    %cst_200 = arith.constant 1.000000e+00 : f32
    %489 = vector.broadcast %cst_200 : f32 to vector<16x128xf32>
    %490 = arith.addf %489, %488 : vector<16x128xf32>
    %491 = arith.divf %489, %490 : vector<16x128xf32>
    %492 = vector.extract_strided_slice %485 {offsets = [0, 128], sizes = [16, 128], strides = [1, 1]} : vector<16x512xf32> to vector<16x128xf32>
    %493 = arith.negf %492 : vector<16x128xf32>
    %494 = math.exp %493 : vector<16x128xf32>
    %cst_201 = arith.constant 1.000000e+00 : f32
    %495 = vector.broadcast %cst_201 : f32 to vector<16x128xf32>
    %496 = arith.addf %495, %494 : vector<16x128xf32>
    %497 = arith.divf %495, %496 : vector<16x128xf32>
    %498 = vector.extract_strided_slice %485 {offsets = [0, 256], sizes = [16, 128], strides = [1, 1]} : vector<16x512xf32> to vector<16x128xf32>
    %499 = math.tanh %498 : vector<16x128xf32>
    %500 = vector.extract_strided_slice %485 {offsets = [0, 384], sizes = [16, 128], strides = [1, 1]} : vector<16x512xf32> to vector<16x128xf32>
    %501 = arith.negf %500 : vector<16x128xf32>
    %502 = math.exp %501 : vector<16x128xf32>
    %cst_202 = arith.constant 1.000000e+00 : f32
    %503 = vector.broadcast %cst_202 : f32 to vector<16x128xf32>
    %504 = arith.addf %503, %502 : vector<16x128xf32>
    %505 = arith.divf %503, %504 : vector<16x128xf32>
    %c16_203 = arith.constant 16 : index
    %c0_204 = arith.constant 0 : index
    %506 = vector.load %arg8[%c16_203, %c0_204] : memref<32x128xf32, #tpu.memory_space<vmem>>, vector<16x128xf32>
    %507 = arith.mulf %497, %506 : vector<16x128xf32>
    %508 = arith.mulf %491, %499 : vector<16x128xf32>
    %509 = arith.addf %507, %508 : vector<16x128xf32>
    %510 = math.tanh %509 : vector<16x128xf32>
    %511 = arith.mulf %505, %510 : vector<16x128xf32>
    %c16_205 = arith.constant 16 : index
    %c0_206 = arith.constant 0 : index
    %512 = vector.load %arg8[%c16_205, %c0_206] : memref<32x128xf32, #tpu.memory_space<vmem>>, vector<16x128xf32>
    tpu.vector_store %arg8[%c16_205, %c0_206], %509 {strides = array<i32>} : memref<32x128xf32, #tpu.memory_space<vmem>>, vector<16x128xf32>,
    %c16_207 = arith.constant 16 : index
    %c0_208 = arith.constant 0 : index
    %513 = vector.load %arg7[%c16_207, %c0_208] : memref<32x128xf32, #tpu.memory_space<vmem>>, vector<16x128xf32>
    tpu.vector_store %arg7[%c16_207, %c0_208], %511 {strides = array<i32>} : memref<32x128xf32, #tpu.memory_space<vmem>>, vector<16x128xf32>,
    %c7_i32 = arith.constant 7 : i32
    %514 = arith.index_cast %c7_i32 : i32 to index
    %c0_209 = arith.constant 0 : index
    %c0_210 = arith.constant 0 : index
    %515 = vector.load %arg2[%514, %c0_209, %c0_210] : memref<8x32x512xbf16, #tpu.memory_space<vmem>>, vector<1x32x512xbf16>
    %516 = vector.shape_cast %515 : vector<1x32x512xbf16> to vector<32x512xbf16>
    %517 = vector.extract_strided_slice %516 {offsets = [0, 0], sizes = [16, 512], strides = [1, 1]} : vector<32x512xbf16> to vector<16x512xbf16>
    %518 = arith.extf %517 : vector<16x512xbf16> to vector<16x512xf32>
    %c0_211 = arith.constant 0 : index
    %c0_212 = arith.constant 0 : index
    %519 = vector.load %arg7[%c0_211, %c0_212] : memref<32x128xf32, #tpu.memory_space<vmem>>, vector<16x128xf32>
    %520 = arith.truncf %519 : vector<16x128xf32> to vector<16x128xbf16>
    %c0_213 = arith.constant 0 : index
    %c0_214 = arith.constant 0 : index
    %521 = vector.load %arg3[%c0_213, %c0_214] : memref<128x512xbf16, #tpu.memory_space<vmem>>, vector<128x512xbf16>
    %cst_215 = arith.constant dense<0.000000e+00> : vector<16x512xf32>
    %522 = tpu.matmul %520, %521, %cst_215 {dimension_numbers = #tpu.dot_dimension_numbers<[1], [0], [0], [1], [0, 0, 1, 1], [], []>} : vector<16x128xbf16>, vector<128x512xbf16>, vector<16x512xf32> -> vector<16x512xf32>
    %523 = arith.addf %518, %522 : vector<16x512xf32>
    %524 = vector.extract_strided_slice %523 {offsets = [0, 0], sizes = [16, 128], strides = [1, 1]} : vector<16x512xf32> to vector<16x128xf32>
    %525 = arith.negf %524 : vector<16x128xf32>
    %526 = math.exp %525 : vector<16x128xf32>
    %cst_216 = arith.constant 1.000000e+00 : f32
    %527 = vector.broadcast %cst_216 : f32 to vector<16x128xf32>
    %528 = arith.addf %527, %526 : vector<16x128xf32>
    %529 = arith.divf %527, %528 : vector<16x128xf32>
    %530 = vector.extract_strided_slice %523 {offsets = [0, 128], sizes = [16, 128], strides = [1, 1]} : vector<16x512xf32> to vector<16x128xf32>
    %531 = arith.negf %530 : vector<16x128xf32>
    %532 = math.exp %531 : vector<16x128xf32>
    %cst_217 = arith.constant 1.000000e+00 : f32
    %533 = vector.broadcast %cst_217 : f32 to vector<16x128xf32>
    %534 = arith.addf %533, %532 : vector<16x128xf32>
    %535 = arith.divf %533, %534 : vector<16x128xf32>
    %536 = vector.extract_strided_slice %523 {offsets = [0, 256], sizes = [16, 128], strides = [1, 1]} : vector<16x512xf32> to vector<16x128xf32>
    %537 = math.tanh %536 : vector<16x128xf32>
    %538 = vector.extract_strided_slice %523 {offsets = [0, 384], sizes = [16, 128], strides = [1, 1]} : vector<16x512xf32> to vector<16x128xf32>
    %539 = arith.negf %538 : vector<16x128xf32>
    %540 = math.exp %539 : vector<16x128xf32>
    %cst_218 = arith.constant 1.000000e+00 : f32
    %541 = vector.broadcast %cst_218 : f32 to vector<16x128xf32>
    %542 = arith.addf %541, %540 : vector<16x128xf32>
    %543 = arith.divf %541, %542 : vector<16x128xf32>
    %c0_219 = arith.constant 0 : index
    %c0_220 = arith.constant 0 : index
    %544 = vector.load %arg8[%c0_219, %c0_220] : memref<32x128xf32, #tpu.memory_space<vmem>>, vector<16x128xf32>
    %545 = arith.mulf %535, %544 : vector<16x128xf32>
    %546 = arith.mulf %529, %537 : vector<16x128xf32>
    %547 = arith.addf %545, %546 : vector<16x128xf32>
    %548 = math.tanh %547 : vector<16x128xf32>
    %549 = arith.mulf %543, %548 : vector<16x128xf32>
    %c0_221 = arith.constant 0 : index
    %c0_222 = arith.constant 0 : index
    %550 = vector.load %arg8[%c0_221, %c0_222] : memref<32x128xf32, #tpu.memory_space<vmem>>, vector<16x128xf32>
    tpu.vector_store %arg8[%c0_221, %c0_222], %547 {strides = array<i32>} : memref<32x128xf32, #tpu.memory_space<vmem>>, vector<16x128xf32>,
    %c0_223 = arith.constant 0 : index
    %c0_224 = arith.constant 0 : index
    %551 = vector.load %arg7[%c0_223, %c0_224] : memref<32x128xf32, #tpu.memory_space<vmem>>, vector<16x128xf32>
    tpu.vector_store %arg7[%c0_223, %c0_224], %549 {strides = array<i32>} : memref<32x128xf32, #tpu.memory_space<vmem>>, vector<16x128xf32>,
    %552 = vector.extract_strided_slice %516 {offsets = [16, 0], sizes = [16, 512], strides = [1, 1]} : vector<32x512xbf16> to vector<16x512xbf16>
    %553 = arith.extf %552 : vector<16x512xbf16> to vector<16x512xf32>
    %c16_225 = arith.constant 16 : index
    %c0_226 = arith.constant 0 : index
    %554 = vector.load %arg7[%c16_225, %c0_226] : memref<32x128xf32, #tpu.memory_space<vmem>>, vector<16x128xf32>
    %555 = arith.truncf %554 : vector<16x128xf32> to vector<16x128xbf16>
    %c0_227 = arith.constant 0 : index
    %c0_228 = arith.constant 0 : index
    %556 = vector.load %arg3[%c0_227, %c0_228] : memref<128x512xbf16, #tpu.memory_space<vmem>>, vector<128x512xbf16>
    %cst_229 = arith.constant dense<0.000000e+00> : vector<16x512xf32>
    %557 = tpu.matmul %555, %556, %cst_229 {dimension_numbers = #tpu.dot_dimension_numbers<[1], [0], [0], [1], [0, 0, 1, 1], [], []>} : vector<16x128xbf16>, vector<128x512xbf16>, vector<16x512xf32> -> vector<16x512xf32>
    %558 = arith.addf %553, %557 : vector<16x512xf32>
    %559 = vector.extract_strided_slice %558 {offsets = [0, 0], sizes = [16, 128], strides = [1, 1]} : vector<16x512xf32> to vector<16x128xf32>
    %560 = arith.negf %559 : vector<16x128xf32>
    %561 = math.exp %560 : vector<16x128xf32>
    %cst_230 = arith.constant 1.000000e+00 : f32
    %562 = vector.broadcast %cst_230 : f32 to vector<16x128xf32>
    %563 = arith.addf %562, %561 : vector<16x128xf32>
    %564 = arith.divf %562, %563 : vector<16x128xf32>
    %565 = vector.extract_strided_slice %558 {offsets = [0, 128], sizes = [16, 128], strides = [1, 1]} : vector<16x512xf32> to vector<16x128xf32>
    %566 = arith.negf %565 : vector<16x128xf32>
    %567 = math.exp %566 : vector<16x128xf32>
    %cst_231 = arith.constant 1.000000e+00 : f32
    %568 = vector.broadcast %cst_231 : f32 to vector<16x128xf32>
    %569 = arith.addf %568, %567 : vector<16x128xf32>
    %570 = arith.divf %568, %569 : vector<16x128xf32>
    %571 = vector.extract_strided_slice %558 {offsets = [0, 256], sizes = [16, 128], strides = [1, 1]} : vector<16x512xf32> to vector<16x128xf32>
    %572 = math.tanh %571 : vector<16x128xf32>
    %573 = vector.extract_strided_slice %558 {offsets = [0, 384], sizes = [16, 128], strides = [1, 1]} : vector<16x512xf32> to vector<16x128xf32>
    %574 = arith.negf %573 : vector<16x128xf32>
    %575 = math.exp %574 : vector<16x128xf32>
    %cst_232 = arith.constant 1.000000e+00 : f32
    %576 = vector.broadcast %cst_232 : f32 to vector<16x128xf32>
    %577 = arith.addf %576, %575 : vector<16x128xf32>
    %578 = arith.divf %576, %577 : vector<16x128xf32>
    %c16_233 = arith.constant 16 : index
    %c0_234 = arith.constant 0 : index
    %579 = vector.load %arg8[%c16_233, %c0_234] : memref<32x128xf32, #tpu.memory_space<vmem>>, vector<16x128xf32>
    %580 = arith.mulf %570, %579 : vector<16x128xf32>
    %581 = arith.mulf %564, %572 : vector<16x128xf32>
    %582 = arith.addf %580, %581 : vector<16x128xf32>
    %583 = math.tanh %582 : vector<16x128xf32>
    %584 = arith.mulf %578, %583 : vector<16x128xf32>
    %c16_235 = arith.constant 16 : index
    %c0_236 = arith.constant 0 : index
    %585 = vector.load %arg8[%c16_235, %c0_236] : memref<32x128xf32, #tpu.memory_space<vmem>>, vector<16x128xf32>
    tpu.vector_store %arg8[%c16_235, %c0_236], %582 {strides = array<i32>} : memref<32x128xf32, #tpu.memory_space<vmem>>, vector<16x128xf32>,
    %c16_237 = arith.constant 16 : index
    %c0_238 = arith.constant 0 : index
    %586 = vector.load %arg7[%c16_237, %c0_238] : memref<32x128xf32, #tpu.memory_space<vmem>>, vector<16x128xf32>
    tpu.vector_store %arg7[%c16_237, %c0_238], %584 {strides = array<i32>} : memref<32x128xf32, #tpu.memory_space<vmem>>, vector<16x128xf32>,
    %c8_i32 = arith.constant 8 : i32
    %c0_i32_239 = arith.constant 0 : i32
    %587 = arith.cmpi eq, %arg1, %c0_i32_239 : i32
    %588 = arith.extui %587 : i1 to i32
    %c0_i32_240 = arith.constant 0 : i32
    %589 = arith.cmpi ne, %588, %c0_i32_240 : i32
    scf.if %589 {
      %c0_241 = arith.constant 0 : index
      %c0_242 = arith.constant 0 : index
      %590 = vector.load %arg7[%c0_241, %c0_242] : memref<32x128xf32, #tpu.memory_space<vmem>>, vector<32x128xf32>
      %c0_243 = arith.constant 0 : index
      %c0_244 = arith.constant 0 : index
      %591 = vector.load %arg4[%c0_243, %c0_244] : memref<128x128xf32, #tpu.memory_space<vmem>>, vector<128x128xf32>
      %cst_245 = arith.constant dense<0.000000e+00> : vector<32x128xf32>
      %592 = tpu.matmul %590, %591, %cst_245 {dimension_numbers = #tpu.dot_dimension_numbers<[1], [0], [0], [1], [0, 0, 1, 1], [], []>} : vector<32x128xf32>, vector<128x128xf32>, vector<32x128xf32> -> vector<32x128xf32>
      %c0_246 = arith.constant 0 : index
      %c0_247 = arith.constant 0 : index
      %593 = vector.load %arg5[%c0_246, %c0_247] : memref<1x128xf32, #tpu.memory_space<vmem>>, vector<1x128xf32>
      %594 = vector.broadcast %593 : vector<1x128xf32> to vector<32x128xf32>
      %595 = arith.addf %592, %594 : vector<32x128xf32>
      %c0_248 = arith.constant 0 : index
      %c0_249 = arith.constant 0 : index
      %596 = vector.load %arg6[%c0_248, %c0_249] : memref<32x128xf32, #tpu.memory_space<vmem>>, vector<32x128xf32>
      tpu.vector_store %arg6[%c0_248, %c0_249], %595 {strides = array<i32>} : memref<32x128xf32, #tpu.memory_space<vmem>>, vector<32x128xf32>,
    } else {
    }
    return
  }
  func.func @transform_0(%arg0: i32, %arg1: i32) -> (i32, i32, i32) {
    %c0_i32 = arith.constant 0 : i32
    %c0_i32_0 = arith.constant 0 : i32
    return %arg1, %arg0, %c0_i32 : i32, i32, i32
  }
  func.func @transform_1(%arg0: i32, %arg1: i32) -> (i32, i32) {
    %c0_i32 = arith.constant 0 : i32
    %c0_i32_0 = arith.constant 0 : i32
    %c0_i32_1 = arith.constant 0 : i32
    return %c0_i32, %c0_i32_0 : i32, i32
  }
  func.func @transform_2(%arg0: i32, %arg1: i32) -> (i32, i32) {
    %c0_i32 = arith.constant 0 : i32
    %c0_i32_0 = arith.constant 0 : i32
    %c0_i32_1 = arith.constant 0 : i32
    return %c0_i32, %c0_i32_0 : i32, i32
  }
  func.func @transform_3(%arg0: i32, %arg1: i32) -> (i32, i32) {
    %c0_i32 = arith.constant 0 : i32
    %c0_i32_0 = arith.constant 0 : i32
    %c0_i32_1 = arith.constant 0 : i32
    return %c0_i32, %c0_i32_0 : i32, i32
  }
  func.func @transform_4(%arg0: i32, %arg1: i32) -> (i32, i32) {
    %c0_i32 = arith.constant 0 : i32
    %c0_i32_0 = arith.constant 0 : i32
    return %arg0, %c0_i32 : i32, i32
  }
}

</mosaic_0001>

<llo_original>
// kernel: lstm_fixed_len_forward.1
$region0: #{lstm_fixed_len_forward.1}
  #allocation0 [shape = 'u32[]', space=smem, size = 0x4, offset = 0x4, fixed_abs, tag = 'smem constant byte address 0x4 - core index']
  #allocation1 [shape = 'u32[144,128]{1,0:T(1,128)}', space=vmem, size = 0x12000, scoped, tag = 'internal scratch']
  #allocation2 [shape = 'f32[32,128]{1,0:T(8,128)}', space=vmem, size = 0x4000, scoped, tag = 'scratch operand']
  #allocation3 [shape = 'f32[32,128]{1,0:T(8,128)}', space=vmem, size = 0x4000, scoped, tag = 'scratch operand']
  %s0 = inlined_call_operand.vmem [shape: bf16[8,32,512], index: 0, kind: input, shape index: {}]
  %s1 = inlined_call_operand.vmem [shape: bf16[128,512], index: 1, kind: input, shape index: {}]
  %s2 = inlined_call_operand.vmem [shape: f32[128,128], index: 2, kind: input, shape index: {}]
  %s3 = inlined_call_operand.vmem [shape: f32[1,128], index: 3, kind: input, shape index: {}]
  %s4 = inlined_call_operand.vmem [shape: f32[32,128], index: 4, kind: output, shape index: {}]
  %s5 = sld [smem:[#allocation0]]
  $region34: #{lstm_fixed_len_forward.1} parent=0
    _
  %s7 = ssub.s32 1, %s5
  %s8 = scalar_select 0, %s7, %s5
  // Predicated region
  $region2: #{lstm_fixed_len_forward.1} parent=0 // pred_check
    _
  $region3: #{lstm_fixed_len_forward.1} parent=0 // pred_check_branch
    %10 = sbr.rel (0) target = $region5
  $region4: #{lstm_fixed_len_forward.1} parent=0 // pred_region
    _
  $region5: #{lstm_fixed_len_forward.1} parent=0 // pred_fallthru
    _
  // Predicated region
  $region6: #{lstm_fixed_len_forward.1} parent=0 // pred_check
    _
  $region7: #{lstm_fixed_len_forward.1} parent=0 // pred_check_branch
    %12 = sbr.rel (0) target = $region9
  $region8: #{lstm_fixed_len_forward.1} parent=0 // pred_region
    _
  $region9: #{lstm_fixed_len_forward.1} parent=0 // pred_fallthru
    _
  // Predicated region
  $region10: #{lstm_fixed_len_forward.1} parent=0 // pred_check
    _
  $region11: #{lstm_fixed_len_forward.1} parent=0 // pred_check_branch
    %14 = sbr.rel (0) target = $region13
  $region12: #{lstm_fixed_len_forward.1} parent=0 // pred_region
    _
  $region13: #{lstm_fixed_len_forward.1} parent=0 // pred_fallthru
    _
  // Predicated region
  $region14: #{lstm_fixed_len_forward.1} parent=0 // pred_check
    _
  $region15: #{lstm_fixed_len_forward.1} parent=0 // pred_check_branch
    %16 = sbr.rel (0) target = $region17
  $region16: #{lstm_fixed_len_forward.1} parent=0 // pred_region
    _
  $region17: #{lstm_fixed_len_forward.1} parent=0 // pred_fallthru
    _
  %p18 = scmp.eq.s32.totalorder 0, 0
  // Predicated region
  $region18: #{lstm_fixed_len_forward.1} parent=0 // pred_check
    %p19 = pneg %p18
  $region19: #{lstm_fixed_len_forward.1} parent=0 // pred_check_branch
    %21 = sbr.rel (%p19) target = $region21
  $region20: #{lstm_fixed_len_forward.1} parent=0 // pred_region
    %22 = vst [vmem:[#allocation2] sm:$0xff] 0.0
    %23 = vst [vmem:[#allocation2 + $0x8] sm:$0xff] 0.0
    %24 = vst [vmem:[#allocation2 + $0x10] sm:$0xff] 0.0
    %25 = vst [vmem:[#allocation2 + $0x18] sm:$0xff] 0.0
    %26 = vst [vmem:[#allocation3] sm:$0xff] 0.0
    %27 = vst [vmem:[#allocation3 + $0x8] sm:$0xff] 0.0
    %28 = vst [vmem:[#allocation3 + $0x10] sm:$0xff] 0.0
    %29 = vst [vmem:[#allocation3 + $0x18] sm:$0xff] 0.0
  $region21: #{lstm_fixed_len_forward.1} parent=0 // pred_fallthru
    _
  %v30 = vld [vmem:[%s0] sm:$0xff]
  %v31 = vld [vmem:[%s0 + $0x8] sm:$0xff]
  %v32 = vld [vmem:[%s0 + $0x10] sm:$0xff]
  %v33 = vld [vmem:[%s0 + $0x18] sm:$0xff]
  %v34 = vld [vmem:[%s0 + $0x20] sm:$0xff]
  %v35 = vld [vmem:[%s0 + $0x28] sm:$0xff]
  %v36 = vld [vmem:[%s0 + $0x30] sm:$0xff]
  %v37 = vld [vmem:[%s0 + $0x38] sm:$0xff]
  %v38 = vunpack.c.l.bf16 %v30
  %v39 = vunpack.c.h.bf16 %v30
  %v40 = vunpack.c.l.bf16 %v31
  %v41 = vunpack.c.h.bf16 %v31
  %v42 = vunpack.c.l.bf16 %v32
  %v43 = vunpack.c.h.bf16 %v32
  %v44 = vunpack.c.l.bf16 %v33
  %v45 = vunpack.c.h.bf16 %v33
  %v46 = vld [vmem:[#allocation2] sm:$0xff]
  %v47 = vld [vmem:[#allocation2 + $0x8] sm:$0xff]
  %v48 = vpack.c.bf16 %v47, %v46
  %v49 = vld [vmem:[%s1] sm:$0xff]
  %v50 = vld [vmem:[%s1 + $0x8] sm:$0xff]
  %v51 = vld [vmem:[%s1 + $0x10] sm:$0xff]
  %v52 = vld [vmem:[%s1 + $0x18] sm:$0xff]
  %v53 = vld [vmem:[%s1 + $0x20] sm:$0xff]
  %v54 = vld [vmem:[%s1 + $0x28] sm:$0xff]
  %v55 = vld [vmem:[%s1 + $0x30] sm:$0xff]
  %v56 = vld [vmem:[%s1 + $0x38] sm:$0xff]
  %v57 = vld [vmem:[%s1 + $0x40] sm:$0xff]
  %v58 = vld [vmem:[%s1 + $0x48] sm:$0xff]
  %v59 = vld [vmem:[%s1 + $0x50] sm:$0xff]
  %v60 = vld [vmem:[%s1 + $0x58] sm:$0xff]
  %v61 = vld [vmem:[%s1 + $0x60] sm:$0xff]
  %v62 = vld [vmem:[%s1 + $0x68] sm:$0xff]
  %v63 = vld [vmem:[%s1 + $0x70] sm:$0xff]
  %v64 = vld [vmem:[%s1 + $0x78] sm:$0xff]
  %v65 = vld [vmem:[%s1 + $0x80] sm:$0xff]
  %v66 = vld [vmem:[%s1 + $0x88] sm:$0xff]
  %v67 = vld [vmem:[%s1 + $0x90] sm:$0xff]
  %v68 = vld [vmem:[%s1 + $0x98] sm:$0xff]
  %v69 = vld [vmem:[%s1 + $0xa0] sm:$0xff]
  %v70 = vld [vmem:[%s1 + $0xa8] sm:$0xff]
  %v71 = vld [vmem:[%s1 + $0xb0] sm:$0xff]
  %v72 = vld [vmem:[%s1 + $0xb8] sm:$0xff]
  %v73 = vld [vmem:[%s1 + $0xc0] sm:$0xff]
  %v74 = vld [vmem:[%s1 + $0xc8] sm:$0xff]
  %v75 = vld [vmem:[%s1 + $0xd0] sm:$0xff]
  %v76 = vld [vmem:[%s1 + $0xd8] sm:$0xff]
  %v77 = vld [vmem:[%s1 + $0xe0] sm:$0xff]
  %v78 = vld [vmem:[%s1 + $0xe8] sm:$0xff]
  %v79 = vld [vmem:[%s1 + $0xf0] sm:$0xff]
  %v80 = vld [vmem:[%s1 + $0xf8] sm:$0xff]
  %v113 = vunpack.c.l.b16 %v49
  %v114 = vunpack.c.h.b16 %v49
  %v115 = vunpack.c.l.b16 %v50
  %v116 = vunpack.c.h.b16 %v50
  %v117 = vunpack.c.l.b16 %v51
  %v118 = vunpack.c.h.b16 %v51
  %v119 = vunpack.c.l.b16 %v52
  %v120 = vunpack.c.h.b16 %v52
  %v121 = vunpack.c.l.b16 %v53
  %v122 = vunpack.c.h.b16 %v53
  %v123 = vunpack.c.l.b16 %v54
  %v124 = vunpack.c.h.b16 %v54
  %v125 = vunpack.c.l.b16 %v55
  %v126 = vunpack.c.h.b16 %v55
  %v127 = vunpack.c.l.b16 %v56
  %v128 = vunpack.c.h.b16 %v56
  %v129 = vunpack.c.l.b16 %v57
  %v130 = vunpack.c.h.b16 %v57
  %v131 = vunpack.c.l.b16 %v58
  %v132 = vunpack.c.h.b16 %v58
  %v133 = vunpack.c.l.b16 %v59
  %v134 = vunpack.c.h.b16 %v59
  %v135 = vunpack.c.l.b16 %v60
  %v136 = vunpack.c.h.b16 %v60
  %v137 = vunpack.c.l.b16 %v61
  %v138 = vunpack.c.h.b16 %v61
  %v139 = vunpack.c.l.b16 %v62
  %v140 = vunpack.c.h.b16 %v62
  %v141 = vunpack.c.l.b16 %v63
  %v142 = vunpack.c.h.b16 %v63
  %v143 = vunpack.c.l.b16 %v64
  %v144 = vunpack.c.h.b16 %v64
  %v145 = vunpack.c.l.b16 %v65
  %v146 = vunpack.c.h.b16 %v65
  %v147 = vunpack.c.l.b16 %v66
  %v148 = vunpack.c.h.b16 %v66
  %v149 = vunpack.c.l.b16 %v67
  %v150 = vunpack.c.h.b16 %v67
  %v151 = vunpack.c.l.b16 %v68
  %v152 = vunpack.c.h.b16 %v68
  %v153 = vunpack.c.l.b16 %v69
  %v154 = vunpack.c.h.b16 %v69
  %v155 = vunpack.c.l.b16 %v70
  %v156 = vunpack.c.h.b16 %v70
  %v157 = vunpack.c.l.b16 %v71
  %v158 = vunpack.c.h.b16 %v71
  %v159 = vunpack.c.l.b16 %v72
  %v160 = vunpack.c.h.b16 %v72
  %v161 = vunpack.c.l.b16 %v73
  %v162 = vunpack.c.h.b16 %v73
  %v163 = vunpack.c.l.b16 %v74
  %v164 = vunpack.c.h.b16 %v74
  %v165 = vunpack.c.l.b16 %v75
  %v166 = vunpack.c.h.b16 %v75
  %v167 = vunpack.c.l.b16 %v76
  %v168 = vunpack.c.h.b16 %v76
  %v169 = vunpack.c.l.b16 %v77
  %v170 = vunpack.c.h.b16 %v77
  %v171 = vunpack.c.l.b16 %v78
  %v172 = vunpack.c.h.b16 %v78
  %v173 = vunpack.c.l.b16 %v79
  %v174 = vunpack.c.h.b16 %v79
  %v175 = vunpack.c.l.b16 %v80
  %v176 = vunpack.c.h.b16 %v80
  %v177 = vpack.c.b16 %v117, %v113
  %v178 = vpack.c.b16 %v118, %v114
  %v179 = vpack.c.b16 %v119, %v115
  %v180 = vpack.c.b16 %v120, %v116
  %v181 = vpack.c.b16 %v125, %v121
  %v182 = vpack.c.b16 %v126, %v122
  %v183 = vpack.c.b16 %v127, %v123
  %v184 = vpack.c.b16 %v128, %v124
  %v185 = vpack.c.b16 %v133, %v129
  %v186 = vpack.c.b16 %v134, %v130
  %v187 = vpack.c.b16 %v135, %v131
  %v188 = vpack.c.b16 %v136, %v132
  %v189 = vpack.c.b16 %v141, %v137
  %v190 = vpack.c.b16 %v142, %v138
  %v191 = vpack.c.b16 %v143, %v139
  %v192 = vpack.c.b16 %v144, %v140
  %v193 = vpack.c.b16 %v149, %v145
  %v194 = vpack.c.b16 %v150, %v146
  %v195 = vpack.c.b16 %v151, %v147
  %v196 = vpack.c.b16 %v152, %v148
  %v197 = vpack.c.b16 %v157, %v153
  %v198 = vpack.c.b16 %v158, %v154
  %v199 = vpack.c.b16 %v159, %v155
  %v200 = vpack.c.b16 %v160, %v156
  %v201 = vpack.c.b16 %v165, %v161
  %v202 = vpack.c.b16 %v166, %v162
  %v203 = vpack.c.b16 %v167, %v163
  %v204 = vpack.c.b16 %v168, %v164
  %v205 = vpack.c.b16 %v173, %v169
  %v206 = vpack.c.b16 %v174, %v170
  %v207 = vpack.c.b16 %v175, %v171
  %v208 = vpack.c.b16 %v176, %v172
  %241 = vmatprep.subr.bf16.mxu0 %v178
  %242 = vmatpush1.bf16.msra.mxu0 %v177
  %243 = vmatprep.subr.bf16.mxu0 %v182
  %244 = vmatpush1.bf16.msra.mxu0 %v181
  %245 = vmatprep.subr.bf16.mxu0 %v186
  %246 = vmatpush1.bf16.msra.mxu0 %v185
  %247 = vmatprep.subr.bf16.mxu0 %v190
  %248 = vmatpush1.bf16.msra.mxu0 %v189
  %249 = vmatprep.subr.bf16.mxu0 %v194
  %250 = vmatpush1.bf16.msra.mxu0 %v193
  %251 = vmatprep.subr.bf16.mxu0 %v198
  %252 = vmatpush1.bf16.msra.mxu0 %v197
  %253 = vmatprep.subr.bf16.mxu0 %v202
  %254 = vmatpush1.bf16.msra.mxu0 %v201
  %255 = vmatprep.subr.bf16.mxu0 %v206
  %256 = vmatpush1.bf16.msra.mxu0 %v205
  %257 = vmatprep.subr.bf16.mxu0 0
  %258 = vmatpush1.bf16.msra.mxu0 0
  %259 = vmatprep.subr.bf16.mxu0 0
  %260 = vmatpush1.bf16.msra.mxu0 0
  %261 = vmatprep.subr.bf16.mxu0 0
  %262 = vmatpush1.bf16.msra.mxu0 0
  %263 = vmatprep.subr.bf16.mxu0 0
  %264 = vmatpush1.bf16.msra.mxu0 0
  %265 = vmatprep.subr.bf16.mxu0 0
  %266 = vmatpush1.bf16.msra.mxu0 0
  %267 = vmatprep.subr.bf16.mxu0 0
  %268 = vmatpush1.bf16.msra.mxu0 0
  %269 = vmatprep.subr.bf16.mxu0 0
  %270 = vmatpush1.bf16.msra.mxu0 0
  %271 = vmatprep.subr.bf16.mxu0 0
  %272 = vmatpush1.bf16.msra.mxu0 0
  %273 = vmatprep.mubr.bf16.mxu0 0
  %274 = vmatmul.mubr.bf16.gmra.mrb[0].mxu0 %v48
  %v275 = vpop.f32.mrb[0].mxu0
  %v276 = vadd.f32 0.0, %v275
  %v277 = vpop.f32.mrb[0].mxu0
  %v278 = vadd.f32 0.0, %v277
  %v279 = vpop.f32.mrb[0].mxu0
  %v280 = vadd.f32 0.0, %v279
  %v281 = vpop.f32.mrb[0].mxu0
  %v282 = vadd.f32 0.0, %v281
  %283 = vdwg.mxu0
  %284 = vmatprep.subr.bf16.mxu0 %v180
  %285 = vmatpush1.bf16.msra.mxu0 %v179
  %286 = vmatprep.subr.bf16.mxu0 %v184
  %287 = vmatpush1.bf16.msra.mxu0 %v183
  %288 = vmatprep.subr.bf16.mxu0 %v188
  %289 = vmatpush1.bf16.msra.mxu0 %v187
  %290 = vmatprep.subr.bf16.mxu0 %v192
  %291 = vmatpush1.bf16.msra.mxu0 %v191
  %292 = vmatprep.subr.bf16.mxu0 %v196
  %293 = vmatpush1.bf16.msra.mxu0 %v195
  %294 = vmatprep.subr.bf16.mxu0 %v200
  %295 = vmatpush1.bf16.msra.mxu0 %v199
  %296 = vmatprep.subr.bf16.mxu0 %v204
  %297 = vmatpush1.bf16.msra.mxu0 %v203
  %298 = vmatprep.subr.bf16.mxu0 %v208
  %299 = vmatpush1.bf16.msra.mxu0 %v207
  %300 = vmatprep.subr.bf16.mxu0 0
  %301 = vmatpush1.bf16.msra.mxu0 0
  %302 = vmatprep.subr.bf16.mxu0 0
  %303 = vmatpush1.bf16.msra.mxu0 0
  %304 = vmatprep.subr.bf16.mxu0 0
  %305 = vmatpush1.bf16.msra.mxu0 0
  %306 = vmatprep.subr.bf16.mxu0 0
  %307 = vmatpush1.bf16.msra.mxu0 0
  %308 = vmatprep.subr.bf16.mxu0 0
  %309 = vmatpush1.bf16.msra.mxu0 0
  %310 = vmatprep.subr.bf16.mxu0 0
  %311 = vmatpush1.bf16.msra.mxu0 0
  %312 = vmatprep.subr.bf16.mxu0 0
  %313 = vmatpush1.bf16.msra.mxu0 0
  %314 = vmatprep.subr.bf16.mxu0 0
  %315 = vmatpush1.bf16.msra.mxu0 0
  %316 = vmatprep.mubr.bf16.mxu0 0
  %317 = vmatmul.mubr.bf16.gmra.mrb[0].mxu0 %v48
  %v318 = vpop.f32.mrb[0].mxu0
  %v319 = vadd.f32 0.0, %v318
  %v320 = vpop.f32.mrb[0].mxu0
  %v321 = vadd.f32 0.0, %v320
  %v322 = vpop.f32.mrb[0].mxu0
  %v323 = vadd.f32 0.0, %v322
  %v324 = vpop.f32.mrb[0].mxu0
  %v325 = vadd.f32 0.0, %v324
  %326 = vdwg.mxu0
  %v327 = vadd.f32 %v38, %v276
  %v328 = vadd.f32 %v39, %v278
  %v329 = vadd.f32 %v40, %v319
  %v330 = vadd.f32 %v41, %v321
  %v331 = vadd.f32 %v42, %v280
  %v332 = vadd.f32 %v43, %v282
  %v333 = vadd.f32 %v44, %v323
  %v334 = vadd.f32 %v45, %v325
  %v335 = vxor.u32 %v327, 2147483648
  %v336 = vxor.u32 %v331, 2147483648
  %v337 = vmul.f32 %v335, 1.442695
  %v338 = vpow.pop %v337
  %v339 = vmul.f32 %v336, 1.442695
  %v340 = vpow.pop %v339
  %v341 = vadd.f32 %v338, 1.0
  %v342 = vadd.f32 %v340, 1.0
  %v343 = vrcp.pop %v341
  %v344 = vmul.f32 1.0, %v343
  %v345 = vrcp.pop %v342
  %v346 = vmul.f32 1.0, %v345
  %v347 = vxor.u32 %v328, 2147483648
  %v348 = vxor.u32 %v332, 2147483648
  %v349 = vmul.f32 %v347, 1.442695
  %v350 = vpow.pop %v349
  %v351 = vmul.f32 %v348, 1.442695
  %v352 = vpow.pop %v351
  %v353 = vadd.f32 %v350, 1.0
  %v354 = vadd.f32 %v352, 1.0
  %v355 = vrcp.pop %v353
  %v356 = vmul.f32 1.0, %v355
  %v357 = vrcp.pop %v354
  %v358 = vmul.f32 1.0, %v357
  %v359 = vtanh.pop %v329
  %v360 = vtanh.pop %v333
  %v361 = vxor.u32 %v330, 2147483648
  %v362 = vxor.u32 %v334, 2147483648
  %v363 = vmul.f32 %v361, 1.442695
  %v364 = vpow.pop %v363
  %v365 = vmul.f32 %v362, 1.442695
  %v366 = vpow.pop %v365
  %v367 = vadd.f32 %v364, 1.0
  %v368 = vadd.f32 %v366, 1.0
  %v369 = vrcp.pop %v367
  %v370 = vmul.f32 1.0, %v369
  %v371 = vrcp.pop %v368
  %v372 = vmul.f32 1.0, %v371
  %v373 = vld [vmem:[#allocation3] sm:$0xff]
  %v374 = vld [vmem:[#allocation3 + $0x8] sm:$0xff]
  %v375 = vmul.f32 %v356, %v373
  %v376 = vmul.f32 %v358, %v374
  %v377 = vmul.f32 %v344, %v359
  %v378 = vmul.f32 %v346, %v360
  %v379 = vadd.f32 %v375, %v377
  %v380 = vadd.f32 %v376, %v378
  %v381 = vtanh.pop %v379
  %v382 = vtanh.pop %v380
  %v383 = vmul.f32 %v370, %v381
  %v384 = vmul.f32 %v372, %v382
  %385 = vst [vmem:[#allocation3] sm:$0xff] %v379
  %386 = vst [vmem:[#allocation3 + $0x8] sm:$0xff] %v380
  %387 = vst [vmem:[#allocation2] sm:$0xff] %v383
  %388 = vst [vmem:[#allocation2 + $0x8] sm:$0xff] %v384
  %v389 = vunpack.c.l.bf16 %v34
  %v390 = vunpack.c.h.bf16 %v34
  %v391 = vunpack.c.l.bf16 %v35
  %v392 = vunpack.c.h.bf16 %v35
  %v393 = vunpack.c.l.bf16 %v36
  %v394 = vunpack.c.h.bf16 %v36
  %v395 = vunpack.c.l.bf16 %v37
  %v396 = vunpack.c.h.bf16 %v37
  %v397 = vld [vmem:[#allocation2 + $0x10] sm:$0xff]
  %v398 = vld [vmem:[#allocation2 + $0x18] sm:$0xff]
  %v399 = vpack.c.bf16 %v398, %v397
  %v400 = vld [vmem:[%s1] sm:$0xff]
  %v401 = vld [vmem:[%s1 + $0x8] sm:$0xff]
  %v402 = vld [vmem:[%s1 + $0x10] sm:$0xff]
  %v403 = vld [vmem:[%s1 + $0x18] sm:$0xff]
  %v404 = vld [vmem:[%s1 + $0x20] sm:$0xff]
  %v405 = vld [vmem:[%s1 + $0x28] sm:$0xff]
  %v406 = vld [vmem:[%s1 + $0x30] sm:$0xff]
  %v407 = vld [vmem:[%s1 + $0x38] sm:$0xff]
  %v408 = vld [vmem:[%s1 + $0x40] sm:$0xff]
  %v409 = vld [vmem:[%s1 + $0x48] sm:$0xff]
  %v410 = vld [vmem:[%s1 + $0x50] sm:$0xff]
  %v411 = vld [vmem:[%s1 + $0x58] sm:$0xff]
  %v412 = vld [vmem:[%s1 + $0x60] sm:$0xff]
  %v413 = vld [vmem:[%s1 + $0x68] sm:$0xff]
  %v414 = vld [vmem:[%s1 + $0x70] sm:$0xff]
  %v415 = vld [vmem:[%s1 + $0x78] sm:$0xff]
  %v416 = vld [vmem:[%s1 + $0x80] sm:$0xff]
  %v417 = vld [vmem:[%s1 + $0x88] sm:$0xff]
  %v418 = vld [vmem:[%s1 + $0x90] sm:$0xff]
  %v419 = vld [vmem:[%s1 + $0x98] sm:$0xff]
  %v420 = vld [vmem:[%s1 + $0xa0] sm:$0xff]
  %v421 = vld [vmem:[%s1 + $0xa8] sm:$0xff]
  %v422 = vld [vmem:[%s1 + $0xb0] sm:$0xff]
  %v423 = vld [vmem:[%s1 + $0xb8] sm:$0xff]
  %v424 = vld [vmem:[%s1 + $0xc0] sm:$0xff]
  %v425 = vld [vmem:[%s1 + $0xc8] sm:$0xff]
  %v426 = vld [vmem:[%s1 + $0xd0] sm:$0xff]
  %v427 = vld [vmem:[%s1 + $0xd8] sm:$0xff]
  %v428 = vld [vmem:[%s1 + $0xe0] sm:$0xff]
  %v429 = vld [vmem:[%s1 + $0xe8] sm:$0xff]
  %v430 = vld [vmem:[%s1 + $0xf0] sm:$0xff]
  %v431 = vld [vmem:[%s1 + $0xf8] sm:$0xff]
  %v464 = vunpack.c.l.b16 %v400
  %v465 = vunpack.c.h.b16 %v400
  %v466 = vunpack.c.l.b16 %v401
  %v467 = vunpack.c.h.b16 %v401
  %v468 = vunpack.c.l.b16 %v402
  %v469 = vunpack.c.h.b16 %v402
  %v470 = vunpack.c.l.b16 %v403
  %v471 = vunpack.c.h.b16 %v403
  %v472 = vunpack.c.l.b16 %v404
  %v473 = vunpack.c.h.b16 %v404
  %v474 = vunpack.c.l.b16 %v405
  %v475 = vunpack.c.h.b16 %v405
  %v476 = vunpack.c.l.b16 %v406
  %v477 = vunpack.c.h.b16 %v406
  %v478 = vunpack.c.l.b16 %v407
  %v479 = vunpack.c.h.b16 %v407
  %v480 = vunpack.c.l.b16 %v408
  %v481 = vunpack.c.h.b16 %v408
  %v482 = vunpack.c.l.b16 %v409
  %v483 = vunpack.c.h.b16 %v409
  %v484 = vunpack.c.l.b16 %v410
  %v485 = vunpack.c.h.b16 %v410
  %v486 = vunpack.c.l.b16 %v411
  %v487 = vunpack.c.h.b16 %v411
  %v488 = vunpack.c.l.b16 %v412
  %v489 = vunpack.c.h.b16 %v412
  %v490 = vunpack.c.l.b16 %v413
  %v491 = vunpack.c.h.b16 %v413
  %v492 = vunpack.c.l.b16 %v414
  %v493 = vunpack.c.h.b16 %v414
  %v494 = vunpack.c.l.b16 %v415
  %v495 = vunpack.c.h.b16 %v415
  %v496 = vunpack.c.l.b16 %v416
  %v497 = vunpack.c.h.b16 %v416
  %v498 = vunpack.c.l.b16 %v417
  %v499 = vunpack.c.h.b16 %v417
  %v500 = vunpack.c.l.b16 %v418
  %v501 = vunpack.c.h.b16 %v418
  %v502 = vunpack.c.l.b16 %v419
  %v503 = vunpack.c.h.b16 %v419
  %v504 = vunpack.c.l.b16 %v420
  %v505 = vunpack.c.h.b16 %v420
  %v506 = vunpack.c.l.b16 %v421
  %v507 = vunpack.c.h.b16 %v421
  %v508 = vunpack.c.l.b16 %v422
  %v509 = vunpack.c.h.b16 %v422
  %v510 = vunpack.c.l.b16 %v423
  %v511 = vunpack.c.h.b16 %v423
  %v512 = vunpack.c.l.b16 %v424
  %v513 = vunpack.c.h.b16 %v424
  %v514 = vunpack.c.l.b16 %v425
  %v515 = vunpack.c.h.b16 %v425
  %v516 = vunpack.c.l.b16 %v426
  %v517 = vunpack.c.h.b16 %v426
  %v518 = vunpack.c.l.b16 %v427
  %v519 = vunpack.c.h.b16 %v427
  %v520 = vunpack.c.l.b16 %v428
  %v521 = vunpack.c.h.b16 %v428
  %v522 = vunpack.c.l.b16 %v429
  %v523 = vunpack.c.h.b16 %v429
  %v524 = vunpack.c.l.b16 %v430
  %v525 = vunpack.c.h.b16 %v430
  %v526 = vunpack.c.l.b16 %v431
  %v527 = vunpack.c.h.b16 %v431
  %v528 = vpack.c.b16 %v468, %v464
  %v529 = vpack.c.b16 %v469, %v465
  %v530 = vpack.c.b16 %v470, %v466
  %v531 = vpack.c.b16 %v471, %v467
  %v532 = vpack.c.b16 %v476, %v472
  %v533 = vpack.c.b16 %v477, %v473
  %v534 = vpack.c.b16 %v478, %v474
  %v535 = vpack.c.b16 %v479, %v475
  %v536 = vpack.c.b16 %v484, %v480
  %v537 = vpack.c.b16 %v485, %v481
  %v538 = vpack.c.b16 %v486, %v482
  %v539 = vpack.c.b16 %v487, %v483
  %v540 = vpack.c.b16 %v492, %v488
  %v541 = vpack.c.b16 %v493, %v489
  %v542 = vpack.c.b16 %v494, %v490
  %v543 = vpack.c.b16 %v495, %v491
  %v544 = vpack.c.b16 %v500, %v496
  %v545 = vpack.c.b16 %v501, %v497
  %v546 = vpack.c.b16 %v502, %v498
  %v547 = vpack.c.b16 %v503, %v499
  %v548 = vpack.c.b16 %v508, %v504
  %v549 = vpack.c.b16 %v509, %v505
  %v550 = vpack.c.b16 %v510, %v506
  %v551 = vpack.c.b16 %v511, %v507
  %v552 = vpack.c.b16 %v516, %v512
  %v553 = vpack.c.b16 %v517, %v513
  %v554 = vpack.c.b16 %v518, %v514
  %v555 = vpack.c.b16 %v519, %v515
  %v556 = vpack.c.b16 %v524, %v520
  %v557 = vpack.c.b16 %v525, %v521
  %v558 = vpack.c.b16 %v526, %v522
  %v559 = vpack.c.b16 %v527, %v523
  %592 = vmatprep.subr.bf16.mxu0 %v529
  %593 = vmatpush1.bf16.msra.mxu0 %v528
  %594 = vmatprep.subr.bf16.mxu0 %v533
  %595 = vmatpush1.bf16.msra.mxu0 %v532
  %596 = vmatprep.subr.bf16.mxu0 %v537
  %597 = vmatpush1.bf16.msra.mxu0 %v536
  %598 = vmatprep.subr.bf16.mxu0 %v541
  %599 = vmatpush1.bf16.msra.mxu0 %v540
  %600 = vmatprep.subr.bf16.mxu0 %v545
  %601 = vmatpush1.bf16.msra.mxu0 %v544
  %602 = vmatprep.subr.bf16.mxu0 %v549
  %603 = vmatpush1.bf16.msra.mxu0 %v548
  %604 = vmatprep.subr.bf16.mxu0 %v553
  %605 = vmatpush1.bf16.msra.mxu0 %v552
  %606 = vmatprep.subr.bf16.mxu0 %v557
  %607 = vmatpush1.bf16.msra.mxu0 %v556
  %608 = vmatprep.subr.bf16.mxu0 0
  %609 = vmatpush1.bf16.msra.mxu0 0
  %610 = vmatprep.subr.bf16.mxu0 0
  %611 = vmatpush1.bf16.msra.mxu0 0
  %612 = vmatprep.subr.bf16.mxu0 0
  %613 = vmatpush1.bf16.msra.mxu0 0
  %614 = vmatprep.subr.bf16.mxu0 0
  %615 = vmatpush1.bf16.msra.mxu0 0
  %616 = vmatprep.subr.bf16.mxu0 0
  %617 = vmatpush1.bf16.msra.mxu0 0
  %618 = vmatprep.subr.bf16.mxu0 0
  %619 = vmatpush1.bf16.msra.mxu0 0
  %620 = vmatprep.subr.bf16.mxu0 0
  %621 = vmatpush1.bf16.msra.mxu0 0
  %622 = vmatprep.subr.bf16.mxu0 0
  %623 = vmatpush1.bf16.msra.mxu0 0
  %624 = vmatprep.mubr.bf16.mxu0 0
  %625 = vmatmul.mubr.bf16.gmra.mrb[0].mxu0 %v399
  %v626 = vpop.f32.mrb[0].mxu0
  %v627 = vadd.f32 0.0, %v626
  %v628 = vpop.f32.mrb[0].mxu0
  %v629 = vadd.f32 0.0, %v628
  %v630 = vpop.f32.mrb[0].mxu0
  %v631 = vadd.f32 0.0, %v630
  %v632 = vpop.f32.mrb[0].mxu0
  %v633 = vadd.f32 0.0, %v632
  %634 = vdwg.mxu0
  %635 = vmatprep.subr.bf16.mxu0 %v531
  %636 = vmatpush1.bf16.msra.mxu0 %v530
  %637 = vmatprep.subr.bf16.mxu0 %v535
  %638 = vmatpush1.bf16.msra.mxu0 %v534
  %639 = vmatprep.subr.bf16.mxu0 %v539
  %640 = vmatpush1.bf16.msra.mxu0 %v538
  %641 = vmatprep.subr.bf16.mxu0 %v543
  %642 = vmatpush1.bf16.msra.mxu0 %v542
  %643 = vmatprep.subr.bf16.mxu0 %v547
  %644 = vmatpush1.bf16.msra.mxu0 %v546
  %645 = vmatprep.subr.bf16.mxu0 %v551
  %646 = vmatpush1.bf16.msra.mxu0 %v550
  %647 = vmatprep.subr.bf16.mxu0 %v555
  %648 = vmatpush1.bf16.msra.mxu0 %v554
  %649 = vmatprep.subr.bf16.mxu0 %v559
  %650 = vmatpush1.bf16.msra.mxu0 %v558
  %651 = vmatprep.subr.bf16.mxu0 0
  %652 = vmatpush1.bf16.msra.mxu0 0
  %653 = vmatprep.subr.bf16.mxu0 0
  %654 = vmatpush1.bf16.msra.mxu0 0
  %655 = vmatprep.subr.bf16.mxu0 0
  %656 = vmatpush1.bf16.msra.mxu0 0
  %657 = vmatprep.subr.bf16.mxu0 0
  %658 = vmatpush1.bf16.msra.mxu0 0
  %659 = vmatprep.subr.bf16.mxu0 0
  %660 = vmatpush1.bf16.msra.mxu0 0
  %661 = vmatprep.subr.bf16.mxu0 0
  %662 = vmatpush1.bf16.msra.mxu0 0
  %663 = vmatprep.subr.bf16.mxu0 0
  %664 = vmatpush1.bf16.msra.mxu0 0
  %665 = vmatprep.subr.bf16.mxu0 0
  %666 = vmatpush1.bf16.msra.mxu0 0
  %667 = vmatprep.mubr.bf16.mxu0 0
  %668 = vmatmul.mubr.bf16.gmra.mrb[0].mxu0 %v399
  %v669 = vpop.f32.mrb[0].mxu0
  %v670 = vadd.f32 0.0, %v669
  %v671 = vpop.f32.mrb[0].mxu0
  %v672 = vadd.f32 0.0, %v671
  %v673 = vpop.f32.mrb[0].mxu0
  %v674 = vadd.f32 0.0, %v673
  %v675 = vpop.f32.mrb[0].mxu0
  %v676 = vadd.f32 0.0, %v675
  %677 = vdwg.mxu0
  %v678 = vadd.f32 %v389, %v627
  %v679 = vadd.f32 %v390, %v629
  %v680 = vadd.f32 %v391, %v670
  %v681 = vadd.f32 %v392, %v672
  %v682 = vadd.f32 %v393, %v631
  %v683 = vadd.f32 %v394, %v633
  %v684 = vadd.f32 %v395, %v674
  %v685 = vadd.f32 %v396, %v676
  %v686 = vxor.u32 %v678, 2147483648
  %v687 = vxor.u32 %v682, 2147483648
  %v688 = vmul.f32 %v686, 1.442695
  %v689 = vpow.pop %v688
  %v690 = vmul.f32 %v687, 1.442695
  %v691 = vpow.pop %v690
  %v692 = vadd.f32 %v689, 1.0
  %v693 = vadd.f32 %v691, 1.0
  %v694 = vrcp.pop %v692
  %v695 = vmul.f32 1.0, %v694
  %v696 = vrcp.pop %v693
  %v697 = vmul.f32 1.0, %v696
  %v698 = vxor.u32 %v679, 2147483648
  %v699 = vxor.u32 %v683, 2147483648
  %v700 = vmul.f32 %v698, 1.442695
  %v701 = vpow.pop %v700
  %v702 = vmul.f32 %v699, 1.442695
  %v703 = vpow.pop %v702
  %v704 = vadd.f32 %v701, 1.0
  %v705 = vadd.f32 %v703, 1.0
  %v706 = vrcp.pop %v704
  %v707 = vmul.f32 1.0, %v706
  %v708 = vrcp.pop %v705
  %v709 = vmul.f32 1.0, %v708
  %v710 = vtanh.pop %v680
  %v711 = vtanh.pop %v684
  %v712 = vxor.u32 %v681, 2147483648
  %v713 = vxor.u32 %v685, 2147483648
  %v714 = vmul.f32 %v712, 1.442695
  %v715 = vpow.pop %v714
  %v716 = vmul.f32 %v713, 1.442695
  %v717 = vpow.pop %v716
  %v718 = vadd.f32 %v715, 1.0
  %v719 = vadd.f32 %v717, 1.0
  %v720 = vrcp.pop %v718
  %v721 = vmul.f32 1.0, %v720
  %v722 = vrcp.pop %v719
  %v723 = vmul.f32 1.0, %v722
  %v724 = vld [vmem:[#allocation3 + $0x10] sm:$0xff]
  %v725 = vld [vmem:[#allocation3 + $0x18] sm:$0xff]
  %v726 = vmul.f32 %v707, %v724
  %v727 = vmul.f32 %v709, %v725
  %v728 = vmul.f32 %v695, %v710
  %v729 = vmul.f32 %v697, %v711
  %v730 = vadd.f32 %v726, %v728
  %v731 = vadd.f32 %v727, %v729
  %v732 = vtanh.pop %v730
  %v733 = vtanh.pop %v731
  %v734 = vmul.f32 %v721, %v732
  %v735 = vmul.f32 %v723, %v733
  %736 = vst [vmem:[#allocation3 + $0x10] sm:$0xff] %v730
  %737 = vst [vmem:[#allocation3 + $0x18] sm:$0xff] %v731
  %738 = vst [vmem:[#allocation2 + $0x10] sm:$0xff] %v734
  %739 = vst [vmem:[#allocation2 + $0x18] sm:$0xff] %v735
  %s740 = scalar_lea.vmem %s0, 64
  %v741 = vld [vmem:[%s740] sm:$0xff]
  %v742 = vld [vmem:[%s740 + $0x8] sm:$0xff]
  %v743 = vld [vmem:[%s740 + $0x10] sm:$0xff]
  %v744 = vld [vmem:[%s740 + $0x18] sm:$0xff]
  %v745 = vld [vmem:[%s740 + $0x20] sm:$0xff]
  %v746 = vld [vmem:[%s740 + $0x28] sm:$0xff]
  %v747 = vld [vmem:[%s740 + $0x30] sm:$0xff]
  %v748 = vld [vmem:[%s740 + $0x38] sm:$0xff]
  %v749 = vunpack.c.l.bf16 %v741
  %v750 = vunpack.c.h.bf16 %v741
  %v751 = vunpack.c.l.bf16 %v742
  %v752 = vunpack.c.h.bf16 %v742
  %v753 = vunpack.c.l.bf16 %v743
  %v754 = vunpack.c.h.bf16 %v743
  %v755 = vunpack.c.l.bf16 %v744
  %v756 = vunpack.c.h.bf16 %v744
  %v757 = vld [vmem:[#allocation2] sm:$0xff]
  %v758 = vld [vmem:[#allocation2 + $0x8] sm:$0xff]
  %v759 = vpack.c.bf16 %v758, %v757
  %v760 = vld [vmem:[%s1] sm:$0xff]
  %v761 = vld [vmem:[%s1 + $0x8] sm:$0xff]
  %v762 = vld [vmem:[%s1 + $0x10] sm:$0xff]
  %v763 = vld [vmem:[%s1 + $0x18] sm:$0xff]
  %v764 = vld [vmem:[%s1 + $0x20] sm:$0xff]
  %v765 = vld [vmem:[%s1 + $0x28] sm:$0xff]
  %v766 = vld [vmem:[%s1 + $0x30] sm:$0xff]
  %v767 = vld [vmem:[%s1 + $0x38] sm:$0xff]
  %v768 = vld [vmem:[%s1 + $0x40] sm:$0xff]
  %v769 = vld [vmem:[%s1 + $0x48] sm:$0xff]
  %v770 = vld [vmem:[%s1 + $0x50] sm:$0xff]
  %v771 = vld [vmem:[%s1 + $0x58] sm:$0xff]
  %v772 = vld [vmem:[%s1 + $0x60] sm:$0xff]
  %v773 = vld [vmem:[%s1 + $0x68] sm:$0xff]
  %v774 = vld [vmem:[%s1 + $0x70] sm:$0xff]
  %v775 = vld [vmem:[%s1 + $0x78] sm:$0xff]
  %v776 = vld [vmem:[%s1 + $0x80] sm:$0xff]
  %v777 = vld [vmem:[%s1 + $0x88] sm:$0xff]
  %v778 = vld [vmem:[%s1 + $0x90] sm:$0xff]
  %v779 = vld [vmem:[%s1 + $0x98] sm:$0xff]
  %v780 = vld [vmem:[%s1 + $0xa0] sm:$0xff]
  %v781 = vld [vmem:[%s1 + $0xa8] sm:$0xff]
  %v782 = vld [vmem:[%s1 + $0xb0] sm:$0xff]
  %v783 = vld [vmem:[%s1 + $0xb8] sm:$0xff]
  %v784 = vld [vmem:[%s1 + $0xc0] sm:$0xff]
  %v785 = vld [vmem:[%s1 + $0xc8] sm:$0xff]
  %v786 = vld [vmem:[%s1 + $0xd0] sm:$0xff]
  %v787 = vld [vmem:[%s1 + $0xd8] sm:$0xff]
  %v788 = vld [vmem:[%s1 + $0xe0] sm:$0xff]
  %v789 = vld [vmem:[%s1 + $0xe8] sm:$0xff]
  %v790 = vld [vmem:[%s1 + $0xf0] sm:$0xff]
  %v791 = vld [vmem:[%s1 + $0xf8] sm:$0xff]
  %v824 = vunpack.c.l.b16 %v760
  %v825 = vunpack.c.h.b16 %v760
  %v826 = vunpack.c.l.b16 %v761
  %v827 = vunpack.c.h.b16 %v761
  %v828 = vunpack.c.l.b16 %v762
  %v829 = vunpack.c.h.b16 %v762
  %v830 = vunpack.c.l.b16 %v763
  %v831 = vunpack.c.h.b16 %v763
  %v832 = vunpack.c.l.b16 %v764
  %v833 = vunpack.c.h.b16 %v764
  %v834 = vunpack.c.l.b16 %v765
  %v835 = vunpack.c.h.b16 %v765
  %v836 = vunpack.c.l.b16 %v766
  %v837 = vunpack.c.h.b16 %v766
  %v838 = vunpack.c.l.b16 %v767
  %v839 = vunpack.c.h.b16 %v767
  %v840 = vunpack.c.l.b16 %v768
  %v841 = vunpack.c.h.b16 %v768
  %v842 = vunpack.c.l.b16 %v769
  %v843 = vunpack.c.h.b16 %v769
  %v844 = vunpack.c.l.b16 %v770
  %v845 = vunpack.c.h.b16 %v770
  %v846 = vunpack.c.l.b16 %v771
  %v847 = vunpack.c.h.b16 %v771
  %v848 = vunpack.c.l.b16 %v772
  %v849 = vunpack.c.h.b16 %v772
  %v850 = vunpack.c.l.b16 %v773
  %v851 = vunpack.c.h.b16 %v773
  %v852 = vunpack.c.l.b16 %v774
  %v853 = vunpack.c.h.b16 %v774
  %v854 = vunpack.c.l.b16 %v775
  %v855 = vunpack.c.h.b16 %v775
  %v856 = vunpack.c.l.b16 %v776
  %v857 = vunpack.c.h.b16 %v776
  %v858 = vunpack.c.l.b16 %v777
  %v859 = vunpack.c.h.b16 %v777
  %v860 = vunpack.c.l.b16 %v778
  %v861 = vunpack.c.h.b16 %v778
  %v862 = vunpack.c.l.b16 %v779
  %v863 = vunpack.c.h.b16 %v779
  %v864 = vunpack.c.l.b16 %v780
  %v865 = vunpack.c.h.b16 %v780
  %v866 = vunpack.c.l.b16 %v781
  %v867 = vunpack.c.h.b16 %v781
  %v868 = vunpack.c.l.b16 %v782
  %v869 = vunpack.c.h.b16 %v782
  %v870 = vunpack.c.l.b16 %v783
  %v871 = vunpack.c.h.b16 %v783
  %v872 = vunpack.c.l.b16 %v784
  %v873 = vunpack.c.h.b16 %v784
  %v874 = vunpack.c.l.b16 %v785
  %v875 = vunpack.c.h.b16 %v785
  %v876 = vunpack.c.l.b16 %v786
  %v877 = vunpack.c.h.b16 %v786
  %v878 = vunpack.c.l.b16 %v787
  %v879 = vunpack.c.h.b16 %v787
  %v880 = vunpack.c.l.b16 %v788
  %v881 = vunpack.c.h.b16 %v788
  %v882 = vunpack.c.l.b16 %v789
  %v883 = vunpack.c.h.b16 %v789
  %v884 = vunpack.c.l.b16 %v790
  %v885 = vunpack.c.h.b16 %v790
  %v886 = vunpack.c.l.b16 %v791
  %v887 = vunpack.c.h.b16 %v791
  %v888 = vpack.c.b16 %v828, %v824
  %v889 = vpack.c.b16 %v829, %v825
  %v890 = vpack.c.b16 %v830, %v826
  %v891 = vpack.c.b16 %v831, %v827
  %v892 = vpack.c.b16 %v836, %v832
  %v893 = vpack.c.b16 %v837, %v833
  %v894 = vpack.c.b16 %v838, %v834
  %v895 = vpack.c.b16 %v839, %v835
  %v896 = vpack.c.b16 %v844, %v840
  %v897 = vpack.c.b16 %v845, %v841
  %v898 = vpack.c.b16 %v846, %v842
  %v899 = vpack.c.b16 %v847, %v843
  %v900 = vpack.c.b16 %v852, %v848
  %v901 = vpack.c.b16 %v853, %v849
  %v902 = vpack.c.b16 %v854, %v850
  %v903 = vpack.c.b16 %v855, %v851
  %v904 = vpack.c.b16 %v860, %v856
  %v905 = vpack.c.b16 %v861, %v857
  %v906 = vpack.c.b16 %v862, %v858
  %v907 = vpack.c.b16 %v863, %v859
  %v908 = vpack.c.b16 %v868, %v864
  %v909 = vpack.c.b16 %v869, %v865
  %v910 = vpack.c.b16 %v870, %v866
  %v911 = vpack.c.b16 %v871, %v867
  %v912 = vpack.c.b16 %v876, %v872
  %v913 = vpack.c.b16 %v877, %v873
  %v914 = vpack.c.b16 %v878, %v874
  %v915 = vpack.c.b16 %v879, %v875
  %v916 = vpack.c.b16 %v884, %v880
  %v917 = vpack.c.b16 %v885, %v881
  %v918 = vpack.c.b16 %v886, %v882
  %v919 = vpack.c.b16 %v887, %v883
  %952 = vmatprep.subr.bf16.mxu0 %v889
  %953 = vmatpush1.bf16.msra.mxu0 %v888
  %954 = vmatprep.subr.bf16.mxu0 %v893
  %955 = vmatpush1.bf16.msra.mxu0 %v892
  %956 = vmatprep.subr.bf16.mxu0 %v897
  %957 = vmatpush1.bf16.msra.mxu0 %v896
  %958 = vmatprep.subr.bf16.mxu0 %v901
  %959 = vmatpush1.bf16.msra.mxu0 %v900
  %960 = vmatprep.subr.bf16.mxu0 %v905
  %961 = vmatpush1.bf16.msra.mxu0 %v904
  %962 = vmatprep.subr.bf16.mxu0 %v909
  %963 = vmatpush1.bf16.msra.mxu0 %v908
  %964 = vmatprep.subr.bf16.mxu0 %v913
  %965 = vmatpush1.bf16.msra.mxu0 %v912
  %966 = vmatprep.subr.bf16.mxu0 %v917
  %967 = vmatpush1.bf16.msra.mxu0 %v916
  %968 = vmatprep.subr.bf16.mxu0 0
  %969 = vmatpush1.bf16.msra.mxu0 0
  %970 = vmatprep.subr.bf16.mxu0 0
  %971 = vmatpush1.bf16.msra.mxu0 0
  %972 = vmatprep.subr.bf16.mxu0 0
  %973 = vmatpush1.bf16.msra.mxu0 0
  %974 = vmatprep.subr.bf16.mxu0 0
  %975 = vmatpush1.bf16.msra.mxu0 0
  %976 = vmatprep.subr.bf16.mxu0 0
  %977 = vmatpush1.bf16.msra.mxu0 0
  %978 = vmatprep.subr.bf16.mxu0 0
  %979 = vmatpush1.bf16.msra.mxu0 0
  %980 = vmatprep.subr.bf16.mxu0 0
  %981 = vmatpush1.bf16.msra.mxu0 0
  %982 = vmatprep.subr.bf16.mxu0 0
  %983 = vmatpush1.bf16.msra.mxu0 0
  %984 = vmatprep.mubr.bf16.mxu0 0
  %985 = vmatmul.mubr.bf16.gmra.mrb[0].mxu0 %v759
  %v986 = vpop.f32.mrb[0].mxu0
  %v987 = vadd.f32 0.0, %v986
  %v988 = vpop.f32.mrb[0].mxu0
  %v989 = vadd.f32 0.0, %v988
  %v990 = vpop.f32.mrb[0].mxu0
  %v991 = vadd.f32 0.0, %v990
  %v992 = vpop.f32.mrb[0].mxu0
  %v993 = vadd.f32 0.0, %v992
  %994 = vdwg.mxu0
  %995 = vmatprep.subr.bf16.mxu0 %v891
  %996 = vmatpush1.bf16.msra.mxu0 %v890
  %997 = vmatprep.subr.bf16.mxu0 %v895
  %998 = vmatpush1.bf16.msra.mxu0 %v894
  %999 = vmatprep.subr.bf16.mxu0 %v899
  %1000 = vmatpush1.bf16.msra.mxu0 %v898
  %1001 = vmatprep.subr.bf16.mxu0 %v903
  %1002 = vmatpush1.bf16.msra.mxu0 %v902
  %1003 = vmatprep.subr.bf16.mxu0 %v907
  %1004 = vmatpush1.bf16.msra.mxu0 %v906
  %1005 = vmatprep.subr.bf16.mxu0 %v911
  %1006 = vmatpush1.bf16.msra.mxu0 %v910
  %1007 = vmatprep.subr.bf16.mxu0 %v915
  %1008 = vmatpush1.bf16.msra.mxu0 %v914
  %1009 = vmatprep.subr.bf16.mxu0 %v919
  %1010 = vmatpush1.bf16.msra.mxu0 %v918
  %1011 = vmatprep.subr.bf16.mxu0 0
  %1012 = vmatpush1.bf16.msra.mxu0 0
  %1013 = vmatprep.subr.bf16.mxu0 0
  %1014 = vmatpush1.bf16.msra.mxu0 0
  %1015 = vmatprep.subr.bf16.mxu0 0
  %1016 = vmatpush1.bf16.msra.mxu0 0
  %1017 = vmatprep.subr.bf16.mxu0 0
  %1018 = vmatpush1.bf16.msra.mxu0 0
  %1019 = vmatprep.subr.bf16.mxu0 0
  %1020 = vmatpush1.bf16.msra.mxu0 0
  %1021 = vmatprep.subr.bf16.mxu0 0
  %1022 = vmatpush1.bf16.msra.mxu0 0
  %1023 = vmatprep.subr.bf16.mxu0 0
  %1024 = vmatpush1.bf16.msra.mxu0 0
  %1025 = vmatprep.subr.bf16.mxu0 0
  %1026 = vmatpush1.bf16.msra.mxu0 0
  %1027 = vmatprep.mubr.bf16.mxu0 0
  %1028 = vmatmul.mubr.bf16.gmra.mrb[0].mxu0 %v759
  %v1029 = vpop.f32.mrb[0].mxu0
  %v1030 = vadd.f32 0.0, %v1029
  %v1031 = vpop.f32.mrb[0].mxu0
  %v1032 = vadd.f32 0.0, %v1031
  %v1033 = vpop.f32.mrb[0].mxu0
  %v1034 = vadd.f32 0.0, %v1033
  %v1035 = vpop.f32.mrb[0].mxu0
  %v1036 = vadd.f32 0.0, %v1035
  %1037 = vdwg.mxu0
  %v1038 = vadd.f32 %v749, %v987
  %v1039 = vadd.f32 %v750, %v989
  %v1040 = vadd.f32 %v751, %v1030
  %v1041 = vadd.f32 %v752, %v1032
  %v1042 = vadd.f32 %v753, %v991
  %v1043 = vadd.f32 %v754, %v993
  %v1044 = vadd.f32 %v755, %v1034
  %v1045 = vadd.f32 %v756, %v1036
  %v1046 = vxor.u32 %v1038, 2147483648
  %v1047 = vxor.u32 %v1042, 2147483648
  %v1048 = vmul.f32 %v1046, 1.442695
  %v1049 = vpow.pop %v1048
  %v1050 = vmul.f32 %v1047, 1.442695
  %v1051 = vpow.pop %v1050
  %v1052 = vadd.f32 %v1049, 1.0
  %v1053 = vadd.f32 %v1051, 1.0
  %v1054 = vrcp.pop %v1052
  %v1055 = vmul.f32 1.0, %v1054
  %v1056 = vrcp.pop %v1053
  %v1057 = vmul.f32 1.0, %v1056
  %v1058 = vxor.u32 %v1039, 2147483648
  %v1059 = vxor.u32 %v1043, 2147483648
  %v1060 = vmul.f32 %v1058, 1.442695
  %v1061 = vpow.pop %v1060
  %v1062 = vmul.f32 %v1059, 1.442695
  %v1063 = vpow.pop %v1062
  %v1064 = vadd.f32 %v1061, 1.0
  %v1065 = vadd.f32 %v1063, 1.0
  %v1066 = vrcp.pop %v1064
  %v1067 = vmul.f32 1.0, %v1066
  %v1068 = vrcp.pop %v1065
  %v1069 = vmul.f32 1.0, %v1068
  %v1070 = vtanh.pop %v1040
  %v1071 = vtanh.pop %v1044
  %v1072 = vxor.u32 %v1041, 2147483648
  %v1073 = vxor.u32 %v1045, 2147483648
  %v1074 = vmul.f32 %v1072, 1.442695
  %v1075 = vpow.pop %v1074
  %v1076 = vmul.f32 %v1073, 1.442695
  %v1077 = vpow.pop %v1076
  %v1078 = vadd.f32 %v1075, 1.0
  %v1079 = vadd.f32 %v1077, 1.0
  %v1080 = vrcp.pop %v1078
  %v1081 = vmul.f32 1.0, %v1080
  %v1082 = vrcp.pop %v1079
  %v1083 = vmul.f32 1.0, %v1082
  %v1084 = vld [vmem:[#allocation3] sm:$0xff]
  %v1085 = vld [vmem:[#allocation3 + $0x8] sm:$0xff]
  %v1086 = vmul.f32 %v1067, %v1084
  %v1087 = vmul.f32 %v1069, %v1085
  %v1088 = vmul.f32 %v1055, %v1070
  %v1089 = vmul.f32 %v1057, %v1071
  %v1090 = vadd.f32 %v1086, %v1088
  %v1091 = vadd.f32 %v1087, %v1089
  %v1092 = vtanh.pop %v1090
  %v1093 = vtanh.pop %v1091
  %v1094 = vmul.f32 %v1081, %v1092
  %v1095 = vmul.f32 %v1083, %v1093
  %1096 = vst [vmem:[#allocation3] sm:$0xff] %v1090
  %1097 = vst [vmem:[#allocation3 + $0x8] sm:$0xff] %v1091
  %1098 = vst [vmem:[#allocation2] sm:$0xff] %v1094
  %1099 = vst [vmem:[#allocation2 + $0x8] sm:$0xff] %v1095
  %v1100 = vunpack.c.l.bf16 %v745
  %v1101 = vunpack.c.h.bf16 %v745
  %v1102 = vunpack.c.l.bf16 %v746
  %v1103 = vunpack.c.h.bf16 %v746
  %v1104 = vunpack.c.l.bf16 %v747
  %v1105 = vunpack.c.h.bf16 %v747
  %v1106 = vunpack.c.l.bf16 %v748
  %v1107 = vunpack.c.h.bf16 %v748
  %v1108 = vld [vmem:[#allocation2 + $0x10] sm:$0xff]
  %v1109 = vld [vmem:[#allocation2 + $0x18] sm:$0xff]
  %v1110 = vpack.c.bf16 %v1109, %v1108
  %v1111 = vld [vmem:[%s1] sm:$0xff]
  %v1112 = vld [vmem:[%s1 + $0x8] sm:$0xff]
  %v1113 = vld [vmem:[%s1 + $0x10] sm:$0xff]
  %v1114 = vld [vmem:[%s1 + $0x18] sm:$0xff]
  %v1115 = vld [vmem:[%s1 + $0x20] sm:$0xff]
  %v1116 = vld [vmem:[%s1 + $0x28] sm:$0xff]
  %v1117 = vld [vmem:[%s1 + $0x30] sm:$0xff]
  %v1118 = vld [vmem:[%s1 + $0x38] sm:$0xff]
  %v1119 = vld [vmem:[%s1 + $0x40] sm:$0xff]
  %v1120 = vld [vmem:[%s1 + $0x48] sm:$0xff]
  %v1121 = vld [vmem:[%s1 + $0x50] sm:$0xff]
  %v1122 = vld [vmem:[%s1 + $0x58] sm:$0xff]
  %v1123 = vld [vmem:[%s1 + $0x60] sm:$0xff]
  %v1124 = vld [vmem:[%s1 + $0x68] sm:$0xff]
  %v1125 = vld [vmem:[%s1 + $0x70] sm:$0xff]
  %v1126 = vld [vmem:[%s1 + $0x78] sm:$0xff]
  %v1127 = vld [vmem:[%s1 + $0x80] sm:$0xff]
  %v1128 = vld [vmem:[%s1 + $0x88] sm:$0xff]
  %v1129 = vld [vmem:[%s1 + $0x90] sm:$0xff]
  %v1130 = vld [vmem:[%s1 + $0x98] sm:$0xff]
  %v1131 = vld [vmem:[%s1 + $0xa0] sm:$0xff]
  %v1132 = vld [vmem:[%s1 + $0xa8] sm:$0xff]
  %v1133 = vld [vmem:[%s1 + $0xb0] sm:$0xff]
  %v1134 = vld [vmem:[%s1 + $0xb8] sm:$0xff]
  %v1135 = vld [vmem:[%s1 + $0xc0] sm:$0xff]
  %v1136 = vld [vmem:[%s1 + $0xc8] sm:$0xff]
  %v1137 = vld [vmem:[%s1 + $0xd0] sm:$0xff]
  %v1138 = vld [vmem:[%s1 + $0xd8] sm:$0xff]
  %v1139 = vld [vmem:[%s1 + $0xe0] sm:$0xff]
  %v1140 = vld [vmem:[%s1 + $0xe8] sm:$0xff]
  %v1141 = vld [vmem:[%s1 + $0xf0] sm:$0xff]
  %v1142 = vld [vmem:[%s1 + $0xf8] sm:$0xff]
  %v1175 = vunpack.c.l.b16 %v1111
  %v1176 = vunpack.c.h.b16 %v1111
  %v1177 = vunpack.c.l.b16 %v1112
  %v1178 = vunpack.c.h.b16 %v1112
  %v1179 = vunpack.c.l.b16 %v1113
  %v1180 = vunpack.c.h.b16 %v1113
  %v1181 = vunpack.c.l.b16 %v1114
  %v1182 = vunpack.c.h.b16 %v1114
  %v1183 = vunpack.c.l.b16 %v1115
  %v1184 = vunpack.c.h.b16 %v1115
  %v1185 = vunpack.c.l.b16 %v1116
  %v1186 = vunpack.c.h.b16 %v1116
  %v1187 = vunpack.c.l.b16 %v1117
  %v1188 = vunpack.c.h.b16 %v1117
  %v1189 = vunpack.c.l.b16 %v1118
  %v1190 = vunpack.c.h.b16 %v1118
  %v1191 = vunpack.c.l.b16 %v1119
  %v1192 = vunpack.c.h.b16 %v1119
  %v1193 = vunpack.c.l.b16 %v1120
  %v1194 = vunpack.c.h.b16 %v1120
  %v1195 = vunpack.c.l.b16 %v1121
  %v1196 = vunpack.c.h.b16 %v1121
  %v1197 = vunpack.c.l.b16 %v1122
  %v1198 = vunpack.c.h.b16 %v1122
  %v1199 = vunpack.c.l.b16 %v1123
  %v1200 = vunpack.c.h.b16 %v1123
  %v1201 = vunpack.c.l.b16 %v1124
  %v1202 = vunpack.c.h.b16 %v1124
  %v1203 = vunpack.c.l.b16 %v1125
  %v1204 = vunpack.c.h.b16 %v1125
  %v1205 = vunpack.c.l.b16 %v1126
  %v1206 = vunpack.c.h.b16 %v1126
  %v1207 = vunpack.c.l.b16 %v1127
  %v1208 = vunpack.c.h.b16 %v1127
  %v1209 = vunpack.c.l.b16 %v1128
  %v1210 = vunpack.c.h.b16 %v1128
  %v1211 = vunpack.c.l.b16 %v1129
  %v1212 = vunpack.c.h.b16 %v1129
  %v1213 = vunpack.c.l.b16 %v1130
  %v1214 = vunpack.c.h.b16 %v1130
  %v1215 = vunpack.c.l.b16 %v1131
  %v1216 = vunpack.c.h.b16 %v1131
  %v1217 = vunpack.c.l.b16 %v1132
  %v1218 = vunpack.c.h.b16 %v1132
  %v1219 = vunpack.c.l.b16 %v1133
  %v1220 = vunpack.c.h.b16 %v1133
  %v1221 = vunpack.c.l.b16 %v1134
  %v1222 = vunpack.c.h.b16 %v1134
  %v1223 = vunpack.c.l.b16 %v1135
  %v1224 = vunpack.c.h.b16 %v1135
  %v1225 = vunpack.c.l.b16 %v1136
  %v1226 = vunpack.c.h.b16 %v1136
  %v1227 = vunpack.c.l.b16 %v1137
  %v1228 = vunpack.c.h.b16 %v1137
  %v1229 = vunpack.c.l.b16 %v1138
  %v1230 = vunpack.c.h.b16 %v1138
  %v1231 = vunpack.c.l.b16 %v1139
  %v1232 = vunpack.c.h.b16 %v1139
  %v1233 = vunpack.c.l.b16 %v1140
  %v1234 = vunpack.c.h.b16 %v1140
  %v1235 = vunpack.c.l.b16 %v1141
  %v1236 = vunpack.c.h.b16 %v1141
  %v1237 = vunpack.c.l.b16 %v1142
  %v1238 = vunpack.c.h.b16 %v1142
  %v1239 = vpack.c.b16 %v1179, %v1175
  %v1240 = vpack.c.b16 %v1180, %v1176
  %v1241 = vpack.c.b16 %v1181, %v1177
  %v1242 = vpack.c.b16 %v1182, %v1178
  %v1243 = vpack.c.b16 %v1187, %v1183
  %v1244 = vpack.c.b16 %v1188, %v1184
  %v1245 = vpack.c.b16 %v1189, %v1185
  %v1246 = vpack.c.b16 %v1190, %v1186
  %v1247 = vpack.c.b16 %v1195, %v1191
  %v1248 = vpack.c.b16 %v1196, %v1192
  %v1249 = vpack.c.b16 %v1197, %v1193
  %v1250 = vpack.c.b16 %v1198, %v1194
  %v1251 = vpack.c.b16 %v1203, %v1199
  %v1252 = vpack.c.b16 %v1204, %v1200
  %v1253 = vpack.c.b16 %v1205, %v1201
  %v1254 = vpack.c.b16 %v1206, %v1202
  %v1255 = vpack.c.b16 %v1211, %v1207
  %v1256 = vpack.c.b16 %v1212, %v1208
  %v1257 = vpack.c.b16 %v1213, %v1209
  %v1258 = vpack.c.b16 %v1214, %v1210
  %v1259 = vpack.c.b16 %v1219, %v1215
  %v1260 = vpack.c.b16 %v1220, %v1216
  %v1261 = vpack.c.b16 %v1221, %v1217
  %v1262 = vpack.c.b16 %v1222, %v1218
  %v1263 = vpack.c.b16 %v1227, %v1223
  %v1264 = vpack.c.b16 %v1228, %v1224
  %v1265 = vpack.c.b16 %v1229, %v1225
  %v1266 = vpack.c.b16 %v1230, %v1226
  %v1267 = vpack.c.b16 %v1235, %v1231
  %v1268 = vpack.c.b16 %v1236, %v1232
  %v1269 = vpack.c.b16 %v1237, %v1233
  %v1270 = vpack.c.b16 %v1238, %v1234
  %1303 = vmatprep.subr.bf16.mxu0 %v1240
  %1304 = vmatpush1.bf16.msra.mxu0 %v1239
  %1305 = vmatprep.subr.bf16.mxu0 %v1244
  %1306 = vmatpush1.bf16.msra.mxu0 %v1243
  %1307 = vmatprep.subr.bf16.mxu0 %v1248
  %1308 = vmatpush1.bf16.msra.mxu0 %v1247
  %1309 = vmatprep.subr.bf16.mxu0 %v1252
  %1310 = vmatpush1.bf16.msra.mxu0 %v1251
  %1311 = vmatprep.subr.bf16.mxu0 %v1256
  %1312 = vmatpush1.bf16.msra.mxu0 %v1255
  %1313 = vmatprep.subr.bf16.mxu0 %v1260
  %1314 = vmatpush1.bf16.msra.mxu0 %v1259
  %1315 = vmatprep.subr.bf16.mxu0 %v1264
  %1316 = vmatpush1.bf16.msra.mxu0 %v1263
  %1317 = vmatprep.subr.bf16.mxu0 %v1268
  %1318 = vmatpush1.bf16.msra.mxu0 %v1267
  %1319 = vmatprep.subr.bf16.mxu0 0
  %1320 = vmatpush1.bf16.msra.mxu0 0
  %1321 = vmatprep.subr.bf16.mxu0 0
  %1322 = vmatpush1.bf16.msra.mxu0 0
  %1323 = vmatprep.subr.bf16.mxu0 0
  %1324 = vmatpush1.bf16.msra.mxu0 0
  %1325 = vmatprep.subr.bf16.mxu0 0
  %1326 = vmatpush1.bf16.msra.mxu0 0
  %1327 = vmatprep.subr.bf16.mxu0 0
  %1328 = vmatpush1.bf16.msra.mxu0 0
  %1329 = vmatprep.subr.bf16.mxu0 0
  %1330 = vmatpush1.bf16.msra.mxu0 0
  %1331 = vmatprep.subr.bf16.mxu0 0
  %1332 = vmatpush1.bf16.msra.mxu0 0
  %1333 = vmatprep.subr.bf16.mxu0 0
  %1334 = vmatpush1.bf16.msra.mxu0 0
  %1335 = vmatprep.mubr.bf16.mxu0 0
  %1336 = vmatmul.mubr.bf16.gmra.mrb[0].mxu0 %v1110
  %v1337 = vpop.f32.mrb[0].mxu0
  %v1338 = vadd.f32 0.0, %v1337
  %v1339 = vpop.f32.mrb[0].mxu0
  %v1340 = vadd.f32 0.0, %v1339
  %v1341 = vpop.f32.mrb[0].mxu0
  %v1342 = vadd.f32 0.0, %v1341
  %v1343 = vpop.f32.mrb[0].mxu0
  %v1344 = vadd.f32 0.0, %v1343
  %1345 = vdwg.mxu0
  %1346 = vmatprep.subr.bf16.mxu0 %v1242
  %1347 = vmatpush1.bf16.msra.mxu0 %v1241
  %1348 = vmatprep.subr.bf16.mxu0 %v1246
  %1349 = vmatpush1.bf16.msra.mxu0 %v1245
  %1350 = vmatprep.subr.bf16.mxu0 %v1250
  %1351 = vmatpush1.bf16.msra.mxu0 %v1249
  %1352 = vmatprep.subr.bf16.mxu0 %v1254
  %1353 = vmatpush1.bf16.msra.mxu0 %v1253
  %1354 = vmatprep.subr.bf16.mxu0 %v1258
  %1355 = vmatpush1.bf16.msra.mxu0 %v1257
  %1356 = vmatprep.subr.bf16.mxu0 %v1262
  %1357 = vmatpush1.bf16.msra.mxu0 %v1261
  %1358 = vmatprep.subr.bf16.mxu0 %v1266
  %1359 = vmatpush1.bf16.msra.mxu0 %v1265
  %1360 = vmatprep.subr.bf16.mxu0 %v1270
  %1361 = vmatpush1.bf16.msra.mxu0 %v1269
  %1362 = vmatprep.subr.bf16.mxu0 0
  %1363 = vmatpush1.bf16.msra.mxu0 0
  %1364 = vmatprep.subr.bf16.mxu0 0
  %1365 = vmatpush1.bf16.msra.mxu0 0
  %1366 = vmatprep.subr.bf16.mxu0 0
  %1367 = vmatpush1.bf16.msra.mxu0 0
  %1368 = vmatprep.subr.bf16.mxu0 0
  %1369 = vmatpush1.bf16.msra.mxu0 0
  %1370 = vmatprep.subr.bf16.mxu0 0
  %1371 = vmatpush1.bf16.msra.mxu0 0
  %1372 = vmatprep.subr.bf16.mxu0 0
  %1373 = vmatpush1.bf16.msra.mxu0 0
  %1374 = vmatprep.subr.bf16.mxu0 0
  %1375 = vmatpush1.bf16.msra.mxu0 0
  %1376 = vmatprep.subr.bf16.mxu0 0
  %1377 = vmatpush1.bf16.msra.mxu0 0
  %1378 = vmatprep.mubr.bf16.mxu0 0
  %1379 = vmatmul.mubr.bf16.gmra.mrb[0].mxu0 %v1110
  %v1380 = vpop.f32.mrb[0].mxu0
  %v1381 = vadd.f32 0.0, %v1380
  %v1382 = vpop.f32.mrb[0].mxu0
  %v1383 = vadd.f32 0.0, %v1382
  %v1384 = vpop.f32.mrb[0].mxu0
  %v1385 = vadd.f32 0.0, %v1384
  %v1386 = vpop.f32.mrb[0].mxu0
  %v1387 = vadd.f32 0.0, %v1386
  %1388 = vdwg.mxu0
  %v1389 = vadd.f32 %v1100, %v1338
  %v1390 = vadd.f32 %v1101, %v1340
  %v1391 = vadd.f32 %v1102, %v1381
  %v1392 = vadd.f32 %v1103, %v1383
  %v1393 = vadd.f32 %v1104, %v1342
  %v1394 = vadd.f32 %v1105, %v1344
  %v1395 = vadd.f32 %v1106, %v1385
  %v1396 = vadd.f32 %v1107, %v1387
  %v1397 = vxor.u32 %v1389, 2147483648
  %v1398 = vxor.u32 %v1393, 2147483648
  %v1399 = vmul.f32 %v1397, 1.442695
  %v1400 = vpow.pop %v1399
  %v1401 = vmul.f32 %v1398, 1.442695
  %v1402 = vpow.pop %v1401
  %v1403 = vadd.f32 %v1400, 1.0
  %v1404 = vadd.f32 %v1402, 1.0
  %v1405 = vrcp.pop %v1403
  %v1406 = vmul.f32 1.0, %v1405
  %v1407 = vrcp.pop %v1404
  %v1408 = vmul.f32 1.0, %v1407
  %v1409 = vxor.u32 %v1390, 2147483648
  %v1410 = vxor.u32 %v1394, 2147483648
  %v1411 = vmul.f32 %v1409, 1.442695
  %v1412 = vpow.pop %v1411
  %v1413 = vmul.f32 %v1410, 1.442695
  %v1414 = vpow.pop %v1413
  %v1415 = vadd.f32 %v1412, 1.0
  %v1416 = vadd.f32 %v1414, 1.0
  %v1417 = vrcp.pop %v1415
  %v1418 = vmul.f32 1.0, %v1417
  %v1419 = vrcp.pop %v1416
  %v1420 = vmul.f32 1.0, %v1419
  %v1421 = vtanh.pop %v1391
  %v1422 = vtanh.pop %v1395
  %v1423 = vxor.u32 %v1392, 2147483648
  %v1424 = vxor.u32 %v1396, 2147483648
  %v1425 = vmul.f32 %v1423, 1.442695
  %v1426 = vpow.pop %v1425
  %v1427 = vmul.f32 %v1424, 1.442695
  %v1428 = vpow.pop %v1427
  %v1429 = vadd.f32 %v1426, 1.0
  %v1430 = vadd.f32 %v1428, 1.0
  %v1431 = vrcp.pop %v1429
  %v1432 = vmul.f32 1.0, %v1431
  %v1433 = vrcp.pop %v1430
  %v1434 = vmul.f32 1.0, %v1433
  %v1435 = vld [vmem:[#allocation3 + $0x10] sm:$0xff]
  %v1436 = vld [vmem:[#allocation3 + $0x18] sm:$0xff]
  %v1437 = vmul.f32 %v1418, %v1435
  %v1438 = vmul.f32 %v1420, %v1436
  %v1439 = vmul.f32 %v1406, %v1421
  %v1440 = vmul.f32 %v1408, %v1422
  %v1441 = vadd.f32 %v1437, %v1439
  %v1442 = vadd.f32 %v1438, %v1440
  %v1443 = vtanh.pop %v1441
  %v1444 = vtanh.pop %v1442
  %v1445 = vmul.f32 %v1432, %v1443
  %v1446 = vmul.f32 %v1434, %v1444
  %1447 = vst [vmem:[#allocation3 + $0x10] sm:$0xff] %v1441
  %1448 = vst [vmem:[#allocation3 + $0x18] sm:$0xff] %v1442
  %1449 = vst [vmem:[#allocation2 + $0x10] sm:$0xff] %v1445
  %1450 = vst [vmem:[#allocation2 + $0x18] sm:$0xff] %v1446
  %s1451 = scalar_lea.vmem %s0, 128
  %v1452 = vld [vmem:[%s1451] sm:$0xff]
  %v1453 = vld [vmem:[%s1451 + $0x8] sm:$0xff]
  %v1454 = vld [vmem:[%s1451 + $0x10] sm:$0xff]
  %v1455 = vld [vmem:[%s1451 + $0x18] sm:$0xff]
  %v1456 = vld [vmem:[%s1451 + $0x20] sm:$0xff]
  %v1457 = vld [vmem:[%s1451 + $0x28] sm:$0xff]
  %v1458 = vld [vmem:[%s1451 + $0x30] sm:$0xff]
  %v1459 = vld [vmem:[%s1451 + $0x38] sm:$0xff]
  %v1460 = vunpack.c.l.bf16 %v1452
  %v1461 = vunpack.c.h.bf16 %v1452
  %v1462 = vunpack.c.l.bf16 %v1453
  %v1463 = vunpack.c.h.bf16 %v1453
  %v1464 = vunpack.c.l.bf16 %v1454
  %v1465 = vunpack.c.h.bf16 %v1454
  %v1466 = vunpack.c.l.bf16 %v1455
  %v1467 = vunpack.c.h.bf16 %v1455
  %v1468 = vld [vmem:[#allocation2] sm:$0xff]
  %v1469 = vld [vmem:[#allocation2 + $0x8] sm:$0xff]
  %v1470 = vpack.c.bf16 %v1469, %v1468
  %v1471 = vld [vmem:[%s1] sm:$0xff]
  %v1472 = vld [vmem:[%s1 + $0x8] sm:$0xff]
  %v1473 = vld [vmem:[%s1 + $0x10] sm:$0xff]
  %v1474 = vld [vmem:[%s1 + $0x18] sm:$0xff]
  %v1475 = vld [vmem:[%s1 + $0x20] sm:$0xff]
  %v1476 = vld [vmem:[%s1 + $0x28] sm:$0xff]
  %v1477 = vld [vmem:[%s1 + $0x30] sm:$0xff]
  %v1478 = vld [vmem:[%s1 + $0x38] sm:$0xff]
  %v1479 = vld [vmem:[%s1 + $0x40] sm:$0xff]
  %v1480 = vld [vmem:[%s1 + $0x48] sm:$0xff]
  %v1481 = vld [vmem:[%s1 + $0x50] sm:$0xff]
  %v1482 = vld [vmem:[%s1 + $0x58] sm:$0xff]
  %v1483 = vld [vmem:[%s1 + $0x60] sm:$0xff]
  %v1484 = vld [vmem:[%s1 + $0x68] sm:$0xff]
  %v1485 = vld [vmem:[%s1 + $0x70] sm:$0xff]
  %v1486 = vld [vmem:[%s1 + $0x78] sm:$0xff]
  %v1487 = vld [vmem:[%s1 + $0x80] sm:$0xff]
  %v1488 = vld [vmem:[%s1 + $0x88] sm:$0xff]
  %v1489 = vld [vmem:[%s1 + $0x90] sm:$0xff]
  %v1490 = vld [vmem:[%s1 + $0x98] sm:$0xff]
  %v1491 = vld [vmem:[%s1 + $0xa0] sm:$0xff]
  %v1492 = vld [vmem:[%s1 + $0xa8] sm:$0xff]
  %v1493 = vld [vmem:[%s1 + $0xb0] sm:$0xff]
  %v1494 = vld [vmem:[%s1 + $0xb8] sm:$0xff]
  %v1495 = vld [vmem:[%s1 + $0xc0] sm:$0xff]
  %v1496 = vld [vmem:[%s1 + $0xc8] sm:$0xff]
  %v1497 = vld [vmem:[%s1 + $0xd0] sm:$0xff]
  %v1498 = vld [vmem:[%s1 + $0xd8] sm:$0xff]
  %v1499 = vld [vmem:[%s1 + $0xe0] sm:$0xff]
  %v1500 = vld [vmem:[%s1 + $0xe8] sm:$0xff]
  %v1501 = vld [vmem:[%s1 + $0xf0] sm:$0xff]
  %v1502 = vld [vmem:[%s1 + $0xf8] sm:$0xff]
  %v1535 = vunpack.c.l.b16 %v1471
  %v1536 = vunpack.c.h.b16 %v1471
  %v1537 = vunpack.c.l.b16 %v1472
  %v1538 = vunpack.c.h.b16 %v1472
  %v1539 = vunpack.c.l.b16 %v1473
  %v1540 = vunpack.c.h.b16 %v1473
  %v1541 = vunpack.c.l.b16 %v1474
  %v1542 = vunpack.c.h.b16 %v1474
  %v1543 = vunpack.c.l.b16 %v1475
  %v1544 = vunpack.c.h.b16 %v1475
  %v1545 = vunpack.c.l.b16 %v1476
  %v1546 = vunpack.c.h.b16 %v1476
  %v1547 = vunpack.c.l.b16 %v1477
  %v1548 = vunpack.c.h.b16 %v1477
  %v1549 = vunpack.c.l.b16 %v1478
  %v1550 = vunpack.c.h.b16 %v1478
  %v1551 = vunpack.c.l.b16 %v1479
  %v1552 = vunpack.c.h.b16 %v1479
  %v1553 = vunpack.c.l.b16 %v1480
  %v1554 = vunpack.c.h.b16 %v1480
  %v1555 = vunpack.c.l.b16 %v1481
  %v1556 = vunpack.c.h.b16 %v1481
  %v1557 = vunpack.c.l.b16 %v1482
  %v1558 = vunpack.c.h.b16 %v1482
  %v1559 = vunpack.c.l.b16 %v1483
  %v1560 = vunpack.c.h.b16 %v1483
  %v1561 = vunpack.c.l.b16 %v1484
  %v1562 = vunpack.c.h.b16 %v1484
  %v1563 = vunpack.c.l.b16 %v1485
  %v1564 = vunpack.c.h.b16 %v1485
  %v1565 = vunpack.c.l.b16 %v1486
  %v1566 = vunpack.c.h.b16 %v1486
  %v1567 = vunpack.c.l.b16 %v1487
  %v1568 = vunpack.c.h.b16 %v1487
  %v1569 = vunpack.c.l.b16 %v1488
  %v1570 = vunpack.c.h.b16 %v1488
  %v1571 = vunpack.c.l.b16 %v1489
  %v1572 = vunpack.c.h.b16 %v1489
  %v1573 = vunpack.c.l.b16 %v1490
  %v1574 = vunpack.c.h.b16 %v1490
  %v1575 = vunpack.c.l.b16 %v1491
  %v1576 = vunpack.c.h.b16 %v1491
  %v1577 = vunpack.c.l.b16 %v1492
  %v1578 = vunpack.c.h.b16 %v1492
  %v1579 = vunpack.c.l.b16 %v1493
  %v1580 = vunpack.c.h.b16 %v1493
  %v1581 = vunpack.c.l.b16 %v1494
  %v1582 = vunpack.c.h.b16 %v1494
  %v1583 = vunpack.c.l.b16 %v1495
  %v1584 = vunpack.c.h.b16 %v1495
  %v1585 = vunpack.c.l.b16 %v1496
  %v1586 = vunpack.c.h.b16 %v1496
  %v1587 = vunpack.c.l.b16 %v1497
  %v1588 = vunpack.c.h.b16 %v1497
  %v1589 = vunpack.c.l.b16 %v1498
  %v1590 = vunpack.c.h.b16 %v1498
  %v1591 = vunpack.c.l.b16 %v1499
  %v1592 = vunpack.c.h.b16 %v1499
  %v1593 = vunpack.c.l.b16 %v1500
  %v1594 = vunpack.c.h.b16 %v1500
  %v1595 = vunpack.c.l.b16 %v1501
  %v1596 = vunpack.c.h.b16 %v1501
  %v1597 = vunpack.c.l.b16 %v1502
  %v1598 = vunpack.c.h.b16 %v1502
  %v1599 = vpack.c.b16 %v1539, %v1535
  %v1600 = vpack.c.b16 %v1540, %v1536
  %v1601 = vpack.c.b16 %v1541, %v1537
  %v1602 = vpack.c.b16 %v1542, %v1538
  %v1603 = vpack.c.b16 %v1547, %v1543
  %v1604 = vpack.c.b16 %v1548, %v1544
  %v1605 = vpack.c.b16 %v1549, %v1545
  %v1606 = vpack.c.b16 %v1550, %v1546
  %v1607 = vpack.c.b16 %v1555, %v1551
  %v1608 = vpack.c.b16 %v1556, %v1552
  %v1609 = vpack.c.b16 %v1557, %v1553
  %v1610 = vpack.c.b16 %v1558, %v1554
  %v1611 = vpack.c.b16 %v1563, %v1559
  %v1612 = vpack.c.b16 %v1564, %v1560
  %v1613 = vpack.c.b16 %v1565, %v1561
  %v1614 = vpack.c.b16 %v1566, %v1562
  %v1615 = vpack.c.b16 %v1571, %v1567
  %v1616 = vpack.c.b16 %v1572, %v1568
  %v1617 = vpack.c.b16 %v1573, %v1569
  %v1618 = vpack.c.b16 %v1574, %v1570
  %v1619 = vpack.c.b16 %v1579, %v1575
  %v1620 = vpack.c.b16 %v1580, %v1576
  %v1621 = vpack.c.b16 %v1581, %v1577
  %v1622 = vpack.c.b16 %v1582, %v1578
  %v1623 = vpack.c.b16 %v1587, %v1583
  %v1624 = vpack.c.b16 %v1588, %v1584
  %v1625 = vpack.c.b16 %v1589, %v1585
  %v1626 = vpack.c.b16 %v1590, %v1586
  %v1627 = vpack.c.b16 %v1595, %v1591
  %v1628 = vpack.c.b16 %v1596, %v1592
  %v1629 = vpack.c.b16 %v1597, %v1593
  %v1630 = vpack.c.b16 %v1598, %v1594
  %1663 = vmatprep.subr.bf16.mxu0 %v1600
  %1664 = vmatpush1.bf16.msra.mxu0 %v1599
  %1665 = vmatprep.subr.bf16.mxu0 %v1604
  %1666 = vmatpush1.bf16.msra.mxu0 %v1603
  %1667 = vmatprep.subr.bf16.mxu0 %v1608
  %1668 = vmatpush1.bf16.msra.mxu0 %v1607
  %1669 = vmatprep.subr.bf16.mxu0 %v1612
  %1670 = vmatpush1.bf16.msra.mxu0 %v1611
  %1671 = vmatprep.subr.bf16.mxu0 %v1616
  %1672 = vmatpush1.bf16.msra.mxu0 %v1615
  %1673 = vmatprep.subr.bf16.mxu0 %v1620
  %1674 = vmatpush1.bf16.msra.mxu0 %v1619
  %1675 = vmatprep.subr.bf16.mxu0 %v1624
  %1676 = vmatpush1.bf16.msra.mxu0 %v1623
  %1677 = vmatprep.subr.bf16.mxu0 %v1628
  %1678 = vmatpush1.bf16.msra.mxu0 %v1627
  %1679 = vmatprep.subr.bf16.mxu0 0
  %1680 = vmatpush1.bf16.msra.mxu0 0
  %1681 = vmatprep.subr.bf16.mxu0 0
  %1682 = vmatpush1.bf16.msra.mxu0 0
  %1683 = vmatprep.subr.bf16.mxu0 0
  %1684 = vmatpush1.bf16.msra.mxu0 0
  %1685 = vmatprep.subr.bf16.mxu0 0
  %1686 = vmatpush1.bf16.msra.mxu0 0
  %1687 = vmatprep.subr.bf16.mxu0 0
  %1688 = vmatpush1.bf16.msra.mxu0 0
  %1689 = vmatprep.subr.bf16.mxu0 0
  %1690 = vmatpush1.bf16.msra.mxu0 0
  %1691 = vmatprep.subr.bf16.mxu0 0
  %1692 = vmatpush1.bf16.msra.mxu0 0
  %1693 = vmatprep.subr.bf16.mxu0 0
  %1694 = vmatpush1.bf16.msra.mxu0 0
  %1695 = vmatprep.mubr.bf16.mxu0 0
  %1696 = vmatmul.mubr.bf16.gmra.mrb[0].mxu0 %v1470
  %v1697 = vpop.f32.mrb[0].mxu0
  %v1698 = vadd.f32 0.0, %v1697
  %v1699 = vpop.f32.mrb[0].mxu0
  %v1700 = vadd.f32 0.0, %v1699
  %v1701 = vpop.f32.mrb[0].mxu0
  %v1702 = vadd.f32 0.0, %v1701
  %v1703 = vpop.f32.mrb[0].mxu0
  %v1704 = vadd.f32 0.0, %v1703
  %1705 = vdwg.mxu0
  %1706 = vmatprep.subr.bf16.mxu0 %v1602
  %1707 = vmatpush1.bf16.msra.mxu0 %v1601
  %1708 = vmatprep.subr.bf16.mxu0 %v1606
  %1709 = vmatpush1.bf16.msra.mxu0 %v1605
  %1710 = vmatprep.subr.bf16.mxu0 %v1610
  %1711 = vmatpush1.bf16.msra.mxu0 %v1609
  %1712 = vmatprep.subr.bf16.mxu0 %v1614
  %1713 = vmatpush1.bf16.msra.mxu0 %v1613
  %1714 = vmatprep.subr.bf16.mxu0 %v1618
  %1715 = vmatpush1.bf16.msra.mxu0 %v1617
  %1716 = vmatprep.subr.bf16.mxu0 %v1622
  %1717 = vmatpush1.bf16.msra.mxu0 %v1621
  %1718 = vmatprep.subr.bf16.mxu0 %v1626
  %1719 = vmatpush1.bf16.msra.mxu0 %v1625
  %1720 = vmatprep.subr.bf16.mxu0 %v1630
  %1721 = vmatpush1.bf16.msra.mxu0 %v1629
  %1722 = vmatprep.subr.bf16.mxu0 0
  %1723 = vmatpush1.bf16.msra.mxu0 0
  %1724 = vmatprep.subr.bf16.mxu0 0
  %1725 = vmatpush1.bf16.msra.mxu0 0
  %1726 = vmatprep.subr.bf16.mxu0 0
  %1727 = vmatpush1.bf16.msra.mxu0 0
  %1728 = vmatprep.subr.bf16.mxu0 0
  %1729 = vmatpush1.bf16.msra.mxu0 0
  %1730 = vmatprep.subr.bf16.mxu0 0
  %1731 = vmatpush1.bf16.msra.mxu0 0
  %1732 = vmatprep.subr.bf16.mxu0 0
  %1733 = vmatpush1.bf16.msra.mxu0 0
  %1734 = vmatprep.subr.bf16.mxu0 0
  %1735 = vmatpush1.bf16.msra.mxu0 0
  %1736 = vmatprep.subr.bf16.mxu0 0
  %1737 = vmatpush1.bf16.msra.mxu0 0
  %1738 = vmatprep.mubr.bf16.mxu0 0
  %1739 = vmatmul.mubr.bf16.gmra.mrb[0].mxu0 %v1470
  %v1740 = vpop.f32.mrb[0].mxu0
  %v1741 = vadd.f32 0.0, %v1740
  %v1742 = vpop.f32.mrb[0].mxu0
  %v1743 = vadd.f32 0.0, %v1742
  %v1744 = vpop.f32.mrb[0].mxu0
  %v1745 = vadd.f32 0.0, %v1744
  %v1746 = vpop.f32.mrb[0].mxu0
  %v1747 = vadd.f32 0.0, %v1746
  %1748 = vdwg.mxu0
  %v1749 = vadd.f32 %v1460, %v1698
  %v1750 = vadd.f32 %v1461, %v1700
  %v1751 = vadd.f32 %v1462, %v1741
  %v1752 = vadd.f32 %v1463, %v1743
  %v1753 = vadd.f32 %v1464, %v1702
  %v1754 = vadd.f32 %v1465, %v1704
  %v1755 = vadd.f32 %v1466, %v1745
  %v1756 = vadd.f32 %v1467, %v1747
  %v1757 = vxor.u32 %v1749, 2147483648
  %v1758 = vxor.u32 %v1753, 2147483648
  %v1759 = vmul.f32 %v1757, 1.442695
  %v1760 = vpow.pop %v1759
  %v1761 = vmul.f32 %v1758, 1.442695
  %v1762 = vpow.pop %v1761
  %v1763 = vadd.f32 %v1760, 1.0
  %v1764 = vadd.f32 %v1762, 1.0
  %v1765 = vrcp.pop %v1763
  %v1766 = vmul.f32 1.0, %v1765
  %v1767 = vrcp.pop %v1764
  %v1768 = vmul.f32 1.0, %v1767
  %v1769 = vxor.u32 %v1750, 2147483648
  %v1770 = vxor.u32 %v1754, 2147483648
  %v1771 = vmul.f32 %v1769, 1.442695
  %v1772 = vpow.pop %v1771
  %v1773 = vmul.f32 %v1770, 1.442695
  %v1774 = vpow.pop %v1773
  %v1775 = vadd.f32 %v1772, 1.0
  %v1776 = vadd.f32 %v1774, 1.0
  %v1777 = vrcp.pop %v1775
  %v1778 = vmul.f32 1.0, %v1777
  %v1779 = vrcp.pop %v1776
  %v1780 = vmul.f32 1.0, %v1779
  %v1781 = vtanh.pop %v1751
  %v1782 = vtanh.pop %v1755
  %v1783 = vxor.u32 %v1752, 2147483648
  %v1784 = vxor.u32 %v1756, 2147483648
  %v1785 = vmul.f32 %v1783, 1.442695
  %v1786 = vpow.pop %v1785
  %v1787 = vmul.f32 %v1784, 1.442695
  %v1788 = vpow.pop %v1787
  %v1789 = vadd.f32 %v1786, 1.0
  %v1790 = vadd.f32 %v1788, 1.0
  %v1791 = vrcp.pop %v1789
  %v1792 = vmul.f32 1.0, %v1791
  %v1793 = vrcp.pop %v1790
  %v1794 = vmul.f32 1.0, %v1793
  %v1795 = vld [vmem:[#allocation3] sm:$0xff]
  %v1796 = vld [vmem:[#allocation3 + $0x8] sm:$0xff]
  %v1797 = vmul.f32 %v1778, %v1795
  %v1798 = vmul.f32 %v1780, %v1796
  %v1799 = vmul.f32 %v1766, %v1781
  %v1800 = vmul.f32 %v1768, %v1782
  %v1801 = vadd.f32 %v1797, %v1799
  %v1802 = vadd.f32 %v1798, %v1800
  %v1803 = vtanh.pop %v1801
  %v1804 = vtanh.pop %v1802
  %v1805 = vmul.f32 %v1792, %v1803
  %v1806 = vmul.f32 %v1794, %v1804
  %1807 = vst [vmem:[#allocation3] sm:$0xff] %v1801
  %1808 = vst [vmem:[#allocation3 + $0x8] sm:$0xff] %v1802
  %1809 = vst [vmem:[#allocation2] sm:$0xff] %v1805
  %1810 = vst [vmem:[#allocation2 + $0x8] sm:$0xff] %v1806
  %v1811 = vunpack.c.l.bf16 %v1456
  %v1812 = vunpack.c.h.bf16 %v1456
  %v1813 = vunpack.c.l.bf16 %v1457
  %v1814 = vunpack.c.h.bf16 %v1457
  %v1815 = vunpack.c.l.bf16 %v1458
  %v1816 = vunpack.c.h.bf16 %v1458
  %v1817 = vunpack.c.l.bf16 %v1459
  %v1818 = vunpack.c.h.bf16 %v1459
  %v1819 = vld [vmem:[#allocation2 + $0x10] sm:$0xff]
  %v1820 = vld [vmem:[#allocation2 + $0x18] sm:$0xff]
  %v1821 = vpack.c.bf16 %v1820, %v1819
  %v1822 = vld [vmem:[%s1] sm:$0xff]
  %v1823 = vld [vmem:[%s1 + $0x8] sm:$0xff]
  %v1824 = vld [vmem:[%s1 + $0x10] sm:$0xff]
  %v1825 = vld [vmem:[%s1 + $0x18] sm:$0xff]
  %v1826 = vld [vmem:[%s1 + $0x20] sm:$0xff]
  %v1827 = vld [vmem:[%s1 + $0x28] sm:$0xff]
  %v1828 = vld [vmem:[%s1 + $0x30] sm:$0xff]
  %v1829 = vld [vmem:[%s1 + $0x38] sm:$0xff]
  %v1830 = vld [vmem:[%s1 + $0x40] sm:$0xff]
  %v1831 = vld [vmem:[%s1 + $0x48] sm:$0xff]
  %v1832 = vld [vmem:[%s1 + $0x50] sm:$0xff]
  %v1833 = vld [vmem:[%s1 + $0x58] sm:$0xff]
  %v1834 = vld [vmem:[%s1 + $0x60] sm:$0xff]
  %v1835 = vld [vmem:[%s1 + $0x68] sm:$0xff]
  %v1836 = vld [vmem:[%s1 + $0x70] sm:$0xff]
  %v1837 = vld [vmem:[%s1 + $0x78] sm:$0xff]
  %v1838 = vld [vmem:[%s1 + $0x80] sm:$0xff]
  %v1839 = vld [vmem:[%s1 + $0x88] sm:$0xff]
  %v1840 = vld [vmem:[%s1 + $0x90] sm:$0xff]
  %v1841 = vld [vmem:[%s1 + $0x98] sm:$0xff]
  %v1842 = vld [vmem:[%s1 + $0xa0] sm:$0xff]
  %v1843 = vld [vmem:[%s1 + $0xa8] sm:$0xff]
  %v1844 = vld [vmem:[%s1 + $0xb0] sm:$0xff]
  %v1845 = vld [vmem:[%s1 + $0xb8] sm:$0xff]
  %v1846 = vld [vmem:[%s1 + $0xc0] sm:$0xff]
  %v1847 = vld [vmem:[%s1 + $0xc8] sm:$0xff]
  %v1848 = vld [vmem:[%s1 + $0xd0] sm:$0xff]
  %v1849 = vld [vmem:[%s1 + $0xd8] sm:$0xff]
  %v1850 = vld [vmem:[%s1 + $0xe0] sm:$0xff]
  %v1851 = vld [vmem:[%s1 + $0xe8] sm:$0xff]
  %v1852 = vld [vmem:[%s1 + $0xf0] sm:$0xff]
  %v1853 = vld [vmem:[%s1 + $0xf8] sm:$0xff]
  %v1886 = vunpack.c.l.b16 %v1822
  %v1887 = vunpack.c.h.b16 %v1822
  %v1888 = vunpack.c.l.b16 %v1823
  %v1889 = vunpack.c.h.b16 %v1823
  %v1890 = vunpack.c.l.b16 %v1824
  %v1891 = vunpack.c.h.b16 %v1824
  %v1892 = vunpack.c.l.b16 %v1825
  %v1893 = vunpack.c.h.b16 %v1825
  %v1894 = vunpack.c.l.b16 %v1826
  %v1895 = vunpack.c.h.b16 %v1826
  %v1896 = vunpack.c.l.b16 %v1827
  %v1897 = vunpack.c.h.b16 %v1827
  %v1898 = vunpack.c.l.b16 %v1828
  %v1899 = vunpack.c.h.b16 %v1828
  %v1900 = vunpack.c.l.b16 %v1829
  %v1901 = vunpack.c.h.b16 %v1829
  %v1902 = vunpack.c.l.b16 %v1830
  %v1903 = vunpack.c.h.b16 %v1830
  %v1904 = vunpack.c.l.b16 %v1831
  %v1905 = vunpack.c.h.b16 %v1831
  %v1906 = vunpack.c.l.b16 %v1832
  %v1907 = vunpack.c.h.b16 %v1832
  %v1908 = vunpack.c.l.b16 %v1833
  %v1909 = vunpack.c.h.b16 %v1833
  %v1910 = vunpack.c.l.b16 %v1834
  %v1911 = vunpack.c.h.b16 %v1834
  %v1912 = vunpack.c.l.b16 %v1835
  %v1913 = vunpack.c.h.b16 %v1835
  %v1914 = vunpack.c.l.b16 %v1836
  %v1915 = vunpack.c.h.b16 %v1836
  %v1916 = vunpack.c.l.b16 %v1837
  %v1917 = vunpack.c.h.b16 %v1837
  %v1918 = vunpack.c.l.b16 %v1838
  %v1919 = vunpack.c.h.b16 %v1838
  %v1920 = vunpack.c.l.b16 %v1839
  %v1921 = vunpack.c.h.b16 %v1839
  %v1922 = vunpack.c.l.b16 %v1840
  %v1923 = vunpack.c.h.b16 %v1840
  %v1924 = vunpack.c.l.b16 %v1841
  %v1925 = vunpack.c.h.b16 %v1841
  %v1926 = vunpack.c.l.b16 %v1842
  %v1927 = vunpack.c.h.b16 %v1842
  %v1928 = vunpack.c.l.b16 %v1843
  %v1929 = vunpack.c.h.b16 %v1843
  %v1930 = vunpack.c.l.b16 %v1844
  %v1931 = vunpack.c.h.b16 %v1844
  %v1932 = vunpack.c.l.b16 %v1845
  %v1933 = vunpack.c.h.b16 %v1845
  %v1934 = vunpack.c.l.b16 %v1846
  %v1935 = vunpack.c.h.b16 %v1846
  %v1936 = vunpack.c.l.b16 %v1847
  %v1937 = vunpack.c.h.b16 %v1847
  %v1938 = vunpack.c.l.b16 %v1848
  %v1939 = vunpack.c.h.b16 %v1848
  %v1940 = vunpack.c.l.b16 %v1849
  %v1941 = vunpack.c.h.b16 %v1849
  %v1942 = vunpack.c.l.b16 %v1850
  %v1943 = vunpack.c.h.b16 %v1850
  %v1944 = vunpack.c.l.b16 %v1851
  %v1945 = vunpack.c.h.b16 %v1851
  %v1946 = vunpack.c.l.b16 %v1852
  %v1947 = vunpack.c.h.b16 %v1852
  %v1948 = vunpack.c.l.b16 %v1853
  %v1949 = vunpack.c.h.b16 %v1853
  %v1950 = vpack.c.b16 %v1890, %v1886
  %v1951 = vpack.c.b16 %v1891, %v1887
  %v1952 = vpack.c.b16 %v1892, %v1888
  %v1953 = vpack.c.b16 %v1893, %v1889
  %v1954 = vpack.c.b16 %v1898, %v1894
  %v1955 = vpack.c.b16 %v1899, %v1895
  %v1956 = vpack.c.b16 %v1900, %v1896
  %v1957 = vpack.c.b16 %v1901, %v1897
  %v1958 = vpack.c.b16 %v1906, %v1902
  %v1959 = vpack.c.b16 %v1907, %v1903
  %v1960 = vpack.c.b16 %v1908, %v1904
  %v1961 = vpack.c.b16 %v1909, %v1905
  %v1962 = vpack.c.b16 %v1914, %v1910
  %v1963 = vpack.c.b16 %v1915, %v1911
  %v1964 = vpack.c.b16 %v1916, %v1912
  %v1965 = vpack.c.b16 %v1917, %v1913
  %v1966 = vpack.c.b16 %v1922, %v1918
  %v1967 = vpack.c.b16 %v1923, %v1919
  %v1968 = vpack.c.b16 %v1924, %v1920
  %v1969 = vpack.c.b16 %v1925, %v1921
  %v1970 = vpack.c.b16 %v1930, %v1926
  %v1971 = vpack.c.b16 %v1931, %v1927
  %v1972 = vpack.c.b16 %v1932, %v1928
  %v1973 = vpack.c.b16 %v1933, %v1929
  %v1974 = vpack.c.b16 %v1938, %v1934
  %v1975 = vpack.c.b16 %v1939, %v1935
  %v1976 = vpack.c.b16 %v1940, %v1936
  %v1977 = vpack.c.b16 %v1941, %v1937
  %v1978 = vpack.c.b16 %v1946, %v1942
  %v1979 = vpack.c.b16 %v1947, %v1943
  %v1980 = vpack.c.b16 %v1948, %v1944
  %v1981 = vpack.c.b16 %v1949, %v1945
  %2014 = vmatprep.subr.bf16.mxu0 %v1951
  %2015 = vmatpush1.bf16.msra.mxu0 %v1950
  %2016 = vmatprep.subr.bf16.mxu0 %v1955
  %2017 = vmatpush1.bf16.msra.mxu0 %v1954
  %2018 = vmatprep.subr.bf16.mxu0 %v1959
  %2019 = vmatpush1.bf16.msra.mxu0 %v1958
  %2020 = vmatprep.subr.bf16.mxu0 %v1963
  %2021 = vmatpush1.bf16.msra.mxu0 %v1962
  %2022 = vmatprep.subr.bf16.mxu0 %v1967
  %2023 = vmatpush1.bf16.msra.mxu0 %v1966
  %2024 = vmatprep.subr.bf16.mxu0 %v1971
  %2025 = vmatpush1.bf16.msra.mxu0 %v1970
  %2026 = vmatprep.subr.bf16.mxu0 %v1975
  %2027 = vmatpush1.bf16.msra.mxu0 %v1974
  %2028 = vmatprep.subr.bf16.mxu0 %v1979
  %2029 = vmatpush1.bf16.msra.mxu0 %v1978
  %2030 = vmatprep.subr.bf16.mxu0 0
  %2031 = vmatpush1.bf16.msra.mxu0 0
  %2032 = vmatprep.subr.bf16.mxu0 0
  %2033 = vmatpush1.bf16.msra.mxu0 0
  %2034 = vmatprep.subr.bf16.mxu0 0
  %2035 = vmatpush1.bf16.msra.mxu0 0
  %2036 = vmatprep.subr.bf16.mxu0 0
  %2037 = vmatpush1.bf16.msra.mxu0 0
  %2038 = vmatprep.subr.bf16.mxu0 0
  %2039 = vmatpush1.bf16.msra.mxu0 0
  %2040 = vmatprep.subr.bf16.mxu0 0
  %2041 = vmatpush1.bf16.msra.mxu0 0
  %2042 = vmatprep.subr.bf16.mxu0 0
  %2043 = vmatpush1.bf16.msra.mxu0 0
  %2044 = vmatprep.subr.bf16.mxu0 0
  %2045 = vmatpush1.bf16.msra.mxu0 0
  %2046 = vmatprep.mubr.bf16.mxu0 0
  %2047 = vmatmul.mubr.bf16.gmra.mrb[0].mxu0 %v1821
  %v2048 = vpop.f32.mrb[0].mxu0
  %v2049 = vadd.f32 0.0, %v2048
  %v2050 = vpop.f32.mrb[0].mxu0
  %v2051 = vadd.f32 0.0, %v2050
  %v2052 = vpop.f32.mrb[0].mxu0
  %v2053 = vadd.f32 0.0, %v2052
  %v2054 = vpop.f32.mrb[0].mxu0
  %v2055 = vadd.f32 0.0, %v2054
  %2056 = vdwg.mxu0
  %2057 = vmatprep.subr.bf16.mxu0 %v1953
  %2058 = vmatpush1.bf16.msra.mxu0 %v1952
  %2059 = vmatprep.subr.bf16.mxu0 %v1957
  %2060 = vmatpush1.bf16.msra.mxu0 %v1956
  %2061 = vmatprep.subr.bf16.mxu0 %v1961
  %2062 = vmatpush1.bf16.msra.mxu0 %v1960
  %2063 = vmatprep.subr.bf16.mxu0 %v1965
  %2064 = vmatpush1.bf16.msra.mxu0 %v1964
  %2065 = vmatprep.subr.bf16.mxu0 %v1969
  %2066 = vmatpush1.bf16.msra.mxu0 %v1968
  %2067 = vmatprep.subr.bf16.mxu0 %v1973
  %2068 = vmatpush1.bf16.msra.mxu0 %v1972
  %2069 = vmatprep.subr.bf16.mxu0 %v1977
  %2070 = vmatpush1.bf16.msra.mxu0 %v1976
  %2071 = vmatprep.subr.bf16.mxu0 %v1981
  %2072 = vmatpush1.bf16.msra.mxu0 %v1980
  %2073 = vmatprep.subr.bf16.mxu0 0
  %2074 = vmatpush1.bf16.msra.mxu0 0
  %2075 = vmatprep.subr.bf16.mxu0 0
  %2076 = vmatpush1.bf16.msra.mxu0 0
  %2077 = vmatprep.subr.bf16.mxu0 0
  %2078 = vmatpush1.bf16.msra.mxu0 0
  %2079 = vmatprep.subr.bf16.mxu0 0
  %2080 = vmatpush1.bf16.msra.mxu0 0
  %2081 = vmatprep.subr.bf16.mxu0 0
  %2082 = vmatpush1.bf16.msra.mxu0 0
  %2083 = vmatprep.subr.bf16.mxu0 0
  %2084 = vmatpush1.bf16.msra.mxu0 0
  %2085 = vmatprep.subr.bf16.mxu0 0
  %2086 = vmatpush1.bf16.msra.mxu0 0
  %2087 = vmatprep.subr.bf16.mxu0 0
  %2088 = vmatpush1.bf16.msra.mxu0 0
  %2089 = vmatprep.mubr.bf16.mxu0 0
  %2090 = vmatmul.mubr.bf16.gmra.mrb[0].mxu0 %v1821
  %v2091 = vpop.f32.mrb[0].mxu0
  %v2092 = vadd.f32 0.0, %v2091
  %v2093 = vpop.f32.mrb[0].mxu0
  %v2094 = vadd.f32 0.0, %v2093
  %v2095 = vpop.f32.mrb[0].mxu0
  %v2096 = vadd.f32 0.0, %v2095
  %v2097 = vpop.f32.mrb[0].mxu0
  %v2098 = vadd.f32 0.0, %v2097
  %2099 = vdwg.mxu0
  %v2100 = vadd.f32 %v1811, %v2049
  %v2101 = vadd.f32 %v1812, %v2051
  %v2102 = vadd.f32 %v1813, %v2092
  %v2103 = vadd.f32 %v1814, %v2094
  %v2104 = vadd.f32 %v1815, %v2053
  %v2105 = vadd.f32 %v1816, %v2055
  %v2106 = vadd.f32 %v1817, %v2096
  %v2107 = vadd.f32 %v1818, %v2098
  %v2108 = vxor.u32 %v2100, 2147483648
  %v2109 = vxor.u32 %v2104, 2147483648
  %v2110 = vmul.f32 %v2108, 1.442695
  %v2111 = vpow.pop %v2110
  %v2112 = vmul.f32 %v2109, 1.442695
  %v2113 = vpow.pop %v2112
  %v2114 = vadd.f32 %v2111, 1.0
  %v2115 = vadd.f32 %v2113, 1.0
  %v2116 = vrcp.pop %v2114
  %v2117 = vmul.f32 1.0, %v2116
  %v2118 = vrcp.pop %v2115
  %v2119 = vmul.f32 1.0, %v2118
  %v2120 = vxor.u32 %v2101, 2147483648
  %v2121 = vxor.u32 %v2105, 2147483648
  %v2122 = vmul.f32 %v2120, 1.442695
  %v2123 = vpow.pop %v2122
  %v2124 = vmul.f32 %v2121, 1.442695
  %v2125 = vpow.pop %v2124
  %v2126 = vadd.f32 %v2123, 1.0
  %v2127 = vadd.f32 %v2125, 1.0
  %v2128 = vrcp.pop %v2126
  %v2129 = vmul.f32 1.0, %v2128
  %v2130 = vrcp.pop %v2127
  %v2131 = vmul.f32 1.0, %v2130
  %v2132 = vtanh.pop %v2102
  %v2133 = vtanh.pop %v2106
  %v2134 = vxor.u32 %v2103, 2147483648
  %v2135 = vxor.u32 %v2107, 2147483648
  %v2136 = vmul.f32 %v2134, 1.442695
  %v2137 = vpow.pop %v2136
  %v2138 = vmul.f32 %v2135, 1.442695
  %v2139 = vpow.pop %v2138
  %v2140 = vadd.f32 %v2137, 1.0
  %v2141 = vadd.f32 %v2139, 1.0
  %v2142 = vrcp.pop %v2140
  %v2143 = vmul.f32 1.0, %v2142
  %v2144 = vrcp.pop %v2141
  %v2145 = vmul.f32 1.0, %v2144
  %v2146 = vld [vmem:[#allocation3 + $0x10] sm:$0xff]
  %v2147 = vld [vmem:[#allocation3 + $0x18] sm:$0xff]
  %v2148 = vmul.f32 %v2129, %v2146
  %v2149 = vmul.f32 %v2131, %v2147
  %v2150 = vmul.f32 %v2117, %v2132
  %v2151 = vmul.f32 %v2119, %v2133
  %v2152 = vadd.f32 %v2148, %v2150
  %v2153 = vadd.f32 %v2149, %v2151
  %v2154 = vtanh.pop %v2152
  %v2155 = vtanh.pop %v2153
  %v2156 = vmul.f32 %v2143, %v2154
  %v2157 = vmul.f32 %v2145, %v2155
  %2158 = vst [vmem:[#allocation3 + $0x10] sm:$0xff] %v2152
  %2159 = vst [vmem:[#allocation3 + $0x18] sm:$0xff] %v2153
  %2160 = vst [vmem:[#allocation2 + $0x10] sm:$0xff] %v2156
  %2161 = vst [vmem:[#allocation2 + $0x18] sm:$0xff] %v2157
  %s2162 = scalar_lea.vmem %s0, 192
  %v2163 = vld [vmem:[%s2162] sm:$0xff]
  %v2164 = vld [vmem:[%s2162 + $0x8] sm:$0xff]
  %v2165 = vld [vmem:[%s2162 + $0x10] sm:$0xff]
  %v2166 = vld [vmem:[%s2162 + $0x18] sm:$0xff]
  %v2167 = vld [vmem:[%s2162 + $0x20] sm:$0xff]
  %v2168 = vld [vmem:[%s2162 + $0x28] sm:$0xff]
  %v2169 = vld [vmem:[%s2162 + $0x30] sm:$0xff]
  %v2170 = vld [vmem:[%s2162 + $0x38] sm:$0xff]
  %v2171 = vunpack.c.l.bf16 %v2163
  %v2172 = vunpack.c.h.bf16 %v2163
  %v2173 = vunpack.c.l.bf16 %v2164
  %v2174 = vunpack.c.h.bf16 %v2164
  %v2175 = vunpack.c.l.bf16 %v2165
  %v2176 = vunpack.c.h.bf16 %v2165
  %v2177 = vunpack.c.l.bf16 %v2166
  %v2178 = vunpack.c.h.bf16 %v2166
  %v2179 = vld [vmem:[#allocation2] sm:$0xff]
  %v2180 = vld [vmem:[#allocation2 + $0x8] sm:$0xff]
  %v2181 = vpack.c.bf16 %v2180, %v2179
  %v2182 = vld [vmem:[%s1] sm:$0xff]
  %v2183 = vld [vmem:[%s1 + $0x8] sm:$0xff]
  %v2184 = vld [vmem:[%s1 + $0x10] sm:$0xff]
  %v2185 = vld [vmem:[%s1 + $0x18] sm:$0xff]
  %v2186 = vld [vmem:[%s1 + $0x20] sm:$0xff]
  %v2187 = vld [vmem:[%s1 + $0x28] sm:$0xff]
  %v2188 = vld [vmem:[%s1 + $0x30] sm:$0xff]
  %v2189 = vld [vmem:[%s1 + $0x38] sm:$0xff]
  %v2190 = vld [vmem:[%s1 + $0x40] sm:$0xff]
  %v2191 = vld [vmem:[%s1 + $0x48] sm:$0xff]
  %v2192 = vld [vmem:[%s1 + $0x50] sm:$0xff]
  %v2193 = vld [vmem:[%s1 + $0x58] sm:$0xff]
  %v2194 = vld [vmem:[%s1 + $0x60] sm:$0xff]
  %v2195 = vld [vmem:[%s1 + $0x68] sm:$0xff]
  %v2196 = vld [vmem:[%s1 + $0x70] sm:$0xff]
  %v2197 = vld [vmem:[%s1 + $0x78] sm:$0xff]
  %v2198 = vld [vmem:[%s1 + $0x80] sm:$0xff]
  %v2199 = vld [vmem:[%s1 + $0x88] sm:$0xff]
  %v2200 = vld [vmem:[%s1 + $0x90] sm:$0xff]
  %v2201 = vld [vmem:[%s1 + $0x98] sm:$0xff]
  %v2202 = vld [vmem:[%s1 + $0xa0] sm:$0xff]
  %v2203 = vld [vmem:[%s1 + $0xa8] sm:$0xff]
  %v2204 = vld [vmem:[%s1 + $0xb0] sm:$0xff]
  %v2205 = vld [vmem:[%s1 + $0xb8] sm:$0xff]
  %v2206 = vld [vmem:[%s1 + $0xc0] sm:$0xff]
  %v2207 = vld [vmem:[%s1 + $0xc8] sm:$0xff]
  %v2208 = vld [vmem:[%s1 + $0xd0] sm:$0xff]
  %v2209 = vld [vmem:[%s1 + $0xd8] sm:$0xff]
  %v2210 = vld [vmem:[%s1 + $0xe0] sm:$0xff]
  %v2211 = vld [vmem:[%s1 + $0xe8] sm:$0xff]
  %v2212 = vld [vmem:[%s1 + $0xf0] sm:$0xff]
  %v2213 = vld [vmem:[%s1 + $0xf8] sm:$0xff]
  %v2246 = vunpack.c.l.b16 %v2182
  %v2247 = vunpack.c.h.b16 %v2182
  %v2248 = vunpack.c.l.b16 %v2183
  %v2249 = vunpack.c.h.b16 %v2183
  %v2250 = vunpack.c.l.b16 %v2184
  %v2251 = vunpack.c.h.b16 %v2184
  %v2252 = vunpack.c.l.b16 %v2185
  %v2253 = vunpack.c.h.b16 %v2185
  %v2254 = vunpack.c.l.b16 %v2186
  %v2255 = vunpack.c.h.b16 %v2186
  %v2256 = vunpack.c.l.b16 %v2187
  %v2257 = vunpack.c.h.b16 %v2187
  %v2258 = vunpack.c.l.b16 %v2188
  %v2259 = vunpack.c.h.b16 %v2188
  %v2260 = vunpack.c.l.b16 %v2189
  %v2261 = vunpack.c.h.b16 %v2189
  %v2262 = vunpack.c.l.b16 %v2190
  %v2263 = vunpack.c.h.b16 %v2190
  %v2264 = vunpack.c.l.b16 %v2191
  %v2265 = vunpack.c.h.b16 %v2191
  %v2266 = vunpack.c.l.b16 %v2192
  %v2267 = vunpack.c.h.b16 %v2192
  %v2268 = vunpack.c.l.b16 %v2193
  %v2269 = vunpack.c.h.b16 %v2193
  %v2270 = vunpack.c.l.b16 %v2194
  %v2271 = vunpack.c.h.b16 %v2194
  %v2272 = vunpack.c.l.b16 %v2195
  %v2273 = vunpack.c.h.b16 %v2195
  %v2274 = vunpack.c.l.b16 %v2196
  %v2275 = vunpack.c.h.b16 %v2196
  %v2276 = vunpack.c.l.b16 %v2197
  %v2277 = vunpack.c.h.b16 %v2197
  %v2278 = vunpack.c.l.b16 %v2198
  %v2279 = vunpack.c.h.b16 %v2198
  %v2280 = vunpack.c.l.b16 %v2199
  %v2281 = vunpack.c.h.b16 %v2199
  %v2282 = vunpack.c.l.b16 %v2200
  %v2283 = vunpack.c.h.b16 %v2200
  %v2284 = vunpack.c.l.b16 %v2201
  %v2285 = vunpack.c.h.b16 %v2201
  %v2286 = vunpack.c.l.b16 %v2202
  %v2287 = vunpack.c.h.b16 %v2202
  %v2288 = vunpack.c.l.b16 %v2203
  %v2289 = vunpack.c.h.b16 %v2203
  %v2290 = vunpack.c.l.b16 %v2204
  %v2291 = vunpack.c.h.b16 %v2204
  %v2292 = vunpack.c.l.b16 %v2205
  %v2293 = vunpack.c.h.b16 %v2205
  %v2294 = vunpack.c.l.b16 %v2206
  %v2295 = vunpack.c.h.b16 %v2206
  %v2296 = vunpack.c.l.b16 %v2207
  %v2297 = vunpack.c.h.b16 %v2207
  %v2298 = vunpack.c.l.b16 %v2208
  %v2299 = vunpack.c.h.b16 %v2208
  %v2300 = vunpack.c.l.b16 %v2209
  %v2301 = vunpack.c.h.b16 %v2209
  %v2302 = vunpack.c.l.b16 %v2210
  %v2303 = vunpack.c.h.b16 %v2210
  %v2304 = vunpack.c.l.b16 %v2211
  %v2305 = vunpack.c.h.b16 %v2211
  %v2306 = vunpack.c.l.b16 %v2212
  %v2307 = vunpack.c.h.b16 %v2212
  %v2308 = vunpack.c.l.b16 %v2213
  %v2309 = vunpack.c.h.b16 %v2213
  %v2310 = vpack.c.b16 %v2250, %v2246
  %v2311 = vpack.c.b16 %v2251, %v2247
  %v2312 = vpack.c.b16 %v2252, %v2248
  %v2313 = vpack.c.b16 %v2253, %v2249
  %v2314 = vpack.c.b16 %v2258, %v2254
  %v2315 = vpack.c.b16 %v2259, %v2255
  %v2316 = vpack.c.b16 %v2260, %v2256
  %v2317 = vpack.c.b16 %v2261, %v2257
  %v2318 = vpack.c.b16 %v2266, %v2262
  %v2319 = vpack.c.b16 %v2267, %v2263
  %v2320 = vpack.c.b16 %v2268, %v2264
  %v2321 = vpack.c.b16 %v2269, %v2265
  %v2322 = vpack.c.b16 %v2274, %v2270
  %v2323 = vpack.c.b16 %v2275, %v2271
  %v2324 = vpack.c.b16 %v2276, %v2272
  %v2325 = vpack.c.b16 %v2277, %v2273
  %v2326 = vpack.c.b16 %v2282, %v2278
  %v2327 = vpack.c.b16 %v2283, %v2279
  %v2328 = vpack.c.b16 %v2284, %v2280
  %v2329 = vpack.c.b16 %v2285, %v2281
  %v2330 = vpack.c.b16 %v2290, %v2286
  %v2331 = vpack.c.b16 %v2291, %v2287
  %v2332 = vpack.c.b16 %v2292, %v2288
  %v2333 = vpack.c.b16 %v2293, %v2289
  %v2334 = vpack.c.b16 %v2298, %v2294
  %v2335 = vpack.c.b16 %v2299, %v2295
  %v2336 = vpack.c.b16 %v2300, %v2296
  %v2337 = vpack.c.b16 %v2301, %v2297
  %v2338 = vpack.c.b16 %v2306, %v2302
  %v2339 = vpack.c.b16 %v2307, %v2303
  %v2340 = vpack.c.b16 %v2308, %v2304
  %v2341 = vpack.c.b16 %v2309, %v2305
  %2374 = vmatprep.subr.bf16.mxu0 %v2311
  %2375 = vmatpush1.bf16.msra.mxu0 %v2310
  %2376 = vmatprep.subr.bf16.mxu0 %v2315
  %2377 = vmatpush1.bf16.msra.mxu0 %v2314
  %2378 = vmatprep.subr.bf16.mxu0 %v2319
  %2379 = vmatpush1.bf16.msra.mxu0 %v2318
  %2380 = vmatprep.subr.bf16.mxu0 %v2323
  %2381 = vmatpush1.bf16.msra.mxu0 %v2322
  %2382 = vmatprep.subr.bf16.mxu0 %v2327
  %2383 = vmatpush1.bf16.msra.mxu0 %v2326
  %2384 = vmatprep.subr.bf16.mxu0 %v2331
  %2385 = vmatpush1.bf16.msra.mxu0 %v2330
  %2386 = vmatprep.subr.bf16.mxu0 %v2335
  %2387 = vmatpush1.bf16.msra.mxu0 %v2334
  %2388 = vmatprep.subr.bf16.mxu0 %v2339
  %2389 = vmatpush1.bf16.msra.mxu0 %v2338
  %2390 = vmatprep.subr.bf16.mxu0 0
  %2391 = vmatpush1.bf16.msra.mxu0 0
  %2392 = vmatprep.subr.bf16.mxu0 0
  %2393 = vmatpush1.bf16.msra.mxu0 0
  %2394 = vmatprep.subr.bf16.mxu0 0
  %2395 = vmatpush1.bf16.msra.mxu0 0
  %2396 = vmatprep.subr.bf16.mxu0 0
  %2397 = vmatpush1.bf16.msra.mxu0 0
  %2398 = vmatprep.subr.bf16.mxu0 0
  %2399 = vmatpush1.bf16.msra.mxu0 0
  %2400 = vmatprep.subr.bf16.mxu0 0
  %2401 = vmatpush1.bf16.msra.mxu0 0
  %2402 = vmatprep.subr.bf16.mxu0 0
  %2403 = vmatpush1.bf16.msra.mxu0 0
  %2404 = vmatprep.subr.bf16.mxu0 0
  %2405 = vmatpush1.bf16.msra.mxu0 0
  %2406 = vmatprep.mubr.bf16.mxu0 0
  %2407 = vmatmul.mubr.bf16.gmra.mrb[0].mxu0 %v2181
  %v2408 = vpop.f32.mrb[0].mxu0
  %v2409 = vadd.f32 0.0, %v2408
  %v2410 = vpop.f32.mrb[0].mxu0
  %v2411 = vadd.f32 0.0, %v2410
  %v2412 = vpop.f32.mrb[0].mxu0
  %v2413 = vadd.f32 0.0, %v2412
  %v2414 = vpop.f32.mrb[0].mxu0
  %v2415 = vadd.f32 0.0, %v2414
  %2416 = vdwg.mxu0
  %2417 = vmatprep.subr.bf16.mxu0 %v2313
  %2418 = vmatpush1.bf16.msra.mxu0 %v2312
  %2419 = vmatprep.subr.bf16.mxu0 %v2317
  %2420 = vmatpush1.bf16.msra.mxu0 %v2316
  %2421 = vmatprep.subr.bf16.mxu0 %v2321
  %2422 = vmatpush1.bf16.msra.mxu0 %v2320
  %2423 = vmatprep.subr.bf16.mxu0 %v2325
  %2424 = vmatpush1.bf16.msra.mxu0 %v2324
  %2425 = vmatprep.subr.bf16.mxu0 %v2329
  %2426 = vmatpush1.bf16.msra.mxu0 %v2328
  %2427 = vmatprep.subr.bf16.mxu0 %v2333
  %2428 = vmatpush1.bf16.msra.mxu0 %v2332
  %2429 = vmatprep.subr.bf16.mxu0 %v2337
  %2430 = vmatpush1.bf16.msra.mxu0 %v2336
  %2431 = vmatprep.subr.bf16.mxu0 %v2341
  %2432 = vmatpush1.bf16.msra.mxu0 %v2340
  %2433 = vmatprep.subr.bf16.mxu0 0
  %2434 = vmatpush1.bf16.msra.mxu0 0
  %2435 = vmatprep.subr.bf16.mxu0 0
  %2436 = vmatpush1.bf16.msra.mxu0 0
  %2437 = vmatprep.subr.bf16.mxu0 0
  %2438 = vmatpush1.bf16.msra.mxu0 0
  %2439 = vmatprep.subr.bf16.mxu0 0
  %2440 = vmatpush1.bf16.msra.mxu0 0
  %2441 = vmatprep.subr.bf16.mxu0 0
  %2442 = vmatpush1.bf16.msra.mxu0 0
  %2443 = vmatprep.subr.bf16.mxu0 0
  %2444 = vmatpush1.bf16.msra.mxu0 0
  %2445 = vmatprep.subr.bf16.mxu0 0
  %2446 = vmatpush1.bf16.msra.mxu0 0
  %2447 = vmatprep.subr.bf16.mxu0 0
  %2448 = vmatpush1.bf16.msra.mxu0 0
  %2449 = vmatprep.mubr.bf16.mxu0 0
  %2450 = vmatmul.mubr.bf16.gmra.mrb[0].mxu0 %v2181
  %v2451 = vpop.f32.mrb[0].mxu0
  %v2452 = vadd.f32 0.0, %v2451
  %v2453 = vpop.f32.mrb[0].mxu0
  %v2454 = vadd.f32 0.0, %v2453
  %v2455 = vpop.f32.mrb[0].mxu0
  %v2456 = vadd.f32 0.0, %v2455
  %v2457 = vpop.f32.mrb[0].mxu0
  %v2458 = vadd.f32 0.0, %v2457
  %2459 = vdwg.mxu0
  %v2460 = vadd.f32 %v2171, %v2409
  %v2461 = vadd.f32 %v2172, %v2411
  %v2462 = vadd.f32 %v2173, %v2452
  %v2463 = vadd.f32 %v2174, %v2454
  %v2464 = vadd.f32 %v2175, %v2413
  %v2465 = vadd.f32 %v2176, %v2415
  %v2466 = vadd.f32 %v2177, %v2456
  %v2467 = vadd.f32 %v2178, %v2458
  %v2468 = vxor.u32 %v2460, 2147483648
  %v2469 = vxor.u32 %v2464, 2147483648
  %v2470 = vmul.f32 %v2468, 1.442695
  %v2471 = vpow.pop %v2470
  %v2472 = vmul.f32 %v2469, 1.442695
  %v2473 = vpow.pop %v2472
  %v2474 = vadd.f32 %v2471, 1.0
  %v2475 = vadd.f32 %v2473, 1.0
  %v2476 = vrcp.pop %v2474
  %v2477 = vmul.f32 1.0, %v2476
  %v2478 = vrcp.pop %v2475
  %v2479 = vmul.f32 1.0, %v2478
  %v2480 = vxor.u32 %v2461, 2147483648
  %v2481 = vxor.u32 %v2465, 2147483648
  %v2482 = vmul.f32 %v2480, 1.442695
  %v2483 = vpow.pop %v2482
  %v2484 = vmul.f32 %v2481, 1.442695
  %v2485 = vpow.pop %v2484
  %v2486 = vadd.f32 %v2483, 1.0
  %v2487 = vadd.f32 %v2485, 1.0
  %v2488 = vrcp.pop %v2486
  %v2489 = vmul.f32 1.0, %v2488
  %v2490 = vrcp.pop %v2487
  %v2491 = vmul.f32 1.0, %v2490
  %v2492 = vtanh.pop %v2462
  %v2493 = vtanh.pop %v2466
  %v2494 = vxor.u32 %v2463, 2147483648
  %v2495 = vxor.u32 %v2467, 2147483648
  %v2496 = vmul.f32 %v2494, 1.442695
  %v2497 = vpow.pop %v2496
  %v2498 = vmul.f32 %v2495, 1.442695
  %v2499 = vpow.pop %v2498
  %v2500 = vadd.f32 %v2497, 1.0
  %v2501 = vadd.f32 %v2499, 1.0
  %v2502 = vrcp.pop %v2500
  %v2503 = vmul.f32 1.0, %v2502
  %v2504 = vrcp.pop %v2501
  %v2505 = vmul.f32 1.0, %v2504
  %v2506 = vld [vmem:[#allocation3] sm:$0xff]
  %v2507 = vld [vmem:[#allocation3 + $0x8] sm:$0xff]
  %v2508 = vmul.f32 %v2489, %v2506
  %v2509 = vmul.f32 %v2491, %v2507
  %v2510 = vmul.f32 %v2477, %v2492
  %v2511 = vmul.f32 %v2479, %v2493
  %v2512 = vadd.f32 %v2508, %v2510
  %v2513 = vadd.f32 %v2509, %v2511
  %v2514 = vtanh.pop %v2512
  %v2515 = vtanh.pop %v2513
  %v2516 = vmul.f32 %v2503, %v2514
  %v2517 = vmul.f32 %v2505, %v2515
  %2518 = vst [vmem:[#allocation3] sm:$0xff] %v2512
  %2519 = vst [vmem:[#allocation3 + $0x8] sm:$0xff] %v2513
  %2520 = vst [vmem:[#allocation2] sm:$0xff] %v2516
  %2521 = vst [vmem:[#allocation2 + $0x8] sm:$0xff] %v2517
  %v2522 = vunpack.c.l.bf16 %v2167
  %v2523 = vunpack.c.h.bf16 %v2167
  %v2524 = vunpack.c.l.bf16 %v2168
  %v2525 = vunpack.c.h.bf16 %v2168
  %v2526 = vunpack.c.l.bf16 %v2169
  %v2527 = vunpack.c.h.bf16 %v2169
  %v2528 = vunpack.c.l.bf16 %v2170
  %v2529 = vunpack.c.h.bf16 %v2170
  %v2530 = vld [vmem:[#allocation2 + $0x10] sm:$0xff]
  %v2531 = vld [vmem:[#allocation2 + $0x18] sm:$0xff]
  %v2532 = vpack.c.bf16 %v2531, %v2530
  %v2533 = vld [vmem:[%s1] sm:$0xff]
  %v2534 = vld [vmem:[%s1 + $0x8] sm:$0xff]
  %v2535 = vld [vmem:[%s1 + $0x10] sm:$0xff]
  %v2536 = vld [vmem:[%s1 + $0x18] sm:$0xff]
  %v2537 = vld [vmem:[%s1 + $0x20] sm:$0xff]
  %v2538 = vld [vmem:[%s1 + $0x28] sm:$0xff]
  %v2539 = vld [vmem:[%s1 + $0x30] sm:$0xff]
  %v2540 = vld [vmem:[%s1 + $0x38] sm:$0xff]
  %v2541 = vld [vmem:[%s1 + $0x40] sm:$0xff]
  %v2542 = vld [vmem:[%s1 + $0x48] sm:$0xff]
  %v2543 = vld [vmem:[%s1 + $0x50] sm:$0xff]
  %v2544 = vld [vmem:[%s1 + $0x58] sm:$0xff]
  %v2545 = vld [vmem:[%s1 + $0x60] sm:$0xff]
  %v2546 = vld [vmem:[%s1 + $0x68] sm:$0xff]
  %v2547 = vld [vmem:[%s1 + $0x70] sm:$0xff]
  %v2548 = vld [vmem:[%s1 + $0x78] sm:$0xff]
  %v2549 = vld [vmem:[%s1 + $0x80] sm:$0xff]
  %v2550 = vld [vmem:[%s1 + $0x88] sm:$0xff]
  %v2551 = vld [vmem:[%s1 + $0x90] sm:$0xff]
  %v2552 = vld [vmem:[%s1 + $0x98] sm:$0xff]
  %v2553 = vld [vmem:[%s1 + $0xa0] sm:$0xff]
  %v2554 = vld [vmem:[%s1 + $0xa8] sm:$0xff]
  %v2555 = vld [vmem:[%s1 + $0xb0] sm:$0xff]
  %v2556 = vld [vmem:[%s1 + $0xb8] sm:$0xff]
  %v2557 = vld [vmem:[%s1 + $0xc0] sm:$0xff]
  %v2558 = vld [vmem:[%s1 + $0xc8] sm:$0xff]
  %v2559 = vld [vmem:[%s1 + $0xd0] sm:$0xff]
  %v2560 = vld [vmem:[%s1 + $0xd8] sm:$0xff]
  %v2561 = vld [vmem:[%s1 + $0xe0] sm:$0xff]
  %v2562 = vld [vmem:[%s1 + $0xe8] sm:$0xff]
  %v2563 = vld [vmem:[%s1 + $0xf0] sm:$0xff]
  %v2564 = vld [vmem:[%s1 + $0xf8] sm:$0xff]
  %v2597 = vunpack.c.l.b16 %v2533
  %v2598 = vunpack.c.h.b16 %v2533
  %v2599 = vunpack.c.l.b16 %v2534
  %v2600 = vunpack.c.h.b16 %v2534
  %v2601 = vunpack.c.l.b16 %v2535
  %v2602 = vunpack.c.h.b16 %v2535
  %v2603 = vunpack.c.l.b16 %v2536
  %v2604 = vunpack.c.h.b16 %v2536
  %v2605 = vunpack.c.l.b16 %v2537
  %v2606 = vunpack.c.h.b16 %v2537
  %v2607 = vunpack.c.l.b16 %v2538
  %v2608 = vunpack.c.h.b16 %v2538
  %v2609 = vunpack.c.l.b16 %v2539
  %v2610 = vunpack.c.h.b16 %v2539
  %v2611 = vunpack.c.l.b16 %v2540
  %v2612 = vunpack.c.h.b16 %v2540
  %v2613 = vunpack.c.l.b16 %v2541
  %v2614 = vunpack.c.h.b16 %v2541
  %v2615 = vunpack.c.l.b16 %v2542
  %v2616 = vunpack.c.h.b16 %v2542
  %v2617 = vunpack.c.l.b16 %v2543
  %v2618 = vunpack.c.h.b16 %v2543
  %v2619 = vunpack.c.l.b16 %v2544
  %v2620 = vunpack.c.h.b16 %v2544
  %v2621 = vunpack.c.l.b16 %v2545
  %v2622 = vunpack.c.h.b16 %v2545
  %v2623 = vunpack.c.l.b16 %v2546
  %v2624 = vunpack.c.h.b16 %v2546
  %v2625 = vunpack.c.l.b16 %v2547
  %v2626 = vunpack.c.h.b16 %v2547
  %v2627 = vunpack.c.l.b16 %v2548
  %v2628 = vunpack.c.h.b16 %v2548
  %v2629 = vunpack.c.l.b16 %v2549
  %v2630 = vunpack.c.h.b16 %v2549
  %v2631 = vunpack.c.l.b16 %v2550
  %v2632 = vunpack.c.h.b16 %v2550
  %v2633 = vunpack.c.l.b16 %v2551
  %v2634 = vunpack.c.h.b16 %v2551
  %v2635 = vunpack.c.l.b16 %v2552
  %v2636 = vunpack.c.h.b16 %v2552
  %v2637 = vunpack.c.l.b16 %v2553
  %v2638 = vunpack.c.h.b16 %v2553
  %v2639 = vunpack.c.l.b16 %v2554
  %v2640 = vunpack.c.h.b16 %v2554
  %v2641 = vunpack.c.l.b16 %v2555
  %v2642 = vunpack.c.h.b16 %v2555
  %v2643 = vunpack.c.l.b16 %v2556
  %v2644 = vunpack.c.h.b16 %v2556
  %v2645 = vunpack.c.l.b16 %v2557
  %v2646 = vunpack.c.h.b16 %v2557
  %v2647 = vunpack.c.l.b16 %v2558
  %v2648 = vunpack.c.h.b16 %v2558
  %v2649 = vunpack.c.l.b16 %v2559
  %v2650 = vunpack.c.h.b16 %v2559
  %v2651 = vunpack.c.l.b16 %v2560
  %v2652 = vunpack.c.h.b16 %v2560
  %v2653 = vunpack.c.l.b16 %v2561
  %v2654 = vunpack.c.h.b16 %v2561
  %v2655 = vunpack.c.l.b16 %v2562
  %v2656 = vunpack.c.h.b16 %v2562
  %v2657 = vunpack.c.l.b16 %v2563
  %v2658 = vunpack.c.h.b16 %v2563
  %v2659 = vunpack.c.l.b16 %v2564
  %v2660 = vunpack.c.h.b16 %v2564
  %v2661 = vpack.c.b16 %v2601, %v2597
  %v2662 = vpack.c.b16 %v2602, %v2598
  %v2663 = vpack.c.b16 %v2603, %v2599
  %v2664 = vpack.c.b16 %v2604, %v2600
  %v2665 = vpack.c.b16 %v2609, %v2605
  %v2666 = vpack.c.b16 %v2610, %v2606
  %v2667 = vpack.c.b16 %v2611, %v2607
  %v2668 = vpack.c.b16 %v2612, %v2608
  %v2669 = vpack.c.b16 %v2617, %v2613
  %v2670 = vpack.c.b16 %v2618, %v2614
  %v2671 = vpack.c.b16 %v2619, %v2615
  %v2672 = vpack.c.b16 %v2620, %v2616
  %v2673 = vpack.c.b16 %v2625, %v2621
  %v2674 = vpack.c.b16 %v2626, %v2622
  %v2675 = vpack.c.b16 %v2627, %v2623
  %v2676 = vpack.c.b16 %v2628, %v2624
  %v2677 = vpack.c.b16 %v2633, %v2629
  %v2678 = vpack.c.b16 %v2634, %v2630
  %v2679 = vpack.c.b16 %v2635, %v2631
  %v2680 = vpack.c.b16 %v2636, %v2632
  %v2681 = vpack.c.b16 %v2641, %v2637
  %v2682 = vpack.c.b16 %v2642, %v2638
  %v2683 = vpack.c.b16 %v2643, %v2639
  %v2684 = vpack.c.b16 %v2644, %v2640
  %v2685 = vpack.c.b16 %v2649, %v2645
  %v2686 = vpack.c.b16 %v2650, %v2646
  %v2687 = vpack.c.b16 %v2651, %v2647
  %v2688 = vpack.c.b16 %v2652, %v2648
  %v2689 = vpack.c.b16 %v2657, %v2653
  %v2690 = vpack.c.b16 %v2658, %v2654
  %v2691 = vpack.c.b16 %v2659, %v2655
  %v2692 = vpack.c.b16 %v2660, %v2656
  %2725 = vmatprep.subr.bf16.mxu0 %v2662
  %2726 = vmatpush1.bf16.msra.mxu0 %v2661
  %2727 = vmatprep.subr.bf16.mxu0 %v2666
  %2728 = vmatpush1.bf16.msra.mxu0 %v2665
  %2729 = vmatprep.subr.bf16.mxu0 %v2670
  %2730 = vmatpush1.bf16.msra.mxu0 %v2669
  %2731 = vmatprep.subr.bf16.mxu0 %v2674
  %2732 = vmatpush1.bf16.msra.mxu0 %v2673
  %2733 = vmatprep.subr.bf16.mxu0 %v2678
  %2734 = vmatpush1.bf16.msra.mxu0 %v2677
  %2735 = vmatprep.subr.bf16.mxu0 %v2682
  %2736 = vmatpush1.bf16.msra.mxu0 %v2681
  %2737 = vmatprep.subr.bf16.mxu0 %v2686
  %2738 = vmatpush1.bf16.msra.mxu0 %v2685
  %2739 = vmatprep.subr.bf16.mxu0 %v2690
  %2740 = vmatpush1.bf16.msra.mxu0 %v2689
  %2741 = vmatprep.subr.bf16.mxu0 0
  %2742 = vmatpush1.bf16.msra.mxu0 0
  %2743 = vmatprep.subr.bf16.mxu0 0
  %2744 = vmatpush1.bf16.msra.mxu0 0
  %2745 = vmatprep.subr.bf16.mxu0 0
  %2746 = vmatpush1.bf16.msra.mxu0 0
  %2747 = vmatprep.subr.bf16.mxu0 0
  %2748 = vmatpush1.bf16.msra.mxu0 0
  %2749 = vmatprep.subr.bf16.mxu0 0
  %2750 = vmatpush1.bf16.msra.mxu0 0
  %2751 = vmatprep.subr.bf16.mxu0 0
  %2752 = vmatpush1.bf16.msra.mxu0 0
  %2753 = vmatprep.subr.bf16.mxu0 0
  %2754 = vmatpush1.bf16.msra.mxu0 0
  %2755 = vmatprep.subr.bf16.mxu0 0
  %2756 = vmatpush1.bf16.msra.mxu0 0
  %2757 = vmatprep.mubr.bf16.mxu0 0
  %2758 = vmatmul.mubr.bf16.gmra.mrb[0].mxu0 %v2532
  %v2759 = vpop.f32.mrb[0].mxu0
  %v2760 = vadd.f32 0.0, %v2759
  %v2761 = vpop.f32.mrb[0].mxu0
  %v2762 = vadd.f32 0.0, %v2761
  %v2763 = vpop.f32.mrb[0].mxu0
  %v2764 = vadd.f32 0.0, %v2763
  %v2765 = vpop.f32.mrb[0].mxu0
  %v2766 = vadd.f32 0.0, %v2765
  %2767 = vdwg.mxu0
  %2768 = vmatprep.subr.bf16.mxu0 %v2664
  %2769 = vmatpush1.bf16.msra.mxu0 %v2663
  %2770 = vmatprep.subr.bf16.mxu0 %v2668
  %2771 = vmatpush1.bf16.msra.mxu0 %v2667
  %2772 = vmatprep.subr.bf16.mxu0 %v2672
  %2773 = vmatpush1.bf16.msra.mxu0 %v2671
  %2774 = vmatprep.subr.bf16.mxu0 %v2676
  %2775 = vmatpush1.bf16.msra.mxu0 %v2675
  %2776 = vmatprep.subr.bf16.mxu0 %v2680
  %2777 = vmatpush1.bf16.msra.mxu0 %v2679
  %2778 = vmatprep.subr.bf16.mxu0 %v2684
  %2779 = vmatpush1.bf16.msra.mxu0 %v2683
  %2780 = vmatprep.subr.bf16.mxu0 %v2688
  %2781 = vmatpush1.bf16.msra.mxu0 %v2687
  %2782 = vmatprep.subr.bf16.mxu0 %v2692
  %2783 = vmatpush1.bf16.msra.mxu0 %v2691
  %2784 = vmatprep.subr.bf16.mxu0 0
  %2785 = vmatpush1.bf16.msra.mxu0 0
  %2786 = vmatprep.subr.bf16.mxu0 0
  %2787 = vmatpush1.bf16.msra.mxu0 0
  %2788 = vmatprep.subr.bf16.mxu0 0
  %2789 = vmatpush1.bf16.msra.mxu0 0
  %2790 = vmatprep.subr.bf16.mxu0 0
  %2791 = vmatpush1.bf16.msra.mxu0 0
  %2792 = vmatprep.subr.bf16.mxu0 0
  %2793 = vmatpush1.bf16.msra.mxu0 0
  %2794 = vmatprep.subr.bf16.mxu0 0
  %2795 = vmatpush1.bf16.msra.mxu0 0
  %2796 = vmatprep.subr.bf16.mxu0 0
  %2797 = vmatpush1.bf16.msra.mxu0 0
  %2798 = vmatprep.subr.bf16.mxu0 0
  %2799 = vmatpush1.bf16.msra.mxu0 0
  %2800 = vmatprep.mubr.bf16.mxu0 0
  %2801 = vmatmul.mubr.bf16.gmra.mrb[0].mxu0 %v2532
  %v2802 = vpop.f32.mrb[0].mxu0
  %v2803 = vadd.f32 0.0, %v2802
  %v2804 = vpop.f32.mrb[0].mxu0
  %v2805 = vadd.f32 0.0, %v2804
  %v2806 = vpop.f32.mrb[0].mxu0
  %v2807 = vadd.f32 0.0, %v2806
  %v2808 = vpop.f32.mrb[0].mxu0
  %v2809 = vadd.f32 0.0, %v2808
  %2810 = vdwg.mxu0
  %v2811 = vadd.f32 %v2522, %v2760
  %v2812 = vadd.f32 %v2523, %v2762
  %v2813 = vadd.f32 %v2524, %v2803
  %v2814 = vadd.f32 %v2525, %v2805
  %v2815 = vadd.f32 %v2526, %v2764
  %v2816 = vadd.f32 %v2527, %v2766
  %v2817 = vadd.f32 %v2528, %v2807
  %v2818 = vadd.f32 %v2529, %v2809
  %v2819 = vxor.u32 %v2811, 2147483648
  %v2820 = vxor.u32 %v2815, 2147483648
  %v2821 = vmul.f32 %v2819, 1.442695
  %v2822 = vpow.pop %v2821
  %v2823 = vmul.f32 %v2820, 1.442695
  %v2824 = vpow.pop %v2823
  %v2825 = vadd.f32 %v2822, 1.0
  %v2826 = vadd.f32 %v2824, 1.0
  %v2827 = vrcp.pop %v2825
  %v2828 = vmul.f32 1.0, %v2827
  %v2829 = vrcp.pop %v2826
  %v2830 = vmul.f32 1.0, %v2829
  %v2831 = vxor.u32 %v2812, 2147483648
  %v2832 = vxor.u32 %v2816, 2147483648
  %v2833 = vmul.f32 %v2831, 1.442695
  %v2834 = vpow.pop %v2833
  %v2835 = vmul.f32 %v2832, 1.442695
  %v2836 = vpow.pop %v2835
  %v2837 = vadd.f32 %v2834, 1.0
  %v2838 = vadd.f32 %v2836, 1.0
  %v2839 = vrcp.pop %v2837
  %v2840 = vmul.f32 1.0, %v2839
  %v2841 = vrcp.pop %v2838
  %v2842 = vmul.f32 1.0, %v2841
  %v2843 = vtanh.pop %v2813
  %v2844 = vtanh.pop %v2817
  %v2845 = vxor.u32 %v2814, 2147483648
  %v2846 = vxor.u32 %v2818, 2147483648
  %v2847 = vmul.f32 %v2845, 1.442695
  %v2848 = vpow.pop %v2847
  %v2849 = vmul.f32 %v2846, 1.442695
  %v2850 = vpow.pop %v2849
  %v2851 = vadd.f32 %v2848, 1.0
  %v2852 = vadd.f32 %v2850, 1.0
  %v2853 = vrcp.pop %v2851
  %v2854 = vmul.f32 1.0, %v2853
  %v2855 = vrcp.pop %v2852
  %v2856 = vmul.f32 1.0, %v2855
  %v2857 = vld [vmem:[#allocation3 + $0x10] sm:$0xff]
  %v2858 = vld [vmem:[#allocation3 + $0x18] sm:$0xff]
  %v2859 = vmul.f32 %v2840, %v2857
  %v2860 = vmul.f32 %v2842, %v2858
  %v2861 = vmul.f32 %v2828, %v2843
  %v2862 = vmul.f32 %v2830, %v2844
  %v2863 = vadd.f32 %v2859, %v2861
  %v2864 = vadd.f32 %v2860, %v2862
  %v2865 = vtanh.pop %v2863
  %v2866 = vtanh.pop %v2864
  %v2867 = vmul.f32 %v2854, %v2865
  %v2868 = vmul.f32 %v2856, %v2866
  %2869 = vst [vmem:[#allocation3 + $0x10] sm:$0xff] %v2863
  %2870 = vst [vmem:[#allocation3 + $0x18] sm:$0xff] %v2864
  %2871 = vst [vmem:[#allocation2 + $0x10] sm:$0xff] %v2867
  %2872 = vst [vmem:[#allocation2 + $0x18] sm:$0xff] %v2868
  %s2873 = scalar_lea.vmem %s0, 256
  %v2874 = vld [vmem:[%s2873] sm:$0xff]
  %v2875 = vld [vmem:[%s2873 + $0x8] sm:$0xff]
  %v2876 = vld [vmem:[%s2873 + $0x10] sm:$0xff]
  %v2877 = vld [vmem:[%s2873 + $0x18] sm:$0xff]
  %v2878 = vld [vmem:[%s2873 + $0x20] sm:$0xff]
  %v2879 = vld [vmem:[%s2873 + $0x28] sm:$0xff]
  %v2880 = vld [vmem:[%s2873 + $0x30] sm:$0xff]
  %v2881 = vld [vmem:[%s2873 + $0x38] sm:$0xff]
  %v2882 = vunpack.c.l.bf16 %v2874
  %v2883 = vunpack.c.h.bf16 %v2874
  %v2884 = vunpack.c.l.bf16 %v2875
  %v2885 = vunpack.c.h.bf16 %v2875
  %v2886 = vunpack.c.l.bf16 %v2876
  %v2887 = vunpack.c.h.bf16 %v2876
  %v2888 = vunpack.c.l.bf16 %v2877
  %v2889 = vunpack.c.h.bf16 %v2877
  %v2890 = vld [vmem:[#allocation2] sm:$0xff]
  %v2891 = vld [vmem:[#allocation2 + $0x8] sm:$0xff]
  %v2892 = vpack.c.bf16 %v2891, %v2890
  %v2893 = vld [vmem:[%s1] sm:$0xff]
  %v2894 = vld [vmem:[%s1 + $0x8] sm:$0xff]
  %v2895 = vld [vmem:[%s1 + $0x10] sm:$0xff]
  %v2896 = vld [vmem:[%s1 + $0x18] sm:$0xff]
  %v2897 = vld [vmem:[%s1 + $0x20] sm:$0xff]
  %v2898 = vld [vmem:[%s1 + $0x28] sm:$0xff]
  %v2899 = vld [vmem:[%s1 + $0x30] sm:$0xff]
  %v2900 = vld [vmem:[%s1 + $0x38] sm:$0xff]
  %v2901 = vld [vmem:[%s1 + $0x40] sm:$0xff]
  %v2902 = vld [vmem:[%s1 + $0x48] sm:$0xff]
  %v2903 = vld [vmem:[%s1 + $0x50] sm:$0xff]
  %v2904 = vld [vmem:[%s1 + $0x58] sm:$0xff]
  %v2905 = vld [vmem:[%s1 + $0x60] sm:$0xff]
  %v2906 = vld [vmem:[%s1 + $0x68] sm:$0xff]
  %v2907 = vld [vmem:[%s1 + $0x70] sm:$0xff]
  %v2908 = vld [vmem:[%s1 + $0x78] sm:$0xff]
  %v2909 = vld [vmem:[%s1 + $0x80] sm:$0xff]
  %v2910 = vld [vmem:[%s1 + $0x88] sm:$0xff]
  %v2911 = vld [vmem:[%s1 + $0x90] sm:$0xff]
  %v2912 = vld [vmem:[%s1 + $0x98] sm:$0xff]
  %v2913 = vld [vmem:[%s1 + $0xa0] sm:$0xff]
  %v2914 = vld [vmem:[%s1 + $0xa8] sm:$0xff]
  %v2915 = vld [vmem:[%s1 + $0xb0] sm:$0xff]
  %v2916 = vld [vmem:[%s1 + $0xb8] sm:$0xff]
  %v2917 = vld [vmem:[%s1 + $0xc0] sm:$0xff]
  %v2918 = vld [vmem:[%s1 + $0xc8] sm:$0xff]
  %v2919 = vld [vmem:[%s1 + $0xd0] sm:$0xff]
  %v2920 = vld [vmem:[%s1 + $0xd8] sm:$0xff]
  %v2921 = vld [vmem:[%s1 + $0xe0] sm:$0xff]
  %v2922 = vld [vmem:[%s1 + $0xe8] sm:$0xff]
  %v2923 = vld [vmem:[%s1 + $0xf0] sm:$0xff]
  %v2924 = vld [vmem:[%s1 + $0xf8] sm:$0xff]
  %v2957 = vunpack.c.l.b16 %v2893
  %v2958 = vunpack.c.h.b16 %v2893
  %v2959 = vunpack.c.l.b16 %v2894
  %v2960 = vunpack.c.h.b16 %v2894
  %v2961 = vunpack.c.l.b16 %v2895
  %v2962 = vunpack.c.h.b16 %v2895
  %v2963 = vunpack.c.l.b16 %v2896
  %v2964 = vunpack.c.h.b16 %v2896
  %v2965 = vunpack.c.l.b16 %v2897
  %v2966 = vunpack.c.h.b16 %v2897
  %v2967 = vunpack.c.l.b16 %v2898
  %v2968 = vunpack.c.h.b16 %v2898
  %v2969 = vunpack.c.l.b16 %v2899
  %v2970 = vunpack.c.h.b16 %v2899
  %v2971 = vunpack.c.l.b16 %v2900
  %v2972 = vunpack.c.h.b16 %v2900
  %v2973 = vunpack.c.l.b16 %v2901
  %v2974 = vunpack.c.h.b16 %v2901
  %v2975 = vunpack.c.l.b16 %v2902
  %v2976 = vunpack.c.h.b16 %v2902
  %v2977 = vunpack.c.l.b16 %v2903
  %v2978 = vunpack.c.h.b16 %v2903
  %v2979 = vunpack.c.l.b16 %v2904
  %v2980 = vunpack.c.h.b16 %v2904
  %v2981 = vunpack.c.l.b16 %v2905
  %v2982 = vunpack.c.h.b16 %v2905
  %v2983 = vunpack.c.l.b16 %v2906
  %v2984 = vunpack.c.h.b16 %v2906
  %v2985 = vunpack.c.l.b16 %v2907
  %v2986 = vunpack.c.h.b16 %v2907
  %v2987 = vunpack.c.l.b16 %v2908
  %v2988 = vunpack.c.h.b16 %v2908
  %v2989 = vunpack.c.l.b16 %v2909
  %v2990 = vunpack.c.h.b16 %v2909
  %v2991 = vunpack.c.l.b16 %v2910
  %v2992 = vunpack.c.h.b16 %v2910
  %v2993 = vunpack.c.l.b16 %v2911
  %v2994 = vunpack.c.h.b16 %v2911
  %v2995 = vunpack.c.l.b16 %v2912
  %v2996 = vunpack.c.h.b16 %v2912
  %v2997 = vunpack.c.l.b16 %v2913
  %v2998 = vunpack.c.h.b16 %v2913
  %v2999 = vunpack.c.l.b16 %v2914
  %v3000 = vunpack.c.h.b16 %v2914
  %v3001 = vunpack.c.l.b16 %v2915
  %v3002 = vunpack.c.h.b16 %v2915
  %v3003 = vunpack.c.l.b16 %v2916
  %v3004 = vunpack.c.h.b16 %v2916
  %v3005 = vunpack.c.l.b16 %v2917
  %v3006 = vunpack.c.h.b16 %v2917
  %v3007 = vunpack.c.l.b16 %v2918
  %v3008 = vunpack.c.h.b16 %v2918
  %v3009 = vunpack.c.l.b16 %v2919
  %v3010 = vunpack.c.h.b16 %v2919
  %v3011 = vunpack.c.l.b16 %v2920
  %v3012 = vunpack.c.h.b16 %v2920
  %v3013 = vunpack.c.l.b16 %v2921
  %v3014 = vunpack.c.h.b16 %v2921
  %v3015 = vunpack.c.l.b16 %v2922
  %v3016 = vunpack.c.h.b16 %v2922
  %v3017 = vunpack.c.l.b16 %v2923
  %v3018 = vunpack.c.h.b16 %v2923
  %v3019 = vunpack.c.l.b16 %v2924
  %v3020 = vunpack.c.h.b16 %v2924
  %v3021 = vpack.c.b16 %v2961, %v2957
  %v3022 = vpack.c.b16 %v2962, %v2958
  %v3023 = vpack.c.b16 %v2963, %v2959
  %v3024 = vpack.c.b16 %v2964, %v2960
  %v3025 = vpack.c.b16 %v2969, %v2965
  %v3026 = vpack.c.b16 %v2970, %v2966
  %v3027 = vpack.c.b16 %v2971, %v2967
  %v3028 = vpack.c.b16 %v2972, %v2968
  %v3029 = vpack.c.b16 %v2977, %v2973
  %v3030 = vpack.c.b16 %v2978, %v2974
  %v3031 = vpack.c.b16 %v2979, %v2975
  %v3032 = vpack.c.b16 %v2980, %v2976
  %v3033 = vpack.c.b16 %v2985, %v2981
  %v3034 = vpack.c.b16 %v2986, %v2982
  %v3035 = vpack.c.b16 %v2987, %v2983
  %v3036 = vpack.c.b16 %v2988, %v2984
  %v3037 = vpack.c.b16 %v2993, %v2989
  %v3038 = vpack.c.b16 %v2994, %v2990
  %v3039 = vpack.c.b16 %v2995, %v2991
  %v3040 = vpack.c.b16 %v2996, %v2992
  %v3041 = vpack.c.b16 %v3001, %v2997
  %v3042 = vpack.c.b16 %v3002, %v2998
  %v3043 = vpack.c.b16 %v3003, %v2999
  %v3044 = vpack.c.b16 %v3004, %v3000
  %v3045 = vpack.c.b16 %v3009, %v3005
  %v3046 = vpack.c.b16 %v3010, %v3006
  %v3047 = vpack.c.b16 %v3011, %v3007
  %v3048 = vpack.c.b16 %v3012, %v3008
  %v3049 = vpack.c.b16 %v3017, %v3013
  %v3050 = vpack.c.b16 %v3018, %v3014
  %v3051 = vpack.c.b16 %v3019, %v3015
  %v3052 = vpack.c.b16 %v3020, %v3016
  %3085 = vmatprep.subr.bf16.mxu0 %v3022
  %3086 = vmatpush1.bf16.msra.mxu0 %v3021
  %3087 = vmatprep.subr.bf16.mxu0 %v3026
  %3088 = vmatpush1.bf16.msra.mxu0 %v3025
  %3089 = vmatprep.subr.bf16.mxu0 %v3030
  %3090 = vmatpush1.bf16.msra.mxu0 %v3029
  %3091 = vmatprep.subr.bf16.mxu0 %v3034
  %3092 = vmatpush1.bf16.msra.mxu0 %v3033
  %3093 = vmatprep.subr.bf16.mxu0 %v3038
  %3094 = vmatpush1.bf16.msra.mxu0 %v3037
  %3095 = vmatprep.subr.bf16.mxu0 %v3042
  %3096 = vmatpush1.bf16.msra.mxu0 %v3041
  %3097 = vmatprep.subr.bf16.mxu0 %v3046
  %3098 = vmatpush1.bf16.msra.mxu0 %v3045
  %3099 = vmatprep.subr.bf16.mxu0 %v3050
  %3100 = vmatpush1.bf16.msra.mxu0 %v3049
  %3101 = vmatprep.subr.bf16.mxu0 0
  %3102 = vmatpush1.bf16.msra.mxu0 0
  %3103 = vmatprep.subr.bf16.mxu0 0
  %3104 = vmatpush1.bf16.msra.mxu0 0
  %3105 = vmatprep.subr.bf16.mxu0 0
  %3106 = vmatpush1.bf16.msra.mxu0 0
  %3107 = vmatprep.subr.bf16.mxu0 0
  %3108 = vmatpush1.bf16.msra.mxu0 0
  %3109 = vmatprep.subr.bf16.mxu0 0
  %3110 = vmatpush1.bf16.msra.mxu0 0
  %3111 = vmatprep.subr.bf16.mxu0 0
  %3112 = vmatpush1.bf16.msra.mxu0 0
  %3113 = vmatprep.subr.bf16.mxu0 0
  %3114 = vmatpush1.bf16.msra.mxu0 0
  %3115 = vmatprep.subr.bf16.mxu0 0
  %3116 = vmatpush1.bf16.msra.mxu0 0
  %3117 = vmatprep.mubr.bf16.mxu0 0
  %3118 = vmatmul.mubr.bf16.gmra.mrb[0].mxu0 %v2892
  %v3119 = vpop.f32.mrb[0].mxu0
  %v3120 = vadd.f32 0.0, %v3119
  %v3121 = vpop.f32.mrb[0].mxu0
  %v3122 = vadd.f32 0.0, %v3121
  %v3123 = vpop.f32.mrb[0].mxu0
  %v3124 = vadd.f32 0.0, %v3123
  %v3125 = vpop.f32.mrb[0].mxu0
  %v3126 = vadd.f32 0.0, %v3125
  %3127 = vdwg.mxu0
  %3128 = vmatprep.subr.bf16.mxu0 %v3024
  %3129 = vmatpush1.bf16.msra.mxu0 %v3023
  %3130 = vmatprep.subr.bf16.mxu0 %v3028
  %3131 = vmatpush1.bf16.msra.mxu0 %v3027
  %3132 = vmatprep.subr.bf16.mxu0 %v3032
  %3133 = vmatpush1.bf16.msra.mxu0 %v3031
  %3134 = vmatprep.subr.bf16.mxu0 %v3036
  %3135 = vmatpush1.bf16.msra.mxu0 %v3035
  %3136 = vmatprep.subr.bf16.mxu0 %v3040
  %3137 = vmatpush1.bf16.msra.mxu0 %v3039
  %3138 = vmatprep.subr.bf16.mxu0 %v3044
  %3139 = vmatpush1.bf16.msra.mxu0 %v3043
  %3140 = vmatprep.subr.bf16.mxu0 %v3048
  %3141 = vmatpush1.bf16.msra.mxu0 %v3047
  %3142 = vmatprep.subr.bf16.mxu0 %v3052
  %3143 = vmatpush1.bf16.msra.mxu0 %v3051
  %3144 = vmatprep.subr.bf16.mxu0 0
  %3145 = vmatpush1.bf16.msra.mxu0 0
  %3146 = vmatprep.subr.bf16.mxu0 0
  %3147 = vmatpush1.bf16.msra.mxu0 0
  %3148 = vmatprep.subr.bf16.mxu0 0
  %3149 = vmatpush1.bf16.msra.mxu0 0
  %3150 = vmatprep.subr.bf16.mxu0 0
  %3151 = vmatpush1.bf16.msra.mxu0 0
  %3152 = vmatprep.subr.bf16.mxu0 0
  %3153 = vmatpush1.bf16.msra.mxu0 0
  %3154 = vmatprep.subr.bf16.mxu0 0
  %3155 = vmatpush1.bf16.msra.mxu0 0
  %3156 = vmatprep.subr.bf16.mxu0 0
  %3157 = vmatpush1.bf16.msra.mxu0 0
  %3158 = vmatprep.subr.bf16.mxu0 0
  %3159 = vmatpush1.bf16.msra.mxu0 0
  %3160 = vmatprep.mubr.bf16.mxu0 0
  %3161 = vmatmul.mubr.bf16.gmra.mrb[0].mxu0 %v2892
  %v3162 = vpop.f32.mrb[0].mxu0
  %v3163 = vadd.f32 0.0, %v3162
  %v3164 = vpop.f32.mrb[0].mxu0
  %v3165 = vadd.f32 0.0, %v3164
  %v3166 = vpop.f32.mrb[0].mxu0
  %v3167 = vadd.f32 0.0, %v3166
  %v3168 = vpop.f32.mrb[0].mxu0
  %v3169 = vadd.f32 0.0, %v3168
  %3170 = vdwg.mxu0
  %v3171 = vadd.f32 %v2882, %v3120
  %v3172 = vadd.f32 %v2883, %v3122
  %v3173 = vadd.f32 %v2884, %v3163
  %v3174 = vadd.f32 %v2885, %v3165
  %v3175 = vadd.f32 %v2886, %v3124
  %v3176 = vadd.f32 %v2887, %v3126
  %v3177 = vadd.f32 %v2888, %v3167
  %v3178 = vadd.f32 %v2889, %v3169
  %v3179 = vxor.u32 %v3171, 2147483648
  %v3180 = vxor.u32 %v3175, 2147483648
  %v3181 = vmul.f32 %v3179, 1.442695
  %v3182 = vpow.pop %v3181
  %v3183 = vmul.f32 %v3180, 1.442695
  %v3184 = vpow.pop %v3183
  %v3185 = vadd.f32 %v3182, 1.0
  %v3186 = vadd.f32 %v3184, 1.0
  %v3187 = vrcp.pop %v3185
  %v3188 = vmul.f32 1.0, %v3187
  %v3189 = vrcp.pop %v3186
  %v3190 = vmul.f32 1.0, %v3189
  %v3191 = vxor.u32 %v3172, 2147483648
  %v3192 = vxor.u32 %v3176, 2147483648
  %v3193 = vmul.f32 %v3191, 1.442695
  %v3194 = vpow.pop %v3193
  %v3195 = vmul.f32 %v3192, 1.442695
  %v3196 = vpow.pop %v3195
  %v3197 = vadd.f32 %v3194, 1.0
  %v3198 = vadd.f32 %v3196, 1.0
  %v3199 = vrcp.pop %v3197
  %v3200 = vmul.f32 1.0, %v3199
  %v3201 = vrcp.pop %v3198
  %v3202 = vmul.f32 1.0, %v3201
  %v3203 = vtanh.pop %v3173
  %v3204 = vtanh.pop %v3177
  %v3205 = vxor.u32 %v3174, 2147483648
  %v3206 = vxor.u32 %v3178, 2147483648
  %v3207 = vmul.f32 %v3205, 1.442695
  %v3208 = vpow.pop %v3207
  %v3209 = vmul.f32 %v3206, 1.442695
  %v3210 = vpow.pop %v3209
  %v3211 = vadd.f32 %v3208, 1.0
  %v3212 = vadd.f32 %v3210, 1.0
  %v3213 = vrcp.pop %v3211
  %v3214 = vmul.f32 1.0, %v3213
  %v3215 = vrcp.pop %v3212
  %v3216 = vmul.f32 1.0, %v3215
  %v3217 = vld [vmem:[#allocation3] sm:$0xff]
  %v3218 = vld [vmem:[#allocation3 + $0x8] sm:$0xff]
  %v3219 = vmul.f32 %v3200, %v3217
  %v3220 = vmul.f32 %v3202, %v3218
  %v3221 = vmul.f32 %v3188, %v3203
  %v3222 = vmul.f32 %v3190, %v3204
  %v3223 = vadd.f32 %v3219, %v3221
  %v3224 = vadd.f32 %v3220, %v3222
  %v3225 = vtanh.pop %v3223
  %v3226 = vtanh.pop %v3224
  %v3227 = vmul.f32 %v3214, %v3225
  %v3228 = vmul.f32 %v3216, %v3226
  %3229 = vst [vmem:[#allocation3] sm:$0xff] %v3223
  %3230 = vst [vmem:[#allocation3 + $0x8] sm:$0xff] %v3224
  %3231 = vst [vmem:[#allocation2] sm:$0xff] %v3227
  %3232 = vst [vmem:[#allocation2 + $0x8] sm:$0xff] %v3228
  %v3233 = vunpack.c.l.bf16 %v2878
  %v3234 = vunpack.c.h.bf16 %v2878
  %v3235 = vunpack.c.l.bf16 %v2879
  %v3236 = vunpack.c.h.bf16 %v2879
  %v3237 = vunpack.c.l.bf16 %v2880
  %v3238 = vunpack.c.h.bf16 %v2880
  %v3239 = vunpack.c.l.bf16 %v2881
  %v3240 = vunpack.c.h.bf16 %v2881
  %v3241 = vld [vmem:[#allocation2 + $0x10] sm:$0xff]
  %v3242 = vld [vmem:[#allocation2 + $0x18] sm:$0xff]
  %v3243 = vpack.c.bf16 %v3242, %v3241
  %v3244 = vld [vmem:[%s1] sm:$0xff]
  %v3245 = vld [vmem:[%s1 + $0x8] sm:$0xff]
  %v3246 = vld [vmem:[%s1 + $0x10] sm:$0xff]
  %v3247 = vld [vmem:[%s1 + $0x18] sm:$0xff]
  %v3248 = vld [vmem:[%s1 + $0x20] sm:$0xff]
  %v3249 = vld [vmem:[%s1 + $0x28] sm:$0xff]
  %v3250 = vld [vmem:[%s1 + $0x30] sm:$0xff]
  %v3251 = vld [vmem:[%s1 + $0x38] sm:$0xff]
  %v3252 = vld [vmem:[%s1 + $0x40] sm:$0xff]
  %v3253 = vld [vmem:[%s1 + $0x48] sm:$0xff]
  %v3254 = vld [vmem:[%s1 + $0x50] sm:$0xff]
  %v3255 = vld [vmem:[%s1 + $0x58] sm:$0xff]
  %v3256 = vld [vmem:[%s1 + $0x60] sm:$0xff]
  %v3257 = vld [vmem:[%s1 + $0x68] sm:$0xff]
  %v3258 = vld [vmem:[%s1 + $0x70] sm:$0xff]
  %v3259 = vld [vmem:[%s1 + $0x78] sm:$0xff]
  %v3260 = vld [vmem:[%s1 + $0x80] sm:$0xff]
  %v3261 = vld [vmem:[%s1 + $0x88] sm:$0xff]
  %v3262 = vld [vmem:[%s1 + $0x90] sm:$0xff]
  %v3263 = vld [vmem:[%s1 + $0x98] sm:$0xff]
  %v3264 = vld [vmem:[%s1 + $0xa0] sm:$0xff]
  %v3265 = vld [vmem:[%s1 + $0xa8] sm:$0xff]
  %v3266 = vld [vmem:[%s1 + $0xb0] sm:$0xff]
  %v3267 = vld [vmem:[%s1 + $0xb8] sm:$0xff]
  %v3268 = vld [vmem:[%s1 + $0xc0] sm:$0xff]
  %v3269 = vld [vmem:[%s1 + $0xc8] sm:$0xff]
  %v3270 = vld [vmem:[%s1 + $0xd0] sm:$0xff]
  %v3271 = vld [vmem:[%s1 + $0xd8] sm:$0xff]
  %v3272 = vld [vmem:[%s1 + $0xe0] sm:$0xff]
  %v3273 = vld [vmem:[%s1 + $0xe8] sm:$0xff]
  %v3274 = vld [vmem:[%s1 + $0xf0] sm:$0xff]
  %v3275 = vld [vmem:[%s1 + $0xf8] sm:$0xff]
  %v3308 = vunpack.c.l.b16 %v3244
  %v3309 = vunpack.c.h.b16 %v3244
  %v3310 = vunpack.c.l.b16 %v3245
  %v3311 = vunpack.c.h.b16 %v3245
  %v3312 = vunpack.c.l.b16 %v3246
  %v3313 = vunpack.c.h.b16 %v3246
  %v3314 = vunpack.c.l.b16 %v3247
  %v3315 = vunpack.c.h.b16 %v3247
  %v3316 = vunpack.c.l.b16 %v3248
  %v3317 = vunpack.c.h.b16 %v3248
  %v3318 = vunpack.c.l.b16 %v3249
  %v3319 = vunpack.c.h.b16 %v3249
  %v3320 = vunpack.c.l.b16 %v3250
  %v3321 = vunpack.c.h.b16 %v3250
  %v3322 = vunpack.c.l.b16 %v3251
  %v3323 = vunpack.c.h.b16 %v3251
  %v3324 = vunpack.c.l.b16 %v3252
  %v3325 = vunpack.c.h.b16 %v3252
  %v3326 = vunpack.c.l.b16 %v3253
  %v3327 = vunpack.c.h.b16 %v3253
  %v3328 = vunpack.c.l.b16 %v3254
  %v3329 = vunpack.c.h.b16 %v3254
  %v3330 = vunpack.c.l.b16 %v3255
  %v3331 = vunpack.c.h.b16 %v3255
  %v3332 = vunpack.c.l.b16 %v3256
  %v3333 = vunpack.c.h.b16 %v3256
  %v3334 = vunpack.c.l.b16 %v3257
  %v3335 = vunpack.c.h.b16 %v3257
  %v3336 = vunpack.c.l.b16 %v3258
  %v3337 = vunpack.c.h.b16 %v3258
  %v3338 = vunpack.c.l.b16 %v3259
  %v3339 = vunpack.c.h.b16 %v3259
  %v3340 = vunpack.c.l.b16 %v3260
  %v3341 = vunpack.c.h.b16 %v3260
  %v3342 = vunpack.c.l.b16 %v3261
  %v3343 = vunpack.c.h.b16 %v3261
  %v3344 = vunpack.c.l.b16 %v3262
  %v3345 = vunpack.c.h.b16 %v3262
  %v3346 = vunpack.c.l.b16 %v3263
  %v3347 = vunpack.c.h.b16 %v3263
  %v3348 = vunpack.c.l.b16 %v3264
  %v3349 = vunpack.c.h.b16 %v3264
  %v3350 = vunpack.c.l.b16 %v3265
  %v3351 = vunpack.c.h.b16 %v3265
  %v3352 = vunpack.c.l.b16 %v3266
  %v3353 = vunpack.c.h.b16 %v3266
  %v3354 = vunpack.c.l.b16 %v3267
  %v3355 = vunpack.c.h.b16 %v3267
  %v3356 = vunpack.c.l.b16 %v3268
  %v3357 = vunpack.c.h.b16 %v3268
  %v3358 = vunpack.c.l.b16 %v3269
  %v3359 = vunpack.c.h.b16 %v3269
  %v3360 = vunpack.c.l.b16 %v3270
  %v3361 = vunpack.c.h.b16 %v3270
  %v3362 = vunpack.c.l.b16 %v3271
  %v3363 = vunpack.c.h.b16 %v3271
  %v3364 = vunpack.c.l.b16 %v3272
  %v3365 = vunpack.c.h.b16 %v3272
  %v3366 = vunpack.c.l.b16 %v3273
  %v3367 = vunpack.c.h.b16 %v3273
  %v3368 = vunpack.c.l.b16 %v3274
  %v3369 = vunpack.c.h.b16 %v3274
  %v3370 = vunpack.c.l.b16 %v3275
  %v3371 = vunpack.c.h.b16 %v3275
  %v3372 = vpack.c.b16 %v3312, %v3308
  %v3373 = vpack.c.b16 %v3313, %v3309
  %v3374 = vpack.c.b16 %v3314, %v3310
  %v3375 = vpack.c.b16 %v3315, %v3311
  %v3376 = vpack.c.b16 %v3320, %v3316
  %v3377 = vpack.c.b16 %v3321, %v3317
  %v3378 = vpack.c.b16 %v3322, %v3318
  %v3379 = vpack.c.b16 %v3323, %v3319
  %v3380 = vpack.c.b16 %v3328, %v3324
  %v3381 = vpack.c.b16 %v3329, %v3325
  %v3382 = vpack.c.b16 %v3330, %v3326
  %v3383 = vpack.c.b16 %v3331, %v3327
  %v3384 = vpack.c.b16 %v3336, %v3332
  %v3385 = vpack.c.b16 %v3337, %v3333
  %v3386 = vpack.c.b16 %v3338, %v3334
  %v3387 = vpack.c.b16 %v3339, %v3335
  %v3388 = vpack.c.b16 %v3344, %v3340
  %v3389 = vpack.c.b16 %v3345, %v3341
  %v3390 = vpack.c.b16 %v3346, %v3342
  %v3391 = vpack.c.b16 %v3347, %v3343
  %v3392 = vpack.c.b16 %v3352, %v3348
  %v3393 = vpack.c.b16 %v3353, %v3349
  %v3394 = vpack.c.b16 %v3354, %v3350
  %v3395 = vpack.c.b16 %v3355, %v3351
  %v3396 = vpack.c.b16 %v3360, %v3356
  %v3397 = vpack.c.b16 %v3361, %v3357
  %v3398 = vpack.c.b16 %v3362, %v3358
  %v3399 = vpack.c.b16 %v3363, %v3359
  %v3400 = vpack.c.b16 %v3368, %v3364
  %v3401 = vpack.c.b16 %v3369, %v3365
  %v3402 = vpack.c.b16 %v3370, %v3366
  %v3403 = vpack.c.b16 %v3371, %v3367
  %3436 = vmatprep.subr.bf16.mxu0 %v3373
  %3437 = vmatpush1.bf16.msra.mxu0 %v3372
  %3438 = vmatprep.subr.bf16.mxu0 %v3377
  %3439 = vmatpush1.bf16.msra.mxu0 %v3376
  %3440 = vmatprep.subr.bf16.mxu0 %v3381
  %3441 = vmatpush1.bf16.msra.mxu0 %v3380
  %3442 = vmatprep.subr.bf16.mxu0 %v3385
  %3443 = vmatpush1.bf16.msra.mxu0 %v3384
  %3444 = vmatprep.subr.bf16.mxu0 %v3389
  %3445 = vmatpush1.bf16.msra.mxu0 %v3388
  %3446 = vmatprep.subr.bf16.mxu0 %v3393
  %3447 = vmatpush1.bf16.msra.mxu0 %v3392
  %3448 = vmatprep.subr.bf16.mxu0 %v3397
  %3449 = vmatpush1.bf16.msra.mxu0 %v3396
  %3450 = vmatprep.subr.bf16.mxu0 %v3401
  %3451 = vmatpush1.bf16.msra.mxu0 %v3400
  %3452 = vmatprep.subr.bf16.mxu0 0
  %3453 = vmatpush1.bf16.msra.mxu0 0
  %3454 = vmatprep.subr.bf16.mxu0 0
  %3455 = vmatpush1.bf16.msra.mxu0 0
  %3456 = vmatprep.subr.bf16.mxu0 0
  %3457 = vmatpush1.bf16.msra.mxu0 0
  %3458 = vmatprep.subr.bf16.mxu0 0
  %3459 = vmatpush1.bf16.msra.mxu0 0
  %3460 = vmatprep.subr.bf16.mxu0 0
  %3461 = vmatpush1.bf16.msra.mxu0 0
  %3462 = vmatprep.subr.bf16.mxu0 0
  %3463 = vmatpush1.bf16.msra.mxu0 0
  %3464 = vmatprep.subr.bf16.mxu0 0
  %3465 = vmatpush1.bf16.msra.mxu0 0
  %3466 = vmatprep.subr.bf16.mxu0 0
  %3467 = vmatpush1.bf16.msra.mxu0 0
  %3468 = vmatprep.mubr.bf16.mxu0 0
  %3469 = vmatmul.mubr.bf16.gmra.mrb[0].mxu0 %v3243
  %v3470 = vpop.f32.mrb[0].mxu0
  %v3471 = vadd.f32 0.0, %v3470
  %v3472 = vpop.f32.mrb[0].mxu0
  %v3473 = vadd.f32 0.0, %v3472
  %v3474 = vpop.f32.mrb[0].mxu0
  %v3475 = vadd.f32 0.0, %v3474
  %v3476 = vpop.f32.mrb[0].mxu0
  %v3477 = vadd.f32 0.0, %v3476
  %3478 = vdwg.mxu0
  %3479 = vmatprep.subr.bf16.mxu0 %v3375
  %3480 = vmatpush1.bf16.msra.mxu0 %v3374
  %3481 = vmatprep.subr.bf16.mxu0 %v3379
  %3482 = vmatpush1.bf16.msra.mxu0 %v3378
  %3483 = vmatprep.subr.bf16.mxu0 %v3383
  %3484 = vmatpush1.bf16.msra.mxu0 %v3382
  %3485 = vmatprep.subr.bf16.mxu0 %v3387
  %3486 = vmatpush1.bf16.msra.mxu0 %v3386
  %3487 = vmatprep.subr.bf16.mxu0 %v3391
  %3488 = vmatpush1.bf16.msra.mxu0 %v3390
  %3489 = vmatprep.subr.bf16.mxu0 %v3395
  %3490 = vmatpush1.bf16.msra.mxu0 %v3394
  %3491 = vmatprep.subr.bf16.mxu0 %v3399
  %3492 = vmatpush1.bf16.msra.mxu0 %v3398
  %3493 = vmatprep.subr.bf16.mxu0 %v3403
  %3494 = vmatpush1.bf16.msra.mxu0 %v3402
  %3495 = vmatprep.subr.bf16.mxu0 0
  %3496 = vmatpush1.bf16.msra.mxu0 0
  %3497 = vmatprep.subr.bf16.mxu0 0
  %3498 = vmatpush1.bf16.msra.mxu0 0
  %3499 = vmatprep.subr.bf16.mxu0 0
  %3500 = vmatpush1.bf16.msra.mxu0 0
  %3501 = vmatprep.subr.bf16.mxu0 0
  %3502 = vmatpush1.bf16.msra.mxu0 0
  %3503 = vmatprep.subr.bf16.mxu0 0
  %3504 = vmatpush1.bf16.msra.mxu0 0
  %3505 = vmatprep.subr.bf16.mxu0 0
  %3506 = vmatpush1.bf16.msra.mxu0 0
  %3507 = vmatprep.subr.bf16.mxu0 0
  %3508 = vmatpush1.bf16.msra.mxu0 0
  %3509 = vmatprep.subr.bf16.mxu0 0
  %3510 = vmatpush1.bf16.msra.mxu0 0
  %3511 = vmatprep.mubr.bf16.mxu0 0
  %3512 = vmatmul.mubr.bf16.gmra.mrb[0].mxu0 %v3243
  %v3513 = vpop.f32.mrb[0].mxu0
  %v3514 = vadd.f32 0.0, %v3513
  %v3515 = vpop.f32.mrb[0].mxu0
  %v3516 = vadd.f32 0.0, %v3515
  %v3517 = vpop.f32.mrb[0].mxu0
  %v3518 = vadd.f32 0.0, %v3517
  %v3519 = vpop.f32.mrb[0].mxu0
  %v3520 = vadd.f32 0.0, %v3519
  %3521 = vdwg.mxu0
  %v3522 = vadd.f32 %v3233, %v3471
  %v3523 = vadd.f32 %v3234, %v3473
  %v3524 = vadd.f32 %v3235, %v3514
  %v3525 = vadd.f32 %v3236, %v3516
  %v3526 = vadd.f32 %v3237, %v3475
  %v3527 = vadd.f32 %v3238, %v3477
  %v3528 = vadd.f32 %v3239, %v3518
  %v3529 = vadd.f32 %v3240, %v3520
  %v3530 = vxor.u32 %v3522, 2147483648
  %v3531 = vxor.u32 %v3526, 2147483648
  %v3532 = vmul.f32 %v3530, 1.442695
  %v3533 = vpow.pop %v3532
  %v3534 = vmul.f32 %v3531, 1.442695
  %v3535 = vpow.pop %v3534
  %v3536 = vadd.f32 %v3533, 1.0
  %v3537 = vadd.f32 %v3535, 1.0
  %v3538 = vrcp.pop %v3536
  %v3539 = vmul.f32 1.0, %v3538
  %v3540 = vrcp.pop %v3537
  %v3541 = vmul.f32 1.0, %v3540
  %v3542 = vxor.u32 %v3523, 2147483648
  %v3543 = vxor.u32 %v3527, 2147483648
  %v3544 = vmul.f32 %v3542, 1.442695
  %v3545 = vpow.pop %v3544
  %v3546 = vmul.f32 %v3543, 1.442695
  %v3547 = vpow.pop %v3546
  %v3548 = vadd.f32 %v3545, 1.0
  %v3549 = vadd.f32 %v3547, 1.0
  %v3550 = vrcp.pop %v3548
  %v3551 = vmul.f32 1.0, %v3550
  %v3552 = vrcp.pop %v3549
  %v3553 = vmul.f32 1.0, %v3552
  %v3554 = vtanh.pop %v3524
  %v3555 = vtanh.pop %v3528
  %v3556 = vxor.u32 %v3525, 2147483648
  %v3557 = vxor.u32 %v3529, 2147483648
  %v3558 = vmul.f32 %v3556, 1.442695
  %v3559 = vpow.pop %v3558
  %v3560 = vmul.f32 %v3557, 1.442695
  %v3561 = vpow.pop %v3560
  %v3562 = vadd.f32 %v3559, 1.0
  %v3563 = vadd.f32 %v3561, 1.0
  %v3564 = vrcp.pop %v3562
  %v3565 = vmul.f32 1.0, %v3564
  %v3566 = vrcp.pop %v3563
  %v3567 = vmul.f32 1.0, %v3566
  %v3568 = vld [vmem:[#allocation3 + $0x10] sm:$0xff]
  %v3569 = vld [vmem:[#allocation3 + $0x18] sm:$0xff]
  %v3570 = vmul.f32 %v3551, %v3568
  %v3571 = vmul.f32 %v3553, %v3569
  %v3572 = vmul.f32 %v3539, %v3554
  %v3573 = vmul.f32 %v3541, %v3555
  %v3574 = vadd.f32 %v3570, %v3572
  %v3575 = vadd.f32 %v3571, %v3573
  %v3576 = vtanh.pop %v3574
  %v3577 = vtanh.pop %v3575
  %v3578 = vmul.f32 %v3565, %v3576
  %v3579 = vmul.f32 %v3567, %v3577
  %3580 = vst [vmem:[#allocation3 + $0x10] sm:$0xff] %v3574
  %3581 = vst [vmem:[#allocation3 + $0x18] sm:$0xff] %v3575
  %3582 = vst [vmem:[#allocation2 + $0x10] sm:$0xff] %v3578
  %3583 = vst [vmem:[#allocation2 + $0x18] sm:$0xff] %v3579
  %s3584 = scalar_lea.vmem %s0, 320
  %v3585 = vld [vmem:[%s3584] sm:$0xff]
  %v3586 = vld [vmem:[%s3584 + $0x8] sm:$0xff]
  %v3587 = vld [vmem:[%s3584 + $0x10] sm:$0xff]
  %v3588 = vld [vmem:[%s3584 + $0x18] sm:$0xff]
  %v3589 = vld [vmem:[%s3584 + $0x20] sm:$0xff]
  %v3590 = vld [vmem:[%s3584 + $0x28] sm:$0xff]
  %v3591 = vld [vmem:[%s3584 + $0x30] sm:$0xff]
  %v3592 = vld [vmem:[%s3584 + $0x38] sm:$0xff]
  %v3593 = vunpack.c.l.bf16 %v3585
  %v3594 = vunpack.c.h.bf16 %v3585
  %v3595 = vunpack.c.l.bf16 %v3586
  %v3596 = vunpack.c.h.bf16 %v3586
  %v3597 = vunpack.c.l.bf16 %v3587
  %v3598 = vunpack.c.h.bf16 %v3587
  %v3599 = vunpack.c.l.bf16 %v3588
  %v3600 = vunpack.c.h.bf16 %v3588
  %v3601 = vld [vmem:[#allocation2] sm:$0xff]
  %v3602 = vld [vmem:[#allocation2 + $0x8] sm:$0xff]
  %v3603 = vpack.c.bf16 %v3602, %v3601
  %v3604 = vld [vmem:[%s1] sm:$0xff]
  %v3605 = vld [vmem:[%s1 + $0x8] sm:$0xff]
  %v3606 = vld [vmem:[%s1 + $0x10] sm:$0xff]
  %v3607 = vld [vmem:[%s1 + $0x18] sm:$0xff]
  %v3608 = vld [vmem:[%s1 + $0x20] sm:$0xff]
  %v3609 = vld [vmem:[%s1 + $0x28] sm:$0xff]
  %v3610 = vld [vmem:[%s1 + $0x30] sm:$0xff]
  %v3611 = vld [vmem:[%s1 + $0x38] sm:$0xff]
  %v3612 = vld [vmem:[%s1 + $0x40] sm:$0xff]
  %v3613 = vld [vmem:[%s1 + $0x48] sm:$0xff]
  %v3614 = vld [vmem:[%s1 + $0x50] sm:$0xff]
  %v3615 = vld [vmem:[%s1 + $0x58] sm:$0xff]
  %v3616 = vld [vmem:[%s1 + $0x60] sm:$0xff]
  %v3617 = vld [vmem:[%s1 + $0x68] sm:$0xff]
  %v3618 = vld [vmem:[%s1 + $0x70] sm:$0xff]
  %v3619 = vld [vmem:[%s1 + $0x78] sm:$0xff]
  %v3620 = vld [vmem:[%s1 + $0x80] sm:$0xff]
  %v3621 = vld [vmem:[%s1 + $0x88] sm:$0xff]
  %v3622 = vld [vmem:[%s1 + $0x90] sm:$0xff]
  %v3623 = vld [vmem:[%s1 + $0x98] sm:$0xff]
  %v3624 = vld [vmem:[%s1 + $0xa0] sm:$0xff]
  %v3625 = vld [vmem:[%s1 + $0xa8] sm:$0xff]
  %v3626 = vld [vmem:[%s1 + $0xb0] sm:$0xff]
  %v3627 = vld [vmem:[%s1 + $0xb8] sm:$0xff]
  %v3628 = vld [vmem:[%s1 + $0xc0] sm:$0xff]
  %v3629 = vld [vmem:[%s1 + $0xc8] sm:$0xff]
  %v3630 = vld [vmem:[%s1 + $0xd0] sm:$0xff]
  %v3631 = vld [vmem:[%s1 + $0xd8] sm:$0xff]
  %v3632 = vld [vmem:[%s1 + $0xe0] sm:$0xff]
  %v3633 = vld [vmem:[%s1 + $0xe8] sm:$0xff]
  %v3634 = vld [vmem:[%s1 + $0xf0] sm:$0xff]
  %v3635 = vld [vmem:[%s1 + $0xf8] sm:$0xff]
  %v3668 = vunpack.c.l.b16 %v3604
  %v3669 = vunpack.c.h.b16 %v3604
  %v3670 = vunpack.c.l.b16 %v3605
  %v3671 = vunpack.c.h.b16 %v3605
  %v3672 = vunpack.c.l.b16 %v3606
  %v3673 = vunpack.c.h.b16 %v3606
  %v3674 = vunpack.c.l.b16 %v3607
  %v3675 = vunpack.c.h.b16 %v3607
  %v3676 = vunpack.c.l.b16 %v3608
  %v3677 = vunpack.c.h.b16 %v3608
  %v3678 = vunpack.c.l.b16 %v3609
  %v3679 = vunpack.c.h.b16 %v3609
  %v3680 = vunpack.c.l.b16 %v3610
  %v3681 = vunpack.c.h.b16 %v3610
  %v3682 = vunpack.c.l.b16 %v3611
  %v3683 = vunpack.c.h.b16 %v3611
  %v3684 = vunpack.c.l.b16 %v3612
  %v3685 = vunpack.c.h.b16 %v3612
  %v3686 = vunpack.c.l.b16 %v3613
  %v3687 = vunpack.c.h.b16 %v3613
  %v3688 = vunpack.c.l.b16 %v3614
  %v3689 = vunpack.c.h.b16 %v3614
  %v3690 = vunpack.c.l.b16 %v3615
  %v3691 = vunpack.c.h.b16 %v3615
  %v3692 = vunpack.c.l.b16 %v3616
  %v3693 = vunpack.c.h.b16 %v3616
  %v3694 = vunpack.c.l.b16 %v3617
  %v3695 = vunpack.c.h.b16 %v3617
  %v3696 = vunpack.c.l.b16 %v3618
  %v3697 = vunpack.c.h.b16 %v3618
  %v3698 = vunpack.c.l.b16 %v3619
  %v3699 = vunpack.c.h.b16 %v3619
  %v3700 = vunpack.c.l.b16 %v3620
  %v3701 = vunpack.c.h.b16 %v3620
  %v3702 = vunpack.c.l.b16 %v3621
  %v3703 = vunpack.c.h.b16 %v3621
  %v3704 = vunpack.c.l.b16 %v3622
  %v3705 = vunpack.c.h.b16 %v3622
  %v3706 = vunpack.c.l.b16 %v3623
  %v3707 = vunpack.c.h.b16 %v3623
  %v3708 = vunpack.c.l.b16 %v3624
  %v3709 = vunpack.c.h.b16 %v3624
  %v3710 = vunpack.c.l.b16 %v3625
  %v3711 = vunpack.c.h.b16 %v3625
  %v3712 = vunpack.c.l.b16 %v3626
  %v3713 = vunpack.c.h.b16 %v3626
  %v3714 = vunpack.c.l.b16 %v3627
  %v3715 = vunpack.c.h.b16 %v3627
  %v3716 = vunpack.c.l.b16 %v3628
  %v3717 = vunpack.c.h.b16 %v3628
  %v3718 = vunpack.c.l.b16 %v3629
  %v3719 = vunpack.c.h.b16 %v3629
  %v3720 = vunpack.c.l.b16 %v3630
  %v3721 = vunpack.c.h.b16 %v3630
  %v3722 = vunpack.c.l.b16 %v3631
  %v3723 = vunpack.c.h.b16 %v3631
  %v3724 = vunpack.c.l.b16 %v3632
  %v3725 = vunpack.c.h.b16 %v3632
  %v3726 = vunpack.c.l.b16 %v3633
  %v3727 = vunpack.c.h.b16 %v3633
  %v3728 = vunpack.c.l.b16 %v3634
  %v3729 = vunpack.c.h.b16 %v3634
  %v3730 = vunpack.c.l.b16 %v3635
  %v3731 = vunpack.c.h.b16 %v3635
  %v3732 = vpack.c.b16 %v3672, %v3668
  %v3733 = vpack.c.b16 %v3673, %v3669
  %v3734 = vpack.c.b16 %v3674, %v3670
  %v3735 = vpack.c.b16 %v3675, %v3671
  %v3736 = vpack.c.b16 %v3680, %v3676
  %v3737 = vpack.c.b16 %v3681, %v3677
  %v3738 = vpack.c.b16 %v3682, %v3678
  %v3739 = vpack.c.b16 %v3683, %v3679
  %v3740 = vpack.c.b16 %v3688, %v3684
  %v3741 = vpack.c.b16 %v3689, %v3685
  %v3742 = vpack.c.b16 %v3690, %v3686
  %v3743 = vpack.c.b16 %v3691, %v3687
  %v3744 = vpack.c.b16 %v3696, %v3692
  %v3745 = vpack.c.b16 %v3697, %v3693
  %v3746 = vpack.c.b16 %v3698, %v3694
  %v3747 = vpack.c.b16 %v3699, %v3695
  %v3748 = vpack.c.b16 %v3704, %v3700
  %v3749 = vpack.c.b16 %v3705, %v3701
  %v3750 = vpack.c.b16 %v3706, %v3702
  %v3751 = vpack.c.b16 %v3707, %v3703
  %v3752 = vpack.c.b16 %v3712, %v3708
  %v3753 = vpack.c.b16 %v3713, %v3709
  %v3754 = vpack.c.b16 %v3714, %v3710
  %v3755 = vpack.c.b16 %v3715, %v3711
  %v3756 = vpack.c.b16 %v3720, %v3716
  %v3757 = vpack.c.b16 %v3721, %v3717
  %v3758 = vpack.c.b16 %v3722, %v3718
  %v3759 = vpack.c.b16 %v3723, %v3719
  %v3760 = vpack.c.b16 %v3728, %v3724
  %v3761 = vpack.c.b16 %v3729, %v3725
  %v3762 = vpack.c.b16 %v3730, %v3726
  %v3763 = vpack.c.b16 %v3731, %v3727
  %3796 = vmatprep.subr.bf16.mxu0 %v3733
  %3797 = vmatpush1.bf16.msra.mxu0 %v3732
  %3798 = vmatprep.subr.bf16.mxu0 %v3737
  %3799 = vmatpush1.bf16.msra.mxu0 %v3736
  %3800 = vmatprep.subr.bf16.mxu0 %v3741
  %3801 = vmatpush1.bf16.msra.mxu0 %v3740
  %3802 = vmatprep.subr.bf16.mxu0 %v3745
  %3803 = vmatpush1.bf16.msra.mxu0 %v3744
  %3804 = vmatprep.subr.bf16.mxu0 %v3749
  %3805 = vmatpush1.bf16.msra.mxu0 %v3748
  %3806 = vmatprep.subr.bf16.mxu0 %v3753
  %3807 = vmatpush1.bf16.msra.mxu0 %v3752
  %3808 = vmatprep.subr.bf16.mxu0 %v3757
  %3809 = vmatpush1.bf16.msra.mxu0 %v3756
  %3810 = vmatprep.subr.bf16.mxu0 %v3761
  %3811 = vmatpush1.bf16.msra.mxu0 %v3760
  %3812 = vmatprep.subr.bf16.mxu0 0
  %3813 = vmatpush1.bf16.msra.mxu0 0
  %3814 = vmatprep.subr.bf16.mxu0 0
  %3815 = vmatpush1.bf16.msra.mxu0 0
  %3816 = vmatprep.subr.bf16.mxu0 0
  %3817 = vmatpush1.bf16.msra.mxu0 0
  %3818 = vmatprep.subr.bf16.mxu0 0
  %3819 = vmatpush1.bf16.msra.mxu0 0
  %3820 = vmatprep.subr.bf16.mxu0 0
  %3821 = vmatpush1.bf16.msra.mxu0 0
  %3822 = vmatprep.subr.bf16.mxu0 0
  %3823 = vmatpush1.bf16.msra.mxu0 0
  %3824 = vmatprep.subr.bf16.mxu0 0
  %3825 = vmatpush1.bf16.msra.mxu0 0
  %3826 = vmatprep.subr.bf16.mxu0 0
  %3827 = vmatpush1.bf16.msra.mxu0 0
  %3828 = vmatprep.mubr.bf16.mxu0 0
  %3829 = vmatmul.mubr.bf16.gmra.mrb[0].mxu0 %v3603
  %v3830 = vpop.f32.mrb[0].mxu0
  %v3831 = vadd.f32 0.0, %v3830
  %v3832 = vpop.f32.mrb[0].mxu0
  %v3833 = vadd.f32 0.0, %v3832
  %v3834 = vpop.f32.mrb[0].mxu0
  %v3835 = vadd.f32 0.0, %v3834
  %v3836 = vpop.f32.mrb[0].mxu0
  %v3837 = vadd.f32 0.0, %v3836
  %3838 = vdwg.mxu0
  %3839 = vmatprep.subr.bf16.mxu0 %v3735
  %3840 = vmatpush1.bf16.msra.mxu0 %v3734
  %3841 = vmatprep.subr.bf16.mxu0 %v3739
  %3842 = vmatpush1.bf16.msra.mxu0 %v3738
  %3843 = vmatprep.subr.bf16.mxu0 %v3743
  %3844 = vmatpush1.bf16.msra.mxu0 %v3742
  %3845 = vmatprep.subr.bf16.mxu0 %v3747
  %3846 = vmatpush1.bf16.msra.mxu0 %v3746
  %3847 = vmatprep.subr.bf16.mxu0 %v3751
  %3848 = vmatpush1.bf16.msra.mxu0 %v3750
  %3849 = vmatprep.subr.bf16.mxu0 %v3755
  %3850 = vmatpush1.bf16.msra.mxu0 %v3754
  %3851 = vmatprep.subr.bf16.mxu0 %v3759
  %3852 = vmatpush1.bf16.msra.mxu0 %v3758
  %3853 = vmatprep.subr.bf16.mxu0 %v3763
  %3854 = vmatpush1.bf16.msra.mxu0 %v3762
  %3855 = vmatprep.subr.bf16.mxu0 0
  %3856 = vmatpush1.bf16.msra.mxu0 0
  %3857 = vmatprep.subr.bf16.mxu0 0
  %3858 = vmatpush1.bf16.msra.mxu0 0
  %3859 = vmatprep.subr.bf16.mxu0 0
  %3860 = vmatpush1.bf16.msra.mxu0 0
  %3861 = vmatprep.subr.bf16.mxu0 0
  %3862 = vmatpush1.bf16.msra.mxu0 0
  %3863 = vmatprep.subr.bf16.mxu0 0
  %3864 = vmatpush1.bf16.msra.mxu0 0
  %3865 = vmatprep.subr.bf16.mxu0 0
  %3866 = vmatpush1.bf16.msra.mxu0 0
  %3867 = vmatprep.subr.bf16.mxu0 0
  %3868 = vmatpush1.bf16.msra.mxu0 0
  %3869 = vmatprep.subr.bf16.mxu0 0
  %3870 = vmatpush1.bf16.msra.mxu0 0
  %3871 = vmatprep.mubr.bf16.mxu0 0
  %3872 = vmatmul.mubr.bf16.gmra.mrb[0].mxu0 %v3603
  %v3873 = vpop.f32.mrb[0].mxu0
  %v3874 = vadd.f32 0.0, %v3873
  %v3875 = vpop.f32.mrb[0].mxu0
  %v3876 = vadd.f32 0.0, %v3875
  %v3877 = vpop.f32.mrb[0].mxu0
  %v3878 = vadd.f32 0.0, %v3877
  %v3879 = vpop.f32.mrb[0].mxu0
  %v3880 = vadd.f32 0.0, %v3879
  %3881 = vdwg.mxu0
  %v3882 = vadd.f32 %v3593, %v3831
  %v3883 = vadd.f32 %v3594, %v3833
  %v3884 = vadd.f32 %v3595, %v3874
  %v3885 = vadd.f32 %v3596, %v3876
  %v3886 = vadd.f32 %v3597, %v3835
  %v3887 = vadd.f32 %v3598, %v3837
  %v3888 = vadd.f32 %v3599, %v3878
  %v3889 = vadd.f32 %v3600, %v3880
  %v3890 = vxor.u32 %v3882, 2147483648
  %v3891 = vxor.u32 %v3886, 2147483648
  %v3892 = vmul.f32 %v3890, 1.442695
  %v3893 = vpow.pop %v3892
  %v3894 = vmul.f32 %v3891, 1.442695
  %v3895 = vpow.pop %v3894
  %v3896 = vadd.f32 %v3893, 1.0
  %v3897 = vadd.f32 %v3895, 1.0
  %v3898 = vrcp.pop %v3896
  %v3899 = vmul.f32 1.0, %v3898
  %v3900 = vrcp.pop %v3897
  %v3901 = vmul.f32 1.0, %v3900
  %v3902 = vxor.u32 %v3883, 2147483648
  %v3903 = vxor.u32 %v3887, 2147483648
  %v3904 = vmul.f32 %v3902, 1.442695
  %v3905 = vpow.pop %v3904
  %v3906 = vmul.f32 %v3903, 1.442695
  %v3907 = vpow.pop %v3906
  %v3908 = vadd.f32 %v3905, 1.0
  %v3909 = vadd.f32 %v3907, 1.0
  %v3910 = vrcp.pop %v3908
  %v3911 = vmul.f32 1.0, %v3910
  %v3912 = vrcp.pop %v3909
  %v3913 = vmul.f32 1.0, %v3912
  %v3914 = vtanh.pop %v3884
  %v3915 = vtanh.pop %v3888
  %v3916 = vxor.u32 %v3885, 2147483648
  %v3917 = vxor.u32 %v3889, 2147483648
  %v3918 = vmul.f32 %v3916, 1.442695
  %v3919 = vpow.pop %v3918
  %v3920 = vmul.f32 %v3917, 1.442695
  %v3921 = vpow.pop %v3920
  %v3922 = vadd.f32 %v3919, 1.0
  %v3923 = vadd.f32 %v3921, 1.0
  %v3924 = vrcp.pop %v3922
  %v3925 = vmul.f32 1.0, %v3924
  %v3926 = vrcp.pop %v3923
  %v3927 = vmul.f32 1.0, %v3926
  %v3928 = vld [vmem:[#allocation3] sm:$0xff]
  %v3929 = vld [vmem:[#allocation3 + $0x8] sm:$0xff]
  %v3930 = vmul.f32 %v3911, %v3928
  %v3931 = vmul.f32 %v3913, %v3929
  %v3932 = vmul.f32 %v3899, %v3914
  %v3933 = vmul.f32 %v3901, %v3915
  %v3934 = vadd.f32 %v3930, %v3932
  %v3935 = vadd.f32 %v3931, %v3933
  %v3936 = vtanh.pop %v3934
  %v3937 = vtanh.pop %v3935
  %v3938 = vmul.f32 %v3925, %v3936
  %v3939 = vmul.f32 %v3927, %v3937
  %3940 = vst [vmem:[#allocation3] sm:$0xff] %v3934
  %3941 = vst [vmem:[#allocation3 + $0x8] sm:$0xff] %v3935
  %3942 = vst [vmem:[#allocation2] sm:$0xff] %v3938
  %3943 = vst [vmem:[#allocation2 + $0x8] sm:$0xff] %v3939
  %v3944 = vunpack.c.l.bf16 %v3589
  %v3945 = vunpack.c.h.bf16 %v3589
  %v3946 = vunpack.c.l.bf16 %v3590
  %v3947 = vunpack.c.h.bf16 %v3590
  %v3948 = vunpack.c.l.bf16 %v3591
  %v3949 = vunpack.c.h.bf16 %v3591
  %v3950 = vunpack.c.l.bf16 %v3592
  %v3951 = vunpack.c.h.bf16 %v3592
  %v3952 = vld [vmem:[#allocation2 + $0x10] sm:$0xff]
  %v3953 = vld [vmem:[#allocation2 + $0x18] sm:$0xff]
  %v3954 = vpack.c.bf16 %v3953, %v3952
  %v3955 = vld [vmem:[%s1] sm:$0xff]
  %v3956 = vld [vmem:[%s1 + $0x8] sm:$0xff]
  %v3957 = vld [vmem:[%s1 + $0x10] sm:$0xff]
  %v3958 = vld [vmem:[%s1 + $0x18] sm:$0xff]
  %v3959 = vld [vmem:[%s1 + $0x20] sm:$0xff]
  %v3960 = vld [vmem:[%s1 + $0x28] sm:$0xff]
  %v3961 = vld [vmem:[%s1 + $0x30] sm:$0xff]
  %v3962 = vld [vmem:[%s1 + $0x38] sm:$0xff]
  %v3963 = vld [vmem:[%s1 + $0x40] sm:$0xff]
  %v3964 = vld [vmem:[%s1 + $0x48] sm:$0xff]
  %v3965 = vld [vmem:[%s1 + $0x50] sm:$0xff]
  %v3966 = vld [vmem:[%s1 + $0x58] sm:$0xff]
  %v3967 = vld [vmem:[%s1 + $0x60] sm:$0xff]
  %v3968 = vld [vmem:[%s1 + $0x68] sm:$0xff]
  %v3969 = vld [vmem:[%s1 + $0x70] sm:$0xff]
  %v3970 = vld [vmem:[%s1 + $0x78] sm:$0xff]
  %v3971 = vld [vmem:[%s1 + $0x80] sm:$0xff]
  %v3972 = vld [vmem:[%s1 + $0x88] sm:$0xff]
  %v3973 = vld [vmem:[%s1 + $0x90] sm:$0xff]
  %v3974 = vld [vmem:[%s1 + $0x98] sm:$0xff]
  %v3975 = vld [vmem:[%s1 + $0xa0] sm:$0xff]
  %v3976 = vld [vmem:[%s1 + $0xa8] sm:$0xff]
  %v3977 = vld [vmem:[%s1 + $0xb0] sm:$0xff]
  %v3978 = vld [vmem:[%s1 + $0xb8] sm:$0xff]
  %v3979 = vld [vmem:[%s1 + $0xc0] sm:$0xff]
  %v3980 = vld [vmem:[%s1 + $0xc8] sm:$0xff]
  %v3981 = vld [vmem:[%s1 + $0xd0] sm:$0xff]
  %v3982 = vld [vmem:[%s1 + $0xd8] sm:$0xff]
  %v3983 = vld [vmem:[%s1 + $0xe0] sm:$0xff]
  %v3984 = vld [vmem:[%s1 + $0xe8] sm:$0xff]
  %v3985 = vld [vmem:[%s1 + $0xf0] sm:$0xff]
  %v3986 = vld [vmem:[%s1 + $0xf8] sm:$0xff]
  %v4019 = vunpack.c.l.b16 %v3955
  %v4020 = vunpack.c.h.b16 %v3955
  %v4021 = vunpack.c.l.b16 %v3956
  %v4022 = vunpack.c.h.b16 %v3956
  %v4023 = vunpack.c.l.b16 %v3957
  %v4024 = vunpack.c.h.b16 %v3957
  %v4025 = vunpack.c.l.b16 %v3958
  %v4026 = vunpack.c.h.b16 %v3958
  %v4027 = vunpack.c.l.b16 %v3959
  %v4028 = vunpack.c.h.b16 %v3959
  %v4029 = vunpack.c.l.b16 %v3960
  %v4030 = vunpack.c.h.b16 %v3960
  %v4031 = vunpack.c.l.b16 %v3961
  %v4032 = vunpack.c.h.b16 %v3961
  %v4033 = vunpack.c.l.b16 %v3962
  %v4034 = vunpack.c.h.b16 %v3962
  %v4035 = vunpack.c.l.b16 %v3963
  %v4036 = vunpack.c.h.b16 %v3963
  %v4037 = vunpack.c.l.b16 %v3964
  %v4038 = vunpack.c.h.b16 %v3964
  %v4039 = vunpack.c.l.b16 %v3965
  %v4040 = vunpack.c.h.b16 %v3965
  %v4041 = vunpack.c.l.b16 %v3966
  %v4042 = vunpack.c.h.b16 %v3966
  %v4043 = vunpack.c.l.b16 %v3967
  %v4044 = vunpack.c.h.b16 %v3967
  %v4045 = vunpack.c.l.b16 %v3968
  %v4046 = vunpack.c.h.b16 %v3968
  %v4047 = vunpack.c.l.b16 %v3969
  %v4048 = vunpack.c.h.b16 %v3969
  %v4049 = vunpack.c.l.b16 %v3970
  %v4050 = vunpack.c.h.b16 %v3970
  %v4051 = vunpack.c.l.b16 %v3971
  %v4052 = vunpack.c.h.b16 %v3971
  %v4053 = vunpack.c.l.b16 %v3972
  %v4054 = vunpack.c.h.b16 %v3972
  %v4055 = vunpack.c.l.b16 %v3973
  %v4056 = vunpack.c.h.b16 %v3973
  %v4057 = vunpack.c.l.b16 %v3974
  %v4058 = vunpack.c.h.b16 %v3974
  %v4059 = vunpack.c.l.b16 %v3975
  %v4060 = vunpack.c.h.b16 %v3975
  %v4061 = vunpack.c.l.b16 %v3976
  %v4062 = vunpack.c.h.b16 %v3976
  %v4063 = vunpack.c.l.b16 %v3977
  %v4064 = vunpack.c.h.b16 %v3977
  %v4065 = vunpack.c.l.b16 %v3978
  %v4066 = vunpack.c.h.b16 %v3978
  %v4067 = vunpack.c.l.b16 %v3979
  %v4068 = vunpack.c.h.b16 %v3979
  %v4069 = vunpack.c.l.b16 %v3980
  %v4070 = vunpack.c.h.b16 %v3980
  %v4071 = vunpack.c.l.b16 %v3981
  %v4072 = vunpack.c.h.b16 %v3981
  %v4073 = vunpack.c.l.b16 %v3982
  %v4074 = vunpack.c.h.b16 %v3982
  %v4075 = vunpack.c.l.b16 %v3983
  %v4076 = vunpack.c.h.b16 %v3983
  %v4077 = vunpack.c.l.b16 %v3984
  %v4078 = vunpack.c.h.b16 %v3984
  %v4079 = vunpack.c.l.b16 %v3985
  %v4080 = vunpack.c.h.b16 %v3985
  %v4081 = vunpack.c.l.b16 %v3986
  %v4082 = vunpack.c.h.b16 %v3986
  %v4083 = vpack.c.b16 %v4023, %v4019
  %v4084 = vpack.c.b16 %v4024, %v4020
  %v4085 = vpack.c.b16 %v4025, %v4021
  %v4086 = vpack.c.b16 %v4026, %v4022
  %v4087 = vpack.c.b16 %v4031, %v4027
  %v4088 = vpack.c.b16 %v4032, %v4028
  %v4089 = vpack.c.b16 %v4033, %v4029
  %v4090 = vpack.c.b16 %v4034, %v4030
  %v4091 = vpack.c.b16 %v4039, %v4035
  %v4092 = vpack.c.b16 %v4040, %v4036
  %v4093 = vpack.c.b16 %v4041, %v4037
  %v4094 = vpack.c.b16 %v4042, %v4038
  %v4095 = vpack.c.b16 %v4047, %v4043
  %v4096 = vpack.c.b16 %v4048, %v4044
  %v4097 = vpack.c.b16 %v4049, %v4045
  %v4098 = vpack.c.b16 %v4050, %v4046
  %v4099 = vpack.c.b16 %v4055, %v4051
  %v4100 = vpack.c.b16 %v4056, %v4052
  %v4101 = vpack.c.b16 %v4057, %v4053
  %v4102 = vpack.c.b16 %v4058, %v4054
  %v4103 = vpack.c.b16 %v4063, %v4059
  %v4104 = vpack.c.b16 %v4064, %v4060
  %v4105 = vpack.c.b16 %v4065, %v4061
  %v4106 = vpack.c.b16 %v4066, %v4062
  %v4107 = vpack.c.b16 %v4071, %v4067
  %v4108 = vpack.c.b16 %v4072, %v4068
  %v4109 = vpack.c.b16 %v4073, %v4069
  %v4110 = vpack.c.b16 %v4074, %v4070
  %v4111 = vpack.c.b16 %v4079, %v4075
  %v4112 = vpack.c.b16 %v4080, %v4076
  %v4113 = vpack.c.b16 %v4081, %v4077
  %v4114 = vpack.c.b16 %v4082, %v4078
  %4147 = vmatprep.subr.bf16.mxu0 %v4084
  %4148 = vmatpush1.bf16.msra.mxu0 %v4083
  %4149 = vmatprep.subr.bf16.mxu0 %v4088
  %4150 = vmatpush1.bf16.msra.mxu0 %v4087
  %4151 = vmatprep.subr.bf16.mxu0 %v4092
  %4152 = vmatpush1.bf16.msra.mxu0 %v4091
  %4153 = vmatprep.subr.bf16.mxu0 %v4096
  %4154 = vmatpush1.bf16.msra.mxu0 %v4095
  %4155 = vmatprep.subr.bf16.mxu0 %v4100
  %4156 = vmatpush1.bf16.msra.mxu0 %v4099
  %4157 = vmatprep.subr.bf16.mxu0 %v4104
  %4158 = vmatpush1.bf16.msra.mxu0 %v4103
  %4159 = vmatprep.subr.bf16.mxu0 %v4108
  %4160 = vmatpush1.bf16.msra.mxu0 %v4107
  %4161 = vmatprep.subr.bf16.mxu0 %v4112
  %4162 = vmatpush1.bf16.msra.mxu0 %v4111
  %4163 = vmatprep.subr.bf16.mxu0 0
  %4164 = vmatpush1.bf16.msra.mxu0 0
  %4165 = vmatprep.subr.bf16.mxu0 0
  %4166 = vmatpush1.bf16.msra.mxu0 0
  %4167 = vmatprep.subr.bf16.mxu0 0
  %4168 = vmatpush1.bf16.msra.mxu0 0
  %4169 = vmatprep.subr.bf16.mxu0 0
  %4170 = vmatpush1.bf16.msra.mxu0 0
  %4171 = vmatprep.subr.bf16.mxu0 0
  %4172 = vmatpush1.bf16.msra.mxu0 0
  %4173 = vmatprep.subr.bf16.mxu0 0
  %4174 = vmatpush1.bf16.msra.mxu0 0
  %4175 = vmatprep.subr.bf16.mxu0 0
  %4176 = vmatpush1.bf16.msra.mxu0 0
  %4177 = vmatprep.subr.bf16.mxu0 0
  %4178 = vmatpush1.bf16.msra.mxu0 0
  %4179 = vmatprep.mubr.bf16.mxu0 0
  %4180 = vmatmul.mubr.bf16.gmra.mrb[0].mxu0 %v3954
  %v4181 = vpop.f32.mrb[0].mxu0
  %v4182 = vadd.f32 0.0, %v4181
  %v4183 = vpop.f32.mrb[0].mxu0
  %v4184 = vadd.f32 0.0, %v4183
  %v4185 = vpop.f32.mrb[0].mxu0
  %v4186 = vadd.f32 0.0, %v4185
  %v4187 = vpop.f32.mrb[0].mxu0
  %v4188 = vadd.f32 0.0, %v4187
  %4189 = vdwg.mxu0
  %4190 = vmatprep.subr.bf16.mxu0 %v4086
  %4191 = vmatpush1.bf16.msra.mxu0 %v4085
  %4192 = vmatprep.subr.bf16.mxu0 %v4090
  %4193 = vmatpush1.bf16.msra.mxu0 %v4089
  %4194 = vmatprep.subr.bf16.mxu0 %v4094
  %4195 = vmatpush1.bf16.msra.mxu0 %v4093
  %4196 = vmatprep.subr.bf16.mxu0 %v4098
  %4197 = vmatpush1.bf16.msra.mxu0 %v4097
  %4198 = vmatprep.subr.bf16.mxu0 %v4102
  %4199 = vmatpush1.bf16.msra.mxu0 %v4101
  %4200 = vmatprep.subr.bf16.mxu0 %v4106
  %4201 = vmatpush1.bf16.msra.mxu0 %v4105
  %4202 = vmatprep.subr.bf16.mxu0 %v4110
  %4203 = vmatpush1.bf16.msra.mxu0 %v4109
  %4204 = vmatprep.subr.bf16.mxu0 %v4114
  %4205 = vmatpush1.bf16.msra.mxu0 %v4113
  %4206 = vmatprep.subr.bf16.mxu0 0
  %4207 = vmatpush1.bf16.msra.mxu0 0
  %4208 = vmatprep.subr.bf16.mxu0 0
  %4209 = vmatpush1.bf16.msra.mxu0 0
  %4210 = vmatprep.subr.bf16.mxu0 0
  %4211 = vmatpush1.bf16.msra.mxu0 0
  %4212 = vmatprep.subr.bf16.mxu0 0
  %4213 = vmatpush1.bf16.msra.mxu0 0
  %4214 = vmatprep.subr.bf16.mxu0 0
  %4215 = vmatpush1.bf16.msra.mxu0 0
  %4216 = vmatprep.subr.bf16.mxu0 0
  %4217 = vmatpush1.bf16.msra.mxu0 0
  %4218 = vmatprep.subr.bf16.mxu0 0
  %4219 = vmatpush1.bf16.msra.mxu0 0
  %4220 = vmatprep.subr.bf16.mxu0 0
  %4221 = vmatpush1.bf16.msra.mxu0 0
  %4222 = vmatprep.mubr.bf16.mxu0 0
  %4223 = vmatmul.mubr.bf16.gmra.mrb[0].mxu0 %v3954
  %v4224 = vpop.f32.mrb[0].mxu0
  %v4225 = vadd.f32 0.0, %v4224
  %v4226 = vpop.f32.mrb[0].mxu0
  %v4227 = vadd.f32 0.0, %v4226
  %v4228 = vpop.f32.mrb[0].mxu0
  %v4229 = vadd.f32 0.0, %v4228
  %v4230 = vpop.f32.mrb[0].mxu0
  %v4231 = vadd.f32 0.0, %v4230
  %4232 = vdwg.mxu0
  %v4233 = vadd.f32 %v3944, %v4182
  %v4234 = vadd.f32 %v3945, %v4184
  %v4235 = vadd.f32 %v3946, %v4225
  %v4236 = vadd.f32 %v3947, %v4227
  %v4237 = vadd.f32 %v3948, %v4186
  %v4238 = vadd.f32 %v3949, %v4188
  %v4239 = vadd.f32 %v3950, %v4229
  %v4240 = vadd.f32 %v3951, %v4231
  %v4241 = vxor.u32 %v4233, 2147483648
  %v4242 = vxor.u32 %v4237, 2147483648
  %v4243 = vmul.f32 %v4241, 1.442695
  %v4244 = vpow.pop %v4243
  %v4245 = vmul.f32 %v4242, 1.442695
  %v4246 = vpow.pop %v4245
  %v4247 = vadd.f32 %v4244, 1.0
  %v4248 = vadd.f32 %v4246, 1.0
  %v4249 = vrcp.pop %v4247
  %v4250 = vmul.f32 1.0, %v4249
  %v4251 = vrcp.pop %v4248
  %v4252 = vmul.f32 1.0, %v4251
  %v4253 = vxor.u32 %v4234, 2147483648
  %v4254 = vxor.u32 %v4238, 2147483648
  %v4255 = vmul.f32 %v4253, 1.442695
  %v4256 = vpow.pop %v4255
  %v4257 = vmul.f32 %v4254, 1.442695
  %v4258 = vpow.pop %v4257
  %v4259 = vadd.f32 %v4256, 1.0
  %v4260 = vadd.f32 %v4258, 1.0
  %v4261 = vrcp.pop %v4259
  %v4262 = vmul.f32 1.0, %v4261
  %v4263 = vrcp.pop %v4260
  %v4264 = vmul.f32 1.0, %v4263
  %v4265 = vtanh.pop %v4235
  %v4266 = vtanh.pop %v4239
  %v4267 = vxor.u32 %v4236, 2147483648
  %v4268 = vxor.u32 %v4240, 2147483648
  %v4269 = vmul.f32 %v4267, 1.442695
  %v4270 = vpow.pop %v4269
  %v4271 = vmul.f32 %v4268, 1.442695
  %v4272 = vpow.pop %v4271
  %v4273 = vadd.f32 %v4270, 1.0
  %v4274 = vadd.f32 %v4272, 1.0
  %v4275 = vrcp.pop %v4273
  %v4276 = vmul.f32 1.0, %v4275
  %v4277 = vrcp.pop %v4274
  %v4278 = vmul.f32 1.0, %v4277
  %v4279 = vld [vmem:[#allocation3 + $0x10] sm:$0xff]
  %v4280 = vld [vmem:[#allocation3 + $0x18] sm:$0xff]
  %v4281 = vmul.f32 %v4262, %v4279
  %v4282 = vmul.f32 %v4264, %v4280
  %v4283 = vmul.f32 %v4250, %v4265
  %v4284 = vmul.f32 %v4252, %v4266
  %v4285 = vadd.f32 %v4281, %v4283
  %v4286 = vadd.f32 %v4282, %v4284
  %v4287 = vtanh.pop %v4285
  %v4288 = vtanh.pop %v4286
  %v4289 = vmul.f32 %v4276, %v4287
  %v4290 = vmul.f32 %v4278, %v4288
  %4291 = vst [vmem:[#allocation3 + $0x10] sm:$0xff] %v4285
  %4292 = vst [vmem:[#allocation3 + $0x18] sm:$0xff] %v4286
  %4293 = vst [vmem:[#allocation2 + $0x10] sm:$0xff] %v4289
  %4294 = vst [vmem:[#allocation2 + $0x18] sm:$0xff] %v4290
  %s4295 = scalar_lea.vmem %s0, 384
  %v4296 = vld [vmem:[%s4295] sm:$0xff]
  %v4297 = vld [vmem:[%s4295 + $0x8] sm:$0xff]
  %v4298 = vld [vmem:[%s4295 + $0x10] sm:$0xff]
  %v4299 = vld [vmem:[%s4295 + $0x18] sm:$0xff]
  %v4300 = vld [vmem:[%s4295 + $0x20] sm:$0xff]
  %v4301 = vld [vmem:[%s4295 + $0x28] sm:$0xff]
  %v4302 = vld [vmem:[%s4295 + $0x30] sm:$0xff]
  %v4303 = vld [vmem:[%s4295 + $0x38] sm:$0xff]
  %v4304 = vunpack.c.l.bf16 %v4296
  %v4305 = vunpack.c.h.bf16 %v4296
  %v4306 = vunpack.c.l.bf16 %v4297
  %v4307 = vunpack.c.h.bf16 %v4297
  %v4308 = vunpack.c.l.bf16 %v4298
  %v4309 = vunpack.c.h.bf16 %v4298
  %v4310 = vunpack.c.l.bf16 %v4299
  %v4311 = vunpack.c.h.bf16 %v4299
  %v4312 = vld [vmem:[#allocation2] sm:$0xff]
  %v4313 = vld [vmem:[#allocation2 + $0x8] sm:$0xff]
  %v4314 = vpack.c.bf16 %v4313, %v4312
  %v4315 = vld [vmem:[%s1] sm:$0xff]
  %v4316 = vld [vmem:[%s1 + $0x8] sm:$0xff]
  %v4317 = vld [vmem:[%s1 + $0x10] sm:$0xff]
  %v4318 = vld [vmem:[%s1 + $0x18] sm:$0xff]
  %v4319 = vld [vmem:[%s1 + $0x20] sm:$0xff]
  %v4320 = vld [vmem:[%s1 + $0x28] sm:$0xff]
  %v4321 = vld [vmem:[%s1 + $0x30] sm:$0xff]
  %v4322 = vld [vmem:[%s1 + $0x38] sm:$0xff]
  %v4323 = vld [vmem:[%s1 + $0x40] sm:$0xff]
  %v4324 = vld [vmem:[%s1 + $0x48] sm:$0xff]
  %v4325 = vld [vmem:[%s1 + $0x50] sm:$0xff]
  %v4326 = vld [vmem:[%s1 + $0x58] sm:$0xff]
  %v4327 = vld [vmem:[%s1 + $0x60] sm:$0xff]
  %v4328 = vld [vmem:[%s1 + $0x68] sm:$0xff]
  %v4329 = vld [vmem:[%s1 + $0x70] sm:$0xff]
  %v4330 = vld [vmem:[%s1 + $0x78] sm:$0xff]
  %v4331 = vld [vmem:[%s1 + $0x80] sm:$0xff]
  %v4332 = vld [vmem:[%s1 + $0x88] sm:$0xff]
  %v4333 = vld [vmem:[%s1 + $0x90] sm:$0xff]
  %v4334 = vld [vmem:[%s1 + $0x98] sm:$0xff]
  %v4335 = vld [vmem:[%s1 + $0xa0] sm:$0xff]
  %v4336 = vld [vmem:[%s1 + $0xa8] sm:$0xff]
  %v4337 = vld [vmem:[%s1 + $0xb0] sm:$0xff]
  %v4338 = vld [vmem:[%s1 + $0xb8] sm:$0xff]
  %v4339 = vld [vmem:[%s1 + $0xc0] sm:$0xff]
  %v4340 = vld [vmem:[%s1 + $0xc8] sm:$0xff]
  %v4341 = vld [vmem:[%s1 + $0xd0] sm:$0xff]
  %v4342 = vld [vmem:[%s1 + $0xd8] sm:$0xff]
  %v4343 = vld [vmem:[%s1 + $0xe0] sm:$0xff]
  %v4344 = vld [vmem:[%s1 + $0xe8] sm:$0xff]
  %v4345 = vld [vmem:[%s1 + $0xf0] sm:$0xff]
  %v4346 = vld [vmem:[%s1 + $0xf8] sm:$0xff]
  %v4379 = vunpack.c.l.b16 %v4315
  %v4380 = vunpack.c.h.b16 %v4315
  %v4381 = vunpack.c.l.b16 %v4316
  %v4382 = vunpack.c.h.b16 %v4316
  %v4383 = vunpack.c.l.b16 %v4317
  %v4384 = vunpack.c.h.b16 %v4317
  %v4385 = vunpack.c.l.b16 %v4318
  %v4386 = vunpack.c.h.b16 %v4318
  %v4387 = vunpack.c.l.b16 %v4319
  %v4388 = vunpack.c.h.b16 %v4319
  %v4389 = vunpack.c.l.b16 %v4320
  %v4390 = vunpack.c.h.b16 %v4320
  %v4391 = vunpack.c.l.b16 %v4321
  %v4392 = vunpack.c.h.b16 %v4321
  %v4393 = vunpack.c.l.b16 %v4322
  %v4394 = vunpack.c.h.b16 %v4322
  %v4395 = vunpack.c.l.b16 %v4323
  %v4396 = vunpack.c.h.b16 %v4323
  %v4397 = vunpack.c.l.b16 %v4324
  %v4398 = vunpack.c.h.b16 %v4324
  %v4399 = vunpack.c.l.b16 %v4325
  %v4400 = vunpack.c.h.b16 %v4325
  %v4401 = vunpack.c.l.b16 %v4326
  %v4402 = vunpack.c.h.b16 %v4326
  %v4403 = vunpack.c.l.b16 %v4327
  %v4404 = vunpack.c.h.b16 %v4327
  %v4405 = vunpack.c.l.b16 %v4328
  %v4406 = vunpack.c.h.b16 %v4328
  %v4407 = vunpack.c.l.b16 %v4329
  %v4408 = vunpack.c.h.b16 %v4329
  %v4409 = vunpack.c.l.b16 %v4330
  %v4410 = vunpack.c.h.b16 %v4330
  %v4411 = vunpack.c.l.b16 %v4331
  %v4412 = vunpack.c.h.b16 %v4331
  %v4413 = vunpack.c.l.b16 %v4332
  %v4414 = vunpack.c.h.b16 %v4332
  %v4415 = vunpack.c.l.b16 %v4333
  %v4416 = vunpack.c.h.b16 %v4333
  %v4417 = vunpack.c.l.b16 %v4334
  %v4418 = vunpack.c.h.b16 %v4334
  %v4419 = vunpack.c.l.b16 %v4335
  %v4420 = vunpack.c.h.b16 %v4335
  %v4421 = vunpack.c.l.b16 %v4336
  %v4422 = vunpack.c.h.b16 %v4336
  %v4423 = vunpack.c.l.b16 %v4337
  %v4424 = vunpack.c.h.b16 %v4337
  %v4425 = vunpack.c.l.b16 %v4338
  %v4426 = vunpack.c.h.b16 %v4338
  %v4427 = vunpack.c.l.b16 %v4339
  %v4428 = vunpack.c.h.b16 %v4339
  %v4429 = vunpack.c.l.b16 %v4340
  %v4430 = vunpack.c.h.b16 %v4340
  %v4431 = vunpack.c.l.b16 %v4341
  %v4432 = vunpack.c.h.b16 %v4341
  %v4433 = vunpack.c.l.b16 %v4342
  %v4434 = vunpack.c.h.b16 %v4342
  %v4435 = vunpack.c.l.b16 %v4343
  %v4436 = vunpack.c.h.b16 %v4343
  %v4437 = vunpack.c.l.b16 %v4344
  %v4438 = vunpack.c.h.b16 %v4344
  %v4439 = vunpack.c.l.b16 %v4345
  %v4440 = vunpack.c.h.b16 %v4345
  %v4441 = vunpack.c.l.b16 %v4346
  %v4442 = vunpack.c.h.b16 %v4346
  %v4443 = vpack.c.b16 %v4383, %v4379
  %v4444 = vpack.c.b16 %v4384, %v4380
  %v4445 = vpack.c.b16 %v4385, %v4381
  %v4446 = vpack.c.b16 %v4386, %v4382
  %v4447 = vpack.c.b16 %v4391, %v4387
  %v4448 = vpack.c.b16 %v4392, %v4388
  %v4449 = vpack.c.b16 %v4393, %v4389
  %v4450 = vpack.c.b16 %v4394, %v4390
  %v4451 = vpack.c.b16 %v4399, %v4395
  %v4452 = vpack.c.b16 %v4400, %v4396
  %v4453 = vpack.c.b16 %v4401, %v4397
  %v4454 = vpack.c.b16 %v4402, %v4398
  %v4455 = vpack.c.b16 %v4407, %v4403
  %v4456 = vpack.c.b16 %v4408, %v4404
  %v4457 = vpack.c.b16 %v4409, %v4405
  %v4458 = vpack.c.b16 %v4410, %v4406
  %v4459 = vpack.c.b16 %v4415, %v4411
  %v4460 = vpack.c.b16 %v4416, %v4412
  %v4461 = vpack.c.b16 %v4417, %v4413
  %v4462 = vpack.c.b16 %v4418, %v4414
  %v4463 = vpack.c.b16 %v4423, %v4419
  %v4464 = vpack.c.b16 %v4424, %v4420
  %v4465 = vpack.c.b16 %v4425, %v4421
  %v4466 = vpack.c.b16 %v4426, %v4422
  %v4467 = vpack.c.b16 %v4431, %v4427
  %v4468 = vpack.c.b16 %v4432, %v4428
  %v4469 = vpack.c.b16 %v4433, %v4429
  %v4470 = vpack.c.b16 %v4434, %v4430
  %v4471 = vpack.c.b16 %v4439, %v4435
  %v4472 = vpack.c.b16 %v4440, %v4436
  %v4473 = vpack.c.b16 %v4441, %v4437
  %v4474 = vpack.c.b16 %v4442, %v4438
  %4507 = vmatprep.subr.bf16.mxu0 %v4444
  %4508 = vmatpush1.bf16.msra.mxu0 %v4443
  %4509 = vmatprep.subr.bf16.mxu0 %v4448
  %4510 = vmatpush1.bf16.msra.mxu0 %v4447
  %4511 = vmatprep.subr.bf16.mxu0 %v4452
  %4512 = vmatpush1.bf16.msra.mxu0 %v4451
  %4513 = vmatprep.subr.bf16.mxu0 %v4456
  %4514 = vmatpush1.bf16.msra.mxu0 %v4455
  %4515 = vmatprep.subr.bf16.mxu0 %v4460
  %4516 = vmatpush1.bf16.msra.mxu0 %v4459
  %4517 = vmatprep.subr.bf16.mxu0 %v4464
  %4518 = vmatpush1.bf16.msra.mxu0 %v4463
  %4519 = vmatprep.subr.bf16.mxu0 %v4468
  %4520 = vmatpush1.bf16.msra.mxu0 %v4467
  %4521 = vmatprep.subr.bf16.mxu0 %v4472
  %4522 = vmatpush1.bf16.msra.mxu0 %v4471
  %4523 = vmatprep.subr.bf16.mxu0 0
  %4524 = vmatpush1.bf16.msra.mxu0 0
  %4525 = vmatprep.subr.bf16.mxu0 0
  %4526 = vmatpush1.bf16.msra.mxu0 0
  %4527 = vmatprep.subr.bf16.mxu0 0
  %4528 = vmatpush1.bf16.msra.mxu0 0
  %4529 = vmatprep.subr.bf16.mxu0 0
  %4530 = vmatpush1.bf16.msra.mxu0 0
  %4531 = vmatprep.subr.bf16.mxu0 0
  %4532 = vmatpush1.bf16.msra.mxu0 0
  %4533 = vmatprep.subr.bf16.mxu0 0
  %4534 = vmatpush1.bf16.msra.mxu0 0
  %4535 = vmatprep.subr.bf16.mxu0 0
  %4536 = vmatpush1.bf16.msra.mxu0 0
  %4537 = vmatprep.subr.bf16.mxu0 0
  %4538 = vmatpush1.bf16.msra.mxu0 0
  %4539 = vmatprep.mubr.bf16.mxu0 0
  %4540 = vmatmul.mubr.bf16.gmra.mrb[0].mxu0 %v4314
  %v4541 = vpop.f32.mrb[0].mxu0
  %v4542 = vadd.f32 0.0, %v4541
  %v4543 = vpop.f32.mrb[0].mxu0
  %v4544 = vadd.f32 0.0, %v4543
  %v4545 = vpop.f32.mrb[0].mxu0
  %v4546 = vadd.f32 0.0, %v4545
  %v4547 = vpop.f32.mrb[0].mxu0
  %v4548 = vadd.f32 0.0, %v4547
  %4549 = vdwg.mxu0
  %4550 = vmatprep.subr.bf16.mxu0 %v4446
  %4551 = vmatpush1.bf16.msra.mxu0 %v4445
  %4552 = vmatprep.subr.bf16.mxu0 %v4450
  %4553 = vmatpush1.bf16.msra.mxu0 %v4449
  %4554 = vmatprep.subr.bf16.mxu0 %v4454
  %4555 = vmatpush1.bf16.msra.mxu0 %v4453
  %4556 = vmatprep.subr.bf16.mxu0 %v4458
  %4557 = vmatpush1.bf16.msra.mxu0 %v4457
  %4558 = vmatprep.subr.bf16.mxu0 %v4462
  %4559 = vmatpush1.bf16.msra.mxu0 %v4461
  %4560 = vmatprep.subr.bf16.mxu0 %v4466
  %4561 = vmatpush1.bf16.msra.mxu0 %v4465
  %4562 = vmatprep.subr.bf16.mxu0 %v4470
  %4563 = vmatpush1.bf16.msra.mxu0 %v4469
  %4564 = vmatprep.subr.bf16.mxu0 %v4474
  %4565 = vmatpush1.bf16.msra.mxu0 %v4473
  %4566 = vmatprep.subr.bf16.mxu0 0
  %4567 = vmatpush1.bf16.msra.mxu0 0
  %4568 = vmatprep.subr.bf16.mxu0 0
  %4569 = vmatpush1.bf16.msra.mxu0 0
  %4570 = vmatprep.subr.bf16.mxu0 0
  %4571 = vmatpush1.bf16.msra.mxu0 0
  %4572 = vmatprep.subr.bf16.mxu0 0
  %4573 = vmatpush1.bf16.msra.mxu0 0
  %4574 = vmatprep.subr.bf16.mxu0 0
  %4575 = vmatpush1.bf16.msra.mxu0 0
  %4576 = vmatprep.subr.bf16.mxu0 0
  %4577 = vmatpush1.bf16.msra.mxu0 0
  %4578 = vmatprep.subr.bf16.mxu0 0
  %4579 = vmatpush1.bf16.msra.mxu0 0
  %4580 = vmatprep.subr.bf16.mxu0 0
  %4581 = vmatpush1.bf16.msra.mxu0 0
  %4582 = vmatprep.mubr.bf16.mxu0 0
  %4583 = vmatmul.mubr.bf16.gmra.mrb[0].mxu0 %v4314
  %v4584 = vpop.f32.mrb[0].mxu0
  %v4585 = vadd.f32 0.0, %v4584
  %v4586 = vpop.f32.mrb[0].mxu0
  %v4587 = vadd.f32 0.0, %v4586
  %v4588 = vpop.f32.mrb[0].mxu0
  %v4589 = vadd.f32 0.0, %v4588
  %v4590 = vpop.f32.mrb[0].mxu0
  %v4591 = vadd.f32 0.0, %v4590
  %4592 = vdwg.mxu0
  %v4593 = vadd.f32 %v4304, %v4542
  %v4594 = vadd.f32 %v4305, %v4544
  %v4595 = vadd.f32 %v4306, %v4585
  %v4596 = vadd.f32 %v4307, %v4587
  %v4597 = vadd.f32 %v4308, %v4546
  %v4598 = vadd.f32 %v4309, %v4548
  %v4599 = vadd.f32 %v4310, %v4589
  %v4600 = vadd.f32 %v4311, %v4591
  %v4601 = vxor.u32 %v4593, 2147483648
  %v4602 = vxor.u32 %v4597, 2147483648
  %v4603 = vmul.f32 %v4601, 1.442695
  %v4604 = vpow.pop %v4603
  %v4605 = vmul.f32 %v4602, 1.442695
  %v4606 = vpow.pop %v4605
  %v4607 = vadd.f32 %v4604, 1.0
  %v4608 = vadd.f32 %v4606, 1.0
  %v4609 = vrcp.pop %v4607
  %v4610 = vmul.f32 1.0, %v4609
  %v4611 = vrcp.pop %v4608
  %v4612 = vmul.f32 1.0, %v4611
  %v4613 = vxor.u32 %v4594, 2147483648
  %v4614 = vxor.u32 %v4598, 2147483648
  %v4615 = vmul.f32 %v4613, 1.442695
  %v4616 = vpow.pop %v4615
  %v4617 = vmul.f32 %v4614, 1.442695
  %v4618 = vpow.pop %v4617
  %v4619 = vadd.f32 %v4616, 1.0
  %v4620 = vadd.f32 %v4618, 1.0
  %v4621 = vrcp.pop %v4619
  %v4622 = vmul.f32 1.0, %v4621
  %v4623 = vrcp.pop %v4620
  %v4624 = vmul.f32 1.0, %v4623
  %v4625 = vtanh.pop %v4595
  %v4626 = vtanh.pop %v4599
  %v4627 = vxor.u32 %v4596, 2147483648
  %v4628 = vxor.u32 %v4600, 2147483648
  %v4629 = vmul.f32 %v4627, 1.442695
  %v4630 = vpow.pop %v4629
  %v4631 = vmul.f32 %v4628, 1.442695
  %v4632 = vpow.pop %v4631
  %v4633 = vadd.f32 %v4630, 1.0
  %v4634 = vadd.f32 %v4632, 1.0
  %v4635 = vrcp.pop %v4633
  %v4636 = vmul.f32 1.0, %v4635
  %v4637 = vrcp.pop %v4634
  %v4638 = vmul.f32 1.0, %v4637
  %v4639 = vld [vmem:[#allocation3] sm:$0xff]
  %v4640 = vld [vmem:[#allocation3 + $0x8] sm:$0xff]
  %v4641 = vmul.f32 %v4622, %v4639
  %v4642 = vmul.f32 %v4624, %v4640
  %v4643 = vmul.f32 %v4610, %v4625
  %v4644 = vmul.f32 %v4612, %v4626
  %v4645 = vadd.f32 %v4641, %v4643
  %v4646 = vadd.f32 %v4642, %v4644
  %v4647 = vtanh.pop %v4645
  %v4648 = vtanh.pop %v4646
  %v4649 = vmul.f32 %v4636, %v4647
  %v4650 = vmul.f32 %v4638, %v4648
  %4651 = vst [vmem:[#allocation3] sm:$0xff] %v4645
  %4652 = vst [vmem:[#allocation3 + $0x8] sm:$0xff] %v4646
  %4653 = vst [vmem:[#allocation2] sm:$0xff] %v4649
  %4654 = vst [vmem:[#allocation2 + $0x8] sm:$0xff] %v4650
  %v4655 = vunpack.c.l.bf16 %v4300
  %v4656 = vunpack.c.h.bf16 %v4300
  %v4657 = vunpack.c.l.bf16 %v4301
  %v4658 = vunpack.c.h.bf16 %v4301
  %v4659 = vunpack.c.l.bf16 %v4302
  %v4660 = vunpack.c.h.bf16 %v4302
  %v4661 = vunpack.c.l.bf16 %v4303
  %v4662 = vunpack.c.h.bf16 %v4303
  %v4663 = vld [vmem:[#allocation2 + $0x10] sm:$0xff]
  %v4664 = vld [vmem:[#allocation2 + $0x18] sm:$0xff]
  %v4665 = vpack.c.bf16 %v4664, %v4663
  %v4666 = vld [vmem:[%s1] sm:$0xff]
  %v4667 = vld [vmem:[%s1 + $0x8] sm:$0xff]
  %v4668 = vld [vmem:[%s1 + $0x10] sm:$0xff]
  %v4669 = vld [vmem:[%s1 + $0x18] sm:$0xff]
  %v4670 = vld [vmem:[%s1 + $0x20] sm:$0xff]
  %v4671 = vld [vmem:[%s1 + $0x28] sm:$0xff]
  %v4672 = vld [vmem:[%s1 + $0x30] sm:$0xff]
  %v4673 = vld [vmem:[%s1 + $0x38] sm:$0xff]
  %v4674 = vld [vmem:[%s1 + $0x40] sm:$0xff]
  %v4675 = vld [vmem:[%s1 + $0x48] sm:$0xff]
  %v4676 = vld [vmem:[%s1 + $0x50] sm:$0xff]
  %v4677 = vld [vmem:[%s1 + $0x58] sm:$0xff]
  %v4678 = vld [vmem:[%s1 + $0x60] sm:$0xff]
  %v4679 = vld [vmem:[%s1 + $0x68] sm:$0xff]
  %v4680 = vld [vmem:[%s1 + $0x70] sm:$0xff]
  %v4681 = vld [vmem:[%s1 + $0x78] sm:$0xff]
  %v4682 = vld [vmem:[%s1 + $0x80] sm:$0xff]
  %v4683 = vld [vmem:[%s1 + $0x88] sm:$0xff]
  %v4684 = vld [vmem:[%s1 + $0x90] sm:$0xff]
  %v4685 = vld [vmem:[%s1 + $0x98] sm:$0xff]
  %v4686 = vld [vmem:[%s1 + $0xa0] sm:$0xff]
  %v4687 = vld [vmem:[%s1 + $0xa8] sm:$0xff]
  %v4688 = vld [vmem:[%s1 + $0xb0] sm:$0xff]
  %v4689 = vld [vmem:[%s1 + $0xb8] sm:$0xff]
  %v4690 = vld [vmem:[%s1 + $0xc0] sm:$0xff]
  %v4691 = vld [vmem:[%s1 + $0xc8] sm:$0xff]
  %v4692 = vld [vmem:[%s1 + $0xd0] sm:$0xff]
  %v4693 = vld [vmem:[%s1 + $0xd8] sm:$0xff]
  %v4694 = vld [vmem:[%s1 + $0xe0] sm:$0xff]
  %v4695 = vld [vmem:[%s1 + $0xe8] sm:$0xff]
  %v4696 = vld [vmem:[%s1 + $0xf0] sm:$0xff]
  %v4697 = vld [vmem:[%s1 + $0xf8] sm:$0xff]
  %v4730 = vunpack.c.l.b16 %v4666
  %v4731 = vunpack.c.h.b16 %v4666
  %v4732 = vunpack.c.l.b16 %v4667
  %v4733 = vunpack.c.h.b16 %v4667
  %v4734 = vunpack.c.l.b16 %v4668
  %v4735 = vunpack.c.h.b16 %v4668
  %v4736 = vunpack.c.l.b16 %v4669
  %v4737 = vunpack.c.h.b16 %v4669
  %v4738 = vunpack.c.l.b16 %v4670
  %v4739 = vunpack.c.h.b16 %v4670
  %v4740 = vunpack.c.l.b16 %v4671
  %v4741 = vunpack.c.h.b16 %v4671
  %v4742 = vunpack.c.l.b16 %v4672
  %v4743 = vunpack.c.h.b16 %v4672
  %v4744 = vunpack.c.l.b16 %v4673
  %v4745 = vunpack.c.h.b16 %v4673
  %v4746 = vunpack.c.l.b16 %v4674
  %v4747 = vunpack.c.h.b16 %v4674
  %v4748 = vunpack.c.l.b16 %v4675
  %v4749 = vunpack.c.h.b16 %v4675
  %v4750 = vunpack.c.l.b16 %v4676
  %v4751 = vunpack.c.h.b16 %v4676
  %v4752 = vunpack.c.l.b16 %v4677
  %v4753 = vunpack.c.h.b16 %v4677
  %v4754 = vunpack.c.l.b16 %v4678
  %v4755 = vunpack.c.h.b16 %v4678
  %v4756 = vunpack.c.l.b16 %v4679
  %v4757 = vunpack.c.h.b16 %v4679
  %v4758 = vunpack.c.l.b16 %v4680
  %v4759 = vunpack.c.h.b16 %v4680
  %v4760 = vunpack.c.l.b16 %v4681
  %v4761 = vunpack.c.h.b16 %v4681
  %v4762 = vunpack.c.l.b16 %v4682
  %v4763 = vunpack.c.h.b16 %v4682
  %v4764 = vunpack.c.l.b16 %v4683
  %v4765 = vunpack.c.h.b16 %v4683
  %v4766 = vunpack.c.l.b16 %v4684
  %v4767 = vunpack.c.h.b16 %v4684
  %v4768 = vunpack.c.l.b16 %v4685
  %v4769 = vunpack.c.h.b16 %v4685
  %v4770 = vunpack.c.l.b16 %v4686
  %v4771 = vunpack.c.h.b16 %v4686
  %v4772 = vunpack.c.l.b16 %v4687
  %v4773 = vunpack.c.h.b16 %v4687
  %v4774 = vunpack.c.l.b16 %v4688
  %v4775 = vunpack.c.h.b16 %v4688
  %v4776 = vunpack.c.l.b16 %v4689
  %v4777 = vunpack.c.h.b16 %v4689
  %v4778 = vunpack.c.l.b16 %v4690
  %v4779 = vunpack.c.h.b16 %v4690
  %v4780 = vunpack.c.l.b16 %v4691
  %v4781 = vunpack.c.h.b16 %v4691
  %v4782 = vunpack.c.l.b16 %v4692
  %v4783 = vunpack.c.h.b16 %v4692
  %v4784 = vunpack.c.l.b16 %v4693
  %v4785 = vunpack.c.h.b16 %v4693
  %v4786 = vunpack.c.l.b16 %v4694
  %v4787 = vunpack.c.h.b16 %v4694
  %v4788 = vunpack.c.l.b16 %v4695
  %v4789 = vunpack.c.h.b16 %v4695
  %v4790 = vunpack.c.l.b16 %v4696
  %v4791 = vunpack.c.h.b16 %v4696
  %v4792 = vunpack.c.l.b16 %v4697
  %v4793 = vunpack.c.h.b16 %v4697
  %v4794 = vpack.c.b16 %v4734, %v4730
  %v4795 = vpack.c.b16 %v4735, %v4731
  %v4796 = vpack.c.b16 %v4736, %v4732
  %v4797 = vpack.c.b16 %v4737, %v4733
  %v4798 = vpack.c.b16 %v4742, %v4738
  %v4799 = vpack.c.b16 %v4743, %v4739
  %v4800 = vpack.c.b16 %v4744, %v4740
  %v4801 = vpack.c.b16 %v4745, %v4741
  %v4802 = vpack.c.b16 %v4750, %v4746
  %v4803 = vpack.c.b16 %v4751, %v4747
  %v4804 = vpack.c.b16 %v4752, %v4748
  %v4805 = vpack.c.b16 %v4753, %v4749
  %v4806 = vpack.c.b16 %v4758, %v4754
  %v4807 = vpack.c.b16 %v4759, %v4755
  %v4808 = vpack.c.b16 %v4760, %v4756
  %v4809 = vpack.c.b16 %v4761, %v4757
  %v4810 = vpack.c.b16 %v4766, %v4762
  %v4811 = vpack.c.b16 %v4767, %v4763
  %v4812 = vpack.c.b16 %v4768, %v4764
  %v4813 = vpack.c.b16 %v4769, %v4765
  %v4814 = vpack.c.b16 %v4774, %v4770
  %v4815 = vpack.c.b16 %v4775, %v4771
  %v4816 = vpack.c.b16 %v4776, %v4772
  %v4817 = vpack.c.b16 %v4777, %v4773
  %v4818 = vpack.c.b16 %v4782, %v4778
  %v4819 = vpack.c.b16 %v4783, %v4779
  %v4820 = vpack.c.b16 %v4784, %v4780
  %v4821 = vpack.c.b16 %v4785, %v4781
  %v4822 = vpack.c.b16 %v4790, %v4786
  %v4823 = vpack.c.b16 %v4791, %v4787
  %v4824 = vpack.c.b16 %v4792, %v4788
  %v4825 = vpack.c.b16 %v4793, %v4789
  %4858 = vmatprep.subr.bf16.mxu0 %v4795
  %4859 = vmatpush1.bf16.msra.mxu0 %v4794
  %4860 = vmatprep.subr.bf16.mxu0 %v4799
  %4861 = vmatpush1.bf16.msra.mxu0 %v4798
  %4862 = vmatprep.subr.bf16.mxu0 %v4803
  %4863 = vmatpush1.bf16.msra.mxu0 %v4802
  %4864 = vmatprep.subr.bf16.mxu0 %v4807
  %4865 = vmatpush1.bf16.msra.mxu0 %v4806
  %4866 = vmatprep.subr.bf16.mxu0 %v4811
  %4867 = vmatpush1.bf16.msra.mxu0 %v4810
  %4868 = vmatprep.subr.bf16.mxu0 %v4815
  %4869 = vmatpush1.bf16.msra.mxu0 %v4814
  %4870 = vmatprep.subr.bf16.mxu0 %v4819
  %4871 = vmatpush1.bf16.msra.mxu0 %v4818
  %4872 = vmatprep.subr.bf16.mxu0 %v4823
  %4873 = vmatpush1.bf16.msra.mxu0 %v4822
  %4874 = vmatprep.subr.bf16.mxu0 0
  %4875 = vmatpush1.bf16.msra.mxu0 0
  %4876 = vmatprep.subr.bf16.mxu0 0
  %4877 = vmatpush1.bf16.msra.mxu0 0
  %4878 = vmatprep.subr.bf16.mxu0 0
  %4879 = vmatpush1.bf16.msra.mxu0 0
  %4880 = vmatprep.subr.bf16.mxu0 0
  %4881 = vmatpush1.bf16.msra.mxu0 0
  %4882 = vmatprep.subr.bf16.mxu0 0
  %4883 = vmatpush1.bf16.msra.mxu0 0
  %4884 = vmatprep.subr.bf16.mxu0 0
  %4885 = vmatpush1.bf16.msra.mxu0 0
  %4886 = vmatprep.subr.bf16.mxu0 0
  %4887 = vmatpush1.bf16.msra.mxu0 0
  %4888 = vmatprep.subr.bf16.mxu0 0
  %4889 = vmatpush1.bf16.msra.mxu0 0
  %4890 = vmatprep.mubr.bf16.mxu0 0
  %4891 = vmatmul.mubr.bf16.gmra.mrb[0].mxu0 %v4665
  %v4892 = vpop.f32.mrb[0].mxu0
  %v4893 = vadd.f32 0.0, %v4892
  %v4894 = vpop.f32.mrb[0].mxu0
  %v4895 = vadd.f32 0.0, %v4894
  %v4896 = vpop.f32.mrb[0].mxu0
  %v4897 = vadd.f32 0.0, %v4896
  %v4898 = vpop.f32.mrb[0].mxu0
  %v4899 = vadd.f32 0.0, %v4898
  %4900 = vdwg.mxu0
  %4901 = vmatprep.subr.bf16.mxu0 %v4797
  %4902 = vmatpush1.bf16.msra.mxu0 %v4796
  %4903 = vmatprep.subr.bf16.mxu0 %v4801
  %4904 = vmatpush1.bf16.msra.mxu0 %v4800
  %4905 = vmatprep.subr.bf16.mxu0 %v4805
  %4906 = vmatpush1.bf16.msra.mxu0 %v4804
  %4907 = vmatprep.subr.bf16.mxu0 %v4809
  %4908 = vmatpush1.bf16.msra.mxu0 %v4808
  %4909 = vmatprep.subr.bf16.mxu0 %v4813
  %4910 = vmatpush1.bf16.msra.mxu0 %v4812
  %4911 = vmatprep.subr.bf16.mxu0 %v4817
  %4912 = vmatpush1.bf16.msra.mxu0 %v4816
  %4913 = vmatprep.subr.bf16.mxu0 %v4821
  %4914 = vmatpush1.bf16.msra.mxu0 %v4820
  %4915 = vmatprep.subr.bf16.mxu0 %v4825
  %4916 = vmatpush1.bf16.msra.mxu0 %v4824
  %4917 = vmatprep.subr.bf16.mxu0 0
  %4918 = vmatpush1.bf16.msra.mxu0 0
  %4919 = vmatprep.subr.bf16.mxu0 0
  %4920 = vmatpush1.bf16.msra.mxu0 0
  %4921 = vmatprep.subr.bf16.mxu0 0
  %4922 = vmatpush1.bf16.msra.mxu0 0
  %4923 = vmatprep.subr.bf16.mxu0 0
  %4924 = vmatpush1.bf16.msra.mxu0 0
  %4925 = vmatprep.subr.bf16.mxu0 0
  %4926 = vmatpush1.bf16.msra.mxu0 0
  %4927 = vmatprep.subr.bf16.mxu0 0
  %4928 = vmatpush1.bf16.msra.mxu0 0
  %4929 = vmatprep.subr.bf16.mxu0 0
  %4930 = vmatpush1.bf16.msra.mxu0 0
  %4931 = vmatprep.subr.bf16.mxu0 0
  %4932 = vmatpush1.bf16.msra.mxu0 0
  %4933 = vmatprep.mubr.bf16.mxu0 0
  %4934 = vmatmul.mubr.bf16.gmra.mrb[0].mxu0 %v4665
  %v4935 = vpop.f32.mrb[0].mxu0
  %v4936 = vadd.f32 0.0, %v4935
  %v4937 = vpop.f32.mrb[0].mxu0
  %v4938 = vadd.f32 0.0, %v4937
  %v4939 = vpop.f32.mrb[0].mxu0
  %v4940 = vadd.f32 0.0, %v4939
  %v4941 = vpop.f32.mrb[0].mxu0
  %v4942 = vadd.f32 0.0, %v4941
  %4943 = vdwg.mxu0
  %v4944 = vadd.f32 %v4655, %v4893
  %v4945 = vadd.f32 %v4656, %v4895
  %v4946 = vadd.f32 %v4657, %v4936
  %v4947 = vadd.f32 %v4658, %v4938
  %v4948 = vadd.f32 %v4659, %v4897
  %v4949 = vadd.f32 %v4660, %v4899
  %v4950 = vadd.f32 %v4661, %v4940
  %v4951 = vadd.f32 %v4662, %v4942
  %v4952 = vxor.u32 %v4944, 2147483648
  %v4953 = vxor.u32 %v4948, 2147483648
  %v4954 = vmul.f32 %v4952, 1.442695
  %v4955 = vpow.pop %v4954
  %v4956 = vmul.f32 %v4953, 1.442695
  %v4957 = vpow.pop %v4956
  %v4958 = vadd.f32 %v4955, 1.0
  %v4959 = vadd.f32 %v4957, 1.0
  %v4960 = vrcp.pop %v4958
  %v4961 = vmul.f32 1.0, %v4960
  %v4962 = vrcp.pop %v4959
  %v4963 = vmul.f32 1.0, %v4962
  %v4964 = vxor.u32 %v4945, 2147483648
  %v4965 = vxor.u32 %v4949, 2147483648
  %v4966 = vmul.f32 %v4964, 1.442695
  %v4967 = vpow.pop %v4966
  %v4968 = vmul.f32 %v4965, 1.442695
  %v4969 = vpow.pop %v4968
  %v4970 = vadd.f32 %v4967, 1.0
  %v4971 = vadd.f32 %v4969, 1.0
  %v4972 = vrcp.pop %v4970
  %v4973 = vmul.f32 1.0, %v4972
  %v4974 = vrcp.pop %v4971
  %v4975 = vmul.f32 1.0, %v4974
  %v4976 = vtanh.pop %v4946
  %v4977 = vtanh.pop %v4950
  %v4978 = vxor.u32 %v4947, 2147483648
  %v4979 = vxor.u32 %v4951, 2147483648
  %v4980 = vmul.f32 %v4978, 1.442695
  %v4981 = vpow.pop %v4980
  %v4982 = vmul.f32 %v4979, 1.442695
  %v4983 = vpow.pop %v4982
  %v4984 = vadd.f32 %v4981, 1.0
  %v4985 = vadd.f32 %v4983, 1.0
  %v4986 = vrcp.pop %v4984
  %v4987 = vmul.f32 1.0, %v4986
  %v4988 = vrcp.pop %v4985
  %v4989 = vmul.f32 1.0, %v4988
  %v4990 = vld [vmem:[#allocation3 + $0x10] sm:$0xff]
  %v4991 = vld [vmem:[#allocation3 + $0x18] sm:$0xff]
  %v4992 = vmul.f32 %v4973, %v4990
  %v4993 = vmul.f32 %v4975, %v4991
  %v4994 = vmul.f32 %v4961, %v4976
  %v4995 = vmul.f32 %v4963, %v4977
  %v4996 = vadd.f32 %v4992, %v4994
  %v4997 = vadd.f32 %v4993, %v4995
  %v4998 = vtanh.pop %v4996
  %v4999 = vtanh.pop %v4997
  %v5000 = vmul.f32 %v4987, %v4998
  %v5001 = vmul.f32 %v4989, %v4999
  %5002 = vst [vmem:[#allocation3 + $0x10] sm:$0xff] %v4996
  %5003 = vst [vmem:[#allocation3 + $0x18] sm:$0xff] %v4997
  %5004 = vst [vmem:[#allocation2 + $0x10] sm:$0xff] %v5000
  %5005 = vst [vmem:[#allocation2 + $0x18] sm:$0xff] %v5001
  %s5006 = scalar_lea.vmem %s0, 448
  %v5007 = vld [vmem:[%s5006] sm:$0xff]
  %v5008 = vld [vmem:[%s5006 + $0x8] sm:$0xff]
  %v5009 = vld [vmem:[%s5006 + $0x10] sm:$0xff]
  %v5010 = vld [vmem:[%s5006 + $0x18] sm:$0xff]
  %v5011 = vld [vmem:[%s5006 + $0x20] sm:$0xff]
  %v5012 = vld [vmem:[%s5006 + $0x28] sm:$0xff]
  %v5013 = vld [vmem:[%s5006 + $0x30] sm:$0xff]
  %v5014 = vld [vmem:[%s5006 + $0x38] sm:$0xff]
  %v5015 = vunpack.c.l.bf16 %v5007
  %v5016 = vunpack.c.h.bf16 %v5007
  %v5017 = vunpack.c.l.bf16 %v5008
  %v5018 = vunpack.c.h.bf16 %v5008
  %v5019 = vunpack.c.l.bf16 %v5009
  %v5020 = vunpack.c.h.bf16 %v5009
  %v5021 = vunpack.c.l.bf16 %v5010
  %v5022 = vunpack.c.h.bf16 %v5010
  %v5023 = vld [vmem:[#allocation2] sm:$0xff]
  %v5024 = vld [vmem:[#allocation2 + $0x8] sm:$0xff]
  %v5025 = vpack.c.bf16 %v5024, %v5023
  %v5026 = vld [vmem:[%s1] sm:$0xff]
  %v5027 = vld [vmem:[%s1 + $0x8] sm:$0xff]
  %v5028 = vld [vmem:[%s1 + $0x10] sm:$0xff]
  %v5029 = vld [vmem:[%s1 + $0x18] sm:$0xff]
  %v5030 = vld [vmem:[%s1 + $0x20] sm:$0xff]
  %v5031 = vld [vmem:[%s1 + $0x28] sm:$0xff]
  %v5032 = vld [vmem:[%s1 + $0x30] sm:$0xff]
  %v5033 = vld [vmem:[%s1 + $0x38] sm:$0xff]
  %v5034 = vld [vmem:[%s1 + $0x40] sm:$0xff]
  %v5035 = vld [vmem:[%s1 + $0x48] sm:$0xff]
  %v5036 = vld [vmem:[%s1 + $0x50] sm:$0xff]
  %v5037 = vld [vmem:[%s1 + $0x58] sm:$0xff]
  %v5038 = vld [vmem:[%s1 + $0x60] sm:$0xff]
  %v5039 = vld [vmem:[%s1 + $0x68] sm:$0xff]
  %v5040 = vld [vmem:[%s1 + $0x70] sm:$0xff]
  %v5041 = vld [vmem:[%s1 + $0x78] sm:$0xff]
  %v5042 = vld [vmem:[%s1 + $0x80] sm:$0xff]
  %v5043 = vld [vmem:[%s1 + $0x88] sm:$0xff]
  %v5044 = vld [vmem:[%s1 + $0x90] sm:$0xff]
  %v5045 = vld [vmem:[%s1 + $0x98] sm:$0xff]
  %v5046 = vld [vmem:[%s1 + $0xa0] sm:$0xff]
  %v5047 = vld [vmem:[%s1 + $0xa8] sm:$0xff]
  %v5048 = vld [vmem:[%s1 + $0xb0] sm:$0xff]
  %v5049 = vld [vmem:[%s1 + $0xb8] sm:$0xff]
  %v5050 = vld [vmem:[%s1 + $0xc0] sm:$0xff]
  %v5051 = vld [vmem:[%s1 + $0xc8] sm:$0xff]
  %v5052 = vld [vmem:[%s1 + $0xd0] sm:$0xff]
  %v5053 = vld [vmem:[%s1 + $0xd8] sm:$0xff]
  %v5054 = vld [vmem:[%s1 + $0xe0] sm:$0xff]
  %v5055 = vld [vmem:[%s1 + $0xe8] sm:$0xff]
  %v5056 = vld [vmem:[%s1 + $0xf0] sm:$0xff]
  %v5057 = vld [vmem:[%s1 + $0xf8] sm:$0xff]
  %v5090 = vunpack.c.l.b16 %v5026
  %v5091 = vunpack.c.h.b16 %v5026
  %v5092 = vunpack.c.l.b16 %v5027
  %v5093 = vunpack.c.h.b16 %v5027
  %v5094 = vunpack.c.l.b16 %v5028
  %v5095 = vunpack.c.h.b16 %v5028
  %v5096 = vunpack.c.l.b16 %v5029
  %v5097 = vunpack.c.h.b16 %v5029
  %v5098 = vunpack.c.l.b16 %v5030
  %v5099 = vunpack.c.h.b16 %v5030
  %v5100 = vunpack.c.l.b16 %v5031
  %v5101 = vunpack.c.h.b16 %v5031
  %v5102 = vunpack.c.l.b16 %v5032
  %v5103 = vunpack.c.h.b16 %v5032
  %v5104 = vunpack.c.l.b16 %v5033
  %v5105 = vunpack.c.h.b16 %v5033
  %v5106 = vunpack.c.l.b16 %v5034
  %v5107 = vunpack.c.h.b16 %v5034
  %v5108 = vunpack.c.l.b16 %v5035
  %v5109 = vunpack.c.h.b16 %v5035
  %v5110 = vunpack.c.l.b16 %v5036
  %v5111 = vunpack.c.h.b16 %v5036
  %v5112 = vunpack.c.l.b16 %v5037
  %v5113 = vunpack.c.h.b16 %v5037
  %v5114 = vunpack.c.l.b16 %v5038
  %v5115 = vunpack.c.h.b16 %v5038
  %v5116 = vunpack.c.l.b16 %v5039
  %v5117 = vunpack.c.h.b16 %v5039
  %v5118 = vunpack.c.l.b16 %v5040
  %v5119 = vunpack.c.h.b16 %v5040
  %v5120 = vunpack.c.l.b16 %v5041
  %v5121 = vunpack.c.h.b16 %v5041
  %v5122 = vunpack.c.l.b16 %v5042
  %v5123 = vunpack.c.h.b16 %v5042
  %v5124 = vunpack.c.l.b16 %v5043
  %v5125 = vunpack.c.h.b16 %v5043
  %v5126 = vunpack.c.l.b16 %v5044
  %v5127 = vunpack.c.h.b16 %v5044
  %v5128 = vunpack.c.l.b16 %v5045
  %v5129 = vunpack.c.h.b16 %v5045
  %v5130 = vunpack.c.l.b16 %v5046
  %v5131 = vunpack.c.h.b16 %v5046
  %v5132 = vunpack.c.l.b16 %v5047
  %v5133 = vunpack.c.h.b16 %v5047
  %v5134 = vunpack.c.l.b16 %v5048
  %v5135 = vunpack.c.h.b16 %v5048
  %v5136 = vunpack.c.l.b16 %v5049
  %v5137 = vunpack.c.h.b16 %v5049
  %v5138 = vunpack.c.l.b16 %v5050
  %v5139 = vunpack.c.h.b16 %v5050
  %v5140 = vunpack.c.l.b16 %v5051
  %v5141 = vunpack.c.h.b16 %v5051
  %v5142 = vunpack.c.l.b16 %v5052
  %v5143 = vunpack.c.h.b16 %v5052
  %v5144 = vunpack.c.l.b16 %v5053
  %v5145 = vunpack.c.h.b16 %v5053
  %v5146 = vunpack.c.l.b16 %v5054
  %v5147 = vunpack.c.h.b16 %v5054
  %v5148 = vunpack.c.l.b16 %v5055
  %v5149 = vunpack.c.h.b16 %v5055
  %v5150 = vunpack.c.l.b16 %v5056
  %v5151 = vunpack.c.h.b16 %v5056
  %v5152 = vunpack.c.l.b16 %v5057
  %v5153 = vunpack.c.h.b16 %v5057
  %v5154 = vpack.c.b16 %v5094, %v5090
  %v5155 = vpack.c.b16 %v5095, %v5091
  %v5156 = vpack.c.b16 %v5096, %v5092
  %v5157 = vpack.c.b16 %v5097, %v5093
  %v5158 = vpack.c.b16 %v5102, %v5098
  %v5159 = vpack.c.b16 %v5103, %v5099
  %v5160 = vpack.c.b16 %v5104, %v5100
  %v5161 = vpack.c.b16 %v5105, %v5101
  %v5162 = vpack.c.b16 %v5110, %v5106
  %v5163 = vpack.c.b16 %v5111, %v5107
  %v5164 = vpack.c.b16 %v5112, %v5108
  %v5165 = vpack.c.b16 %v5113, %v5109
  %v5166 = vpack.c.b16 %v5118, %v5114
  %v5167 = vpack.c.b16 %v5119, %v5115
  %v5168 = vpack.c.b16 %v5120, %v5116
  %v5169 = vpack.c.b16 %v5121, %v5117
  %v5170 = vpack.c.b16 %v5126, %v5122
  %v5171 = vpack.c.b16 %v5127, %v5123
  %v5172 = vpack.c.b16 %v5128, %v5124
  %v5173 = vpack.c.b16 %v5129, %v5125
  %v5174 = vpack.c.b16 %v5134, %v5130
  %v5175 = vpack.c.b16 %v5135, %v5131
  %v5176 = vpack.c.b16 %v5136, %v5132
  %v5177 = vpack.c.b16 %v5137, %v5133
  %v5178 = vpack.c.b16 %v5142, %v5138
  %v5179 = vpack.c.b16 %v5143, %v5139
  %v5180 = vpack.c.b16 %v5144, %v5140
  %v5181 = vpack.c.b16 %v5145, %v5141
  %v5182 = vpack.c.b16 %v5150, %v5146
  %v5183 = vpack.c.b16 %v5151, %v5147
  %v5184 = vpack.c.b16 %v5152, %v5148
  %v5185 = vpack.c.b16 %v5153, %v5149
  %5218 = vmatprep.subr.bf16.mxu0 %v5155
  %5219 = vmatpush1.bf16.msra.mxu0 %v5154
  %5220 = vmatprep.subr.bf16.mxu0 %v5159
  %5221 = vmatpush1.bf16.msra.mxu0 %v5158
  %5222 = vmatprep.subr.bf16.mxu0 %v5163
  %5223 = vmatpush1.bf16.msra.mxu0 %v5162
  %5224 = vmatprep.subr.bf16.mxu0 %v5167
  %5225 = vmatpush1.bf16.msra.mxu0 %v5166
  %5226 = vmatprep.subr.bf16.mxu0 %v5171
  %5227 = vmatpush1.bf16.msra.mxu0 %v5170
  %5228 = vmatprep.subr.bf16.mxu0 %v5175
  %5229 = vmatpush1.bf16.msra.mxu0 %v5174
  %5230 = vmatprep.subr.bf16.mxu0 %v5179
  %5231 = vmatpush1.bf16.msra.mxu0 %v5178
  %5232 = vmatprep.subr.bf16.mxu0 %v5183
  %5233 = vmatpush1.bf16.msra.mxu0 %v5182
  %5234 = vmatprep.subr.bf16.mxu0 0
  %5235 = vmatpush1.bf16.msra.mxu0 0
  %5236 = vmatprep.subr.bf16.mxu0 0
  %5237 = vmatpush1.bf16.msra.mxu0 0
  %5238 = vmatprep.subr.bf16.mxu0 0
  %5239 = vmatpush1.bf16.msra.mxu0 0
  %5240 = vmatprep.subr.bf16.mxu0 0
  %5241 = vmatpush1.bf16.msra.mxu0 0
  %5242 = vmatprep.subr.bf16.mxu0 0
  %5243 = vmatpush1.bf16.msra.mxu0 0
  %5244 = vmatprep.subr.bf16.mxu0 0
  %5245 = vmatpush1.bf16.msra.mxu0 0
  %5246 = vmatprep.subr.bf16.mxu0 0
  %5247 = vmatpush1.bf16.msra.mxu0 0
  %5248 = vmatprep.subr.bf16.mxu0 0
  %5249 = vmatpush1.bf16.msra.mxu0 0
  %5250 = vmatprep.mubr.bf16.mxu0 0
  %5251 = vmatmul.mubr.bf16.gmra.mrb[0].mxu0 %v5025
  %v5252 = vpop.f32.mrb[0].mxu0
  %v5253 = vadd.f32 0.0, %v5252
  %v5254 = vpop.f32.mrb[0].mxu0
  %v5255 = vadd.f32 0.0, %v5254
  %v5256 = vpop.f32.mrb[0].mxu0
  %v5257 = vadd.f32 0.0, %v5256
  %v5258 = vpop.f32.mrb[0].mxu0
  %v5259 = vadd.f32 0.0, %v5258
  %5260 = vdwg.mxu0
  %5261 = vmatprep.subr.bf16.mxu0 %v5157
  %5262 = vmatpush1.bf16.msra.mxu0 %v5156
  %5263 = vmatprep.subr.bf16.mxu0 %v5161
  %5264 = vmatpush1.bf16.msra.mxu0 %v5160
  %5265 = vmatprep.subr.bf16.mxu0 %v5165
  %5266 = vmatpush1.bf16.msra.mxu0 %v5164
  %5267 = vmatprep.subr.bf16.mxu0 %v5169
  %5268 = vmatpush1.bf16.msra.mxu0 %v5168
  %5269 = vmatprep.subr.bf16.mxu0 %v5173
  %5270 = vmatpush1.bf16.msra.mxu0 %v5172
  %5271 = vmatprep.subr.bf16.mxu0 %v5177
  %5272 = vmatpush1.bf16.msra.mxu0 %v5176
  %5273 = vmatprep.subr.bf16.mxu0 %v5181
  %5274 = vmatpush1.bf16.msra.mxu0 %v5180
  %5275 = vmatprep.subr.bf16.mxu0 %v5185
  %5276 = vmatpush1.bf16.msra.mxu0 %v5184
  %5277 = vmatprep.subr.bf16.mxu0 0
  %5278 = vmatpush1.bf16.msra.mxu0 0
  %5279 = vmatprep.subr.bf16.mxu0 0
  %5280 = vmatpush1.bf16.msra.mxu0 0
  %5281 = vmatprep.subr.bf16.mxu0 0
  %5282 = vmatpush1.bf16.msra.mxu0 0
  %5283 = vmatprep.subr.bf16.mxu0 0
  %5284 = vmatpush1.bf16.msra.mxu0 0
  %5285 = vmatprep.subr.bf16.mxu0 0
  %5286 = vmatpush1.bf16.msra.mxu0 0
  %5287 = vmatprep.subr.bf16.mxu0 0
  %5288 = vmatpush1.bf16.msra.mxu0 0
  %5289 = vmatprep.subr.bf16.mxu0 0
  %5290 = vmatpush1.bf16.msra.mxu0 0
  %5291 = vmatprep.subr.bf16.mxu0 0
  %5292 = vmatpush1.bf16.msra.mxu0 0
  %5293 = vmatprep.mubr.bf16.mxu0 0
  %5294 = vmatmul.mubr.bf16.gmra.mrb[0].mxu0 %v5025
  %v5295 = vpop.f32.mrb[0].mxu0
  %v5296 = vadd.f32 0.0, %v5295
  %v5297 = vpop.f32.mrb[0].mxu0
  %v5298 = vadd.f32 0.0, %v5297
  %v5299 = vpop.f32.mrb[0].mxu0
  %v5300 = vadd.f32 0.0, %v5299
  %v5301 = vpop.f32.mrb[0].mxu0
  %v5302 = vadd.f32 0.0, %v5301
  %5303 = vdwg.mxu0
  %v5304 = vadd.f32 %v5015, %v5253
  %v5305 = vadd.f32 %v5016, %v5255
  %v5306 = vadd.f32 %v5017, %v5296
  %v5307 = vadd.f32 %v5018, %v5298
  %v5308 = vadd.f32 %v5019, %v5257
  %v5309 = vadd.f32 %v5020, %v5259
  %v5310 = vadd.f32 %v5021, %v5300
  %v5311 = vadd.f32 %v5022, %v5302
  %v5312 = vxor.u32 %v5304, 2147483648
  %v5313 = vxor.u32 %v5308, 2147483648
  %v5314 = vmul.f32 %v5312, 1.442695
  %v5315 = vpow.pop %v5314
  %v5316 = vmul.f32 %v5313, 1.442695
  %v5317 = vpow.pop %v5316
  %v5318 = vadd.f32 %v5315, 1.0
  %v5319 = vadd.f32 %v5317, 1.0
  %v5320 = vrcp.pop %v5318
  %v5321 = vmul.f32 1.0, %v5320
  %v5322 = vrcp.pop %v5319
  %v5323 = vmul.f32 1.0, %v5322
  %v5324 = vxor.u32 %v5305, 2147483648
  %v5325 = vxor.u32 %v5309, 2147483648
  %v5326 = vmul.f32 %v5324, 1.442695
  %v5327 = vpow.pop %v5326
  %v5328 = vmul.f32 %v5325, 1.442695
  %v5329 = vpow.pop %v5328
  %v5330 = vadd.f32 %v5327, 1.0
  %v5331 = vadd.f32 %v5329, 1.0
  %v5332 = vrcp.pop %v5330
  %v5333 = vmul.f32 1.0, %v5332
  %v5334 = vrcp.pop %v5331
  %v5335 = vmul.f32 1.0, %v5334
  %v5336 = vtanh.pop %v5306
  %v5337 = vtanh.pop %v5310
  %v5338 = vxor.u32 %v5307, 2147483648
  %v5339 = vxor.u32 %v5311, 2147483648
  %v5340 = vmul.f32 %v5338, 1.442695
  %v5341 = vpow.pop %v5340
  %v5342 = vmul.f32 %v5339, 1.442695
  %v5343 = vpow.pop %v5342
  %v5344 = vadd.f32 %v5341, 1.0
  %v5345 = vadd.f32 %v5343, 1.0
  %v5346 = vrcp.pop %v5344
  %v5347 = vmul.f32 1.0, %v5346
  %v5348 = vrcp.pop %v5345
  %v5349 = vmul.f32 1.0, %v5348
  %v5350 = vld [vmem:[#allocation3] sm:$0xff]
  %v5351 = vld [vmem:[#allocation3 + $0x8] sm:$0xff]
  %v5352 = vmul.f32 %v5333, %v5350
  %v5353 = vmul.f32 %v5335, %v5351
  %v5354 = vmul.f32 %v5321, %v5336
  %v5355 = vmul.f32 %v5323, %v5337
  %v5356 = vadd.f32 %v5352, %v5354
  %v5357 = vadd.f32 %v5353, %v5355
  %v5358 = vtanh.pop %v5356
  %v5359 = vtanh.pop %v5357
  %v5360 = vmul.f32 %v5347, %v5358
  %v5361 = vmul.f32 %v5349, %v5359
  %5362 = vst [vmem:[#allocation3] sm:$0xff] %v5356
  %5363 = vst [vmem:[#allocation3 + $0x8] sm:$0xff] %v5357
  %5364 = vst [vmem:[#allocation2] sm:$0xff] %v5360
  %5365 = vst [vmem:[#allocation2 + $0x8] sm:$0xff] %v5361
  %v5366 = vunpack.c.l.bf16 %v5011
  %v5367 = vunpack.c.h.bf16 %v5011
  %v5368 = vunpack.c.l.bf16 %v5012
  %v5369 = vunpack.c.h.bf16 %v5012
  %v5370 = vunpack.c.l.bf16 %v5013
  %v5371 = vunpack.c.h.bf16 %v5013
  %v5372 = vunpack.c.l.bf16 %v5014
  %v5373 = vunpack.c.h.bf16 %v5014
  %v5374 = vld [vmem:[#allocation2 + $0x10] sm:$0xff]
  %v5375 = vld [vmem:[#allocation2 + $0x18] sm:$0xff]
  %v5376 = vpack.c.bf16 %v5375, %v5374
  %v5377 = vld [vmem:[%s1] sm:$0xff]
  %v5378 = vld [vmem:[%s1 + $0x8] sm:$0xff]
  %v5379 = vld [vmem:[%s1 + $0x10] sm:$0xff]
  %v5380 = vld [vmem:[%s1 + $0x18] sm:$0xff]
  %v5381 = vld [vmem:[%s1 + $0x20] sm:$0xff]
  %v5382 = vld [vmem:[%s1 + $0x28] sm:$0xff]
  %v5383 = vld [vmem:[%s1 + $0x30] sm:$0xff]
  %v5384 = vld [vmem:[%s1 + $0x38] sm:$0xff]
  %v5385 = vld [vmem:[%s1 + $0x40] sm:$0xff]
  %v5386 = vld [vmem:[%s1 + $0x48] sm:$0xff]
  %v5387 = vld [vmem:[%s1 + $0x50] sm:$0xff]
  %v5388 = vld [vmem:[%s1 + $0x58] sm:$0xff]
  %v5389 = vld [vmem:[%s1 + $0x60] sm:$0xff]
  %v5390 = vld [vmem:[%s1 + $0x68] sm:$0xff]
  %v5391 = vld [vmem:[%s1 + $0x70] sm:$0xff]
  %v5392 = vld [vmem:[%s1 + $0x78] sm:$0xff]
  %v5393 = vld [vmem:[%s1 + $0x80] sm:$0xff]
  %v5394 = vld [vmem:[%s1 + $0x88] sm:$0xff]
  %v5395 = vld [vmem:[%s1 + $0x90] sm:$0xff]
  %v5396 = vld [vmem:[%s1 + $0x98] sm:$0xff]
  %v5397 = vld [vmem:[%s1 + $0xa0] sm:$0xff]
  %v5398 = vld [vmem:[%s1 + $0xa8] sm:$0xff]
  %v5399 = vld [vmem:[%s1 + $0xb0] sm:$0xff]
  %v5400 = vld [vmem:[%s1 + $0xb8] sm:$0xff]
  %v5401 = vld [vmem:[%s1 + $0xc0] sm:$0xff]
  %v5402 = vld [vmem:[%s1 + $0xc8] sm:$0xff]
  %v5403 = vld [vmem:[%s1 + $0xd0] sm:$0xff]
  %v5404 = vld [vmem:[%s1 + $0xd8] sm:$0xff]
  %v5405 = vld [vmem:[%s1 + $0xe0] sm:$0xff]
  %v5406 = vld [vmem:[%s1 + $0xe8] sm:$0xff]
  %v5407 = vld [vmem:[%s1 + $0xf0] sm:$0xff]
  %v5408 = vld [vmem:[%s1 + $0xf8] sm:$0xff]
  %v5441 = vunpack.c.l.b16 %v5377
  %v5442 = vunpack.c.h.b16 %v5377
  %v5443 = vunpack.c.l.b16 %v5378
  %v5444 = vunpack.c.h.b16 %v5378
  %v5445 = vunpack.c.l.b16 %v5379
  %v5446 = vunpack.c.h.b16 %v5379
  %v5447 = vunpack.c.l.b16 %v5380
  %v5448 = vunpack.c.h.b16 %v5380
  %v5449 = vunpack.c.l.b16 %v5381
  %v5450 = vunpack.c.h.b16 %v5381
  %v5451 = vunpack.c.l.b16 %v5382
  %v5452 = vunpack.c.h.b16 %v5382
  %v5453 = vunpack.c.l.b16 %v5383
  %v5454 = vunpack.c.h.b16 %v5383
  %v5455 = vunpack.c.l.b16 %v5384
  %v5456 = vunpack.c.h.b16 %v5384
  %v5457 = vunpack.c.l.b16 %v5385
  %v5458 = vunpack.c.h.b16 %v5385
  %v5459 = vunpack.c.l.b16 %v5386
  %v5460 = vunpack.c.h.b16 %v5386
  %v5461 = vunpack.c.l.b16 %v5387
  %v5462 = vunpack.c.h.b16 %v5387
  %v5463 = vunpack.c.l.b16 %v5388
  %v5464 = vunpack.c.h.b16 %v5388
  %v5465 = vunpack.c.l.b16 %v5389
  %v5466 = vunpack.c.h.b16 %v5389
  %v5467 = vunpack.c.l.b16 %v5390
  %v5468 = vunpack.c.h.b16 %v5390
  %v5469 = vunpack.c.l.b16 %v5391
  %v5470 = vunpack.c.h.b16 %v5391
  %v5471 = vunpack.c.l.b16 %v5392
  %v5472 = vunpack.c.h.b16 %v5392
  %v5473 = vunpack.c.l.b16 %v5393
  %v5474 = vunpack.c.h.b16 %v5393
  %v5475 = vunpack.c.l.b16 %v5394
  %v5476 = vunpack.c.h.b16 %v5394
  %v5477 = vunpack.c.l.b16 %v5395
  %v5478 = vunpack.c.h.b16 %v5395
  %v5479 = vunpack.c.l.b16 %v5396
  %v5480 = vunpack.c.h.b16 %v5396
  %v5481 = vunpack.c.l.b16 %v5397
  %v5482 = vunpack.c.h.b16 %v5397
  %v5483 = vunpack.c.l.b16 %v5398
  %v5484 = vunpack.c.h.b16 %v5398
  %v5485 = vunpack.c.l.b16 %v5399
  %v5486 = vunpack.c.h.b16 %v5399
  %v5487 = vunpack.c.l.b16 %v5400
  %v5488 = vunpack.c.h.b16 %v5400
  %v5489 = vunpack.c.l.b16 %v5401
  %v5490 = vunpack.c.h.b16 %v5401
  %v5491 = vunpack.c.l.b16 %v5402
  %v5492 = vunpack.c.h.b16 %v5402
  %v5493 = vunpack.c.l.b16 %v5403
  %v5494 = vunpack.c.h.b16 %v5403
  %v5495 = vunpack.c.l.b16 %v5404
  %v5496 = vunpack.c.h.b16 %v5404
  %v5497 = vunpack.c.l.b16 %v5405
  %v5498 = vunpack.c.h.b16 %v5405
  %v5499 = vunpack.c.l.b16 %v5406
  %v5500 = vunpack.c.h.b16 %v5406
  %v5501 = vunpack.c.l.b16 %v5407
  %v5502 = vunpack.c.h.b16 %v5407
  %v5503 = vunpack.c.l.b16 %v5408
  %v5504 = vunpack.c.h.b16 %v5408
  %v5505 = vpack.c.b16 %v5445, %v5441
  %v5506 = vpack.c.b16 %v5446, %v5442
  %v5507 = vpack.c.b16 %v5447, %v5443
  %v5508 = vpack.c.b16 %v5448, %v5444
  %v5509 = vpack.c.b16 %v5453, %v5449
  %v5510 = vpack.c.b16 %v5454, %v5450
  %v5511 = vpack.c.b16 %v5455, %v5451
  %v5512 = vpack.c.b16 %v5456, %v5452
  %v5513 = vpack.c.b16 %v5461, %v5457
  %v5514 = vpack.c.b16 %v5462, %v5458
  %v5515 = vpack.c.b16 %v5463, %v5459
  %v5516 = vpack.c.b16 %v5464, %v5460
  %v5517 = vpack.c.b16 %v5469, %v5465
  %v5518 = vpack.c.b16 %v5470, %v5466
  %v5519 = vpack.c.b16 %v5471, %v5467
  %v5520 = vpack.c.b16 %v5472, %v5468
  %v5521 = vpack.c.b16 %v5477, %v5473
  %v5522 = vpack.c.b16 %v5478, %v5474
  %v5523 = vpack.c.b16 %v5479, %v5475
  %v5524 = vpack.c.b16 %v5480, %v5476
  %v5525 = vpack.c.b16 %v5485, %v5481
  %v5526 = vpack.c.b16 %v5486, %v5482
  %v5527 = vpack.c.b16 %v5487, %v5483
  %v5528 = vpack.c.b16 %v5488, %v5484
  %v5529 = vpack.c.b16 %v5493, %v5489
  %v5530 = vpack.c.b16 %v5494, %v5490
  %v5531 = vpack.c.b16 %v5495, %v5491
  %v5532 = vpack.c.b16 %v5496, %v5492
  %v5533 = vpack.c.b16 %v5501, %v5497
  %v5534 = vpack.c.b16 %v5502, %v5498
  %v5535 = vpack.c.b16 %v5503, %v5499
  %v5536 = vpack.c.b16 %v5504, %v5500
  %5569 = vmatprep.subr.bf16.mxu0 %v5506
  %5570 = vmatpush1.bf16.msra.mxu0 %v5505
  %5571 = vmatprep.subr.bf16.mxu0 %v5510
  %5572 = vmatpush1.bf16.msra.mxu0 %v5509
  %5573 = vmatprep.subr.bf16.mxu0 %v5514
  %5574 = vmatpush1.bf16.msra.mxu0 %v5513
  %5575 = vmatprep.subr.bf16.mxu0 %v5518
  %5576 = vmatpush1.bf16.msra.mxu0 %v5517
  %5577 = vmatprep.subr.bf16.mxu0 %v5522
  %5578 = vmatpush1.bf16.msra.mxu0 %v5521
  %5579 = vmatprep.subr.bf16.mxu0 %v5526
  %5580 = vmatpush1.bf16.msra.mxu0 %v5525
  %5581 = vmatprep.subr.bf16.mxu0 %v5530
  %5582 = vmatpush1.bf16.msra.mxu0 %v5529
  %5583 = vmatprep.subr.bf16.mxu0 %v5534
  %5584 = vmatpush1.bf16.msra.mxu0 %v5533
  %5585 = vmatprep.subr.bf16.mxu0 0
  %5586 = vmatpush1.bf16.msra.mxu0 0
  %5587 = vmatprep.subr.bf16.mxu0 0
  %5588 = vmatpush1.bf16.msra.mxu0 0
  %5589 = vmatprep.subr.bf16.mxu0 0
  %5590 = vmatpush1.bf16.msra.mxu0 0
  %5591 = vmatprep.subr.bf16.mxu0 0
  %5592 = vmatpush1.bf16.msra.mxu0 0
  %5593 = vmatprep.subr.bf16.mxu0 0
  %5594 = vmatpush1.bf16.msra.mxu0 0
  %5595 = vmatprep.subr.bf16.mxu0 0
  %5596 = vmatpush1.bf16.msra.mxu0 0
  %5597 = vmatprep.subr.bf16.mxu0 0
  %5598 = vmatpush1.bf16.msra.mxu0 0
  %5599 = vmatprep.subr.bf16.mxu0 0
  %5600 = vmatpush1.bf16.msra.mxu0 0
  %5601 = vmatprep.mubr.bf16.mxu0 0
  %5602 = vmatmul.mubr.bf16.gmra.mrb[0].mxu0 %v5376
  %v5603 = vpop.f32.mrb[0].mxu0
  %v5604 = vadd.f32 0.0, %v5603
  %v5605 = vpop.f32.mrb[0].mxu0
  %v5606 = vadd.f32 0.0, %v5605
  %v5607 = vpop.f32.mrb[0].mxu0
  %v5608 = vadd.f32 0.0, %v5607
  %v5609 = vpop.f32.mrb[0].mxu0
  %v5610 = vadd.f32 0.0, %v5609
  %5611 = vdwg.mxu0
  %5612 = vmatprep.subr.bf16.mxu0 %v5508
  %5613 = vmatpush1.bf16.msra.mxu0 %v5507
  %5614 = vmatprep.subr.bf16.mxu0 %v5512
  %5615 = vmatpush1.bf16.msra.mxu0 %v5511
  %5616 = vmatprep.subr.bf16.mxu0 %v5516
  %5617 = vmatpush1.bf16.msra.mxu0 %v5515
  %5618 = vmatprep.subr.bf16.mxu0 %v5520
  %5619 = vmatpush1.bf16.msra.mxu0 %v5519
  %5620 = vmatprep.subr.bf16.mxu0 %v5524
  %5621 = vmatpush1.bf16.msra.mxu0 %v5523
  %5622 = vmatprep.subr.bf16.mxu0 %v5528
  %5623 = vmatpush1.bf16.msra.mxu0 %v5527
  %5624 = vmatprep.subr.bf16.mxu0 %v5532
  %5625 = vmatpush1.bf16.msra.mxu0 %v5531
  %5626 = vmatprep.subr.bf16.mxu0 %v5536
  %5627 = vmatpush1.bf16.msra.mxu0 %v5535
  %5628 = vmatprep.subr.bf16.mxu0 0
  %5629 = vmatpush1.bf16.msra.mxu0 0
  %5630 = vmatprep.subr.bf16.mxu0 0
  %5631 = vmatpush1.bf16.msra.mxu0 0
  %5632 = vmatprep.subr.bf16.mxu0 0
  %5633 = vmatpush1.bf16.msra.mxu0 0
  %5634 = vmatprep.subr.bf16.mxu0 0
  %5635 = vmatpush1.bf16.msra.mxu0 0
  %5636 = vmatprep.subr.bf16.mxu0 0
  %5637 = vmatpush1.bf16.msra.mxu0 0
  %5638 = vmatprep.subr.bf16.mxu0 0
  %5639 = vmatpush1.bf16.msra.mxu0 0
  %5640 = vmatprep.subr.bf16.mxu0 0
  %5641 = vmatpush1.bf16.msra.mxu0 0
  %5642 = vmatprep.subr.bf16.mxu0 0
  %5643 = vmatpush1.bf16.msra.mxu0 0
  %5644 = vmatprep.mubr.bf16.mxu0 0
  %5645 = vmatmul.mubr.bf16.gmra.mrb[0].mxu0 %v5376
  %v5646 = vpop.f32.mrb[0].mxu0
  %v5647 = vadd.f32 0.0, %v5646
  %v5648 = vpop.f32.mrb[0].mxu0
  %v5649 = vadd.f32 0.0, %v5648
  %v5650 = vpop.f32.mrb[0].mxu0
  %v5651 = vadd.f32 0.0, %v5650
  %v5652 = vpop.f32.mrb[0].mxu0
  %v5653 = vadd.f32 0.0, %v5652
  %5654 = vdwg.mxu0
  %v5655 = vadd.f32 %v5366, %v5604
  %v5656 = vadd.f32 %v5367, %v5606
  %v5657 = vadd.f32 %v5368, %v5647
  %v5658 = vadd.f32 %v5369, %v5649
  %v5659 = vadd.f32 %v5370, %v5608
  %v5660 = vadd.f32 %v5371, %v5610
  %v5661 = vadd.f32 %v5372, %v5651
  %v5662 = vadd.f32 %v5373, %v5653
  %v5663 = vxor.u32 %v5655, 2147483648
  %v5664 = vxor.u32 %v5659, 2147483648
  %v5665 = vmul.f32 %v5663, 1.442695
  %v5666 = vpow.pop %v5665
  %v5667 = vmul.f32 %v5664, 1.442695
  %v5668 = vpow.pop %v5667
  %v5669 = vadd.f32 %v5666, 1.0
  %v5670 = vadd.f32 %v5668, 1.0
  %v5671 = vrcp.pop %v5669
  %v5672 = vmul.f32 1.0, %v5671
  %v5673 = vrcp.pop %v5670
  %v5674 = vmul.f32 1.0, %v5673
  %v5675 = vxor.u32 %v5656, 2147483648
  %v5676 = vxor.u32 %v5660, 2147483648
  %v5677 = vmul.f32 %v5675, 1.442695
  %v5678 = vpow.pop %v5677
  %v5679 = vmul.f32 %v5676, 1.442695
  %v5680 = vpow.pop %v5679
  %v5681 = vadd.f32 %v5678, 1.0
  %v5682 = vadd.f32 %v5680, 1.0
  %v5683 = vrcp.pop %v5681
  %v5684 = vmul.f32 1.0, %v5683
  %v5685 = vrcp.pop %v5682
  %v5686 = vmul.f32 1.0, %v5685
  %v5687 = vtanh.pop %v5657
  %v5688 = vtanh.pop %v5661
  %v5689 = vxor.u32 %v5658, 2147483648
  %v5690 = vxor.u32 %v5662, 2147483648
  %v5691 = vmul.f32 %v5689, 1.442695
  %v5692 = vpow.pop %v5691
  %v5693 = vmul.f32 %v5690, 1.442695
  %v5694 = vpow.pop %v5693
  %v5695 = vadd.f32 %v5692, 1.0
  %v5696 = vadd.f32 %v5694, 1.0
  %v5697 = vrcp.pop %v5695
  %v5698 = vmul.f32 1.0, %v5697
  %v5699 = vrcp.pop %v5696
  %v5700 = vmul.f32 1.0, %v5699
  %v5701 = vld [vmem:[#allocation3 + $0x10] sm:$0xff]
  %v5702 = vld [vmem:[#allocation3 + $0x18] sm:$0xff]
  %v5703 = vmul.f32 %v5684, %v5701
  %v5704 = vmul.f32 %v5686, %v5702
  %v5705 = vmul.f32 %v5672, %v5687
  %v5706 = vmul.f32 %v5674, %v5688
  %v5707 = vadd.f32 %v5703, %v5705
  %v5708 = vadd.f32 %v5704, %v5706
  %v5709 = vtanh.pop %v5707
  %v5710 = vtanh.pop %v5708
  %v5711 = vmul.f32 %v5698, %v5709
  %v5712 = vmul.f32 %v5700, %v5710
  %5713 = vst [vmem:[#allocation3 + $0x10] sm:$0xff] %v5707
  %5714 = vst [vmem:[#allocation3 + $0x18] sm:$0xff] %v5708
  %5715 = vst [vmem:[#allocation2 + $0x10] sm:$0xff] %v5711
  %5716 = vst [vmem:[#allocation2 + $0x18] sm:$0xff] %v5712
  // Predicated region
  $region22: #{lstm_fixed_len_forward.1} parent=0 // pred_check
    %p5717 = pneg %p18
  $region23: #{lstm_fixed_len_forward.1} parent=0 // pred_check_branch
    %5719 = sbr.rel (%p5717) target = $region25
  $region24: #{lstm_fixed_len_forward.1} parent=0 // pred_region
    %v5720 = vld [vmem:[#allocation2] sm:$0xff]
    %v5721 = vld [vmem:[#allocation2 + $0x8] sm:$0xff]
    %v5722 = vld [vmem:[#allocation2 + $0x10] sm:$0xff]
    %v5723 = vld [vmem:[#allocation2 + $0x18] sm:$0xff]
    %v5724 = vld [vmem:[%s2] sm:$0xff]
    %v5725 = vld [vmem:[%s2 + $0x8] sm:$0xff]
    %v5726 = vld [vmem:[%s2 + $0x10] sm:$0xff]
    %v5727 = vld [vmem:[%s2 + $0x18] sm:$0xff]
    %v5728 = vld [vmem:[%s2 + $0x20] sm:$0xff]
    %v5729 = vld [vmem:[%s2 + $0x28] sm:$0xff]
    %v5730 = vld [vmem:[%s2 + $0x30] sm:$0xff]
    %v5731 = vld [vmem:[%s2 + $0x38] sm:$0xff]
    %v5732 = vld [vmem:[%s2 + $0x40] sm:$0xff]
    %v5733 = vld [vmem:[%s2 + $0x48] sm:$0xff]
    %v5734 = vld [vmem:[%s2 + $0x50] sm:$0xff]
    %v5735 = vld [vmem:[%s2 + $0x58] sm:$0xff]
    %v5736 = vld [vmem:[%s2 + $0x60] sm:$0xff]
    %v5737 = vld [vmem:[%s2 + $0x68] sm:$0xff]
    %v5738 = vld [vmem:[%s2 + $0x70] sm:$0xff]
    %v5739 = vld [vmem:[%s2 + $0x78] sm:$0xff]
    %v5740 = vld [vmem:[%s3] sm:$0x1]
    %v5742 = vlaneseq
    %v5743 = vshrl.u32 %v5742, 7
    %v5744 = vsub.s32 0, %v5743
    %v5745 = vrot.slane %v5740, %v5744
    %5747 = vmatprep.subr.mxu0 0.0
    %5748 = vmatpush1.msra.mxu0 %v5724
    %5749 = vmatprep.subr.mxu0 0.0
    %5750 = vmatpush1.msra.mxu0 %v5725
    %5751 = vmatprep.subr.mxu0 0.0
    %5752 = vmatpush1.msra.mxu0 %v5726
    %5753 = vmatprep.subr.mxu0 0.0
    %5754 = vmatpush1.msra.mxu0 %v5727
    %5755 = vmatprep.subr.mxu0 0.0
    %5756 = vmatpush1.msra.mxu0 %v5728
    %5757 = vmatprep.subr.mxu0 0.0
    %5758 = vmatpush1.msra.mxu0 %v5729
    %5759 = vmatprep.subr.mxu0 0.0
    %5760 = vmatpush1.msra.mxu0 %v5730
    %5761 = vmatprep.subr.mxu0 0.0
    %5762 = vmatpush1.msra.mxu0 %v5731
    %5763 = vmatprep.subr.mxu0 0.0
    %5764 = vmatpush1.msra.mxu0 %v5732
    %5765 = vmatprep.subr.mxu0 0.0
    %5766 = vmatpush1.msra.mxu0 %v5733
    %5767 = vmatprep.subr.mxu0 0.0
    %5768 = vmatpush1.msra.mxu0 %v5734
    %5769 = vmatprep.subr.mxu0 0.0
    %5770 = vmatpush1.msra.mxu0 %v5735
    %5771 = vmatprep.subr.mxu0 0.0
    %5772 = vmatpush1.msra.mxu0 %v5736
    %5773 = vmatprep.subr.mxu0 0.0
    %5774 = vmatpush1.msra.mxu0 %v5737
    %5775 = vmatprep.subr.mxu0 0.0
    %5776 = vmatpush1.msra.mxu0 %v5738
    %5777 = vmatprep.subr.mxu0 0.0
    %5778 = vmatpush1.msra.mxu0 %v5739
    %5779 = vmatprep.subr.mxu0 0.0
    %5780 = vmatpush1.msra.mxu0 0.0
    %5781 = vmatprep.subr.mxu0 0.0
    %5782 = vmatpush1.msra.mxu0 0.0
    %5783 = vmatprep.subr.mxu0 0.0
    %5784 = vmatpush1.msra.mxu0 0.0
    %5785 = vmatprep.subr.mxu0 0.0
    %5786 = vmatpush1.msra.mxu0 0.0
    %5787 = vmatprep.subr.mxu0 0.0
    %5788 = vmatpush1.msra.mxu0 0.0
    %5789 = vmatprep.subr.mxu0 0.0
    %5790 = vmatpush1.msra.mxu0 0.0
    %5791 = vmatprep.subr.mxu0 0.0
    %5792 = vmatpush1.msra.mxu0 0.0
    %5793 = vmatprep.subr.mxu0 0.0
    %5794 = vmatpush1.msra.mxu0 0.0
    %5795 = vmatprep.subr.mxu0 0.0
    %5796 = vmatpush1.msra.mxu0 0.0
    %5797 = vmatprep.subr.mxu0 0.0
    %5798 = vmatpush1.msra.mxu0 0.0
    %5799 = vmatprep.subr.mxu0 0.0
    %5800 = vmatpush1.msra.mxu0 0.0
    %5801 = vmatprep.subr.mxu0 0.0
    %5802 = vmatpush1.msra.mxu0 0.0
    %5803 = vmatprep.subr.mxu0 0.0
    %5804 = vmatpush1.msra.mxu0 0.0
    %5805 = vmatprep.subr.mxu0 0.0
    %5806 = vmatpush1.msra.mxu0 0.0
    %5807 = vmatprep.subr.mxu0 0.0
    %5808 = vmatpush1.msra.mxu0 0.0
    %5809 = vmatprep.subr.mxu0 0.0
    %5810 = vmatpush1.msra.mxu0 0.0
    %5811 = vmatprep.mubr.f32.mxu0 0.0
    %5812 = vmatmul.mubr.f32.gmra.mrb[0].mxu0 %v5720
    %v5813 = vpop.f32.mrb[0].mxu0
    %v5814 = vadd.f32 %v5745, %v5813
    %v5815 = vpop.f32.mrb[0].mxu0
    %5816 = vmatprep.mubr.f32.mxu0 0.0
    %5817 = vmatmul.mubr.f32.gmra.mrb[0].mxu0 %v5721
    %v5818 = vpop.f32.mrb[0].mxu0
    %v5819 = vadd.f32 %v5745, %v5818
    %v5820 = vpop.f32.mrb[0].mxu0
    %5821 = vmatprep.mubr.f32.mxu0 0.0
    %5822 = vmatmul.mubr.f32.gmra.mrb[0].mxu0 %v5722
    %v5823 = vpop.f32.mrb[0].mxu0
    %v5824 = vadd.f32 %v5745, %v5823
    %v5825 = vpop.f32.mrb[0].mxu0
    %5826 = vmatprep.mubr.f32.mxu0 0.0
    %5827 = vmatmul.mubr.f32.gmra.mrb[0].mxu0 %v5723
    %v5828 = vpop.f32.mrb[0].mxu0
    %v5829 = vadd.f32 %v5745, %v5828
    %v5830 = vpop.f32.mrb[0].mxu0
    %5831 = vdwg.mxu0
    %5832 = vst [vmem:[%s4] sm:$0xff] %v5814
    %5833 = vst [vmem:[%s4 + $0x8] sm:$0xff] %v5819
    %5834 = vst [vmem:[%s4 + $0x10] sm:$0xff] %v5824
    %5835 = vst [vmem:[%s4 + $0x18] sm:$0xff] %v5829
  $region25: #{lstm_fixed_len_forward.1} parent=0 // pred_fallthru
    _
  // Predicated region
  $region26: #{lstm_fixed_len_forward.1} parent=0 // pred_check
    _
  $region27: #{lstm_fixed_len_forward.1} parent=0 // pred_check_branch
    %5837 = sbr.rel (0) target = $region29
  $region28: #{lstm_fixed_len_forward.1} parent=0 // pred_region
    _
  $region29: #{lstm_fixed_len_forward.1} parent=0 // pred_fallthru
    _
  // Predicated region
  $region30: #{lstm_fixed_len_forward.1} parent=0 // pred_check
    _
  $region31: #{lstm_fixed_len_forward.1} parent=0 // pred_check_branch
    %5839 = sbr.rel (0) target = $region33
  $region32: #{lstm_fixed_len_forward.1} parent=0 // pred_region
    _
  $region33: #{lstm_fixed_len_forward.1} parent=0 // pred_fallthru
    _

</llo_original>
